<compile_context>
chip_gen: v7x
topology: tpu7x:2x2x1
jax: 0.10.0
libtpu: 0.0.40
codegen_flags: <defaults>
</compile_context>

<pallas_src>
import functools

import jax
import jax.numpy as jnp
from jax.experimental import pallas as pl
from jax.experimental.pallas import tpu as pltpu


def _round_up(x, m):
    return (x + m - 1) // m * m


def _cdiv(a, b):
    return (a + b - 1) // b


# ---------------------------------------------------------------------------
# Pallas kernel: fused (prev-BN shift + ReLU) -> bf16 GEMM (f32 accumulation)
# ---------------------------------------------------------------------------
def _preact_gemm_kernel(x_ref, shift_ref, w_ref, o_ref, *, pre_act):
    # x_ref:     (TM, K)  f32  raw conv sums of the previous layer (or input)
    # shift_ref: (1, K)   f32  previous layer's folded BN shift (zeros for L0)
    # w_ref:     (K, NC)  bf16 this layer's GEMM weight, BN scale pre-folded
    # o_ref:     (TM, NC) bf16 partial transposed-conv products
    x = x_ref[...].astype(jnp.float32) + shift_ref[...]
    if pre_act == "relu":
        x = jnp.maximum(x, 0.0)
    lhs = x.astype(jnp.bfloat16)
    acc = jnp.dot(lhs, w_ref[...], preferred_element_type=jnp.float32)
    o_ref[...] = acc.astype(o_ref.dtype)


def preact_gemm(x2d, pre_shift, w, pre_act):
    """x2d: (MT, K) f32; pre_shift: (K,) f32; w: (K, NC) f32 -> (MT, NC) bf16."""
    MT, K = x2d.shape
    NC = w.shape[1]

    # Zero-pad K (cheap, contributes 0 to the accumulator) and make the output
    # lane-dense (NC multiple of 128) so stores are unmasked.
    K_pad = max(16, _round_up(K, 16))
    NC_pad = _round_up(NC, 128)
    if K_pad != K:
        x2d = jnp.pad(x2d, ((0, 0), (0, K_pad - K)))
        w = jnp.pad(w, ((0, K_pad - K), (0, 0)))
        pre_shift = jnp.pad(pre_shift, ((0, K_pad - K),))
    if NC_pad != NC:
        w = jnp.pad(w, ((0, 0), (0, NC_pad - NC)))

    # 2-8 grid steps for the larger layers (pipelines the LHS DMA and feeds
    # both v7x TensorCores); a single step for the tiny early layers so 1-TC
    # chips don't pay per-step overhead for nothing.
    TM_TARGET = 256
    num_blocks = max(1, min(_cdiv(MT, TM_TARGET), 8))
    TM = _round_up(_cdiv(MT, num_blocks), 16)
    M_pad = TM * num_blocks
    if M_pad != MT:
        x2d = jnp.pad(x2d, ((0, M_pad - MT), (0, 0)))

    wb = w.astype(jnp.bfloat16)
    shift2 = pre_shift.reshape(1, K_pad).astype(jnp.float32)

    out = pl.pallas_call(
        functools.partial(_preact_gemm_kernel, pre_act=pre_act),
        out_shape=jax.ShapeDtypeStruct((M_pad, NC_pad), jnp.bfloat16),
        grid_spec=pltpu.PrefetchScalarGridSpec(
            num_scalar_prefetch=0,
            grid=(num_blocks,),
            in_specs=[
                pl.BlockSpec((TM, K_pad), lambda m: (m, 0)),
                pl.BlockSpec((1, K_pad), lambda m: (0, 0)),
                pl.BlockSpec((K_pad, NC_pad), lambda m: (0, 0)),
            ],
            out_specs=pl.BlockSpec((TM, NC_pad), lambda m: (m, 0)),
        ),
        compiler_params=pltpu.CompilerParams(
            dimension_semantics=("parallel",),
            vmem_limit_bytes=32 * 1024 * 1024),
    )(x2d.astype(jnp.float32), shift2, wb)
    # Padded rows/cols are garbage/zero; slice them off before col2im.
    return out[:MT, :NC]


# ---------------------------------------------------------------------------
# Wrapper glue: col2im scatter-add (the transposed-conv output assembly)
# ---------------------------------------------------------------------------
def _col2im_add(y2d, N, H, W, kh, kw, sh, sw, ph, pw, cout):
    """y2d: (N*H*W, kh*kw*cout) -> raw conv sums (N, H_out, W_out, cout) f32."""
    H_out = (H - 1) * sh - 2 * ph + kh
    W_out = (W - 1) * sw - 2 * pw + kw
    H_ext = (H - 1) * sh + kh
    W_ext = (W - 1) * sw + kw
    y = y2d.reshape(N, H, W, kh, kw, cout).astype(jnp.float32)
    out = jnp.zeros((N, H_ext, W_ext, cout), jnp.float32)
    for ki in range(kh):
        for kj in range(kw):
            out = out.at[:, ki:ki + (H - 1) * sh + 1:sh,
                         kj:kj + (W - 1) * sw + 1:sw, :].add(y[:, :, :, ki, kj, :])
    return out[:, ph:ph + H_out, pw:pw + W_out, :]


def _ct_weight_to_gemm(w_ct, scale):
    """PyTorch ConvTranspose2d weight (Cin, Cout, kh, kw) -> (Cin, kh*kw*Cout),
    with the per-Cout BN scale folded into the columns."""
    cin, cout, kh, kw = w_ct.shape
    wg = jnp.transpose(w_ct, (0, 2, 3, 1))          # (Cin, kh, kw, Cout)
    wg = wg * scale[None, None, None, :]
    return wg.reshape(cin, kh * kw * cout)


# (Cin, Cout, kernel, stride, padding, has_bias) — matches the nn.Sequential.
LAYERS = [
    (1,   64,  (3, 3), (1, 1), (0, 0), False),
    (64,  128, (3, 3), (2, 2), (1, 1), False),
    (128, 256, (2, 2), (2, 2), (2, 2), False),
    (256, 128, (3, 3), (1, 1), (2, 2), False),
    (128, 64,  (4, 4), (2, 2), (1, 1), False),
    (64,  32,  (4, 4), (2, 2), (1, 1), False),
    (32,  1,   (3, 3), (1, 1), (1, 1), True),
]


def init_params(key):
    params = []
    for (cin, cout, (kh, kw), _s, _p, has_bias) in LAYERS:
        key, kwt, kb, kg, kbe, kme, kva = jax.random.split(key, 7)
        layer = {
            "w": 0.1 * jax.random.normal(kwt, (cin, cout, kh, kw), jnp.float32)
        }
        if has_bias:
            layer["b"] = 0.1 * jax.random.normal(kb, (cout,), jnp.float32)
        else:
            layer["gamma"] = 1.0 + 0.1 * jax.random.normal(kg, (cout,), jnp.float32)
            layer["beta"] = 0.1 * jax.random.normal(kbe, (cout,), jnp.float32)
            layer["mean"] = 0.1 * jax.random.normal(kme, (cout,), jnp.float32)
            layer["var"] = 1.0 + jax.random.uniform(kva, (cout,), jnp.float32)
        params.append(layer)
    return params


def generator_forward(x_nchw, params):
    if x_nchw.ndim == 2:                                  # torch: unsqueeze twice
        x_nchw = x_nchw[None, None]
    x = jnp.transpose(x_nchw, (0, 2, 3, 1)).astype(jnp.float32)   # NHWC, f32 sums
    eps = 1e-5

    # The previous layer's BN shift + ReLU is applied inside the *next* GEMM
    # kernel (pre-activation fusion).  Layer 0 has no predecessor.
    pre_shift = jnp.zeros((x.shape[-1],), jnp.float32)
    pre_act = "none"

    for (cin, cout, (kh, kw), (sh, sw), (ph, pw), has_bias), layer in zip(LAYERS, params):
        nb, h, w_sp, _ = x.shape
        if has_bias:
            scale = jnp.ones((cout,), jnp.float32)
            shift = layer["b"].astype(jnp.float32)
        else:
            inv = layer["gamma"] / jnp.sqrt(layer["var"] + eps)
            scale = inv                                   # fold BN scale into weights
            shift = layer["beta"] - layer["mean"] * inv
        wg = _ct_weight_to_gemm(layer["w"].astype(jnp.float32), scale)

        x2d = x.reshape(nb * h * w_sp, cin)
        y2d = preact_gemm(x2d, pre_shift, wg, pre_act)    # (N*H*W, kh*kw*Cout) bf16
        x = _col2im_add(y2d, nb, h, w_sp, kh, kw, sh, sw, ph, pw, cout)

        pre_shift = shift
        pre_act = "relu"

    # Final layer epilogue: bias + Tanh, then the module's 0.5*x + 0.5.
    y = 0.5 * jnp.tanh(x + pre_shift[None, None, None, :]) + 0.5
    y = jnp.transpose(y, (0, 3, 1, 2))                    # back to NCHW
    return jnp.squeeze(y)                                 # torch .squeeze()


if __name__ == "__main__":
    key = jax.random.PRNGKey(0)
    kx, kp = jax.random.split(key)
    x = jax.random.normal(kx, (2, 1, 4, 4), jnp.float32)  # NCHW, 1 input channel
    params = init_params(kp)
    fwd = jax.jit(generator_forward)
    y = fwd(x, params)
    y = jax.block_until_ready(y)
    assert y.shape == (2, 64, 64), y.shape
    assert bool(jnp.all(jnp.isfinite(y)))
    print("KERNEL_OK")
</pallas_src>

<mosaic_0001>
module attributes {stable_mosaic.version = 11 : i64} {
  func.func @_preact_gemm_kernel(%arg0: i32, %arg1: memref<32x16xf32, #tpu.memory_space<vmem>>, %arg2: memref<1x16xf32, #tpu.memory_space<vmem>>, %arg3: memref<16x640xbf16, #tpu.memory_space<vmem>>, %arg4: memref<32x640xbf16, #tpu.memory_space<vmem>>) attributes {dimension_semantics = [#tpu.dimension_semantics<parallel>], iteration_bounds = array<i64: 1>, scalar_prefetch = 0 : i64, scratch_operands = 0 : i64, tpu.core_type = #tpu.core_type<tc>, window_params = [{transform_indices = @transform_0, window_bounds = array<i64: 32, 16>}, {pipeline_mode = #tpu.pipeline_mode<synchronous>, transform_indices = @transform_1, window_bounds = array<i64: 1, 16>}, {pipeline_mode = #tpu.pipeline_mode<synchronous>, transform_indices = @transform_2, window_bounds = array<i64: 16, 640>}, {transform_indices = @transform_3, window_bounds = array<i64: 32, 640>}]} {
    %c0 = arith.constant 0 : index
    %c0_0 = arith.constant 0 : index
    %0 = vector.load %arg1[%c0, %c0_0] : memref<32x16xf32, #tpu.memory_space<vmem>>, vector<32x16xf32>
    %c0_1 = arith.constant 0 : index
    %c0_2 = arith.constant 0 : index
    %1 = vector.load %arg2[%c0_1, %c0_2] : memref<1x16xf32, #tpu.memory_space<vmem>>, vector<1x16xf32>
    %2 = vector.broadcast %1 : vector<1x16xf32> to vector<32x16xf32>
    %3 = arith.addf %0, %2 : vector<32x16xf32>
    %4 = arith.truncf %3 : vector<32x16xf32> to vector<32x16xbf16>
    %c0_3 = arith.constant 0 : index
    %c0_4 = arith.constant 0 : index
    %5 = vector.load %arg3[%c0_3, %c0_4] : memref<16x640xbf16, #tpu.memory_space<vmem>>, vector<16x640xbf16>
    %cst = arith.constant dense<0.000000e+00> : vector<32x640xf32>
    %6 = tpu.matmul %4, %5, %cst {dimension_numbers = #tpu.dot_dimension_numbers<[1], [0], [0], [1], [0, 0, 1, 1], [], []>} : vector<32x16xbf16>, vector<16x640xbf16>, vector<32x640xf32> -> vector<32x640xf32>
    %7 = arith.truncf %6 : vector<32x640xf32> to vector<32x640xbf16>
    %c0_5 = arith.constant 0 : index
    %c0_6 = arith.constant 0 : index
    %8 = vector.load %arg4[%c0_5, %c0_6] : memref<32x640xbf16, #tpu.memory_space<vmem>>, vector<32x640xbf16>
    tpu.vector_store %arg4[%c0_5, %c0_6], %7 {strides = array<i32>} : memref<32x640xbf16, #tpu.memory_space<vmem>>, vector<32x640xbf16>,
    return
  }
  func.func @transform_0(%arg0: i32) -> (i32, i32) {
    %c0_i32 = arith.constant 0 : i32
    %c0_i32_0 = arith.constant 0 : i32
    return %arg0, %c0_i32 : i32, i32
  }
  func.func @transform_1(%arg0: i32) -> (i32, i32) {
    %c0_i32 = arith.constant 0 : i32
    %c0_i32_0 = arith.constant 0 : i32
    %c0_i32_1 = arith.constant 0 : i32
    return %c0_i32, %c0_i32_0 : i32, i32
  }
  func.func @transform_2(%arg0: i32) -> (i32, i32) {
    %c0_i32 = arith.constant 0 : i32
    %c0_i32_0 = arith.constant 0 : i32
    %c0_i32_1 = arith.constant 0 : i32
    return %c0_i32, %c0_i32_0 : i32, i32
  }
  func.func @transform_3(%arg0: i32) -> (i32, i32) {
    %c0_i32 = arith.constant 0 : i32
    %c0_i32_0 = arith.constant 0 : i32
    return %arg0, %c0_i32 : i32, i32
  }
}

module attributes {stable_mosaic.version = 11 : i64} {
  func.func @_preact_gemm_kernel(%arg0: i32, %arg1: memref<80x64xf32, #tpu.memory_space<vmem>>, %arg2: memref<1x64xf32, #tpu.memory_space<vmem>>, %arg3: memref<64x1152xbf16, #tpu.memory_space<vmem>>, %arg4: memref<80x1152xbf16, #tpu.memory_space<vmem>>) attributes {dimension_semantics = [#tpu.dimension_semantics<parallel>], iteration_bounds = array<i64: 1>, scalar_prefetch = 0 : i64, scratch_operands = 0 : i64, tpu.core_type = #tpu.core_type<tc>, window_params = [{transform_indices = @transform_0, window_bounds = array<i64: 80, 64>}, {pipeline_mode = #tpu.pipeline_mode<synchronous>, transform_indices = @transform_1, window_bounds = array<i64: 1, 64>}, {pipeline_mode = #tpu.pipeline_mode<synchronous>, transform_indices = @transform_2, window_bounds = array<i64: 64, 1152>}, {transform_indices = @transform_3, window_bounds = array<i64: 80, 1152>}]} {
    %c0 = arith.constant 0 : index
    %c0_0 = arith.constant 0 : index
    %0 = vector.load %arg1[%c0, %c0_0] : memref<80x64xf32, #tpu.memory_space<vmem>>, vector<80x64xf32>
    %c0_1 = arith.constant 0 : index
    %c0_2 = arith.constant 0 : index
    %1 = vector.load %arg2[%c0_1, %c0_2] : memref<1x64xf32, #tpu.memory_space<vmem>>, vector<1x64xf32>
    %2 = vector.broadcast %1 : vector<1x64xf32> to vector<80x64xf32>
    %3 = arith.addf %0, %2 : vector<80x64xf32>
    %cst = arith.constant 0.000000e+00 : f32
    %4 = vector.broadcast %cst : f32 to vector<80x64xf32>
    %5 = arith.maximumf %3, %4 : vector<80x64xf32>
    %6 = arith.truncf %5 : vector<80x64xf32> to vector<80x64xbf16>
    %c0_3 = arith.constant 0 : index
    %c0_4 = arith.constant 0 : index
    %7 = vector.load %arg3[%c0_3, %c0_4] : memref<64x1152xbf16, #tpu.memory_space<vmem>>, vector<64x1152xbf16>
    %cst_5 = arith.constant dense<0.000000e+00> : vector<80x1152xf32>
    %8 = tpu.matmul %6, %7, %cst_5 {dimension_numbers = #tpu.dot_dimension_numbers<[1], [0], [0], [1], [0, 0, 1, 1], [], []>} : vector<80x64xbf16>, vector<64x1152xbf16>, vector<80x1152xf32> -> vector<80x1152xf32>
    %9 = arith.truncf %8 : vector<80x1152xf32> to vector<80x1152xbf16>
    %c0_6 = arith.constant 0 : index
    %c0_7 = arith.constant 0 : index
    %10 = vector.load %arg4[%c0_6, %c0_7] : memref<80x1152xbf16, #tpu.memory_space<vmem>>, vector<80x1152xbf16>
    tpu.vector_store %arg4[%c0_6, %c0_7], %9 {strides = array<i32>} : memref<80x1152xbf16, #tpu.memory_space<vmem>>, vector<80x1152xbf16>,
    return
  }
  func.func @transform_0(%arg0: i32) -> (i32, i32) {
    %c0_i32 = arith.constant 0 : i32
    %c0_i32_0 = arith.constant 0 : i32
    return %arg0, %c0_i32 : i32, i32
  }
  func.func @transform_1(%arg0: i32) -> (i32, i32) {
    %c0_i32 = arith.constant 0 : i32
    %c0_i32_0 = arith.constant 0 : i32
    %c0_i32_1 = arith.constant 0 : i32
    return %c0_i32, %c0_i32_0 : i32, i32
  }
  func.func @transform_2(%arg0: i32) -> (i32, i32) {
    %c0_i32 = arith.constant 0 : i32
    %c0_i32_0 = arith.constant 0 : i32
    %c0_i32_1 = arith.constant 0 : i32
    return %c0_i32, %c0_i32_0 : i32, i32
  }
  func.func @transform_3(%arg0: i32) -> (i32, i32) {
    %c0_i32 = arith.constant 0 : i32
    %c0_i32_0 = arith.constant 0 : i32
    return %arg0, %c0_i32 : i32, i32
  }
}

module attributes {stable_mosaic.version = 11 : i64} {
  func.func @_preact_gemm_kernel(%arg0: i32, %arg1: memref<256x128xf32, #tpu.memory_space<vmem>>, %arg2: memref<1x128xf32, #tpu.memory_space<vmem>>, %arg3: memref<128x1024xbf16, #tpu.memory_space<vmem>>, %arg4: memref<256x1024xbf16, #tpu.memory_space<vmem>>) attributes {dimension_semantics = [#tpu.dimension_semantics<parallel>], iteration_bounds = array<i64: 1>, scalar_prefetch = 0 : i64, scratch_operands = 0 : i64, tpu.core_type = #tpu.core_type<tc>, window_params = [{transform_indices = @transform_0, window_bounds = array<i64: 256, 128>}, {pipeline_mode = #tpu.pipeline_mode<synchronous>, transform_indices = @transform_1, window_bounds = array<i64: 1, 128>}, {pipeline_mode = #tpu.pipeline_mode<synchronous>, transform_indices = @transform_2, window_bounds = array<i64: 128, 1024>}, {transform_indices = @transform_3, window_bounds = array<i64: 256, 1024>}]} {
    %c0 = arith.constant 0 : index
    %c0_0 = arith.constant 0 : index
    %0 = vector.load %arg1[%c0, %c0_0] : memref<256x128xf32, #tpu.memory_space<vmem>>, vector<256x128xf32>
    %c0_1 = arith.constant 0 : index
    %c0_2 = arith.constant 0 : index
    %1 = vector.load %arg2[%c0_1, %c0_2] : memref<1x128xf32, #tpu.memory_space<vmem>>, vector<1x128xf32>
    %2 = vector.broadcast %1 : vector<1x128xf32> to vector<256x128xf32>
    %3 = arith.addf %0, %2 : vector<256x128xf32>
    %cst = arith.constant 0.000000e+00 : f32
    %4 = vector.broadcast %cst : f32 to vector<256x128xf32>
    %5 = arith.maximumf %3, %4 : vector<256x128xf32>
    %6 = arith.truncf %5 : vector<256x128xf32> to vector<256x128xbf16>
    %c0_3 = arith.constant 0 : index
    %c0_4 = arith.constant 0 : index
    %7 = vector.load %arg3[%c0_3, %c0_4] : memref<128x1024xbf16, #tpu.memory_space<vmem>>, vector<128x1024xbf16>
    %cst_5 = arith.constant dense<0.000000e+00> : vector<256x1024xf32>
    %8 = tpu.matmul %6, %7, %cst_5 {dimension_numbers = #tpu.dot_dimension_numbers<[1], [0], [0], [1], [0, 0, 1, 1], [], []>} : vector<256x128xbf16>, vector<128x1024xbf16>, vector<256x1024xf32> -> vector<256x1024xf32>
    %9 = arith.truncf %8 : vector<256x1024xf32> to vector<256x1024xbf16>
    %c0_6 = arith.constant 0 : index
    %c0_7 = arith.constant 0 : index
    %10 = vector.load %arg4[%c0_6, %c0_7] : memref<256x1024xbf16, #tpu.memory_space<vmem>>, vector<256x1024xbf16>
    tpu.vector_store %arg4[%c0_6, %c0_7], %9 {strides = array<i32>} : memref<256x1024xbf16, #tpu.memory_space<vmem>>, vector<256x1024xbf16>,
    return
  }
  func.func @transform_0(%arg0: i32) -> (i32, i32) {
    %c0_i32 = arith.constant 0 : i32
    %c0_i32_0 = arith.constant 0 : i32
    return %arg0, %c0_i32 : i32, i32
  }
  func.func @transform_1(%arg0: i32) -> (i32, i32) {
    %c0_i32 = arith.constant 0 : i32
    %c0_i32_0 = arith.constant 0 : i32
    %c0_i32_1 = arith.constant 0 : i32
    return %c0_i32, %c0_i32_0 : i32, i32
  }
  func.func @transform_2(%arg0: i32) -> (i32, i32) {
    %c0_i32 = arith.constant 0 : i32
    %c0_i32_0 = arith.constant 0 : i32
    %c0_i32_1 = arith.constant 0 : i32
    return %c0_i32, %c0_i32_0 : i32, i32
  }
  func.func @transform_3(%arg0: i32) -> (i32, i32) {
    %c0_i32 = arith.constant 0 : i32
    %c0_i32_0 = arith.constant 0 : i32
    return %arg0, %c0_i32 : i32, i32
  }
}

module attributes {stable_mosaic.version = 11 : i64} {
  func.func @_preact_gemm_kernel(%arg0: i32, %arg1: memref<224x256xf32, #tpu.memory_space<vmem>>, %arg2: memref<1x256xf32, #tpu.memory_space<vmem>>, %arg3: memref<256x1152xbf16, #tpu.memory_space<vmem>>, %arg4: memref<224x1152xbf16, #tpu.memory_space<vmem>>) attributes {dimension_semantics = [#tpu.dimension_semantics<parallel>], iteration_bounds = array<i64: 3>, scalar_prefetch = 0 : i64, scratch_operands = 0 : i64, tpu.core_type = #tpu.core_type<tc>, window_params = [{transform_indices = @transform_0, window_bounds = array<i64: 224, 256>}, {pipeline_mode = #tpu.pipeline_mode<synchronous>, transform_indices = @transform_1, window_bounds = array<i64: 1, 256>}, {pipeline_mode = #tpu.pipeline_mode<synchronous>, transform_indices = @transform_2, window_bounds = array<i64: 256, 1152>}, {transform_indices = @transform_3, window_bounds = array<i64: 224, 1152>}]} {
    %c0 = arith.constant 0 : index
    %c0_0 = arith.constant 0 : index
    %0 = vector.load %arg1[%c0, %c0_0] : memref<224x256xf32, #tpu.memory_space<vmem>>, vector<224x256xf32>
    %c0_1 = arith.constant 0 : index
    %c0_2 = arith.constant 0 : index
    %1 = vector.load %arg2[%c0_1, %c0_2] : memref<1x256xf32, #tpu.memory_space<vmem>>, vector<1x256xf32>
    %2 = vector.broadcast %1 : vector<1x256xf32> to vector<224x256xf32>
    %3 = arith.addf %0, %2 : vector<224x256xf32>
    %cst = arith.constant 0.000000e+00 : f32
    %4 = vector.broadcast %cst : f32 to vector<224x256xf32>
    %5 = arith.maximumf %3, %4 : vector<224x256xf32>
    %6 = arith.truncf %5 : vector<224x256xf32> to vector<224x256xbf16>
    %c0_3 = arith.constant 0 : index
    %c0_4 = arith.constant 0 : index
    %7 = vector.load %arg3[%c0_3, %c0_4] : memref<256x1152xbf16, #tpu.memory_space<vmem>>, vector<256x1152xbf16>
    %cst_5 = arith.constant dense<0.000000e+00> : vector<224x1152xf32>
    %8 = tpu.matmul %6, %7, %cst_5 {dimension_numbers = #tpu.dot_dimension_numbers<[1], [0], [0], [1], [0, 0, 1, 1], [], []>} : vector<224x256xbf16>, vector<256x1152xbf16>, vector<224x1152xf32> -> vector<224x1152xf32>
    %9 = arith.truncf %8 : vector<224x1152xf32> to vector<224x1152xbf16>
    %c0_6 = arith.constant 0 : index
    %c0_7 = arith.constant 0 : index
    %10 = vector.load %arg4[%c0_6, %c0_7] : memref<224x1152xbf16, #tpu.memory_space<vmem>>, vector<224x1152xbf16>
    tpu.vector_store %arg4[%c0_6, %c0_7], %9 {strides = array<i32>} : memref<224x1152xbf16, #tpu.memory_space<vmem>>, vector<224x1152xbf16>,
    return
  }
  func.func @transform_0(%arg0: i32) -> (i32, i32) {
    %c0_i32 = arith.constant 0 : i32
    %c0_i32_0 = arith.constant 0 : i32
    return %arg0, %c0_i32 : i32, i32
  }
  func.func @transform_1(%arg0: i32) -> (i32, i32) {
    %c0_i32 = arith.constant 0 : i32
    %c0_i32_0 = arith.constant 0 : i32
    %c0_i32_1 = arith.constant 0 : i32
    return %c0_i32, %c0_i32_0 : i32, i32
  }
  func.func @transform_2(%arg0: i32) -> (i32, i32) {
    %c0_i32 = arith.constant 0 : i32
    %c0_i32_0 = arith.constant 0 : i32
    %c0_i32_1 = arith.constant 0 : i32
    return %c0_i32, %c0_i32_0 : i32, i32
  }
  func.func @transform_3(%arg0: i32) -> (i32, i32) {
    %c0_i32 = arith.constant 0 : i32
    %c0_i32_0 = arith.constant 0 : i32
    return %arg0, %c0_i32 : i32, i32
  }
}

module attributes {stable_mosaic.version = 11 : i64} {
  func.func @_preact_gemm_kernel(%arg0: i32, %arg1: memref<256x128xf32, #tpu.memory_space<vmem>>, %arg2: memref<1x128xf32, #tpu.memory_space<vmem>>, %arg3: memref<128x1024xbf16, #tpu.memory_space<vmem>>, %arg4: memref<256x1024xbf16, #tpu.memory_space<vmem>>) attributes {dimension_semantics = [#tpu.dimension_semantics<parallel>], iteration_bounds = array<i64: 2>, scalar_prefetch = 0 : i64, scratch_operands = 0 : i64, tpu.core_type = #tpu.core_type<tc>, window_params = [{transform_indices = @transform_0, window_bounds = array<i64: 256, 128>}, {pipeline_mode = #tpu.pipeline_mode<synchronous>, transform_indices = @transform_1, window_bounds = array<i64: 1, 128>}, {pipeline_mode = #tpu.pipeline_mode<synchronous>, transform_indices = @transform_2, window_bounds = array<i64: 128, 1024>}, {transform_indices = @transform_3, window_bounds = array<i64: 256, 1024>}]} {
    %c0 = arith.constant 0 : index
    %c0_0 = arith.constant 0 : index
    %0 = vector.load %arg1[%c0, %c0_0] : memref<256x128xf32, #tpu.memory_space<vmem>>, vector<256x128xf32>
    %c0_1 = arith.constant 0 : index
    %c0_2 = arith.constant 0 : index
    %1 = vector.load %arg2[%c0_1, %c0_2] : memref<1x128xf32, #tpu.memory_space<vmem>>, vector<1x128xf32>
    %2 = vector.broadcast %1 : vector<1x128xf32> to vector<256x128xf32>
    %3 = arith.addf %0, %2 : vector<256x128xf32>
    %cst = arith.constant 0.000000e+00 : f32
    %4 = vector.broadcast %cst : f32 to vector<256x128xf32>
    %5 = arith.maximumf %3, %4 : vector<256x128xf32>
    %6 = arith.truncf %5 : vector<256x128xf32> to vector<256x128xbf16>
    %c0_3 = arith.constant 0 : index
    %c0_4 = arith.constant 0 : index
    %7 = vector.load %arg3[%c0_3, %c0_4] : memref<128x1024xbf16, #tpu.memory_space<vmem>>, vector<128x1024xbf16>
    %cst_5 = arith.constant dense<0.000000e+00> : vector<256x1024xf32>
    %8 = tpu.matmul %6, %7, %cst_5 {dimension_numbers = #tpu.dot_dimension_numbers<[1], [0], [0], [1], [0, 0, 1, 1], [], []>} : vector<256x128xbf16>, vector<128x1024xbf16>, vector<256x1024xf32> -> vector<256x1024xf32>
    %9 = arith.truncf %8 : vector<256x1024xf32> to vector<256x1024xbf16>
    %c0_6 = arith.constant 0 : index
    %c0_7 = arith.constant 0 : index
    %10 = vector.load %arg4[%c0_6, %c0_7] : memref<256x1024xbf16, #tpu.memory_space<vmem>>, vector<256x1024xbf16>
    tpu.vector_store %arg4[%c0_6, %c0_7], %9 {strides = array<i32>} : memref<256x1024xbf16, #tpu.memory_space<vmem>>, vector<256x1024xbf16>,
    return
  }
  func.func @transform_0(%arg0: i32) -> (i32, i32) {
    %c0_i32 = arith.constant 0 : i32
    %c0_i32_0 = arith.constant 0 : i32
    return %arg0, %c0_i32 : i32, i32
  }
  func.func @transform_1(%arg0: i32) -> (i32, i32) {
    %c0_i32 = arith.constant 0 : i32
    %c0_i32_0 = arith.constant 0 : i32
    %c0_i32_1 = arith.constant 0 : i32
    return %c0_i32, %c0_i32_0 : i32, i32
  }
  func.func @transform_2(%arg0: i32) -> (i32, i32) {
    %c0_i32 = arith.constant 0 : i32
    %c0_i32_0 = arith.constant 0 : i32
    %c0_i32_1 = arith.constant 0 : i32
    return %c0_i32, %c0_i32_0 : i32, i32
  }
  func.func @transform_3(%arg0: i32) -> (i32, i32) {
    %c0_i32 = arith.constant 0 : i32
    %c0_i32_0 = arith.constant 0 : i32
    return %arg0, %c0_i32 : i32, i32
  }
}

module attributes {stable_mosaic.version = 11 : i64} {
  func.func @_preact_gemm_kernel(%arg0: i32, %arg1: memref<256x64xf32, #tpu.memory_space<vmem>>, %arg2: memref<1x64xf32, #tpu.memory_space<vmem>>, %arg3: memref<64x512xbf16, #tpu.memory_space<vmem>>, %arg4: memref<256x512xbf16, #tpu.memory_space<vmem>>) attributes {dimension_semantics = [#tpu.dimension_semantics<parallel>], iteration_bounds = array<i64: 8>, scalar_prefetch = 0 : i64, scratch_operands = 0 : i64, tpu.core_type = #tpu.core_type<tc>, window_params = [{transform_indices = @transform_0, window_bounds = array<i64: 256, 64>}, {pipeline_mode = #tpu.pipeline_mode<synchronous>, transform_indices = @transform_1, window_bounds = array<i64: 1, 64>}, {pipeline_mode = #tpu.pipeline_mode<synchronous>, transform_indices = @transform_2, window_bounds = array<i64: 64, 512>}, {transform_indices = @transform_3, window_bounds = array<i64: 256, 512>}]} {
    %c0 = arith.constant 0 : index
    %c0_0 = arith.constant 0 : index
    %0 = vector.load %arg1[%c0, %c0_0] : memref<256x64xf32, #tpu.memory_space<vmem>>, vector<256x64xf32>
    %c0_1 = arith.constant 0 : index
    %c0_2 = arith.constant 0 : index
    %1 = vector.load %arg2[%c0_1, %c0_2] : memref<1x64xf32, #tpu.memory_space<vmem>>, vector<1x64xf32>
    %2 = vector.broadcast %1 : vector<1x64xf32> to vector<256x64xf32>
    %3 = arith.addf %0, %2 : vector<256x64xf32>
    %cst = arith.constant 0.000000e+00 : f32
    %4 = vector.broadcast %cst : f32 to vector<256x64xf32>
    %5 = arith.maximumf %3, %4 : vector<256x64xf32>
    %6 = arith.truncf %5 : vector<256x64xf32> to vector<256x64xbf16>
    %c0_3 = arith.constant 0 : index
    %c0_4 = arith.constant 0 : index
    %7 = vector.load %arg3[%c0_3, %c0_4] : memref<64x512xbf16, #tpu.memory_space<vmem>>, vector<64x512xbf16>
    %cst_5 = arith.constant dense<0.000000e+00> : vector<256x512xf32>
    %8 = tpu.matmul %6, %7, %cst_5 {dimension_numbers = #tpu.dot_dimension_numbers<[1], [0], [0], [1], [0, 0, 1, 1], [], []>} : vector<256x64xbf16>, vector<64x512xbf16>, vector<256x512xf32> -> vector<256x512xf32>
    %9 = arith.truncf %8 : vector<256x512xf32> to vector<256x512xbf16>
    %c0_6 = arith.constant 0 : index
    %c0_7 = arith.constant 0 : index
    %10 = vector.load %arg4[%c0_6, %c0_7] : memref<256x512xbf16, #tpu.memory_space<vmem>>, vector<256x512xbf16>
    tpu.vector_store %arg4[%c0_6, %c0_7], %9 {strides = array<i32>} : memref<256x512xbf16, #tpu.memory_space<vmem>>, vector<256x512xbf16>,
    return
  }
  func.func @transform_0(%arg0: i32) -> (i32, i32) {
    %c0_i32 = arith.constant 0 : i32
    %c0_i32_0 = arith.constant 0 : i32
    return %arg0, %c0_i32 : i32, i32
  }
  func.func @transform_1(%arg0: i32) -> (i32, i32) {
    %c0_i32 = arith.constant 0 : i32
    %c0_i32_0 = arith.constant 0 : i32
    %c0_i32_1 = arith.constant 0 : i32
    return %c0_i32, %c0_i32_0 : i32, i32
  }
  func.func @transform_2(%arg0: i32) -> (i32, i32) {
    %c0_i32 = arith.constant 0 : i32
    %c0_i32_0 = arith.constant 0 : i32
    %c0_i32_1 = arith.constant 0 : i32
    return %c0_i32, %c0_i32_0 : i32, i32
  }
  func.func @transform_3(%arg0: i32) -> (i32, i32) {
    %c0_i32 = arith.constant 0 : i32
    %c0_i32_0 = arith.constant 0 : i32
    return %arg0, %c0_i32 : i32, i32
  }
}

module attributes {stable_mosaic.version = 11 : i64} {
  func.func @_preact_gemm_kernel(%arg0: i32, %arg1: memref<1024x32xf32, #tpu.memory_space<vmem>>, %arg2: memref<1x32xf32, #tpu.memory_space<vmem>>, %arg3: memref<32x128xbf16, #tpu.memory_space<vmem>>, %arg4: memref<1024x128xbf16, #tpu.memory_space<vmem>>) attributes {dimension_semantics = [#tpu.dimension_semantics<parallel>], iteration_bounds = array<i64: 8>, scalar_prefetch = 0 : i64, scratch_operands = 0 : i64, tpu.core_type = #tpu.core_type<tc>, window_params = [{transform_indices = @transform_0, window_bounds = array<i64: 1024, 32>}, {pipeline_mode = #tpu.pipeline_mode<synchronous>, transform_indices = @transform_1, window_bounds = array<i64: 1, 32>}, {pipeline_mode = #tpu.pipeline_mode<synchronous>, transform_indices = @transform_2, window_bounds = array<i64: 32, 128>}, {transform_indices = @transform_3, window_bounds = array<i64: 1024, 128>}]} {
    %c0 = arith.constant 0 : index
    %c0_0 = arith.constant 0 : index
    %0 = vector.load %arg1[%c0, %c0_0] : memref<1024x32xf32, #tpu.memory_space<vmem>>, vector<1024x32xf32>
    %c0_1 = arith.constant 0 : index
    %c0_2 = arith.constant 0 : index
    %1 = vector.load %arg2[%c0_1, %c0_2] : memref<1x32xf32, #tpu.memory_space<vmem>>, vector<1x32xf32>
    %2 = vector.broadcast %1 : vector<1x32xf32> to vector<1024x32xf32>
    %3 = arith.addf %0, %2 : vector<1024x32xf32>
    %cst = arith.constant 0.000000e+00 : f32
    %4 = vector.broadcast %cst : f32 to vector<1024x32xf32>
    %5 = arith.maximumf %3, %4 : vector<1024x32xf32>
    %6 = arith.truncf %5 : vector<1024x32xf32> to vector<1024x32xbf16>
    %c0_3 = arith.constant 0 : index
    %c0_4 = arith.constant 0 : index
    %7 = vector.load %arg3[%c0_3, %c0_4] : memref<32x128xbf16, #tpu.memory_space<vmem>>, vector<32x128xbf16>
    %cst_5 = arith.constant dense<0.000000e+00> : vector<1024x128xf32>
    %8 = tpu.matmul %6, %7, %cst_5 {dimension_numbers = #tpu.dot_dimension_numbers<[1], [0], [0], [1], [0, 0, 1, 1], [], []>} : vector<1024x32xbf16>, vector<32x128xbf16>, vector<1024x128xf32> -> vector<1024x128xf32>
    %9 = arith.truncf %8 : vector<1024x128xf32> to vector<1024x128xbf16>
    %c0_6 = arith.constant 0 : index
    %c0_7 = arith.constant 0 : index
    %10 = vector.load %arg4[%c0_6, %c0_7] : memref<1024x128xbf16, #tpu.memory_space<vmem>>, vector<1024x128xbf16>
    tpu.vector_store %arg4[%c0_6, %c0_7], %9 {strides = array<i32>} : memref<1024x128xbf16, #tpu.memory_space<vmem>>, vector<1024x128xbf16>,
    return
  }
  func.func @transform_0(%arg0: i32) -> (i32, i32) {
    %c0_i32 = arith.constant 0 : i32
    %c0_i32_0 = arith.constant 0 : i32
    return %arg0, %c0_i32 : i32, i32
  }
  func.func @transform_1(%arg0: i32) -> (i32, i32) {
    %c0_i32 = arith.constant 0 : i32
    %c0_i32_0 = arith.constant 0 : i32
    %c0_i32_1 = arith.constant 0 : i32
    return %c0_i32, %c0_i32_0 : i32, i32
  }
  func.func @transform_2(%arg0: i32) -> (i32, i32) {
    %c0_i32 = arith.constant 0 : i32
    %c0_i32_0 = arith.constant 0 : i32
    %c0_i32_1 = arith.constant 0 : i32
    return %c0_i32, %c0_i32_0 : i32, i32
  }
  func.func @transform_3(%arg0: i32) -> (i32, i32) {
    %c0_i32 = arith.constant 0 : i32
    %c0_i32_0 = arith.constant 0 : i32
    return %arg0, %c0_i32 : i32, i32
  }
}

</mosaic_0001>

<llo_original>
// kernel: generator_forward.7
$region0: #{generator_forward.7}
  #allocation0 [shape = 'u32[]', space=smem, size = 0x4, offset = 0x4, fixed_abs, tag = 'smem constant byte address 0x4 - core index']
  #allocation1 [shape = 'u32[144,128]{1,0:T(1,128)}', space=vmem, size = 0x12000, scoped, tag = 'internal scratch']
  %s0 = inlined_call_operand.vmem [shape: f32[32,16], index: 0, kind: input, shape index: {}]
  %s1 = inlined_call_operand.vmem [shape: f32[1,16], index: 1, kind: input, shape index: {}]
  %s2 = inlined_call_operand.vmem [shape: bf16[16,640], index: 2, kind: input, shape index: {}]
  %s3 = inlined_call_operand.vmem [shape: bf16[32,640], index: 3, kind: output, shape index: {}]
  %s4 = sld [smem:[#allocation0]]
  $region22: #{generator_forward.7} parent=0
    _
  %s6 = ssub.s32 1, %s4
  %s7 = scalar_select 0, %s6, %s4
  // Predicated region
  $region2: #{generator_forward.7} parent=0 // pred_check
    _
  $region3: #{generator_forward.7} parent=0 // pred_check_branch
    %9 = sbr.rel (0) target = $region5
  $region4: #{generator_forward.7} parent=0 // pred_region
    _
  $region5: #{generator_forward.7} parent=0 // pred_fallthru
    _
  // Predicated region
  $region6: #{generator_forward.7} parent=0 // pred_check
    _
  $region7: #{generator_forward.7} parent=0 // pred_check_branch
    %11 = sbr.rel (0) target = $region9
  $region8: #{generator_forward.7} parent=0 // pred_region
    _
  $region9: #{generator_forward.7} parent=0 // pred_fallthru
    _
  // Predicated region
  $region10: #{generator_forward.7} parent=0 // pred_check
    _
  $region11: #{generator_forward.7} parent=0 // pred_check_branch
    %13 = sbr.rel (0) target = $region13
  $region12: #{generator_forward.7} parent=0 // pred_region
    _
  $region13: #{generator_forward.7} parent=0 // pred_fallthru
    _
  %v15 = vld [vmem:[%s0] sm:$0xff]
  %v16 = vld [vmem:[%s0 + $0x8] sm:$0xff]
  %v17 = vld [vmem:[%s0 + $0x10] sm:$0xff]
  %v18 = vld [vmem:[%s0 + $0x18] sm:$0xff]
  %v19 = vld [vmem:[%s1] sm:$0x1]
  %v21 = vlaneseq
  %v22 = vshrl.u32 %v21, 7
  %v23 = vsub.s32 0, %v22
  %v24 = vrot.slane %v19, %v23
  %v26 = vadd.f32 %v15, %v24
  %v27 = vadd.f32 %v16, %v24
  %v28 = vadd.f32 %v17, %v24
  %v29 = vadd.f32 %v18, %v24
  %v30 = vpack.c.bf16 %v27, %v26
  %v31 = vpack.c.bf16 %v29, %v28
  %v32 = vld [vmem:[%s2] sm:$0xff]
  %v33 = vld [vmem:[%s2 + $0x8] sm:$0xff]
  %v34 = vld [vmem:[%s2 + $0x10] sm:$0xf]
  %v35 = vld [vmem:[%s2 + $0x14] sm:$0xff]
  %v36 = vld [vmem:[%s2 + $0x1c] sm:$0xff]
  %v37 = vld [vmem:[%s2 + $0x24] sm:$0xf]
  %v44 = vunpack.c.l.b16 %v32
  %v45 = vunpack.c.h.b16 %v32
  %v46 = vunpack.c.l.b16 %v33
  %v47 = vunpack.c.h.b16 %v33
  %v48 = vunpack.c.l.b16 %v34
  %v49 = vunpack.c.l.b16 %v35
  %v50 = vunpack.c.h.b16 %v35
  %v51 = vunpack.c.l.b16 %v36
  %v52 = vunpack.c.h.b16 %v36
  %v53 = vunpack.c.l.b16 %v37
  %v54 = vpack.c.b16 %v49, %v44
  %v55 = vpack.c.b16 %v50, %v45
  %v56 = vpack.c.b16 %v51, %v46
  %v57 = vpack.c.b16 %v52, %v47
  %v58 = vpack.c.b16 %v53, %v48
  %vm64 = vcmask 130048
  %v66 = vsel %vm64, %v30, 0
  %v69 = vsel %vm64, %v31, 0
  %71 = vmatprep.subr.bf16.mxu0 %v55
  %72 = vmatpush1.bf16.msra.mxu0 %v54
  %73 = vmatprep.subr.bf16.mxu0 0
  %74 = vmatpush1.bf16.msra.mxu0 0
  %75 = vmatprep.subr.bf16.mxu0 0
  %76 = vmatpush1.bf16.msra.mxu0 0
  %77 = vmatprep.subr.bf16.mxu0 0
  %78 = vmatpush1.bf16.msra.mxu0 0
  %79 = vmatprep.subr.bf16.mxu0 0
  %80 = vmatpush1.bf16.msra.mxu0 0
  %81 = vmatprep.subr.bf16.mxu0 0
  %82 = vmatpush1.bf16.msra.mxu0 0
  %83 = vmatprep.subr.bf16.mxu0 0
  %84 = vmatpush1.bf16.msra.mxu0 0
  %85 = vmatprep.subr.bf16.mxu0 0
  %86 = vmatpush1.bf16.msra.mxu0 0
  %87 = vmatprep.subr.bf16.mxu0 0
  %88 = vmatpush1.bf16.msra.mxu0 0
  %89 = vmatprep.subr.bf16.mxu0 0
  %90 = vmatpush1.bf16.msra.mxu0 0
  %91 = vmatprep.subr.bf16.mxu0 0
  %92 = vmatpush1.bf16.msra.mxu0 0
  %93 = vmatprep.subr.bf16.mxu0 0
  %94 = vmatpush1.bf16.msra.mxu0 0
  %95 = vmatprep.subr.bf16.mxu0 0
  %96 = vmatpush1.bf16.msra.mxu0 0
  %97 = vmatprep.subr.bf16.mxu0 0
  %98 = vmatpush1.bf16.msra.mxu0 0
  %99 = vmatprep.subr.bf16.mxu0 0
  %100 = vmatpush1.bf16.msra.mxu0 0
  %101 = vmatprep.subr.bf16.mxu0 0
  %102 = vmatpush1.bf16.msra.mxu0 0
  %103 = vmatprep.mubr.bf16.mxu0 0
  %104 = vmatmul.mubr.bf16.gmra.mrb[0].mxu0 %v66
  %v105 = vpop.f32.mrb[0].mxu0
  %v106 = vadd.f32 0.0, %v105
  %v107 = vpop.f32.mrb[0].mxu0
  %v108 = vadd.f32 0.0, %v107
  %v109 = vpop.f32.mrb[0].mxu0
  %v110 = vadd.f32 0.0, %v109
  %v111 = vpop.f32.mrb[0].mxu0
  %v112 = vadd.f32 0.0, %v111
  %113 = vmatprep.mubr.bf16.mxu0 0
  %114 = vmatmul.mubr.bf16.gmra.mrb[0].mxu0 %v69
  %v115 = vpop.f32.mrb[0].mxu0
  %v116 = vadd.f32 0.0, %v115
  %v117 = vpop.f32.mrb[0].mxu0
  %v118 = vadd.f32 0.0, %v117
  %v119 = vpop.f32.mrb[0].mxu0
  %v120 = vadd.f32 0.0, %v119
  %v121 = vpop.f32.mrb[0].mxu0
  %v122 = vadd.f32 0.0, %v121
  %123 = vdwg.mxu0
  %124 = vmatprep.subr.bf16.mxu0 %v57
  %125 = vmatpush1.bf16.msra.mxu0 %v56
  %126 = vmatprep.subr.bf16.mxu0 0
  %127 = vmatpush1.bf16.msra.mxu0 0
  %128 = vmatprep.subr.bf16.mxu0 0
  %129 = vmatpush1.bf16.msra.mxu0 0
  %130 = vmatprep.subr.bf16.mxu0 0
  %131 = vmatpush1.bf16.msra.mxu0 0
  %132 = vmatprep.subr.bf16.mxu0 0
  %133 = vmatpush1.bf16.msra.mxu0 0
  %134 = vmatprep.subr.bf16.mxu0 0
  %135 = vmatpush1.bf16.msra.mxu0 0
  %136 = vmatprep.subr.bf16.mxu0 0
  %137 = vmatpush1.bf16.msra.mxu0 0
  %138 = vmatprep.subr.bf16.mxu0 0
  %139 = vmatpush1.bf16.msra.mxu0 0
  %140 = vmatprep.subr.bf16.mxu0 0
  %141 = vmatpush1.bf16.msra.mxu0 0
  %142 = vmatprep.subr.bf16.mxu0 0
  %143 = vmatpush1.bf16.msra.mxu0 0
  %144 = vmatprep.subr.bf16.mxu0 0
  %145 = vmatpush1.bf16.msra.mxu0 0
  %146 = vmatprep.subr.bf16.mxu0 0
  %147 = vmatpush1.bf16.msra.mxu0 0
  %148 = vmatprep.subr.bf16.mxu0 0
  %149 = vmatpush1.bf16.msra.mxu0 0
  %150 = vmatprep.subr.bf16.mxu0 0
  %151 = vmatpush1.bf16.msra.mxu0 0
  %152 = vmatprep.subr.bf16.mxu0 0
  %153 = vmatpush1.bf16.msra.mxu0 0
  %154 = vmatprep.subr.bf16.mxu0 0
  %155 = vmatpush1.bf16.msra.mxu0 0
  %156 = vmatprep.mubr.bf16.mxu0 0
  %157 = vmatmul.mubr.bf16.gmra.mrb[0].mxu0 %v66
  %v158 = vpop.f32.mrb[0].mxu0
  %v159 = vadd.f32 0.0, %v158
  %v160 = vpop.f32.mrb[0].mxu0
  %v161 = vadd.f32 0.0, %v160
  %v162 = vpop.f32.mrb[0].mxu0
  %v163 = vadd.f32 0.0, %v162
  %v164 = vpop.f32.mrb[0].mxu0
  %v165 = vadd.f32 0.0, %v164
  %166 = vmatprep.mubr.bf16.mxu0 0
  %167 = vmatmul.mubr.bf16.gmra.mrb[0].mxu0 %v69
  %v168 = vpop.f32.mrb[0].mxu0
  %v169 = vadd.f32 0.0, %v168
  %v170 = vpop.f32.mrb[0].mxu0
  %v171 = vadd.f32 0.0, %v170
  %v172 = vpop.f32.mrb[0].mxu0
  %v173 = vadd.f32 0.0, %v172
  %v174 = vpop.f32.mrb[0].mxu0
  %v175 = vadd.f32 0.0, %v174
  %176 = vdwg.mxu0
  %177 = vmatprep.subr.bf16.mxu0 0
  %178 = vmatpush1.bf16.msra.mxu0 %v58
  %179 = vmatprep.subr.bf16.mxu0 0
  %180 = vmatpush1.bf16.msra.mxu0 0
  %181 = vmatprep.subr.bf16.mxu0 0
  %182 = vmatpush1.bf16.msra.mxu0 0
  %183 = vmatprep.subr.bf16.mxu0 0
  %184 = vmatpush1.bf16.msra.mxu0 0
  %185 = vmatprep.subr.bf16.mxu0 0
  %186 = vmatpush1.bf16.msra.mxu0 0
  %187 = vmatprep.subr.bf16.mxu0 0
  %188 = vmatpush1.bf16.msra.mxu0 0
  %189 = vmatprep.subr.bf16.mxu0 0
  %190 = vmatpush1.bf16.msra.mxu0 0
  %191 = vmatprep.subr.bf16.mxu0 0
  %192 = vmatpush1.bf16.msra.mxu0 0
  %193 = vmatprep.subr.bf16.mxu0 0
  %194 = vmatpush1.bf16.msra.mxu0 0
  %195 = vmatprep.subr.bf16.mxu0 0
  %196 = vmatpush1.bf16.msra.mxu0 0
  %197 = vmatprep.subr.bf16.mxu0 0
  %198 = vmatpush1.bf16.msra.mxu0 0
  %199 = vmatprep.subr.bf16.mxu0 0
  %200 = vmatpush1.bf16.msra.mxu0 0
  %201 = vmatprep.subr.bf16.mxu0 0
  %202 = vmatpush1.bf16.msra.mxu0 0
  %203 = vmatprep.subr.bf16.mxu0 0
  %204 = vmatpush1.bf16.msra.mxu0 0
  %205 = vmatprep.subr.bf16.mxu0 0
  %206 = vmatpush1.bf16.msra.mxu0 0
  %207 = vmatprep.subr.bf16.mxu0 0
  %208 = vmatpush1.bf16.msra.mxu0 0
  %209 = vmatprep.mubr.bf16.mxu0 0
  %210 = vmatmul.mubr.bf16.gmra.mrb[0].mxu0 %v66
  %v211 = vpop.f32.mrb[0].mxu0
  %v212 = vadd.f32 0.0, %v211
  %v213 = vpop.f32.mrb[0].mxu0
  %v214 = vpop.f32.mrb[0].mxu0
  %v215 = vadd.f32 0.0, %v214
  %v216 = vpop.f32.mrb[0].mxu0
  %217 = vmatprep.mubr.bf16.mxu0 0
  %218 = vmatmul.mubr.bf16.gmra.mrb[0].mxu0 %v69
  %v219 = vpop.f32.mrb[0].mxu0
  %v220 = vadd.f32 0.0, %v219
  %v221 = vpop.f32.mrb[0].mxu0
  %v222 = vpop.f32.mrb[0].mxu0
  %v223 = vadd.f32 0.0, %v222
  %v224 = vpop.f32.mrb[0].mxu0
  %225 = vdwg.mxu0
  %v226 = vpack.c.bf16 %v110, %v106
  %v227 = vpack.c.bf16 %v112, %v108
  %v228 = vpack.c.bf16 %v163, %v159
  %v229 = vpack.c.bf16 %v165, %v161
  %v230 = vpack.c.bf16 %v215, %v212
  %v231 = vpack.c.bf16 %v120, %v116
  %v232 = vpack.c.bf16 %v122, %v118
  %v233 = vpack.c.bf16 %v173, %v169
  %v234 = vpack.c.bf16 %v175, %v171
  %v235 = vpack.c.bf16 %v223, %v220
  %v246 = vunpack.c.l.b16 %v226
  %v247 = vunpack.c.l.b16 %v227
  %v248 = vunpack.c.l.b16 %v228
  %v249 = vunpack.c.l.b16 %v229
  %v250 = vunpack.c.l.b16 %v230
  %v251 = vunpack.c.h.b16 %v226
  %v252 = vunpack.c.h.b16 %v227
  %v253 = vunpack.c.h.b16 %v228
  %v254 = vunpack.c.h.b16 %v229
  %v255 = vunpack.c.h.b16 %v230
  %v256 = vunpack.c.l.b16 %v231
  %v257 = vunpack.c.l.b16 %v232
  %v258 = vunpack.c.l.b16 %v233
  %v259 = vunpack.c.l.b16 %v234
  %v260 = vunpack.c.l.b16 %v235
  %v261 = vunpack.c.h.b16 %v231
  %v262 = vunpack.c.h.b16 %v232
  %v263 = vunpack.c.h.b16 %v233
  %v264 = vunpack.c.h.b16 %v234
  %v265 = vunpack.c.h.b16 %v235
  %v266 = vpack.c.b16 %v247, %v246
  %v267 = vpack.c.b16 %v249, %v248
  %v268 = vpack.c.b16 %v250, %v250
  %v269 = vpack.c.b16 %v252, %v251
  %v270 = vpack.c.b16 %v254, %v253
  %v271 = vpack.c.b16 %v255, %v255
  %v272 = vpack.c.b16 %v257, %v256
  %v273 = vpack.c.b16 %v259, %v258
  %v274 = vpack.c.b16 %v260, %v260
  %v275 = vpack.c.b16 %v262, %v261
  %v276 = vpack.c.b16 %v264, %v263
  %v277 = vpack.c.b16 %v265, %v265
  %290 = vst [vmem:[%s3] sm:$0xff] %v266
  %291 = vst [vmem:[%s3 + $0x8] sm:$0xff] %v267
  %292 = vst [vmem:[%s3 + $0x10] sm:$0xf] %v268
  %293 = vst [vmem:[%s3 + $0x14] sm:$0xff] %v269
  %294 = vst [vmem:[%s3 + $0x1c] sm:$0xff] %v270
  %295 = vst [vmem:[%s3 + $0x24] sm:$0xf] %v271
  %296 = vst [vmem:[%s3 + $0x28] sm:$0xff] %v272
  %297 = vst [vmem:[%s3 + $0x30] sm:$0xff] %v273
  %298 = vst [vmem:[%s3 + $0x38] sm:$0xf] %v274
  %299 = vst [vmem:[%s3 + $0x3c] sm:$0xff] %v275
  %300 = vst [vmem:[%s3 + $0x44] sm:$0xff] %v276
  %301 = vst [vmem:[%s3 + $0x4c] sm:$0xf] %v277
  // Predicated region
  $region14: #{generator_forward.7} parent=0 // pred_check
    _
  $region15: #{generator_forward.7} parent=0 // pred_check_branch
    %303 = sbr.rel (0) target = $region17
  $region16: #{generator_forward.7} parent=0 // pred_region
    _
  $region17: #{generator_forward.7} parent=0 // pred_fallthru
    _
  // Predicated region
  $region18: #{generator_forward.7} parent=0 // pred_check
    _
  $region19: #{generator_forward.7} parent=0 // pred_check_branch
    %305 = sbr.rel (0) target = $region21
  $region20: #{generator_forward.7} parent=0 // pred_region
    _
  $region21: #{generator_forward.7} parent=0 // pred_fallthru
    _

// kernel: generator_forward.8
$region0: #{generator_forward.8}
  #allocation0 [shape = 'u32[]', space=smem, size = 0x4, offset = 0x4, fixed_abs, tag = 'smem constant byte address 0x4 - core index']
  #allocation1 [shape = 'u32[144,128]{1,0:T(1,128)}', space=vmem, size = 0x12000, scoped, tag = 'internal scratch']
  %s0 = inlined_call_operand.vmem [shape: f32[80,64], index: 0, kind: input, shape index: {}]
  %s1 = inlined_call_operand.vmem [shape: f32[1,64], index: 1, kind: input, shape index: {}]
  %s2 = inlined_call_operand.vmem [shape: bf16[64,1152], index: 2, kind: input, shape index: {}]
  %s3 = inlined_call_operand.vmem [shape: bf16[80,1152], index: 3, kind: output, shape index: {}]
  %s4 = sld [smem:[#allocation0]]
  $region22: #{generator_forward.8} parent=0
    _
  %s6 = ssub.s32 1, %s4
  %s7 = scalar_select 0, %s6, %s4
  // Predicated region
  $region2: #{generator_forward.8} parent=0 // pred_check
    _
  $region3: #{generator_forward.8} parent=0 // pred_check_branch
    %9 = sbr.rel (0) target = $region5
  $region4: #{generator_forward.8} parent=0 // pred_region
    _
  $region5: #{generator_forward.8} parent=0 // pred_fallthru
    _
  // Predicated region
  $region6: #{generator_forward.8} parent=0 // pred_check
    _
  $region7: #{generator_forward.8} parent=0 // pred_check_branch
    %11 = sbr.rel (0) target = $region9
  $region8: #{generator_forward.8} parent=0 // pred_region
    _
  $region9: #{generator_forward.8} parent=0 // pred_fallthru
    _
  // Predicated region
  $region10: #{generator_forward.8} parent=0 // pred_check
    _
  $region11: #{generator_forward.8} parent=0 // pred_check_branch
    %13 = sbr.rel (0) target = $region13
  $region12: #{generator_forward.8} parent=0 // pred_region
    _
  $region13: #{generator_forward.8} parent=0 // pred_fallthru
    _
  %v15 = vld [vmem:[%s0] sm:$0xff]
  %v16 = vld [vmem:[%s0 + $0x8] sm:$0xff]
  %v17 = vld [vmem:[%s0 + $0x10] sm:$0xff]
  %v18 = vld [vmem:[%s0 + $0x18] sm:$0xff]
  %v19 = vld [vmem:[%s0 + $0x20] sm:$0xff]
  %v20 = vld [vmem:[%s0 + $0x28] sm:$0xff]
  %v21 = vld [vmem:[%s0 + $0x30] sm:$0xff]
  %v22 = vld [vmem:[%s0 + $0x38] sm:$0xff]
  %v23 = vld [vmem:[%s0 + $0x40] sm:$0xff]
  %v24 = vld [vmem:[%s0 + $0x48] sm:$0xff]
  %v25 = vld [vmem:[%s1] sm:$0x1]
  %v27 = vlaneseq
  %v28 = vshrl.u32 %v27, 7
  %v29 = vsub.s32 0, %v28
  %v30 = vrot.slane %v25, %v29
  %v32 = vadd.f32 %v15, %v30
  %v33 = vadd.f32 %v16, %v30
  %v34 = vadd.f32 %v17, %v30
  %v35 = vadd.f32 %v18, %v30
  %v36 = vadd.f32 %v19, %v30
  %v37 = vadd.f32 %v20, %v30
  %v38 = vadd.f32 %v21, %v30
  %v39 = vadd.f32 %v22, %v30
  %v40 = vadd.f32 %v23, %v30
  %v41 = vadd.f32 %v24, %v30
  %v42 = vmax.f32 %v32, 0.0
  %v43 = vmax.f32 %v33, 0.0
  %v44 = vmax.f32 %v34, 0.0
  %v45 = vmax.f32 %v35, 0.0
  %v46 = vmax.f32 %v36, 0.0
  %v47 = vmax.f32 %v37, 0.0
  %v48 = vmax.f32 %v38, 0.0
  %v49 = vmax.f32 %v39, 0.0
  %v50 = vmax.f32 %v40, 0.0
  %v51 = vmax.f32 %v41, 0.0
  %v52 = vpack.c.bf16 %v43, %v42
  %v53 = vpack.c.bf16 %v45, %v44
  %v54 = vpack.c.bf16 %v47, %v46
  %v55 = vpack.c.bf16 %v49, %v48
  %v56 = vpack.c.bf16 %v51, %v50
  %v57 = vld [vmem:[%s2] sm:$0xff]
  %v58 = vld [vmem:[%s2 + $0x8] sm:$0xff]
  %v59 = vld [vmem:[%s2 + $0x10] sm:$0xff]
  %v60 = vld [vmem:[%s2 + $0x18] sm:$0xff]
  %v61 = vld [vmem:[%s2 + $0x20] sm:$0xf]
  %v62 = vld [vmem:[%s2 + $0x24] sm:$0xff]
  %v63 = vld [vmem:[%s2 + $0x2c] sm:$0xff]
  %v64 = vld [vmem:[%s2 + $0x34] sm:$0xff]
  %v65 = vld [vmem:[%s2 + $0x3c] sm:$0xff]
  %v66 = vld [vmem:[%s2 + $0x44] sm:$0xf]
  %v67 = vld [vmem:[%s2 + $0x48] sm:$0xff]
  %v68 = vld [vmem:[%s2 + $0x50] sm:$0xff]
  %v69 = vld [vmem:[%s2 + $0x58] sm:$0xff]
  %v70 = vld [vmem:[%s2 + $0x60] sm:$0xff]
  %v71 = vld [vmem:[%s2 + $0x68] sm:$0xf]
  %v72 = vld [vmem:[%s2 + $0x6c] sm:$0xff]
  %v73 = vld [vmem:[%s2 + $0x74] sm:$0xff]
  %v74 = vld [vmem:[%s2 + $0x7c] sm:$0xff]
  %v75 = vld [vmem:[%s2 + $0x84] sm:$0xff]
  %v76 = vld [vmem:[%s2 + $0x8c] sm:$0xf]
  %v77 = vld [vmem:[%s2 + $0x90] sm:$0xff]
  %v78 = vld [vmem:[%s2 + $0x98] sm:$0xff]
  %v79 = vld [vmem:[%s2 + $0xa0] sm:$0xff]
  %v80 = vld [vmem:[%s2 + $0xa8] sm:$0xff]
  %v81 = vld [vmem:[%s2 + $0xb0] sm:$0xf]
  %v82 = vld [vmem:[%s2 + $0xb4] sm:$0xff]
  %v83 = vld [vmem:[%s2 + $0xbc] sm:$0xff]
  %v84 = vld [vmem:[%s2 + $0xc4] sm:$0xff]
  %v85 = vld [vmem:[%s2 + $0xcc] sm:$0xff]
  %v86 = vld [vmem:[%s2 + $0xd4] sm:$0xf]
  %v87 = vld [vmem:[%s2 + $0xd8] sm:$0xff]
  %v88 = vld [vmem:[%s2 + $0xe0] sm:$0xff]
  %v89 = vld [vmem:[%s2 + $0xe8] sm:$0xff]
  %v90 = vld [vmem:[%s2 + $0xf0] sm:$0xff]
  %v91 = vld [vmem:[%s2 + $0xf8] sm:$0xf]
  %v92 = vld [vmem:[%s2 + $0xfc] sm:$0xff]
  %v93 = vld [vmem:[%s2 + $0x104] sm:$0xff]
  %v94 = vld [vmem:[%s2 + $0x10c] sm:$0xff]
  %v95 = vld [vmem:[%s2 + $0x114] sm:$0xff]
  %v96 = vld [vmem:[%s2 + $0x11c] sm:$0xf]
  %v137 = vunpack.c.l.b16 %v57
  %v138 = vunpack.c.h.b16 %v57
  %v139 = vunpack.c.l.b16 %v58
  %v140 = vunpack.c.h.b16 %v58
  %v141 = vunpack.c.l.b16 %v59
  %v142 = vunpack.c.h.b16 %v59
  %v143 = vunpack.c.l.b16 %v60
  %v144 = vunpack.c.h.b16 %v60
  %v145 = vunpack.c.l.b16 %v61
  %v146 = vunpack.c.l.b16 %v62
  %v147 = vunpack.c.h.b16 %v62
  %v148 = vunpack.c.l.b16 %v63
  %v149 = vunpack.c.h.b16 %v63
  %v150 = vunpack.c.l.b16 %v64
  %v151 = vunpack.c.h.b16 %v64
  %v152 = vunpack.c.l.b16 %v65
  %v153 = vunpack.c.h.b16 %v65
  %v154 = vunpack.c.l.b16 %v66
  %v155 = vunpack.c.l.b16 %v67
  %v156 = vunpack.c.h.b16 %v67
  %v157 = vunpack.c.l.b16 %v68
  %v158 = vunpack.c.h.b16 %v68
  %v159 = vunpack.c.l.b16 %v69
  %v160 = vunpack.c.h.b16 %v69
  %v161 = vunpack.c.l.b16 %v70
  %v162 = vunpack.c.h.b16 %v70
  %v163 = vunpack.c.l.b16 %v71
  %v164 = vunpack.c.l.b16 %v72
  %v165 = vunpack.c.h.b16 %v72
  %v166 = vunpack.c.l.b16 %v73
  %v167 = vunpack.c.h.b16 %v73
  %v168 = vunpack.c.l.b16 %v74
  %v169 = vunpack.c.h.b16 %v74
  %v170 = vunpack.c.l.b16 %v75
  %v171 = vunpack.c.h.b16 %v75
  %v172 = vunpack.c.l.b16 %v76
  %v173 = vunpack.c.l.b16 %v77
  %v174 = vunpack.c.h.b16 %v77
  %v175 = vunpack.c.l.b16 %v78
  %v176 = vunpack.c.h.b16 %v78
  %v177 = vunpack.c.l.b16 %v79
  %v178 = vunpack.c.h.b16 %v79
  %v179 = vunpack.c.l.b16 %v80
  %v180 = vunpack.c.h.b16 %v80
  %v181 = vunpack.c.l.b16 %v81
  %v182 = vunpack.c.l.b16 %v82
  %v183 = vunpack.c.h.b16 %v82
  %v184 = vunpack.c.l.b16 %v83
  %v185 = vunpack.c.h.b16 %v83
  %v186 = vunpack.c.l.b16 %v84
  %v187 = vunpack.c.h.b16 %v84
  %v188 = vunpack.c.l.b16 %v85
  %v189 = vunpack.c.h.b16 %v85
  %v190 = vunpack.c.l.b16 %v86
  %v191 = vunpack.c.l.b16 %v87
  %v192 = vunpack.c.h.b16 %v87
  %v193 = vunpack.c.l.b16 %v88
  %v194 = vunpack.c.h.b16 %v88
  %v195 = vunpack.c.l.b16 %v89
  %v196 = vunpack.c.h.b16 %v89
  %v197 = vunpack.c.l.b16 %v90
  %v198 = vunpack.c.h.b16 %v90
  %v199 = vunpack.c.l.b16 %v91
  %v200 = vunpack.c.l.b16 %v92
  %v201 = vunpack.c.h.b16 %v92
  %v202 = vunpack.c.l.b16 %v93
  %v203 = vunpack.c.h.b16 %v93
  %v204 = vunpack.c.l.b16 %v94
  %v205 = vunpack.c.h.b16 %v94
  %v206 = vunpack.c.l.b16 %v95
  %v207 = vunpack.c.h.b16 %v95
  %v208 = vunpack.c.l.b16 %v96
  %v209 = vpack.c.b16 %v146, %v137
  %v210 = vpack.c.b16 %v147, %v138
  %v211 = vpack.c.b16 %v148, %v139
  %v212 = vpack.c.b16 %v149, %v140
  %v213 = vpack.c.b16 %v150, %v141
  %v214 = vpack.c.b16 %v151, %v142
  %v215 = vpack.c.b16 %v152, %v143
  %v216 = vpack.c.b16 %v153, %v144
  %v217 = vpack.c.b16 %v154, %v145
  %v218 = vpack.c.b16 %v164, %v155
  %v219 = vpack.c.b16 %v165, %v156
  %v220 = vpack.c.b16 %v166, %v157
  %v221 = vpack.c.b16 %v167, %v158
  %v222 = vpack.c.b16 %v168, %v159
  %v223 = vpack.c.b16 %v169, %v160
  %v224 = vpack.c.b16 %v170, %v161
  %v225 = vpack.c.b16 %v171, %v162
  %v226 = vpack.c.b16 %v172, %v163
  %v227 = vpack.c.b16 %v182, %v173
  %v228 = vpack.c.b16 %v183, %v174
  %v229 = vpack.c.b16 %v184, %v175
  %v230 = vpack.c.b16 %v185, %v176
  %v231 = vpack.c.b16 %v186, %v177
  %v232 = vpack.c.b16 %v187, %v178
  %v233 = vpack.c.b16 %v188, %v179
  %v234 = vpack.c.b16 %v189, %v180
  %v235 = vpack.c.b16 %v190, %v181
  %v236 = vpack.c.b16 %v200, %v191
  %v237 = vpack.c.b16 %v201, %v192
  %v238 = vpack.c.b16 %v202, %v193
  %v239 = vpack.c.b16 %v203, %v194
  %v240 = vpack.c.b16 %v204, %v195
  %v241 = vpack.c.b16 %v205, %v196
  %v242 = vpack.c.b16 %v206, %v197
  %v243 = vpack.c.b16 %v207, %v198
  %v244 = vpack.c.b16 %v208, %v199
  %vm281 = vcmask 523264
  %v283 = vsel %vm281, %v52, 0
  %v286 = vsel %vm281, %v53, 0
  %v289 = vsel %vm281, %v54, 0
  %v292 = vsel %vm281, %v55, 0
  %v295 = vsel %vm281, %v56, 0
  %297 = vmatprep.subr.bf16.mxu0 %v210
  %298 = vmatpush1.bf16.msra.mxu0 %v209
  %299 = vmatprep.subr.bf16.mxu0 %v219
  %300 = vmatpush1.bf16.msra.mxu0 %v218
  %301 = vmatprep.subr.bf16.mxu0 %v228
  %302 = vmatpush1.bf16.msra.mxu0 %v227
  %303 = vmatprep.subr.bf16.mxu0 %v237
  %304 = vmatpush1.bf16.msra.mxu0 %v236
  %305 = vmatprep.subr.bf16.mxu0 0
  %306 = vmatpush1.bf16.msra.mxu0 0
  %307 = vmatprep.subr.bf16.mxu0 0
  %308 = vmatpush1.bf16.msra.mxu0 0
  %309 = vmatprep.subr.bf16.mxu0 0
  %310 = vmatpush1.bf16.msra.mxu0 0
  %311 = vmatprep.subr.bf16.mxu0 0
  %312 = vmatpush1.bf16.msra.mxu0 0
  %313 = vmatprep.subr.bf16.mxu0 0
  %314 = vmatpush1.bf16.msra.mxu0 0
  %315 = vmatprep.subr.bf16.mxu0 0
  %316 = vmatpush1.bf16.msra.mxu0 0
  %317 = vmatprep.subr.bf16.mxu0 0
  %318 = vmatpush1.bf16.msra.mxu0 0
  %319 = vmatprep.subr.bf16.mxu0 0
  %320 = vmatpush1.bf16.msra.mxu0 0
  %321 = vmatprep.subr.bf16.mxu0 0
  %322 = vmatpush1.bf16.msra.mxu0 0
  %323 = vmatprep.subr.bf16.mxu0 0
  %324 = vmatpush1.bf16.msra.mxu0 0
  %325 = vmatprep.subr.bf16.mxu0 0
  %326 = vmatpush1.bf16.msra.mxu0 0
  %327 = vmatprep.subr.bf16.mxu0 0
  %328 = vmatpush1.bf16.msra.mxu0 0
  %329 = vmatprep.mubr.bf16.mxu0 0
  %330 = vmatmul.mubr.bf16.gmra.mrb[0].mxu0 %v283
  %v331 = vpop.f32.mrb[0].mxu0
  %v332 = vadd.f32 0.0, %v331
  %v333 = vpop.f32.mrb[0].mxu0
  %v334 = vadd.f32 0.0, %v333
  %v335 = vpop.f32.mrb[0].mxu0
  %v336 = vadd.f32 0.0, %v335
  %v337 = vpop.f32.mrb[0].mxu0
  %v338 = vadd.f32 0.0, %v337
  %339 = vmatprep.mubr.bf16.mxu0 0
  %340 = vmatmul.mubr.bf16.gmra.mrb[0].mxu0 %v286
  %v341 = vpop.f32.mrb[0].mxu0
  %v342 = vadd.f32 0.0, %v341
  %v343 = vpop.f32.mrb[0].mxu0
  %v344 = vadd.f32 0.0, %v343
  %v345 = vpop.f32.mrb[0].mxu0
  %v346 = vadd.f32 0.0, %v345
  %v347 = vpop.f32.mrb[0].mxu0
  %v348 = vadd.f32 0.0, %v347
  %349 = vmatprep.mubr.bf16.mxu0 0
  %350 = vmatmul.mubr.bf16.gmra.mrb[0].mxu0 %v289
  %v351 = vpop.f32.mrb[0].mxu0
  %v352 = vadd.f32 0.0, %v351
  %v353 = vpop.f32.mrb[0].mxu0
  %v354 = vadd.f32 0.0, %v353
  %v355 = vpop.f32.mrb[0].mxu0
  %v356 = vadd.f32 0.0, %v355
  %v357 = vpop.f32.mrb[0].mxu0
  %v358 = vadd.f32 0.0, %v357
  %359 = vmatprep.mubr.bf16.mxu0 0
  %360 = vmatmul.mubr.bf16.gmra.mrb[0].mxu0 %v292
  %v361 = vpop.f32.mrb[0].mxu0
  %v362 = vadd.f32 0.0, %v361
  %v363 = vpop.f32.mrb[0].mxu0
  %v364 = vadd.f32 0.0, %v363
  %v365 = vpop.f32.mrb[0].mxu0
  %v366 = vadd.f32 0.0, %v365
  %v367 = vpop.f32.mrb[0].mxu0
  %v368 = vadd.f32 0.0, %v367
  %369 = vmatprep.mubr.bf16.mxu0 0
  %370 = vmatmul.mubr.bf16.gmra.mrb[0].mxu0 %v295
  %v371 = vpop.f32.mrb[0].mxu0
  %v372 = vadd.f32 0.0, %v371
  %v373 = vpop.f32.mrb[0].mxu0
  %v374 = vadd.f32 0.0, %v373
  %v375 = vpop.f32.mrb[0].mxu0
  %v376 = vadd.f32 0.0, %v375
  %v377 = vpop.f32.mrb[0].mxu0
  %v378 = vadd.f32 0.0, %v377
  %379 = vdwg.mxu0
  %380 = vmatprep.subr.bf16.mxu0 %v212
  %381 = vmatpush1.bf16.msra.mxu0 %v211
  %382 = vmatprep.subr.bf16.mxu0 %v221
  %383 = vmatpush1.bf16.msra.mxu0 %v220
  %384 = vmatprep.subr.bf16.mxu0 %v230
  %385 = vmatpush1.bf16.msra.mxu0 %v229
  %386 = vmatprep.subr.bf16.mxu0 %v239
  %387 = vmatpush1.bf16.msra.mxu0 %v238
  %388 = vmatprep.subr.bf16.mxu0 0
  %389 = vmatpush1.bf16.msra.mxu0 0
  %390 = vmatprep.subr.bf16.mxu0 0
  %391 = vmatpush1.bf16.msra.mxu0 0
  %392 = vmatprep.subr.bf16.mxu0 0
  %393 = vmatpush1.bf16.msra.mxu0 0
  %394 = vmatprep.subr.bf16.mxu0 0
  %395 = vmatpush1.bf16.msra.mxu0 0
  %396 = vmatprep.subr.bf16.mxu0 0
  %397 = vmatpush1.bf16.msra.mxu0 0
  %398 = vmatprep.subr.bf16.mxu0 0
  %399 = vmatpush1.bf16.msra.mxu0 0
  %400 = vmatprep.subr.bf16.mxu0 0
  %401 = vmatpush1.bf16.msra.mxu0 0
  %402 = vmatprep.subr.bf16.mxu0 0
  %403 = vmatpush1.bf16.msra.mxu0 0
  %404 = vmatprep.subr.bf16.mxu0 0
  %405 = vmatpush1.bf16.msra.mxu0 0
  %406 = vmatprep.subr.bf16.mxu0 0
  %407 = vmatpush1.bf16.msra.mxu0 0
  %408 = vmatprep.subr.bf16.mxu0 0
  %409 = vmatpush1.bf16.msra.mxu0 0
  %410 = vmatprep.subr.bf16.mxu0 0
  %411 = vmatpush1.bf16.msra.mxu0 0
  %412 = vmatprep.mubr.bf16.mxu0 0
  %413 = vmatmul.mubr.bf16.gmra.mrb[0].mxu0 %v283
  %v414 = vpop.f32.mrb[0].mxu0
  %v415 = vadd.f32 0.0, %v414
  %v416 = vpop.f32.mrb[0].mxu0
  %v417 = vadd.f32 0.0, %v416
  %v418 = vpop.f32.mrb[0].mxu0
  %v419 = vadd.f32 0.0, %v418
  %v420 = vpop.f32.mrb[0].mxu0
  %v421 = vadd.f32 0.0, %v420
  %422 = vmatprep.mubr.bf16.mxu0 0
  %423 = vmatmul.mubr.bf16.gmra.mrb[0].mxu0 %v286
  %v424 = vpop.f32.mrb[0].mxu0
  %v425 = vadd.f32 0.0, %v424
  %v426 = vpop.f32.mrb[0].mxu0
  %v427 = vadd.f32 0.0, %v426
  %v428 = vpop.f32.mrb[0].mxu0
  %v429 = vadd.f32 0.0, %v428
  %v430 = vpop.f32.mrb[0].mxu0
  %v431 = vadd.f32 0.0, %v430
  %432 = vmatprep.mubr.bf16.mxu0 0
  %433 = vmatmul.mubr.bf16.gmra.mrb[0].mxu0 %v289
  %v434 = vpop.f32.mrb[0].mxu0
  %v435 = vadd.f32 0.0, %v434
  %v436 = vpop.f32.mrb[0].mxu0
  %v437 = vadd.f32 0.0, %v436
  %v438 = vpop.f32.mrb[0].mxu0
  %v439 = vadd.f32 0.0, %v438
  %v440 = vpop.f32.mrb[0].mxu0
  %v441 = vadd.f32 0.0, %v440
  %442 = vmatprep.mubr.bf16.mxu0 0
  %443 = vmatmul.mubr.bf16.gmra.mrb[0].mxu0 %v292
  %v444 = vpop.f32.mrb[0].mxu0
  %v445 = vadd.f32 0.0, %v444
  %v446 = vpop.f32.mrb[0].mxu0
  %v447 = vadd.f32 0.0, %v446
  %v448 = vpop.f32.mrb[0].mxu0
  %v449 = vadd.f32 0.0, %v448
  %v450 = vpop.f32.mrb[0].mxu0
  %v451 = vadd.f32 0.0, %v450
  %452 = vmatprep.mubr.bf16.mxu0 0
  %453 = vmatmul.mubr.bf16.gmra.mrb[0].mxu0 %v295
  %v454 = vpop.f32.mrb[0].mxu0
  %v455 = vadd.f32 0.0, %v454
  %v456 = vpop.f32.mrb[0].mxu0
  %v457 = vadd.f32 0.0, %v456
  %v458 = vpop.f32.mrb[0].mxu0
  %v459 = vadd.f32 0.0, %v458
  %v460 = vpop.f32.mrb[0].mxu0
  %v461 = vadd.f32 0.0, %v460
  %462 = vdwg.mxu0
  %463 = vmatprep.subr.bf16.mxu0 %v214
  %464 = vmatpush1.bf16.msra.mxu0 %v213
  %465 = vmatprep.subr.bf16.mxu0 %v223
  %466 = vmatpush1.bf16.msra.mxu0 %v222
  %467 = vmatprep.subr.bf16.mxu0 %v232
  %468 = vmatpush1.bf16.msra.mxu0 %v231
  %469 = vmatprep.subr.bf16.mxu0 %v241
  %470 = vmatpush1.bf16.msra.mxu0 %v240
  %471 = vmatprep.subr.bf16.mxu0 0
  %472 = vmatpush1.bf16.msra.mxu0 0
  %473 = vmatprep.subr.bf16.mxu0 0
  %474 = vmatpush1.bf16.msra.mxu0 0
  %475 = vmatprep.subr.bf16.mxu0 0
  %476 = vmatpush1.bf16.msra.mxu0 0
  %477 = vmatprep.subr.bf16.mxu0 0
  %478 = vmatpush1.bf16.msra.mxu0 0
  %479 = vmatprep.subr.bf16.mxu0 0
  %480 = vmatpush1.bf16.msra.mxu0 0
  %481 = vmatprep.subr.bf16.mxu0 0
  %482 = vmatpush1.bf16.msra.mxu0 0
  %483 = vmatprep.subr.bf16.mxu0 0
  %484 = vmatpush1.bf16.msra.mxu0 0
  %485 = vmatprep.subr.bf16.mxu0 0
  %486 = vmatpush1.bf16.msra.mxu0 0
  %487 = vmatprep.subr.bf16.mxu0 0
  %488 = vmatpush1.bf16.msra.mxu0 0
  %489 = vmatprep.subr.bf16.mxu0 0
  %490 = vmatpush1.bf16.msra.mxu0 0
  %491 = vmatprep.subr.bf16.mxu0 0
  %492 = vmatpush1.bf16.msra.mxu0 0
  %493 = vmatprep.subr.bf16.mxu0 0
  %494 = vmatpush1.bf16.msra.mxu0 0
  %495 = vmatprep.mubr.bf16.mxu0 0
  %496 = vmatmul.mubr.bf16.gmra.mrb[0].mxu0 %v283
  %v497 = vpop.f32.mrb[0].mxu0
  %v498 = vadd.f32 0.0, %v497
  %v499 = vpop.f32.mrb[0].mxu0
  %v500 = vadd.f32 0.0, %v499
  %v501 = vpop.f32.mrb[0].mxu0
  %v502 = vadd.f32 0.0, %v501
  %v503 = vpop.f32.mrb[0].mxu0
  %v504 = vadd.f32 0.0, %v503
  %505 = vmatprep.mubr.bf16.mxu0 0
  %506 = vmatmul.mubr.bf16.gmra.mrb[0].mxu0 %v286
  %v507 = vpop.f32.mrb[0].mxu0
  %v508 = vadd.f32 0.0, %v507
  %v509 = vpop.f32.mrb[0].mxu0
  %v510 = vadd.f32 0.0, %v509
  %v511 = vpop.f32.mrb[0].mxu0
  %v512 = vadd.f32 0.0, %v511
  %v513 = vpop.f32.mrb[0].mxu0
  %v514 = vadd.f32 0.0, %v513
  %515 = vmatprep.mubr.bf16.mxu0 0
  %516 = vmatmul.mubr.bf16.gmra.mrb[0].mxu0 %v289
  %v517 = vpop.f32.mrb[0].mxu0
  %v518 = vadd.f32 0.0, %v517
  %v519 = vpop.f32.mrb[0].mxu0
  %v520 = vadd.f32 0.0, %v519
  %v521 = vpop.f32.mrb[0].mxu0
  %v522 = vadd.f32 0.0, %v521
  %v523 = vpop.f32.mrb[0].mxu0
  %v524 = vadd.f32 0.0, %v523
  %525 = vmatprep.mubr.bf16.mxu0 0
  %526 = vmatmul.mubr.bf16.gmra.mrb[0].mxu0 %v292
  %v527 = vpop.f32.mrb[0].mxu0
  %v528 = vadd.f32 0.0, %v527
  %v529 = vpop.f32.mrb[0].mxu0
  %v530 = vadd.f32 0.0, %v529
  %v531 = vpop.f32.mrb[0].mxu0
  %v532 = vadd.f32 0.0, %v531
  %v533 = vpop.f32.mrb[0].mxu0
  %v534 = vadd.f32 0.0, %v533
  %535 = vmatprep.mubr.bf16.mxu0 0
  %536 = vmatmul.mubr.bf16.gmra.mrb[0].mxu0 %v295
  %v537 = vpop.f32.mrb[0].mxu0
  %v538 = vadd.f32 0.0, %v537
  %v539 = vpop.f32.mrb[0].mxu0
  %v540 = vadd.f32 0.0, %v539
  %v541 = vpop.f32.mrb[0].mxu0
  %v542 = vadd.f32 0.0, %v541
  %v543 = vpop.f32.mrb[0].mxu0
  %v544 = vadd.f32 0.0, %v543
  %545 = vdwg.mxu0
  %546 = vmatprep.subr.bf16.mxu0 %v216
  %547 = vmatpush1.bf16.msra.mxu0 %v215
  %548 = vmatprep.subr.bf16.mxu0 %v225
  %549 = vmatpush1.bf16.msra.mxu0 %v224
  %550 = vmatprep.subr.bf16.mxu0 %v234
  %551 = vmatpush1.bf16.msra.mxu0 %v233
  %552 = vmatprep.subr.bf16.mxu0 %v243
  %553 = vmatpush1.bf16.msra.mxu0 %v242
  %554 = vmatprep.subr.bf16.mxu0 0
  %555 = vmatpush1.bf16.msra.mxu0 0
  %556 = vmatprep.subr.bf16.mxu0 0
  %557 = vmatpush1.bf16.msra.mxu0 0
  %558 = vmatprep.subr.bf16.mxu0 0
  %559 = vmatpush1.bf16.msra.mxu0 0
  %560 = vmatprep.subr.bf16.mxu0 0
  %561 = vmatpush1.bf16.msra.mxu0 0
  %562 = vmatprep.subr.bf16.mxu0 0
  %563 = vmatpush1.bf16.msra.mxu0 0
  %564 = vmatprep.subr.bf16.mxu0 0
  %565 = vmatpush1.bf16.msra.mxu0 0
  %566 = vmatprep.subr.bf16.mxu0 0
  %567 = vmatpush1.bf16.msra.mxu0 0
  %568 = vmatprep.subr.bf16.mxu0 0
  %569 = vmatpush1.bf16.msra.mxu0 0
  %570 = vmatprep.subr.bf16.mxu0 0
  %571 = vmatpush1.bf16.msra.mxu0 0
  %572 = vmatprep.subr.bf16.mxu0 0
  %573 = vmatpush1.bf16.msra.mxu0 0
  %574 = vmatprep.subr.bf16.mxu0 0
  %575 = vmatpush1.bf16.msra.mxu0 0
  %576 = vmatprep.subr.bf16.mxu0 0
  %577 = vmatpush1.bf16.msra.mxu0 0
  %578 = vmatprep.mubr.bf16.mxu0 0
  %579 = vmatmul.mubr.bf16.gmra.mrb[0].mxu0 %v283
  %v580 = vpop.f32.mrb[0].mxu0
  %v581 = vadd.f32 0.0, %v580
  %v582 = vpop.f32.mrb[0].mxu0
  %v583 = vadd.f32 0.0, %v582
  %v584 = vpop.f32.mrb[0].mxu0
  %v585 = vadd.f32 0.0, %v584
  %v586 = vpop.f32.mrb[0].mxu0
  %v587 = vadd.f32 0.0, %v586
  %588 = vmatprep.mubr.bf16.mxu0 0
  %589 = vmatmul.mubr.bf16.gmra.mrb[0].mxu0 %v286
  %v590 = vpop.f32.mrb[0].mxu0
  %v591 = vadd.f32 0.0, %v590
  %v592 = vpop.f32.mrb[0].mxu0
  %v593 = vadd.f32 0.0, %v592
  %v594 = vpop.f32.mrb[0].mxu0
  %v595 = vadd.f32 0.0, %v594
  %v596 = vpop.f32.mrb[0].mxu0
  %v597 = vadd.f32 0.0, %v596
  %598 = vmatprep.mubr.bf16.mxu0 0
  %599 = vmatmul.mubr.bf16.gmra.mrb[0].mxu0 %v289
  %v600 = vpop.f32.mrb[0].mxu0
  %v601 = vadd.f32 0.0, %v600
  %v602 = vpop.f32.mrb[0].mxu0
  %v603 = vadd.f32 0.0, %v602
  %v604 = vpop.f32.mrb[0].mxu0
  %v605 = vadd.f32 0.0, %v604
  %v606 = vpop.f32.mrb[0].mxu0
  %v607 = vadd.f32 0.0, %v606
  %608 = vmatprep.mubr.bf16.mxu0 0
  %609 = vmatmul.mubr.bf16.gmra.mrb[0].mxu0 %v292
  %v610 = vpop.f32.mrb[0].mxu0
  %v611 = vadd.f32 0.0, %v610
  %v612 = vpop.f32.mrb[0].mxu0
  %v613 = vadd.f32 0.0, %v612
  %v614 = vpop.f32.mrb[0].mxu0
  %v615 = vadd.f32 0.0, %v614
  %v616 = vpop.f32.mrb[0].mxu0
  %v617 = vadd.f32 0.0, %v616
  %618 = vmatprep.mubr.bf16.mxu0 0
  %619 = vmatmul.mubr.bf16.gmra.mrb[0].mxu0 %v295
  %v620 = vpop.f32.mrb[0].mxu0
  %v621 = vadd.f32 0.0, %v620
  %v622 = vpop.f32.mrb[0].mxu0
  %v623 = vadd.f32 0.0, %v622
  %v624 = vpop.f32.mrb[0].mxu0
  %v625 = vadd.f32 0.0, %v624
  %v626 = vpop.f32.mrb[0].mxu0
  %v627 = vadd.f32 0.0, %v626
  %628 = vdwg.mxu0
  %629 = vmatprep.subr.bf16.mxu0 0
  %630 = vmatpush1.bf16.msra.mxu0 %v217
  %631 = vmatprep.subr.bf16.mxu0 0
  %632 = vmatpush1.bf16.msra.mxu0 %v226
  %633 = vmatprep.subr.bf16.mxu0 0
  %634 = vmatpush1.bf16.msra.mxu0 %v235
  %635 = vmatprep.subr.bf16.mxu0 0
  %636 = vmatpush1.bf16.msra.mxu0 %v244
  %637 = vmatprep.subr.bf16.mxu0 0
  %638 = vmatpush1.bf16.msra.mxu0 0
  %639 = vmatprep.subr.bf16.mxu0 0
  %640 = vmatpush1.bf16.msra.mxu0 0
  %641 = vmatprep.subr.bf16.mxu0 0
  %642 = vmatpush1.bf16.msra.mxu0 0
  %643 = vmatprep.subr.bf16.mxu0 0
  %644 = vmatpush1.bf16.msra.mxu0 0
  %645 = vmatprep.subr.bf16.mxu0 0
  %646 = vmatpush1.bf16.msra.mxu0 0
  %647 = vmatprep.subr.bf16.mxu0 0
  %648 = vmatpush1.bf16.msra.mxu0 0
  %649 = vmatprep.subr.bf16.mxu0 0
  %650 = vmatpush1.bf16.msra.mxu0 0
  %651 = vmatprep.subr.bf16.mxu0 0
  %652 = vmatpush1.bf16.msra.mxu0 0
  %653 = vmatprep.subr.bf16.mxu0 0
  %654 = vmatpush1.bf16.msra.mxu0 0
  %655 = vmatprep.subr.bf16.mxu0 0
  %656 = vmatpush1.bf16.msra.mxu0 0
  %657 = vmatprep.subr.bf16.mxu0 0
  %658 = vmatpush1.bf16.msra.mxu0 0
  %659 = vmatprep.subr.bf16.mxu0 0
  %660 = vmatpush1.bf16.msra.mxu0 0
  %661 = vmatprep.mubr.bf16.mxu0 0
  %662 = vmatmul.mubr.bf16.gmra.mrb[0].mxu0 %v283
  %v663 = vpop.f32.mrb[0].mxu0
  %v664 = vadd.f32 0.0, %v663
  %v665 = vpop.f32.mrb[0].mxu0
  %v666 = vpop.f32.mrb[0].mxu0
  %v667 = vadd.f32 0.0, %v666
  %v668 = vpop.f32.mrb[0].mxu0
  %669 = vmatprep.mubr.bf16.mxu0 0
  %670 = vmatmul.mubr.bf16.gmra.mrb[0].mxu0 %v286
  %v671 = vpop.f32.mrb[0].mxu0
  %v672 = vadd.f32 0.0, %v671
  %v673 = vpop.f32.mrb[0].mxu0
  %v674 = vpop.f32.mrb[0].mxu0
  %v675 = vadd.f32 0.0, %v674
  %v676 = vpop.f32.mrb[0].mxu0
  %677 = vmatprep.mubr.bf16.mxu0 0
  %678 = vmatmul.mubr.bf16.gmra.mrb[0].mxu0 %v289
  %v679 = vpop.f32.mrb[0].mxu0
  %v680 = vadd.f32 0.0, %v679
  %v681 = vpop.f32.mrb[0].mxu0
  %v682 = vpop.f32.mrb[0].mxu0
  %v683 = vadd.f32 0.0, %v682
  %v684 = vpop.f32.mrb[0].mxu0
  %685 = vmatprep.mubr.bf16.mxu0 0
  %686 = vmatmul.mubr.bf16.gmra.mrb[0].mxu0 %v292
  %v687 = vpop.f32.mrb[0].mxu0
  %v688 = vadd.f32 0.0, %v687
  %v689 = vpop.f32.mrb[0].mxu0
  %v690 = vpop.f32.mrb[0].mxu0
  %v691 = vadd.f32 0.0, %v690
  %v692 = vpop.f32.mrb[0].mxu0
  %693 = vmatprep.mubr.bf16.mxu0 0
  %694 = vmatmul.mubr.bf16.gmra.mrb[0].mxu0 %v295
  %v695 = vpop.f32.mrb[0].mxu0
  %v696 = vadd.f32 0.0, %v695
  %v697 = vpop.f32.mrb[0].mxu0
  %v698 = vpop.f32.mrb[0].mxu0
  %v699 = vadd.f32 0.0, %v698
  %v700 = vpop.f32.mrb[0].mxu0
  %701 = vdwg.mxu0
  %v702 = vpack.c.bf16 %v336, %v332
  %v703 = vpack.c.bf16 %v338, %v334
  %v704 = vpack.c.bf16 %v419, %v415
  %v705 = vpack.c.bf16 %v421, %v417
  %v706 = vpack.c.bf16 %v502, %v498
  %v707 = vpack.c.bf16 %v504, %v500
  %v708 = vpack.c.bf16 %v585, %v581
  %v709 = vpack.c.bf16 %v587, %v583
  %v710 = vpack.c.bf16 %v667, %v664
  %v711 = vpack.c.bf16 %v346, %v342
  %v712 = vpack.c.bf16 %v348, %v344
  %v713 = vpack.c.bf16 %v429, %v425
  %v714 = vpack.c.bf16 %v431, %v427
  %v715 = vpack.c.bf16 %v512, %v508
  %v716 = vpack.c.bf16 %v514, %v510
  %v717 = vpack.c.bf16 %v595, %v591
  %v718 = vpack.c.bf16 %v597, %v593
  %v719 = vpack.c.bf16 %v675, %v672
  %v720 = vpack.c.bf16 %v356, %v352
  %v721 = vpack.c.bf16 %v358, %v354
  %v722 = vpack.c.bf16 %v439, %v435
  %v723 = vpack.c.bf16 %v441, %v437
  %v724 = vpack.c.bf16 %v522, %v518
  %v725 = vpack.c.bf16 %v524, %v520
  %v726 = vpack.c.bf16 %v605, %v601
  %v727 = vpack.c.bf16 %v607, %v603
  %v728 = vpack.c.bf16 %v683, %v680
  %v729 = vpack.c.bf16 %v366, %v362
  %v730 = vpack.c.bf16 %v368, %v364
  %v731 = vpack.c.bf16 %v449, %v445
  %v732 = vpack.c.bf16 %v451, %v447
  %v733 = vpack.c.bf16 %v532, %v528
  %v734 = vpack.c.bf16 %v534, %v530
  %v735 = vpack.c.bf16 %v615, %v611
  %v736 = vpack.c.bf16 %v617, %v613
  %v737 = vpack.c.bf16 %v691, %v688
  %v738 = vpack.c.bf16 %v376, %v372
  %v739 = vpack.c.bf16 %v378, %v374
  %v740 = vpack.c.bf16 %v459, %v455
  %v741 = vpack.c.bf16 %v461, %v457
  %v742 = vpack.c.bf16 %v542, %v538
  %v743 = vpack.c.bf16 %v544, %v540
  %v744 = vpack.c.bf16 %v625, %v621
  %v745 = vpack.c.bf16 %v627, %v623
  %v746 = vpack.c.bf16 %v699, %v696
  %v792 = vunpack.c.l.b16 %v702
  %v793 = vunpack.c.l.b16 %v703
  %v794 = vunpack.c.l.b16 %v704
  %v795 = vunpack.c.l.b16 %v705
  %v796 = vunpack.c.l.b16 %v706
  %v797 = vunpack.c.l.b16 %v707
  %v798 = vunpack.c.l.b16 %v708
  %v799 = vunpack.c.l.b16 %v709
  %v800 = vunpack.c.l.b16 %v710
  %v801 = vunpack.c.h.b16 %v702
  %v802 = vunpack.c.h.b16 %v703
  %v803 = vunpack.c.h.b16 %v704
  %v804 = vunpack.c.h.b16 %v705
  %v805 = vunpack.c.h.b16 %v706
  %v806 = vunpack.c.h.b16 %v707
  %v807 = vunpack.c.h.b16 %v708
  %v808 = vunpack.c.h.b16 %v709
  %v809 = vunpack.c.h.b16 %v710
  %v810 = vunpack.c.l.b16 %v711
  %v811 = vunpack.c.l.b16 %v712
  %v812 = vunpack.c.l.b16 %v713
  %v813 = vunpack.c.l.b16 %v714
  %v814 = vunpack.c.l.b16 %v715
  %v815 = vunpack.c.l.b16 %v716
  %v816 = vunpack.c.l.b16 %v717
  %v817 = vunpack.c.l.b16 %v718
  %v818 = vunpack.c.l.b16 %v719
  %v819 = vunpack.c.h.b16 %v711
  %v820 = vunpack.c.h.b16 %v712
  %v821 = vunpack.c.h.b16 %v713
  %v822 = vunpack.c.h.b16 %v714
  %v823 = vunpack.c.h.b16 %v715
  %v824 = vunpack.c.h.b16 %v716
  %v825 = vunpack.c.h.b16 %v717
  %v826 = vunpack.c.h.b16 %v718
  %v827 = vunpack.c.h.b16 %v719
  %v828 = vunpack.c.l.b16 %v720
  %v829 = vunpack.c.l.b16 %v721
  %v830 = vunpack.c.l.b16 %v722
  %v831 = vunpack.c.l.b16 %v723
  %v832 = vunpack.c.l.b16 %v724
  %v833 = vunpack.c.l.b16 %v725
  %v834 = vunpack.c.l.b16 %v726
  %v835 = vunpack.c.l.b16 %v727
  %v836 = vunpack.c.l.b16 %v728
  %v837 = vunpack.c.h.b16 %v720
  %v838 = vunpack.c.h.b16 %v721
  %v839 = vunpack.c.h.b16 %v722
  %v840 = vunpack.c.h.b16 %v723
  %v841 = vunpack.c.h.b16 %v724
  %v842 = vunpack.c.h.b16 %v725
  %v843 = vunpack.c.h.b16 %v726
  %v844 = vunpack.c.h.b16 %v727
  %v845 = vunpack.c.h.b16 %v728
  %v846 = vunpack.c.l.b16 %v729
  %v847 = vunpack.c.l.b16 %v730
  %v848 = vunpack.c.l.b16 %v731
  %v849 = vunpack.c.l.b16 %v732
  %v850 = vunpack.c.l.b16 %v733
  %v851 = vunpack.c.l.b16 %v734
  %v852 = vunpack.c.l.b16 %v735
  %v853 = vunpack.c.l.b16 %v736
  %v854 = vunpack.c.l.b16 %v737
  %v855 = vunpack.c.h.b16 %v729
  %v856 = vunpack.c.h.b16 %v730
  %v857 = vunpack.c.h.b16 %v731
  %v858 = vunpack.c.h.b16 %v732
  %v859 = vunpack.c.h.b16 %v733
  %v860 = vunpack.c.h.b16 %v734
  %v861 = vunpack.c.h.b16 %v735
  %v862 = vunpack.c.h.b16 %v736
  %v863 = vunpack.c.h.b16 %v737
  %v864 = vunpack.c.l.b16 %v738
  %v865 = vunpack.c.l.b16 %v739
  %v866 = vunpack.c.l.b16 %v740
  %v867 = vunpack.c.l.b16 %v741
  %v868 = vunpack.c.l.b16 %v742
  %v869 = vunpack.c.l.b16 %v743
  %v870 = vunpack.c.l.b16 %v744
  %v871 = vunpack.c.l.b16 %v745
  %v872 = vunpack.c.l.b16 %v746
  %v873 = vunpack.c.h.b16 %v738
  %v874 = vunpack.c.h.b16 %v739
  %v875 = vunpack.c.h.b16 %v740
  %v876 = vunpack.c.h.b16 %v741
  %v877 = vunpack.c.h.b16 %v742
  %v878 = vunpack.c.h.b16 %v743
  %v879 = vunpack.c.h.b16 %v744
  %v880 = vunpack.c.h.b16 %v745
  %v881 = vunpack.c.h.b16 %v746
  %v882 = vpack.c.b16 %v793, %v792
  %v883 = vpack.c.b16 %v795, %v794
  %v884 = vpack.c.b16 %v797, %v796
  %v885 = vpack.c.b16 %v799, %v798
  %v886 = vpack.c.b16 %v800, %v800
  %v887 = vpack.c.b16 %v802, %v801
  %v888 = vpack.c.b16 %v804, %v803
  %v889 = vpack.c.b16 %v806, %v805
  %v890 = vpack.c.b16 %v808, %v807
  %v891 = vpack.c.b16 %v809, %v809
  %v892 = vpack.c.b16 %v811, %v810
  %v893 = vpack.c.b16 %v813, %v812
  %v894 = vpack.c.b16 %v815, %v814
  %v895 = vpack.c.b16 %v817, %v816
  %v896 = vpack.c.b16 %v818, %v818
  %v897 = vpack.c.b16 %v820, %v819
  %v898 = vpack.c.b16 %v822, %v821
  %v899 = vpack.c.b16 %v824, %v823
  %v900 = vpack.c.b16 %v826, %v825
  %v901 = vpack.c.b16 %v827, %v827
  %v902 = vpack.c.b16 %v829, %v828
  %v903 = vpack.c.b16 %v831, %v830
  %v904 = vpack.c.b16 %v833, %v832
  %v905 = vpack.c.b16 %v835, %v834
  %v906 = vpack.c.b16 %v836, %v836
  %v907 = vpack.c.b16 %v838, %v837
  %v908 = vpack.c.b16 %v840, %v839
  %v909 = vpack.c.b16 %v842, %v841
  %v910 = vpack.c.b16 %v844, %v843
  %v911 = vpack.c.b16 %v845, %v845
  %v912 = vpack.c.b16 %v847, %v846
  %v913 = vpack.c.b16 %v849, %v848
  %v914 = vpack.c.b16 %v851, %v850
  %v915 = vpack.c.b16 %v853, %v852
  %v916 = vpack.c.b16 %v854, %v854
  %v917 = vpack.c.b16 %v856, %v855
  %v918 = vpack.c.b16 %v858, %v857
  %v919 = vpack.c.b16 %v860, %v859
  %v920 = vpack.c.b16 %v862, %v861
  %v921 = vpack.c.b16 %v863, %v863
  %v922 = vpack.c.b16 %v865, %v864
  %v923 = vpack.c.b16 %v867, %v866
  %v924 = vpack.c.b16 %v869, %v868
  %v925 = vpack.c.b16 %v871, %v870
  %v926 = vpack.c.b16 %v872, %v872
  %v927 = vpack.c.b16 %v874, %v873
  %v928 = vpack.c.b16 %v876, %v875
  %v929 = vpack.c.b16 %v878, %v877
  %v930 = vpack.c.b16 %v880, %v879
  %v931 = vpack.c.b16 %v881, %v881
  %982 = vst [vmem:[%s3] sm:$0xff] %v882
  %983 = vst [vmem:[%s3 + $0x8] sm:$0xff] %v883
  %984 = vst [vmem:[%s3 + $0x10] sm:$0xff] %v884
  %985 = vst [vmem:[%s3 + $0x18] sm:$0xff] %v885
  %986 = vst [vmem:[%s3 + $0x20] sm:$0xf] %v886
  %987 = vst [vmem:[%s3 + $0x24] sm:$0xff] %v887
  %988 = vst [vmem:[%s3 + $0x2c] sm:$0xff] %v888
  %989 = vst [vmem:[%s3 + $0x34] sm:$0xff] %v889
  %990 = vst [vmem:[%s3 + $0x3c] sm:$0xff] %v890
  %991 = vst [vmem:[%s3 + $0x44] sm:$0xf] %v891
  %992 = vst [vmem:[%s3 + $0x48] sm:$0xff] %v892
  %993 = vst [vmem:[%s3 + $0x50] sm:$0xff] %v893
  %994 = vst [vmem:[%s3 + $0x58] sm:$0xff] %v894
  %995 = vst [vmem:[%s3 + $0x60] sm:$0xff] %v895
  %996 = vst [vmem:[%s3 + $0x68] sm:$0xf] %v896
  %997 = vst [vmem:[%s3 + $0x6c] sm:$0xff] %v897
  %998 = vst [vmem:[%s3 + $0x74] sm:$0xff] %v898
  %999 = vst [vmem:[%s3 + $0x7c] sm:$0xff] %v899
  %1000 = vst [vmem:[%s3 + $0x84] sm:$0xff] %v900
  %1001 = vst [vmem:[%s3 + $0x8c] sm:$0xf] %v901
  %1002 = vst [vmem:[%s3 + $0x90] sm:$0xff] %v902
  %1003 = vst [vmem:[%s3 + $0x98] sm:$0xff] %v903
  %1004 = vst [vmem:[%s3 + $0xa0] sm:$0xff] %v904
  %1005 = vst [vmem:[%s3 + $0xa8] sm:$0xff] %v905
  %1006 = vst [vmem:[%s3 + $0xb0] sm:$0xf] %v906
  %1007 = vst [vmem:[%s3 + $0xb4] sm:$0xff] %v907
  %1008 = vst [vmem:[%s3 + $0xbc] sm:$0xff] %v908
  %1009 = vst [vmem:[%s3 + $0xc4] sm:$0xff] %v909
  %1010 = vst [vmem:[%s3 + $0xcc] sm:$0xff] %v910
  %1011 = vst [vmem:[%s3 + $0xd4] sm:$0xf] %v911
  %1012 = vst [vmem:[%s3 + $0xd8] sm:$0xff] %v912
  %1013 = vst [vmem:[%s3 + $0xe0] sm:$0xff] %v913
  %1014 = vst [vmem:[%s3 + $0xe8] sm:$0xff] %v914
  %1015 = vst [vmem:[%s3 + $0xf0] sm:$0xff] %v915
  %1016 = vst [vmem:[%s3 + $0xf8] sm:$0xf] %v916
  %1017 = vst [vmem:[%s3 + $0xfc] sm:$0xff] %v917
  %1018 = vst [vmem:[%s3 + $0x104] sm:$0xff] %v918
  %1019 = vst [vmem:[%s3 + $0x10c] sm:$0xff] %v919
  %1020 = vst [vmem:[%s3 + $0x114] sm:$0xff] %v920
  %1021 = vst [vmem:[%s3 + $0x11c] sm:$0xf] %v921
  %1022 = vst [vmem:[%s3 + $0x120] sm:$0xff] %v922
  %1023 = vst [vmem:[%s3 + $0x128] sm:$0xff] %v923
  %1024 = vst [vmem:[%s3 + $0x130] sm:$0xff] %v924
  %1025 = vst [vmem:[%s3 + $0x138] sm:$0xff] %v925
  %1026 = vst [vmem:[%s3 + $0x140] sm:$0xf] %v926
  %1027 = vst [vmem:[%s3 + $0x144] sm:$0xff] %v927
  %1028 = vst [vmem:[%s3 + $0x14c] sm:$0xff] %v928
  %1029 = vst [vmem:[%s3 + $0x154] sm:$0xff] %v929
  %1030 = vst [vmem:[%s3 + $0x15c] sm:$0xff] %v930
  %1031 = vst [vmem:[%s3 + $0x164] sm:$0xf] %v931
  // Predicated region
  $region14: #{generator_forward.8} parent=0 // pred_check
    _
  $region15: #{generator_forward.8} parent=0 // pred_check_branch
    %1033 = sbr.rel (0) target = $region17
  $region16: #{generator_forward.8} parent=0 // pred_region
    _
  $region17: #{generator_forward.8} parent=0 // pred_fallthru
    _
  // Predicated region
  $region18: #{generator_forward.8} parent=0 // pred_check
    _
  $region19: #{generator_forward.8} parent=0 // pred_check_branch
    %1035 = sbr.rel (0) target = $region21
  $region20: #{generator_forward.8} parent=0 // pred_region
    _
  $region21: #{generator_forward.8} parent=0 // pred_fallthru
    _

// kernel: generator_forward.9
$region0: #{generator_forward.9}
  #allocation0 [shape = 'u32[]', space=smem, size = 0x4, offset = 0x4, fixed_abs, tag = 'smem constant byte address 0x4 - core index']
  #allocation1 [shape = 'u32[144,128]{1,0:T(1,128)}', space=vmem, size = 0x12000, scoped, tag = 'internal scratch']
  %s0 = inlined_call_operand.vmem [shape: f32[256,128], index: 0, kind: input, shape index: {}]
  %s1 = inlined_call_operand.vmem [shape: f32[1,128], index: 1, kind: input, shape index: {}]
  %s2 = inlined_call_operand.vmem [shape: bf16[128,1024], index: 2, kind: input, shape index: {}]
  %s3 = inlined_call_operand.vmem [shape: bf16[256,1024], index: 3, kind: output, shape index: {}]
  %s4 = sld [smem:[#allocation0]]
  $region22: #{generator_forward.9} parent=0
    _
  %s6 = ssub.s32 1, %s4
  %s7 = scalar_select 0, %s6, %s4
  // Predicated region
  $region2: #{generator_forward.9} parent=0 // pred_check
    _
  $region3: #{generator_forward.9} parent=0 // pred_check_branch
    %9 = sbr.rel (0) target = $region5
  $region4: #{generator_forward.9} parent=0 // pred_region
    _
  $region5: #{generator_forward.9} parent=0 // pred_fallthru
    _
  // Predicated region
  $region6: #{generator_forward.9} parent=0 // pred_check
    _
  $region7: #{generator_forward.9} parent=0 // pred_check_branch
    %11 = sbr.rel (0) target = $region9
  $region8: #{generator_forward.9} parent=0 // pred_region
    _
  $region9: #{generator_forward.9} parent=0 // pred_fallthru
    _
  // Predicated region
  $region10: #{generator_forward.9} parent=0 // pred_check
    _
  $region11: #{generator_forward.9} parent=0 // pred_check_branch
    %13 = sbr.rel (0) target = $region13
  $region12: #{generator_forward.9} parent=0 // pred_region
    _
  $region13: #{generator_forward.9} parent=0 // pred_fallthru
    _
  %v15 = vld [vmem:[%s0] sm:$0xff]
  %v16 = vld [vmem:[%s0 + $0x8] sm:$0xff]
  %v17 = vld [vmem:[%s0 + $0x10] sm:$0xff]
  %v18 = vld [vmem:[%s0 + $0x18] sm:$0xff]
  %v19 = vld [vmem:[%s0 + $0x20] sm:$0xff]
  %v20 = vld [vmem:[%s0 + $0x28] sm:$0xff]
  %v21 = vld [vmem:[%s0 + $0x30] sm:$0xff]
  %v22 = vld [vmem:[%s0 + $0x38] sm:$0xff]
  %v23 = vld [vmem:[%s0 + $0x40] sm:$0xff]
  %v24 = vld [vmem:[%s0 + $0x48] sm:$0xff]
  %v25 = vld [vmem:[%s0 + $0x50] sm:$0xff]
  %v26 = vld [vmem:[%s0 + $0x58] sm:$0xff]
  %v27 = vld [vmem:[%s0 + $0x60] sm:$0xff]
  %v28 = vld [vmem:[%s0 + $0x68] sm:$0xff]
  %v29 = vld [vmem:[%s0 + $0x70] sm:$0xff]
  %v30 = vld [vmem:[%s0 + $0x78] sm:$0xff]
  %v31 = vld [vmem:[%s0 + $0x80] sm:$0xff]
  %v32 = vld [vmem:[%s0 + $0x88] sm:$0xff]
  %v33 = vld [vmem:[%s0 + $0x90] sm:$0xff]
  %v34 = vld [vmem:[%s0 + $0x98] sm:$0xff]
  %v35 = vld [vmem:[%s0 + $0xa0] sm:$0xff]
  %v36 = vld [vmem:[%s0 + $0xa8] sm:$0xff]
  %v37 = vld [vmem:[%s0 + $0xb0] sm:$0xff]
  %v38 = vld [vmem:[%s0 + $0xb8] sm:$0xff]
  %v39 = vld [vmem:[%s0 + $0xc0] sm:$0xff]
  %v40 = vld [vmem:[%s0 + $0xc8] sm:$0xff]
  %v41 = vld [vmem:[%s0 + $0xd0] sm:$0xff]
  %v42 = vld [vmem:[%s0 + $0xd8] sm:$0xff]
  %v43 = vld [vmem:[%s0 + $0xe0] sm:$0xff]
  %v44 = vld [vmem:[%s0 + $0xe8] sm:$0xff]
  %v45 = vld [vmem:[%s0 + $0xf0] sm:$0xff]
  %v46 = vld [vmem:[%s0 + $0xf8] sm:$0xff]
  %v47 = vld [vmem:[%s1] sm:$0x1]
  %v49 = vlaneseq
  %v50 = vshrl.u32 %v49, 7
  %v51 = vsub.s32 0, %v50
  %v52 = vrot.slane %v47, %v51
  %v54 = vadd.f32 %v15, %v52
  %v55 = vadd.f32 %v16, %v52
  %v56 = vadd.f32 %v17, %v52
  %v57 = vadd.f32 %v18, %v52
  %v58 = vadd.f32 %v19, %v52
  %v59 = vadd.f32 %v20, %v52
  %v60 = vadd.f32 %v21, %v52
  %v61 = vadd.f32 %v22, %v52
  %v62 = vadd.f32 %v23, %v52
  %v63 = vadd.f32 %v24, %v52
  %v64 = vadd.f32 %v25, %v52
  %v65 = vadd.f32 %v26, %v52
  %v66 = vadd.f32 %v27, %v52
  %v67 = vadd.f32 %v28, %v52
  %v68 = vadd.f32 %v29, %v52
  %v69 = vadd.f32 %v30, %v52
  %v70 = vadd.f32 %v31, %v52
  %v71 = vadd.f32 %v32, %v52
  %v72 = vadd.f32 %v33, %v52
  %v73 = vadd.f32 %v34, %v52
  %v74 = vadd.f32 %v35, %v52
  %v75 = vadd.f32 %v36, %v52
  %v76 = vadd.f32 %v37, %v52
  %v77 = vadd.f32 %v38, %v52
  %v78 = vadd.f32 %v39, %v52
  %v79 = vadd.f32 %v40, %v52
  %v80 = vadd.f32 %v41, %v52
  %v81 = vadd.f32 %v42, %v52
  %v82 = vadd.f32 %v43, %v52
  %v83 = vadd.f32 %v44, %v52
  %v84 = vadd.f32 %v45, %v52
  %v85 = vadd.f32 %v46, %v52
  %v86 = vmax.f32 %v54, 0.0
  %v87 = vmax.f32 %v55, 0.0
  %v88 = vmax.f32 %v56, 0.0
  %v89 = vmax.f32 %v57, 0.0
  %v90 = vmax.f32 %v58, 0.0
  %v91 = vmax.f32 %v59, 0.0
  %v92 = vmax.f32 %v60, 0.0
  %v93 = vmax.f32 %v61, 0.0
  %v94 = vmax.f32 %v62, 0.0
  %v95 = vmax.f32 %v63, 0.0
  %v96 = vmax.f32 %v64, 0.0
  %v97 = vmax.f32 %v65, 0.0
  %v98 = vmax.f32 %v66, 0.0
  %v99 = vmax.f32 %v67, 0.0
  %v100 = vmax.f32 %v68, 0.0
  %v101 = vmax.f32 %v69, 0.0
  %v102 = vmax.f32 %v70, 0.0
  %v103 = vmax.f32 %v71, 0.0
  %v104 = vmax.f32 %v72, 0.0
  %v105 = vmax.f32 %v73, 0.0
  %v106 = vmax.f32 %v74, 0.0
  %v107 = vmax.f32 %v75, 0.0
  %v108 = vmax.f32 %v76, 0.0
  %v109 = vmax.f32 %v77, 0.0
  %v110 = vmax.f32 %v78, 0.0
  %v111 = vmax.f32 %v79, 0.0
  %v112 = vmax.f32 %v80, 0.0
  %v113 = vmax.f32 %v81, 0.0
  %v114 = vmax.f32 %v82, 0.0
  %v115 = vmax.f32 %v83, 0.0
  %v116 = vmax.f32 %v84, 0.0
  %v117 = vmax.f32 %v85, 0.0
  %v118 = vpack.c.bf16 %v87, %v86
  %v119 = vpack.c.bf16 %v89, %v88
  %v120 = vpack.c.bf16 %v91, %v90
  %v121 = vpack.c.bf16 %v93, %v92
  %v122 = vpack.c.bf16 %v95, %v94
  %v123 = vpack.c.bf16 %v97, %v96
  %v124 = vpack.c.bf16 %v99, %v98
  %v125 = vpack.c.bf16 %v101, %v100
  %v126 = vpack.c.bf16 %v103, %v102
  %v127 = vpack.c.bf16 %v105, %v104
  %v128 = vpack.c.bf16 %v107, %v106
  %v129 = vpack.c.bf16 %v109, %v108
  %v130 = vpack.c.bf16 %v111, %v110
  %v131 = vpack.c.bf16 %v113, %v112
  %v132 = vpack.c.bf16 %v115, %v114
  %v133 = vpack.c.bf16 %v117, %v116
  %v134 = vld [vmem:[%s2] sm:$0xff]
  %v135 = vld [vmem:[%s2 + $0x8] sm:$0xff]
  %v136 = vld [vmem:[%s2 + $0x10] sm:$0xff]
  %v137 = vld [vmem:[%s2 + $0x18] sm:$0xff]
  %v138 = vld [vmem:[%s2 + $0x20] sm:$0xff]
  %v139 = vld [vmem:[%s2 + $0x28] sm:$0xff]
  %v140 = vld [vmem:[%s2 + $0x30] sm:$0xff]
  %v141 = vld [vmem:[%s2 + $0x38] sm:$0xff]
  %v142 = vld [vmem:[%s2 + $0x40] sm:$0xff]
  %v143 = vld [vmem:[%s2 + $0x48] sm:$0xff]
  %v144 = vld [vmem:[%s2 + $0x50] sm:$0xff]
  %v145 = vld [vmem:[%s2 + $0x58] sm:$0xff]
  %v146 = vld [vmem:[%s2 + $0x60] sm:$0xff]
  %v147 = vld [vmem:[%s2 + $0x68] sm:$0xff]
  %v148 = vld [vmem:[%s2 + $0x70] sm:$0xff]
  %v149 = vld [vmem:[%s2 + $0x78] sm:$0xff]
  %v150 = vld [vmem:[%s2 + $0x80] sm:$0xff]
  %v151 = vld [vmem:[%s2 + $0x88] sm:$0xff]
  %v152 = vld [vmem:[%s2 + $0x90] sm:$0xff]
  %v153 = vld [vmem:[%s2 + $0x98] sm:$0xff]
  %v154 = vld [vmem:[%s2 + $0xa0] sm:$0xff]
  %v155 = vld [vmem:[%s2 + $0xa8] sm:$0xff]
  %v156 = vld [vmem:[%s2 + $0xb0] sm:$0xff]
  %v157 = vld [vmem:[%s2 + $0xb8] sm:$0xff]
  %v158 = vld [vmem:[%s2 + $0xc0] sm:$0xff]
  %v159 = vld [vmem:[%s2 + $0xc8] sm:$0xff]
  %v160 = vld [vmem:[%s2 + $0xd0] sm:$0xff]
  %v161 = vld [vmem:[%s2 + $0xd8] sm:$0xff]
  %v162 = vld [vmem:[%s2 + $0xe0] sm:$0xff]
  %v163 = vld [vmem:[%s2 + $0xe8] sm:$0xff]
  %v164 = vld [vmem:[%s2 + $0xf0] sm:$0xff]
  %v165 = vld [vmem:[%s2 + $0xf8] sm:$0xff]
  %v166 = vld [vmem:[%s2 + $0x100] sm:$0xff]
  %v167 = vld [vmem:[%s2 + $0x108] sm:$0xff]
  %v168 = vld [vmem:[%s2 + $0x110] sm:$0xff]
  %v169 = vld [vmem:[%s2 + $0x118] sm:$0xff]
  %v170 = vld [vmem:[%s2 + $0x120] sm:$0xff]
  %v171 = vld [vmem:[%s2 + $0x128] sm:$0xff]
  %v172 = vld [vmem:[%s2 + $0x130] sm:$0xff]
  %v173 = vld [vmem:[%s2 + $0x138] sm:$0xff]
  %v174 = vld [vmem:[%s2 + $0x140] sm:$0xff]
  %v175 = vld [vmem:[%s2 + $0x148] sm:$0xff]
  %v176 = vld [vmem:[%s2 + $0x150] sm:$0xff]
  %v177 = vld [vmem:[%s2 + $0x158] sm:$0xff]
  %v178 = vld [vmem:[%s2 + $0x160] sm:$0xff]
  %v179 = vld [vmem:[%s2 + $0x168] sm:$0xff]
  %v180 = vld [vmem:[%s2 + $0x170] sm:$0xff]
  %v181 = vld [vmem:[%s2 + $0x178] sm:$0xff]
  %v182 = vld [vmem:[%s2 + $0x180] sm:$0xff]
  %v183 = vld [vmem:[%s2 + $0x188] sm:$0xff]
  %v184 = vld [vmem:[%s2 + $0x190] sm:$0xff]
  %v185 = vld [vmem:[%s2 + $0x198] sm:$0xff]
  %v186 = vld [vmem:[%s2 + $0x1a0] sm:$0xff]
  %v187 = vld [vmem:[%s2 + $0x1a8] sm:$0xff]
  %v188 = vld [vmem:[%s2 + $0x1b0] sm:$0xff]
  %v189 = vld [vmem:[%s2 + $0x1b8] sm:$0xff]
  %v190 = vld [vmem:[%s2 + $0x1c0] sm:$0xff]
  %v191 = vld [vmem:[%s2 + $0x1c8] sm:$0xff]
  %v192 = vld [vmem:[%s2 + $0x1d0] sm:$0xff]
  %v193 = vld [vmem:[%s2 + $0x1d8] sm:$0xff]
  %v194 = vld [vmem:[%s2 + $0x1e0] sm:$0xff]
  %v195 = vld [vmem:[%s2 + $0x1e8] sm:$0xff]
  %v196 = vld [vmem:[%s2 + $0x1f0] sm:$0xff]
  %v197 = vld [vmem:[%s2 + $0x1f8] sm:$0xff]
  %v262 = vunpack.c.l.b16 %v134
  %v263 = vunpack.c.h.b16 %v134
  %v264 = vunpack.c.l.b16 %v135
  %v265 = vunpack.c.h.b16 %v135
  %v266 = vunpack.c.l.b16 %v136
  %v267 = vunpack.c.h.b16 %v136
  %v268 = vunpack.c.l.b16 %v137
  %v269 = vunpack.c.h.b16 %v137
  %v270 = vunpack.c.l.b16 %v138
  %v271 = vunpack.c.h.b16 %v138
  %v272 = vunpack.c.l.b16 %v139
  %v273 = vunpack.c.h.b16 %v139
  %v274 = vunpack.c.l.b16 %v140
  %v275 = vunpack.c.h.b16 %v140
  %v276 = vunpack.c.l.b16 %v141
  %v277 = vunpack.c.h.b16 %v141
  %v278 = vunpack.c.l.b16 %v142
  %v279 = vunpack.c.h.b16 %v142
  %v280 = vunpack.c.l.b16 %v143
  %v281 = vunpack.c.h.b16 %v143
  %v282 = vunpack.c.l.b16 %v144
  %v283 = vunpack.c.h.b16 %v144
  %v284 = vunpack.c.l.b16 %v145
  %v285 = vunpack.c.h.b16 %v145
  %v286 = vunpack.c.l.b16 %v146
  %v287 = vunpack.c.h.b16 %v146
  %v288 = vunpack.c.l.b16 %v147
  %v289 = vunpack.c.h.b16 %v147
  %v290 = vunpack.c.l.b16 %v148
  %v291 = vunpack.c.h.b16 %v148
  %v292 = vunpack.c.l.b16 %v149
  %v293 = vunpack.c.h.b16 %v149
  %v294 = vunpack.c.l.b16 %v150
  %v295 = vunpack.c.h.b16 %v150
  %v296 = vunpack.c.l.b16 %v151
  %v297 = vunpack.c.h.b16 %v151
  %v298 = vunpack.c.l.b16 %v152
  %v299 = vunpack.c.h.b16 %v152
  %v300 = vunpack.c.l.b16 %v153
  %v301 = vunpack.c.h.b16 %v153
  %v302 = vunpack.c.l.b16 %v154
  %v303 = vunpack.c.h.b16 %v154
  %v304 = vunpack.c.l.b16 %v155
  %v305 = vunpack.c.h.b16 %v155
  %v306 = vunpack.c.l.b16 %v156
  %v307 = vunpack.c.h.b16 %v156
  %v308 = vunpack.c.l.b16 %v157
  %v309 = vunpack.c.h.b16 %v157
  %v310 = vunpack.c.l.b16 %v158
  %v311 = vunpack.c.h.b16 %v158
  %v312 = vunpack.c.l.b16 %v159
  %v313 = vunpack.c.h.b16 %v159
  %v314 = vunpack.c.l.b16 %v160
  %v315 = vunpack.c.h.b16 %v160
  %v316 = vunpack.c.l.b16 %v161
  %v317 = vunpack.c.h.b16 %v161
  %v318 = vunpack.c.l.b16 %v162
  %v319 = vunpack.c.h.b16 %v162
  %v320 = vunpack.c.l.b16 %v163
  %v321 = vunpack.c.h.b16 %v163
  %v322 = vunpack.c.l.b16 %v164
  %v323 = vunpack.c.h.b16 %v164
  %v324 = vunpack.c.l.b16 %v165
  %v325 = vunpack.c.h.b16 %v165
  %v326 = vunpack.c.l.b16 %v166
  %v327 = vunpack.c.h.b16 %v166
  %v328 = vunpack.c.l.b16 %v167
  %v329 = vunpack.c.h.b16 %v167
  %v330 = vunpack.c.l.b16 %v168
  %v331 = vunpack.c.h.b16 %v168
  %v332 = vunpack.c.l.b16 %v169
  %v333 = vunpack.c.h.b16 %v169
  %v334 = vunpack.c.l.b16 %v170
  %v335 = vunpack.c.h.b16 %v170
  %v336 = vunpack.c.l.b16 %v171
  %v337 = vunpack.c.h.b16 %v171
  %v338 = vunpack.c.l.b16 %v172
  %v339 = vunpack.c.h.b16 %v172
  %v340 = vunpack.c.l.b16 %v173
  %v341 = vunpack.c.h.b16 %v173
  %v342 = vunpack.c.l.b16 %v174
  %v343 = vunpack.c.h.b16 %v174
  %v344 = vunpack.c.l.b16 %v175
  %v345 = vunpack.c.h.b16 %v175
  %v346 = vunpack.c.l.b16 %v176
  %v347 = vunpack.c.h.b16 %v176
  %v348 = vunpack.c.l.b16 %v177
  %v349 = vunpack.c.h.b16 %v177
  %v350 = vunpack.c.l.b16 %v178
  %v351 = vunpack.c.h.b16 %v178
  %v352 = vunpack.c.l.b16 %v179
  %v353 = vunpack.c.h.b16 %v179
  %v354 = vunpack.c.l.b16 %v180
  %v355 = vunpack.c.h.b16 %v180
  %v356 = vunpack.c.l.b16 %v181
  %v357 = vunpack.c.h.b16 %v181
  %v358 = vunpack.c.l.b16 %v182
  %v359 = vunpack.c.h.b16 %v182
  %v360 = vunpack.c.l.b16 %v183
  %v361 = vunpack.c.h.b16 %v183
  %v362 = vunpack.c.l.b16 %v184
  %v363 = vunpack.c.h.b16 %v184
  %v364 = vunpack.c.l.b16 %v185
  %v365 = vunpack.c.h.b16 %v185
  %v366 = vunpack.c.l.b16 %v186
  %v367 = vunpack.c.h.b16 %v186
  %v368 = vunpack.c.l.b16 %v187
  %v369 = vunpack.c.h.b16 %v187
  %v370 = vunpack.c.l.b16 %v188
  %v371 = vunpack.c.h.b16 %v188
  %v372 = vunpack.c.l.b16 %v189
  %v373 = vunpack.c.h.b16 %v189
  %v374 = vunpack.c.l.b16 %v190
  %v375 = vunpack.c.h.b16 %v190
  %v376 = vunpack.c.l.b16 %v191
  %v377 = vunpack.c.h.b16 %v191
  %v378 = vunpack.c.l.b16 %v192
  %v379 = vunpack.c.h.b16 %v192
  %v380 = vunpack.c.l.b16 %v193
  %v381 = vunpack.c.h.b16 %v193
  %v382 = vunpack.c.l.b16 %v194
  %v383 = vunpack.c.h.b16 %v194
  %v384 = vunpack.c.l.b16 %v195
  %v385 = vunpack.c.h.b16 %v195
  %v386 = vunpack.c.l.b16 %v196
  %v387 = vunpack.c.h.b16 %v196
  %v388 = vunpack.c.l.b16 %v197
  %v389 = vunpack.c.h.b16 %v197
  %v390 = vpack.c.b16 %v270, %v262
  %v391 = vpack.c.b16 %v271, %v263
  %v392 = vpack.c.b16 %v272, %v264
  %v393 = vpack.c.b16 %v273, %v265
  %v394 = vpack.c.b16 %v274, %v266
  %v395 = vpack.c.b16 %v275, %v267
  %v396 = vpack.c.b16 %v276, %v268
  %v397 = vpack.c.b16 %v277, %v269
  %v398 = vpack.c.b16 %v286, %v278
  %v399 = vpack.c.b16 %v287, %v279
  %v400 = vpack.c.b16 %v288, %v280
  %v401 = vpack.c.b16 %v289, %v281
  %v402 = vpack.c.b16 %v290, %v282
  %v403 = vpack.c.b16 %v291, %v283
  %v404 = vpack.c.b16 %v292, %v284
  %v405 = vpack.c.b16 %v293, %v285
  %v406 = vpack.c.b16 %v302, %v294
  %v407 = vpack.c.b16 %v303, %v295
  %v408 = vpack.c.b16 %v304, %v296
  %v409 = vpack.c.b16 %v305, %v297
  %v410 = vpack.c.b16 %v306, %v298
  %v411 = vpack.c.b16 %v307, %v299
  %v412 = vpack.c.b16 %v308, %v300
  %v413 = vpack.c.b16 %v309, %v301
  %v414 = vpack.c.b16 %v318, %v310
  %v415 = vpack.c.b16 %v319, %v311
  %v416 = vpack.c.b16 %v320, %v312
  %v417 = vpack.c.b16 %v321, %v313
  %v418 = vpack.c.b16 %v322, %v314
  %v419 = vpack.c.b16 %v323, %v315
  %v420 = vpack.c.b16 %v324, %v316
  %v421 = vpack.c.b16 %v325, %v317
  %v422 = vpack.c.b16 %v334, %v326
  %v423 = vpack.c.b16 %v335, %v327
  %v424 = vpack.c.b16 %v336, %v328
  %v425 = vpack.c.b16 %v337, %v329
  %v426 = vpack.c.b16 %v338, %v330
  %v427 = vpack.c.b16 %v339, %v331
  %v428 = vpack.c.b16 %v340, %v332
  %v429 = vpack.c.b16 %v341, %v333
  %v430 = vpack.c.b16 %v350, %v342
  %v431 = vpack.c.b16 %v351, %v343
  %v432 = vpack.c.b16 %v352, %v344
  %v433 = vpack.c.b16 %v353, %v345
  %v434 = vpack.c.b16 %v354, %v346
  %v435 = vpack.c.b16 %v355, %v347
  %v436 = vpack.c.b16 %v356, %v348
  %v437 = vpack.c.b16 %v357, %v349
  %v438 = vpack.c.b16 %v366, %v358
  %v439 = vpack.c.b16 %v367, %v359
  %v440 = vpack.c.b16 %v368, %v360
  %v441 = vpack.c.b16 %v369, %v361
  %v442 = vpack.c.b16 %v370, %v362
  %v443 = vpack.c.b16 %v371, %v363
  %v444 = vpack.c.b16 %v372, %v364
  %v445 = vpack.c.b16 %v373, %v365
  %v446 = vpack.c.b16 %v382, %v374
  %v447 = vpack.c.b16 %v383, %v375
  %v448 = vpack.c.b16 %v384, %v376
  %v449 = vpack.c.b16 %v385, %v377
  %v450 = vpack.c.b16 %v386, %v378
  %v451 = vpack.c.b16 %v387, %v379
  %v452 = vpack.c.b16 %v388, %v380
  %v453 = vpack.c.b16 %v389, %v381
  %518 = vmatprep.subr.bf16.mxu0 %v391
  %519 = vmatpush1.bf16.msra.mxu0 %v390
  %520 = vmatprep.subr.bf16.mxu0 %v399
  %521 = vmatpush1.bf16.msra.mxu0 %v398
  %522 = vmatprep.subr.bf16.mxu0 %v407
  %523 = vmatpush1.bf16.msra.mxu0 %v406
  %524 = vmatprep.subr.bf16.mxu0 %v415
  %525 = vmatpush1.bf16.msra.mxu0 %v414
  %526 = vmatprep.subr.bf16.mxu0 %v423
  %527 = vmatpush1.bf16.msra.mxu0 %v422
  %528 = vmatprep.subr.bf16.mxu0 %v431
  %529 = vmatpush1.bf16.msra.mxu0 %v430
  %530 = vmatprep.subr.bf16.mxu0 %v439
  %531 = vmatpush1.bf16.msra.mxu0 %v438
  %532 = vmatprep.subr.bf16.mxu0 %v447
  %533 = vmatpush1.bf16.msra.mxu0 %v446
  %534 = vmatprep.subr.bf16.mxu0 0
  %535 = vmatpush1.bf16.msra.mxu0 0
  %536 = vmatprep.subr.bf16.mxu0 0
  %537 = vmatpush1.bf16.msra.mxu0 0
  %538 = vmatprep.subr.bf16.mxu0 0
  %539 = vmatpush1.bf16.msra.mxu0 0
  %540 = vmatprep.subr.bf16.mxu0 0
  %541 = vmatpush1.bf16.msra.mxu0 0
  %542 = vmatprep.subr.bf16.mxu0 0
  %543 = vmatpush1.bf16.msra.mxu0 0
  %544 = vmatprep.subr.bf16.mxu0 0
  %545 = vmatpush1.bf16.msra.mxu0 0
  %546 = vmatprep.subr.bf16.mxu0 0
  %547 = vmatpush1.bf16.msra.mxu0 0
  %548 = vmatprep.subr.bf16.mxu0 0
  %549 = vmatpush1.bf16.msra.mxu0 0
  %550 = vmatprep.mubr.bf16.mxu0 0
  %551 = vmatmul.mubr.bf16.gmra.mrb[0].mxu0 %v118
  %v552 = vpop.f32.mrb[0].mxu0
  %v553 = vadd.f32 0.0, %v552
  %v554 = vpop.f32.mrb[0].mxu0
  %v555 = vadd.f32 0.0, %v554
  %v556 = vpop.f32.mrb[0].mxu0
  %v557 = vadd.f32 0.0, %v556
  %v558 = vpop.f32.mrb[0].mxu0
  %v559 = vadd.f32 0.0, %v558
  %560 = vmatprep.mubr.bf16.mxu0 0
  %561 = vmatmul.mubr.bf16.gmra.mrb[0].mxu0 %v119
  %v562 = vpop.f32.mrb[0].mxu0
  %v563 = vadd.f32 0.0, %v562
  %v564 = vpop.f32.mrb[0].mxu0
  %v565 = vadd.f32 0.0, %v564
  %v566 = vpop.f32.mrb[0].mxu0
  %v567 = vadd.f32 0.0, %v566
  %v568 = vpop.f32.mrb[0].mxu0
  %v569 = vadd.f32 0.0, %v568
  %570 = vmatprep.mubr.bf16.mxu0 0
  %571 = vmatmul.mubr.bf16.gmra.mrb[0].mxu0 %v120
  %v572 = vpop.f32.mrb[0].mxu0
  %v573 = vadd.f32 0.0, %v572
  %v574 = vpop.f32.mrb[0].mxu0
  %v575 = vadd.f32 0.0, %v574
  %v576 = vpop.f32.mrb[0].mxu0
  %v577 = vadd.f32 0.0, %v576
  %v578 = vpop.f32.mrb[0].mxu0
  %v579 = vadd.f32 0.0, %v578
  %580 = vmatprep.mubr.bf16.mxu0 0
  %581 = vmatmul.mubr.bf16.gmra.mrb[0].mxu0 %v121
  %v582 = vpop.f32.mrb[0].mxu0
  %v583 = vadd.f32 0.0, %v582
  %v584 = vpop.f32.mrb[0].mxu0
  %v585 = vadd.f32 0.0, %v584
  %v586 = vpop.f32.mrb[0].mxu0
  %v587 = vadd.f32 0.0, %v586
  %v588 = vpop.f32.mrb[0].mxu0
  %v589 = vadd.f32 0.0, %v588
  %590 = vmatprep.mubr.bf16.mxu0 0
  %591 = vmatmul.mubr.bf16.gmra.mrb[0].mxu0 %v122
  %v592 = vpop.f32.mrb[0].mxu0
  %v593 = vadd.f32 0.0, %v592
  %v594 = vpop.f32.mrb[0].mxu0
  %v595 = vadd.f32 0.0, %v594
  %v596 = vpop.f32.mrb[0].mxu0
  %v597 = vadd.f32 0.0, %v596
  %v598 = vpop.f32.mrb[0].mxu0
  %v599 = vadd.f32 0.0, %v598
  %600 = vmatprep.mubr.bf16.mxu0 0
  %601 = vmatmul.mubr.bf16.gmra.mrb[0].mxu0 %v123
  %v602 = vpop.f32.mrb[0].mxu0
  %v603 = vadd.f32 0.0, %v602
  %v604 = vpop.f32.mrb[0].mxu0
  %v605 = vadd.f32 0.0, %v604
  %v606 = vpop.f32.mrb[0].mxu0
  %v607 = vadd.f32 0.0, %v606
  %v608 = vpop.f32.mrb[0].mxu0
  %v609 = vadd.f32 0.0, %v608
  %610 = vmatprep.mubr.bf16.mxu0 0
  %611 = vmatmul.mubr.bf16.gmra.mrb[0].mxu0 %v124
  %v612 = vpop.f32.mrb[0].mxu0
  %v613 = vadd.f32 0.0, %v612
  %v614 = vpop.f32.mrb[0].mxu0
  %v615 = vadd.f32 0.0, %v614
  %v616 = vpop.f32.mrb[0].mxu0
  %v617 = vadd.f32 0.0, %v616
  %v618 = vpop.f32.mrb[0].mxu0
  %v619 = vadd.f32 0.0, %v618
  %620 = vmatprep.mubr.bf16.mxu0 0
  %621 = vmatmul.mubr.bf16.gmra.mrb[0].mxu0 %v125
  %v622 = vpop.f32.mrb[0].mxu0
  %v623 = vadd.f32 0.0, %v622
  %v624 = vpop.f32.mrb[0].mxu0
  %v625 = vadd.f32 0.0, %v624
  %v626 = vpop.f32.mrb[0].mxu0
  %v627 = vadd.f32 0.0, %v626
  %v628 = vpop.f32.mrb[0].mxu0
  %v629 = vadd.f32 0.0, %v628
  %630 = vmatprep.mubr.bf16.mxu0 0
  %631 = vmatmul.mubr.bf16.gmra.mrb[0].mxu0 %v126
  %v632 = vpop.f32.mrb[0].mxu0
  %v633 = vadd.f32 0.0, %v632
  %v634 = vpop.f32.mrb[0].mxu0
  %v635 = vadd.f32 0.0, %v634
  %v636 = vpop.f32.mrb[0].mxu0
  %v637 = vadd.f32 0.0, %v636
  %v638 = vpop.f32.mrb[0].mxu0
  %v639 = vadd.f32 0.0, %v638
  %640 = vmatprep.mubr.bf16.mxu0 0
  %641 = vmatmul.mubr.bf16.gmra.mrb[0].mxu0 %v127
  %v642 = vpop.f32.mrb[0].mxu0
  %v643 = vadd.f32 0.0, %v642
  %v644 = vpop.f32.mrb[0].mxu0
  %v645 = vadd.f32 0.0, %v644
  %v646 = vpop.f32.mrb[0].mxu0
  %v647 = vadd.f32 0.0, %v646
  %v648 = vpop.f32.mrb[0].mxu0
  %v649 = vadd.f32 0.0, %v648
  %650 = vmatprep.mubr.bf16.mxu0 0
  %651 = vmatmul.mubr.bf16.gmra.mrb[0].mxu0 %v128
  %v652 = vpop.f32.mrb[0].mxu0
  %v653 = vadd.f32 0.0, %v652
  %v654 = vpop.f32.mrb[0].mxu0
  %v655 = vadd.f32 0.0, %v654
  %v656 = vpop.f32.mrb[0].mxu0
  %v657 = vadd.f32 0.0, %v656
  %v658 = vpop.f32.mrb[0].mxu0
  %v659 = vadd.f32 0.0, %v658
  %660 = vmatprep.mubr.bf16.mxu0 0
  %661 = vmatmul.mubr.bf16.gmra.mrb[0].mxu0 %v129
  %v662 = vpop.f32.mrb[0].mxu0
  %v663 = vadd.f32 0.0, %v662
  %v664 = vpop.f32.mrb[0].mxu0
  %v665 = vadd.f32 0.0, %v664
  %v666 = vpop.f32.mrb[0].mxu0
  %v667 = vadd.f32 0.0, %v666
  %v668 = vpop.f32.mrb[0].mxu0
  %v669 = vadd.f32 0.0, %v668
  %670 = vmatprep.mubr.bf16.mxu0 0
  %671 = vmatmul.mubr.bf16.gmra.mrb[0].mxu0 %v130
  %v672 = vpop.f32.mrb[0].mxu0
  %v673 = vadd.f32 0.0, %v672
  %v674 = vpop.f32.mrb[0].mxu0
  %v675 = vadd.f32 0.0, %v674
  %v676 = vpop.f32.mrb[0].mxu0
  %v677 = vadd.f32 0.0, %v676
  %v678 = vpop.f32.mrb[0].mxu0
  %v679 = vadd.f32 0.0, %v678
  %680 = vmatprep.mubr.bf16.mxu0 0
  %681 = vmatmul.mubr.bf16.gmra.mrb[0].mxu0 %v131
  %v682 = vpop.f32.mrb[0].mxu0
  %v683 = vadd.f32 0.0, %v682
  %v684 = vpop.f32.mrb[0].mxu0
  %v685 = vadd.f32 0.0, %v684
  %v686 = vpop.f32.mrb[0].mxu0
  %v687 = vadd.f32 0.0, %v686
  %v688 = vpop.f32.mrb[0].mxu0
  %v689 = vadd.f32 0.0, %v688
  %690 = vmatprep.mubr.bf16.mxu0 0
  %691 = vmatmul.mubr.bf16.gmra.mrb[0].mxu0 %v132
  %v692 = vpop.f32.mrb[0].mxu0
  %v693 = vadd.f32 0.0, %v692
  %v694 = vpop.f32.mrb[0].mxu0
  %v695 = vadd.f32 0.0, %v694
  %v696 = vpop.f32.mrb[0].mxu0
  %v697 = vadd.f32 0.0, %v696
  %v698 = vpop.f32.mrb[0].mxu0
  %v699 = vadd.f32 0.0, %v698
  %700 = vmatprep.mubr.bf16.mxu0 0
  %701 = vmatmul.mubr.bf16.gmra.mrb[0].mxu0 %v133
  %v702 = vpop.f32.mrb[0].mxu0
  %v703 = vadd.f32 0.0, %v702
  %v704 = vpop.f32.mrb[0].mxu0
  %v705 = vadd.f32 0.0, %v704
  %v706 = vpop.f32.mrb[0].mxu0
  %v707 = vadd.f32 0.0, %v706
  %v708 = vpop.f32.mrb[0].mxu0
  %v709 = vadd.f32 0.0, %v708
  %710 = vdwg.mxu0
  %711 = vmatprep.subr.bf16.mxu0 %v393
  %712 = vmatpush1.bf16.msra.mxu0 %v392
  %713 = vmatprep.subr.bf16.mxu0 %v401
  %714 = vmatpush1.bf16.msra.mxu0 %v400
  %715 = vmatprep.subr.bf16.mxu0 %v409
  %716 = vmatpush1.bf16.msra.mxu0 %v408
  %717 = vmatprep.subr.bf16.mxu0 %v417
  %718 = vmatpush1.bf16.msra.mxu0 %v416
  %719 = vmatprep.subr.bf16.mxu0 %v425
  %720 = vmatpush1.bf16.msra.mxu0 %v424
  %721 = vmatprep.subr.bf16.mxu0 %v433
  %722 = vmatpush1.bf16.msra.mxu0 %v432
  %723 = vmatprep.subr.bf16.mxu0 %v441
  %724 = vmatpush1.bf16.msra.mxu0 %v440
  %725 = vmatprep.subr.bf16.mxu0 %v449
  %726 = vmatpush1.bf16.msra.mxu0 %v448
  %727 = vmatprep.subr.bf16.mxu0 0
  %728 = vmatpush1.bf16.msra.mxu0 0
  %729 = vmatprep.subr.bf16.mxu0 0
  %730 = vmatpush1.bf16.msra.mxu0 0
  %731 = vmatprep.subr.bf16.mxu0 0
  %732 = vmatpush1.bf16.msra.mxu0 0
  %733 = vmatprep.subr.bf16.mxu0 0
  %734 = vmatpush1.bf16.msra.mxu0 0
  %735 = vmatprep.subr.bf16.mxu0 0
  %736 = vmatpush1.bf16.msra.mxu0 0
  %737 = vmatprep.subr.bf16.mxu0 0
  %738 = vmatpush1.bf16.msra.mxu0 0
  %739 = vmatprep.subr.bf16.mxu0 0
  %740 = vmatpush1.bf16.msra.mxu0 0
  %741 = vmatprep.subr.bf16.mxu0 0
  %742 = vmatpush1.bf16.msra.mxu0 0
  %743 = vmatprep.mubr.bf16.mxu0 0
  %744 = vmatmul.mubr.bf16.gmra.mrb[0].mxu0 %v118
  %v745 = vpop.f32.mrb[0].mxu0
  %v746 = vadd.f32 0.0, %v745
  %v747 = vpop.f32.mrb[0].mxu0
  %v748 = vadd.f32 0.0, %v747
  %v749 = vpop.f32.mrb[0].mxu0
  %v750 = vadd.f32 0.0, %v749
  %v751 = vpop.f32.mrb[0].mxu0
  %v752 = vadd.f32 0.0, %v751
  %753 = vmatprep.mubr.bf16.mxu0 0
  %754 = vmatmul.mubr.bf16.gmra.mrb[0].mxu0 %v119
  %v755 = vpop.f32.mrb[0].mxu0
  %v756 = vadd.f32 0.0, %v755
  %v757 = vpop.f32.mrb[0].mxu0
  %v758 = vadd.f32 0.0, %v757
  %v759 = vpop.f32.mrb[0].mxu0
  %v760 = vadd.f32 0.0, %v759
  %v761 = vpop.f32.mrb[0].mxu0
  %v762 = vadd.f32 0.0, %v761
  %763 = vmatprep.mubr.bf16.mxu0 0
  %764 = vmatmul.mubr.bf16.gmra.mrb[0].mxu0 %v120
  %v765 = vpop.f32.mrb[0].mxu0
  %v766 = vadd.f32 0.0, %v765
  %v767 = vpop.f32.mrb[0].mxu0
  %v768 = vadd.f32 0.0, %v767
  %v769 = vpop.f32.mrb[0].mxu0
  %v770 = vadd.f32 0.0, %v769
  %v771 = vpop.f32.mrb[0].mxu0
  %v772 = vadd.f32 0.0, %v771
  %773 = vmatprep.mubr.bf16.mxu0 0
  %774 = vmatmul.mubr.bf16.gmra.mrb[0].mxu0 %v121
  %v775 = vpop.f32.mrb[0].mxu0
  %v776 = vadd.f32 0.0, %v775
  %v777 = vpop.f32.mrb[0].mxu0
  %v778 = vadd.f32 0.0, %v777
  %v779 = vpop.f32.mrb[0].mxu0
  %v780 = vadd.f32 0.0, %v779
  %v781 = vpop.f32.mrb[0].mxu0
  %v782 = vadd.f32 0.0, %v781
  %783 = vmatprep.mubr.bf16.mxu0 0
  %784 = vmatmul.mubr.bf16.gmra.mrb[0].mxu0 %v122
  %v785 = vpop.f32.mrb[0].mxu0
  %v786 = vadd.f32 0.0, %v785
  %v787 = vpop.f32.mrb[0].mxu0
  %v788 = vadd.f32 0.0, %v787
  %v789 = vpop.f32.mrb[0].mxu0
  %v790 = vadd.f32 0.0, %v789
  %v791 = vpop.f32.mrb[0].mxu0
  %v792 = vadd.f32 0.0, %v791
  %793 = vmatprep.mubr.bf16.mxu0 0
  %794 = vmatmul.mubr.bf16.gmra.mrb[0].mxu0 %v123
  %v795 = vpop.f32.mrb[0].mxu0
  %v796 = vadd.f32 0.0, %v795
  %v797 = vpop.f32.mrb[0].mxu0
  %v798 = vadd.f32 0.0, %v797
  %v799 = vpop.f32.mrb[0].mxu0
  %v800 = vadd.f32 0.0, %v799
  %v801 = vpop.f32.mrb[0].mxu0
  %v802 = vadd.f32 0.0, %v801
  %803 = vmatprep.mubr.bf16.mxu0 0
  %804 = vmatmul.mubr.bf16.gmra.mrb[0].mxu0 %v124
  %v805 = vpop.f32.mrb[0].mxu0
  %v806 = vadd.f32 0.0, %v805
  %v807 = vpop.f32.mrb[0].mxu0
  %v808 = vadd.f32 0.0, %v807
  %v809 = vpop.f32.mrb[0].mxu0
  %v810 = vadd.f32 0.0, %v809
  %v811 = vpop.f32.mrb[0].mxu0
  %v812 = vadd.f32 0.0, %v811
  %813 = vmatprep.mubr.bf16.mxu0 0
  %814 = vmatmul.mubr.bf16.gmra.mrb[0].mxu0 %v125
  %v815 = vpop.f32.mrb[0].mxu0
  %v816 = vadd.f32 0.0, %v815
  %v817 = vpop.f32.mrb[0].mxu0
  %v818 = vadd.f32 0.0, %v817
  %v819 = vpop.f32.mrb[0].mxu0
  %v820 = vadd.f32 0.0, %v819
  %v821 = vpop.f32.mrb[0].mxu0
  %v822 = vadd.f32 0.0, %v821
  %823 = vmatprep.mubr.bf16.mxu0 0
  %824 = vmatmul.mubr.bf16.gmra.mrb[0].mxu0 %v126
  %v825 = vpop.f32.mrb[0].mxu0
  %v826 = vadd.f32 0.0, %v825
  %v827 = vpop.f32.mrb[0].mxu0
  %v828 = vadd.f32 0.0, %v827
  %v829 = vpop.f32.mrb[0].mxu0
  %v830 = vadd.f32 0.0, %v829
  %v831 = vpop.f32.mrb[0].mxu0
  %v832 = vadd.f32 0.0, %v831
  %833 = vmatprep.mubr.bf16.mxu0 0
  %834 = vmatmul.mubr.bf16.gmra.mrb[0].mxu0 %v127
  %v835 = vpop.f32.mrb[0].mxu0
  %v836 = vadd.f32 0.0, %v835
  %v837 = vpop.f32.mrb[0].mxu0
  %v838 = vadd.f32 0.0, %v837
  %v839 = vpop.f32.mrb[0].mxu0
  %v840 = vadd.f32 0.0, %v839
  %v841 = vpop.f32.mrb[0].mxu0
  %v842 = vadd.f32 0.0, %v841
  %843 = vmatprep.mubr.bf16.mxu0 0
  %844 = vmatmul.mubr.bf16.gmra.mrb[0].mxu0 %v128
  %v845 = vpop.f32.mrb[0].mxu0
  %v846 = vadd.f32 0.0, %v845
  %v847 = vpop.f32.mrb[0].mxu0
  %v848 = vadd.f32 0.0, %v847
  %v849 = vpop.f32.mrb[0].mxu0
  %v850 = vadd.f32 0.0, %v849
  %v851 = vpop.f32.mrb[0].mxu0
  %v852 = vadd.f32 0.0, %v851
  %853 = vmatprep.mubr.bf16.mxu0 0
  %854 = vmatmul.mubr.bf16.gmra.mrb[0].mxu0 %v129
  %v855 = vpop.f32.mrb[0].mxu0
  %v856 = vadd.f32 0.0, %v855
  %v857 = vpop.f32.mrb[0].mxu0
  %v858 = vadd.f32 0.0, %v857
  %v859 = vpop.f32.mrb[0].mxu0
  %v860 = vadd.f32 0.0, %v859
  %v861 = vpop.f32.mrb[0].mxu0
  %v862 = vadd.f32 0.0, %v861
  %863 = vmatprep.mubr.bf16.mxu0 0
  %864 = vmatmul.mubr.bf16.gmra.mrb[0].mxu0 %v130
  %v865 = vpop.f32.mrb[0].mxu0
  %v866 = vadd.f32 0.0, %v865
  %v867 = vpop.f32.mrb[0].mxu0
  %v868 = vadd.f32 0.0, %v867
  %v869 = vpop.f32.mrb[0].mxu0
  %v870 = vadd.f32 0.0, %v869
  %v871 = vpop.f32.mrb[0].mxu0
  %v872 = vadd.f32 0.0, %v871
  %873 = vmatprep.mubr.bf16.mxu0 0
  %874 = vmatmul.mubr.bf16.gmra.mrb[0].mxu0 %v131
  %v875 = vpop.f32.mrb[0].mxu0
  %v876 = vadd.f32 0.0, %v875
  %v877 = vpop.f32.mrb[0].mxu0
  %v878 = vadd.f32 0.0, %v877
  %v879 = vpop.f32.mrb[0].mxu0
  %v880 = vadd.f32 0.0, %v879
  %v881 = vpop.f32.mrb[0].mxu0
  %v882 = vadd.f32 0.0, %v881
  %883 = vmatprep.mubr.bf16.mxu0 0
  %884 = vmatmul.mubr.bf16.gmra.mrb[0].mxu0 %v132
  %v885 = vpop.f32.mrb[0].mxu0
  %v886 = vadd.f32 0.0, %v885
  %v887 = vpop.f32.mrb[0].mxu0
  %v888 = vadd.f32 0.0, %v887
  %v889 = vpop.f32.mrb[0].mxu0
  %v890 = vadd.f32 0.0, %v889
  %v891 = vpop.f32.mrb[0].mxu0
  %v892 = vadd.f32 0.0, %v891
  %893 = vmatprep.mubr.bf16.mxu0 0
  %894 = vmatmul.mubr.bf16.gmra.mrb[0].mxu0 %v133
  %v895 = vpop.f32.mrb[0].mxu0
  %v896 = vadd.f32 0.0, %v895
  %v897 = vpop.f32.mrb[0].mxu0
  %v898 = vadd.f32 0.0, %v897
  %v899 = vpop.f32.mrb[0].mxu0
  %v900 = vadd.f32 0.0, %v899
  %v901 = vpop.f32.mrb[0].mxu0
  %v902 = vadd.f32 0.0, %v901
  %903 = vdwg.mxu0
  %904 = vmatprep.subr.bf16.mxu0 %v395
  %905 = vmatpush1.bf16.msra.mxu0 %v394
  %906 = vmatprep.subr.bf16.mxu0 %v403
  %907 = vmatpush1.bf16.msra.mxu0 %v402
  %908 = vmatprep.subr.bf16.mxu0 %v411
  %909 = vmatpush1.bf16.msra.mxu0 %v410
  %910 = vmatprep.subr.bf16.mxu0 %v419
  %911 = vmatpush1.bf16.msra.mxu0 %v418
  %912 = vmatprep.subr.bf16.mxu0 %v427
  %913 = vmatpush1.bf16.msra.mxu0 %v426
  %914 = vmatprep.subr.bf16.mxu0 %v435
  %915 = vmatpush1.bf16.msra.mxu0 %v434
  %916 = vmatprep.subr.bf16.mxu0 %v443
  %917 = vmatpush1.bf16.msra.mxu0 %v442
  %918 = vmatprep.subr.bf16.mxu0 %v451
  %919 = vmatpush1.bf16.msra.mxu0 %v450
  %920 = vmatprep.subr.bf16.mxu0 0
  %921 = vmatpush1.bf16.msra.mxu0 0
  %922 = vmatprep.subr.bf16.mxu0 0
  %923 = vmatpush1.bf16.msra.mxu0 0
  %924 = vmatprep.subr.bf16.mxu0 0
  %925 = vmatpush1.bf16.msra.mxu0 0
  %926 = vmatprep.subr.bf16.mxu0 0
  %927 = vmatpush1.bf16.msra.mxu0 0
  %928 = vmatprep.subr.bf16.mxu0 0
  %929 = vmatpush1.bf16.msra.mxu0 0
  %930 = vmatprep.subr.bf16.mxu0 0
  %931 = vmatpush1.bf16.msra.mxu0 0
  %932 = vmatprep.subr.bf16.mxu0 0
  %933 = vmatpush1.bf16.msra.mxu0 0
  %934 = vmatprep.subr.bf16.mxu0 0
  %935 = vmatpush1.bf16.msra.mxu0 0
  %936 = vmatprep.mubr.bf16.mxu0 0
  %937 = vmatmul.mubr.bf16.gmra.mrb[0].mxu0 %v118
  %v938 = vpop.f32.mrb[0].mxu0
  %v939 = vadd.f32 0.0, %v938
  %v940 = vpop.f32.mrb[0].mxu0
  %v941 = vadd.f32 0.0, %v940
  %v942 = vpop.f32.mrb[0].mxu0
  %v943 = vadd.f32 0.0, %v942
  %v944 = vpop.f32.mrb[0].mxu0
  %v945 = vadd.f32 0.0, %v944
  %946 = vmatprep.mubr.bf16.mxu0 0
  %947 = vmatmul.mubr.bf16.gmra.mrb[0].mxu0 %v119
  %v948 = vpop.f32.mrb[0].mxu0
  %v949 = vadd.f32 0.0, %v948
  %v950 = vpop.f32.mrb[0].mxu0
  %v951 = vadd.f32 0.0, %v950
  %v952 = vpop.f32.mrb[0].mxu0
  %v953 = vadd.f32 0.0, %v952
  %v954 = vpop.f32.mrb[0].mxu0
  %v955 = vadd.f32 0.0, %v954
  %956 = vmatprep.mubr.bf16.mxu0 0
  %957 = vmatmul.mubr.bf16.gmra.mrb[0].mxu0 %v120
  %v958 = vpop.f32.mrb[0].mxu0
  %v959 = vadd.f32 0.0, %v958
  %v960 = vpop.f32.mrb[0].mxu0
  %v961 = vadd.f32 0.0, %v960
  %v962 = vpop.f32.mrb[0].mxu0
  %v963 = vadd.f32 0.0, %v962
  %v964 = vpop.f32.mrb[0].mxu0
  %v965 = vadd.f32 0.0, %v964
  %966 = vmatprep.mubr.bf16.mxu0 0
  %967 = vmatmul.mubr.bf16.gmra.mrb[0].mxu0 %v121
  %v968 = vpop.f32.mrb[0].mxu0
  %v969 = vadd.f32 0.0, %v968
  %v970 = vpop.f32.mrb[0].mxu0
  %v971 = vadd.f32 0.0, %v970
  %v972 = vpop.f32.mrb[0].mxu0
  %v973 = vadd.f32 0.0, %v972
  %v974 = vpop.f32.mrb[0].mxu0
  %v975 = vadd.f32 0.0, %v974
  %976 = vmatprep.mubr.bf16.mxu0 0
  %977 = vmatmul.mubr.bf16.gmra.mrb[0].mxu0 %v122
  %v978 = vpop.f32.mrb[0].mxu0
  %v979 = vadd.f32 0.0, %v978
  %v980 = vpop.f32.mrb[0].mxu0
  %v981 = vadd.f32 0.0, %v980
  %v982 = vpop.f32.mrb[0].mxu0
  %v983 = vadd.f32 0.0, %v982
  %v984 = vpop.f32.mrb[0].mxu0
  %v985 = vadd.f32 0.0, %v984
  %986 = vmatprep.mubr.bf16.mxu0 0
  %987 = vmatmul.mubr.bf16.gmra.mrb[0].mxu0 %v123
  %v988 = vpop.f32.mrb[0].mxu0
  %v989 = vadd.f32 0.0, %v988
  %v990 = vpop.f32.mrb[0].mxu0
  %v991 = vadd.f32 0.0, %v990
  %v992 = vpop.f32.mrb[0].mxu0
  %v993 = vadd.f32 0.0, %v992
  %v994 = vpop.f32.mrb[0].mxu0
  %v995 = vadd.f32 0.0, %v994
  %996 = vmatprep.mubr.bf16.mxu0 0
  %997 = vmatmul.mubr.bf16.gmra.mrb[0].mxu0 %v124
  %v998 = vpop.f32.mrb[0].mxu0
  %v999 = vadd.f32 0.0, %v998
  %v1000 = vpop.f32.mrb[0].mxu0
  %v1001 = vadd.f32 0.0, %v1000
  %v1002 = vpop.f32.mrb[0].mxu0
  %v1003 = vadd.f32 0.0, %v1002
  %v1004 = vpop.f32.mrb[0].mxu0
  %v1005 = vadd.f32 0.0, %v1004
  %1006 = vmatprep.mubr.bf16.mxu0 0
  %1007 = vmatmul.mubr.bf16.gmra.mrb[0].mxu0 %v125
  %v1008 = vpop.f32.mrb[0].mxu0
  %v1009 = vadd.f32 0.0, %v1008
  %v1010 = vpop.f32.mrb[0].mxu0
  %v1011 = vadd.f32 0.0, %v1010
  %v1012 = vpop.f32.mrb[0].mxu0
  %v1013 = vadd.f32 0.0, %v1012
  %v1014 = vpop.f32.mrb[0].mxu0
  %v1015 = vadd.f32 0.0, %v1014
  %1016 = vmatprep.mubr.bf16.mxu0 0
  %1017 = vmatmul.mubr.bf16.gmra.mrb[0].mxu0 %v126
  %v1018 = vpop.f32.mrb[0].mxu0
  %v1019 = vadd.f32 0.0, %v1018
  %v1020 = vpop.f32.mrb[0].mxu0
  %v1021 = vadd.f32 0.0, %v1020
  %v1022 = vpop.f32.mrb[0].mxu0
  %v1023 = vadd.f32 0.0, %v1022
  %v1024 = vpop.f32.mrb[0].mxu0
  %v1025 = vadd.f32 0.0, %v1024
  %1026 = vmatprep.mubr.bf16.mxu0 0
  %1027 = vmatmul.mubr.bf16.gmra.mrb[0].mxu0 %v127
  %v1028 = vpop.f32.mrb[0].mxu0
  %v1029 = vadd.f32 0.0, %v1028
  %v1030 = vpop.f32.mrb[0].mxu0
  %v1031 = vadd.f32 0.0, %v1030
  %v1032 = vpop.f32.mrb[0].mxu0
  %v1033 = vadd.f32 0.0, %v1032
  %v1034 = vpop.f32.mrb[0].mxu0
  %v1035 = vadd.f32 0.0, %v1034
  %1036 = vmatprep.mubr.bf16.mxu0 0
  %1037 = vmatmul.mubr.bf16.gmra.mrb[0].mxu0 %v128
  %v1038 = vpop.f32.mrb[0].mxu0
  %v1039 = vadd.f32 0.0, %v1038
  %v1040 = vpop.f32.mrb[0].mxu0
  %v1041 = vadd.f32 0.0, %v1040
  %v1042 = vpop.f32.mrb[0].mxu0
  %v1043 = vadd.f32 0.0, %v1042
  %v1044 = vpop.f32.mrb[0].mxu0
  %v1045 = vadd.f32 0.0, %v1044
  %1046 = vmatprep.mubr.bf16.mxu0 0
  %1047 = vmatmul.mubr.bf16.gmra.mrb[0].mxu0 %v129
  %v1048 = vpop.f32.mrb[0].mxu0
  %v1049 = vadd.f32 0.0, %v1048
  %v1050 = vpop.f32.mrb[0].mxu0
  %v1051 = vadd.f32 0.0, %v1050
  %v1052 = vpop.f32.mrb[0].mxu0
  %v1053 = vadd.f32 0.0, %v1052
  %v1054 = vpop.f32.mrb[0].mxu0
  %v1055 = vadd.f32 0.0, %v1054
  %1056 = vmatprep.mubr.bf16.mxu0 0
  %1057 = vmatmul.mubr.bf16.gmra.mrb[0].mxu0 %v130
  %v1058 = vpop.f32.mrb[0].mxu0
  %v1059 = vadd.f32 0.0, %v1058
  %v1060 = vpop.f32.mrb[0].mxu0
  %v1061 = vadd.f32 0.0, %v1060
  %v1062 = vpop.f32.mrb[0].mxu0
  %v1063 = vadd.f32 0.0, %v1062
  %v1064 = vpop.f32.mrb[0].mxu0
  %v1065 = vadd.f32 0.0, %v1064
  %1066 = vmatprep.mubr.bf16.mxu0 0
  %1067 = vmatmul.mubr.bf16.gmra.mrb[0].mxu0 %v131
  %v1068 = vpop.f32.mrb[0].mxu0
  %v1069 = vadd.f32 0.0, %v1068
  %v1070 = vpop.f32.mrb[0].mxu0
  %v1071 = vadd.f32 0.0, %v1070
  %v1072 = vpop.f32.mrb[0].mxu0
  %v1073 = vadd.f32 0.0, %v1072
  %v1074 = vpop.f32.mrb[0].mxu0
  %v1075 = vadd.f32 0.0, %v1074
  %1076 = vmatprep.mubr.bf16.mxu0 0
  %1077 = vmatmul.mubr.bf16.gmra.mrb[0].mxu0 %v132
  %v1078 = vpop.f32.mrb[0].mxu0
  %v1079 = vadd.f32 0.0, %v1078
  %v1080 = vpop.f32.mrb[0].mxu0
  %v1081 = vadd.f32 0.0, %v1080
  %v1082 = vpop.f32.mrb[0].mxu0
  %v1083 = vadd.f32 0.0, %v1082
  %v1084 = vpop.f32.mrb[0].mxu0
  %v1085 = vadd.f32 0.0, %v1084
  %1086 = vmatprep.mubr.bf16.mxu0 0
  %1087 = vmatmul.mubr.bf16.gmra.mrb[0].mxu0 %v133
  %v1088 = vpop.f32.mrb[0].mxu0
  %v1089 = vadd.f32 0.0, %v1088
  %v1090 = vpop.f32.mrb[0].mxu0
  %v1091 = vadd.f32 0.0, %v1090
  %v1092 = vpop.f32.mrb[0].mxu0
  %v1093 = vadd.f32 0.0, %v1092
  %v1094 = vpop.f32.mrb[0].mxu0
  %v1095 = vadd.f32 0.0, %v1094
  %1096 = vdwg.mxu0
  %1097 = vmatprep.subr.bf16.mxu0 %v397
  %1098 = vmatpush1.bf16.msra.mxu0 %v396
  %1099 = vmatprep.subr.bf16.mxu0 %v405
  %1100 = vmatpush1.bf16.msra.mxu0 %v404
  %1101 = vmatprep.subr.bf16.mxu0 %v413
  %1102 = vmatpush1.bf16.msra.mxu0 %v412
  %1103 = vmatprep.subr.bf16.mxu0 %v421
  %1104 = vmatpush1.bf16.msra.mxu0 %v420
  %1105 = vmatprep.subr.bf16.mxu0 %v429
  %1106 = vmatpush1.bf16.msra.mxu0 %v428
  %1107 = vmatprep.subr.bf16.mxu0 %v437
  %1108 = vmatpush1.bf16.msra.mxu0 %v436
  %1109 = vmatprep.subr.bf16.mxu0 %v445
  %1110 = vmatpush1.bf16.msra.mxu0 %v444
  %1111 = vmatprep.subr.bf16.mxu0 %v453
  %1112 = vmatpush1.bf16.msra.mxu0 %v452
  %1113 = vmatprep.subr.bf16.mxu0 0
  %1114 = vmatpush1.bf16.msra.mxu0 0
  %1115 = vmatprep.subr.bf16.mxu0 0
  %1116 = vmatpush1.bf16.msra.mxu0 0
  %1117 = vmatprep.subr.bf16.mxu0 0
  %1118 = vmatpush1.bf16.msra.mxu0 0
  %1119 = vmatprep.subr.bf16.mxu0 0
  %1120 = vmatpush1.bf16.msra.mxu0 0
  %1121 = vmatprep.subr.bf16.mxu0 0
  %1122 = vmatpush1.bf16.msra.mxu0 0
  %1123 = vmatprep.subr.bf16.mxu0 0
  %1124 = vmatpush1.bf16.msra.mxu0 0
  %1125 = vmatprep.subr.bf16.mxu0 0
  %1126 = vmatpush1.bf16.msra.mxu0 0
  %1127 = vmatprep.subr.bf16.mxu0 0
  %1128 = vmatpush1.bf16.msra.mxu0 0
  %1129 = vmatprep.mubr.bf16.mxu0 0
  %1130 = vmatmul.mubr.bf16.gmra.mrb[0].mxu0 %v118
  %v1131 = vpop.f32.mrb[0].mxu0
  %v1132 = vadd.f32 0.0, %v1131
  %v1133 = vpop.f32.mrb[0].mxu0
  %v1134 = vadd.f32 0.0, %v1133
  %v1135 = vpop.f32.mrb[0].mxu0
  %v1136 = vadd.f32 0.0, %v1135
  %v1137 = vpop.f32.mrb[0].mxu0
  %v1138 = vadd.f32 0.0, %v1137
  %1139 = vmatprep.mubr.bf16.mxu0 0
  %1140 = vmatmul.mubr.bf16.gmra.mrb[0].mxu0 %v119
  %v1141 = vpop.f32.mrb[0].mxu0
  %v1142 = vadd.f32 0.0, %v1141
  %v1143 = vpop.f32.mrb[0].mxu0
  %v1144 = vadd.f32 0.0, %v1143
  %v1145 = vpop.f32.mrb[0].mxu0
  %v1146 = vadd.f32 0.0, %v1145
  %v1147 = vpop.f32.mrb[0].mxu0
  %v1148 = vadd.f32 0.0, %v1147
  %1149 = vmatprep.mubr.bf16.mxu0 0
  %1150 = vmatmul.mubr.bf16.gmra.mrb[0].mxu0 %v120
  %v1151 = vpop.f32.mrb[0].mxu0
  %v1152 = vadd.f32 0.0, %v1151
  %v1153 = vpop.f32.mrb[0].mxu0
  %v1154 = vadd.f32 0.0, %v1153
  %v1155 = vpop.f32.mrb[0].mxu0
  %v1156 = vadd.f32 0.0, %v1155
  %v1157 = vpop.f32.mrb[0].mxu0
  %v1158 = vadd.f32 0.0, %v1157
  %1159 = vmatprep.mubr.bf16.mxu0 0
  %1160 = vmatmul.mubr.bf16.gmra.mrb[0].mxu0 %v121
  %v1161 = vpop.f32.mrb[0].mxu0
  %v1162 = vadd.f32 0.0, %v1161
  %v1163 = vpop.f32.mrb[0].mxu0
  %v1164 = vadd.f32 0.0, %v1163
  %v1165 = vpop.f32.mrb[0].mxu0
  %v1166 = vadd.f32 0.0, %v1165
  %v1167 = vpop.f32.mrb[0].mxu0
  %v1168 = vadd.f32 0.0, %v1167
  %1169 = vmatprep.mubr.bf16.mxu0 0
  %1170 = vmatmul.mubr.bf16.gmra.mrb[0].mxu0 %v122
  %v1171 = vpop.f32.mrb[0].mxu0
  %v1172 = vadd.f32 0.0, %v1171
  %v1173 = vpop.f32.mrb[0].mxu0
  %v1174 = vadd.f32 0.0, %v1173
  %v1175 = vpop.f32.mrb[0].mxu0
  %v1176 = vadd.f32 0.0, %v1175
  %v1177 = vpop.f32.mrb[0].mxu0
  %v1178 = vadd.f32 0.0, %v1177
  %1179 = vmatprep.mubr.bf16.mxu0 0
  %1180 = vmatmul.mubr.bf16.gmra.mrb[0].mxu0 %v123
  %v1181 = vpop.f32.mrb[0].mxu0
  %v1182 = vadd.f32 0.0, %v1181
  %v1183 = vpop.f32.mrb[0].mxu0
  %v1184 = vadd.f32 0.0, %v1183
  %v1185 = vpop.f32.mrb[0].mxu0
  %v1186 = vadd.f32 0.0, %v1185
  %v1187 = vpop.f32.mrb[0].mxu0
  %v1188 = vadd.f32 0.0, %v1187
  %1189 = vmatprep.mubr.bf16.mxu0 0
  %1190 = vmatmul.mubr.bf16.gmra.mrb[0].mxu0 %v124
  %v1191 = vpop.f32.mrb[0].mxu0
  %v1192 = vadd.f32 0.0, %v1191
  %v1193 = vpop.f32.mrb[0].mxu0
  %v1194 = vadd.f32 0.0, %v1193
  %v1195 = vpop.f32.mrb[0].mxu0
  %v1196 = vadd.f32 0.0, %v1195
  %v1197 = vpop.f32.mrb[0].mxu0
  %v1198 = vadd.f32 0.0, %v1197
  %1199 = vmatprep.mubr.bf16.mxu0 0
  %1200 = vmatmul.mubr.bf16.gmra.mrb[0].mxu0 %v125
  %v1201 = vpop.f32.mrb[0].mxu0
  %v1202 = vadd.f32 0.0, %v1201
  %v1203 = vpop.f32.mrb[0].mxu0
  %v1204 = vadd.f32 0.0, %v1203
  %v1205 = vpop.f32.mrb[0].mxu0
  %v1206 = vadd.f32 0.0, %v1205
  %v1207 = vpop.f32.mrb[0].mxu0
  %v1208 = vadd.f32 0.0, %v1207
  %1209 = vmatprep.mubr.bf16.mxu0 0
  %1210 = vmatmul.mubr.bf16.gmra.mrb[0].mxu0 %v126
  %v1211 = vpop.f32.mrb[0].mxu0
  %v1212 = vadd.f32 0.0, %v1211
  %v1213 = vpop.f32.mrb[0].mxu0
  %v1214 = vadd.f32 0.0, %v1213
  %v1215 = vpop.f32.mrb[0].mxu0
  %v1216 = vadd.f32 0.0, %v1215
  %v1217 = vpop.f32.mrb[0].mxu0
  %v1218 = vadd.f32 0.0, %v1217
  %1219 = vmatprep.mubr.bf16.mxu0 0
  %1220 = vmatmul.mubr.bf16.gmra.mrb[0].mxu0 %v127
  %v1221 = vpop.f32.mrb[0].mxu0
  %v1222 = vadd.f32 0.0, %v1221
  %v1223 = vpop.f32.mrb[0].mxu0
  %v1224 = vadd.f32 0.0, %v1223
  %v1225 = vpop.f32.mrb[0].mxu0
  %v1226 = vadd.f32 0.0, %v1225
  %v1227 = vpop.f32.mrb[0].mxu0
  %v1228 = vadd.f32 0.0, %v1227
  %1229 = vmatprep.mubr.bf16.mxu0 0
  %1230 = vmatmul.mubr.bf16.gmra.mrb[0].mxu0 %v128
  %v1231 = vpop.f32.mrb[0].mxu0
  %v1232 = vadd.f32 0.0, %v1231
  %v1233 = vpop.f32.mrb[0].mxu0
  %v1234 = vadd.f32 0.0, %v1233
  %v1235 = vpop.f32.mrb[0].mxu0
  %v1236 = vadd.f32 0.0, %v1235
  %v1237 = vpop.f32.mrb[0].mxu0
  %v1238 = vadd.f32 0.0, %v1237
  %1239 = vmatprep.mubr.bf16.mxu0 0
  %1240 = vmatmul.mubr.bf16.gmra.mrb[0].mxu0 %v129
  %v1241 = vpop.f32.mrb[0].mxu0
  %v1242 = vadd.f32 0.0, %v1241
  %v1243 = vpop.f32.mrb[0].mxu0
  %v1244 = vadd.f32 0.0, %v1243
  %v1245 = vpop.f32.mrb[0].mxu0
  %v1246 = vadd.f32 0.0, %v1245
  %v1247 = vpop.f32.mrb[0].mxu0
  %v1248 = vadd.f32 0.0, %v1247
  %1249 = vmatprep.mubr.bf16.mxu0 0
  %1250 = vmatmul.mubr.bf16.gmra.mrb[0].mxu0 %v130
  %v1251 = vpop.f32.mrb[0].mxu0
  %v1252 = vadd.f32 0.0, %v1251
  %v1253 = vpop.f32.mrb[0].mxu0
  %v1254 = vadd.f32 0.0, %v1253
  %v1255 = vpop.f32.mrb[0].mxu0
  %v1256 = vadd.f32 0.0, %v1255
  %v1257 = vpop.f32.mrb[0].mxu0
  %v1258 = vadd.f32 0.0, %v1257
  %1259 = vmatprep.mubr.bf16.mxu0 0
  %1260 = vmatmul.mubr.bf16.gmra.mrb[0].mxu0 %v131
  %v1261 = vpop.f32.mrb[0].mxu0
  %v1262 = vadd.f32 0.0, %v1261
  %v1263 = vpop.f32.mrb[0].mxu0
  %v1264 = vadd.f32 0.0, %v1263
  %v1265 = vpop.f32.mrb[0].mxu0
  %v1266 = vadd.f32 0.0, %v1265
  %v1267 = vpop.f32.mrb[0].mxu0
  %v1268 = vadd.f32 0.0, %v1267
  %1269 = vmatprep.mubr.bf16.mxu0 0
  %1270 = vmatmul.mubr.bf16.gmra.mrb[0].mxu0 %v132
  %v1271 = vpop.f32.mrb[0].mxu0
  %v1272 = vadd.f32 0.0, %v1271
  %v1273 = vpop.f32.mrb[0].mxu0
  %v1274 = vadd.f32 0.0, %v1273
  %v1275 = vpop.f32.mrb[0].mxu0
  %v1276 = vadd.f32 0.0, %v1275
  %v1277 = vpop.f32.mrb[0].mxu0
  %v1278 = vadd.f32 0.0, %v1277
  %1279 = vmatprep.mubr.bf16.mxu0 0
  %1280 = vmatmul.mubr.bf16.gmra.mrb[0].mxu0 %v133
  %v1281 = vpop.f32.mrb[0].mxu0
  %v1282 = vadd.f32 0.0, %v1281
  %v1283 = vpop.f32.mrb[0].mxu0
  %v1284 = vadd.f32 0.0, %v1283
  %v1285 = vpop.f32.mrb[0].mxu0
  %v1286 = vadd.f32 0.0, %v1285
  %v1287 = vpop.f32.mrb[0].mxu0
  %v1288 = vadd.f32 0.0, %v1287
  %1289 = vdwg.mxu0
  %v1290 = vpack.c.bf16 %v557, %v553
  %v1291 = vpack.c.bf16 %v559, %v555
  %v1292 = vpack.c.bf16 %v750, %v746
  %v1293 = vpack.c.bf16 %v752, %v748
  %v1294 = vpack.c.bf16 %v943, %v939
  %v1295 = vpack.c.bf16 %v945, %v941
  %v1296 = vpack.c.bf16 %v1136, %v1132
  %v1297 = vpack.c.bf16 %v1138, %v1134
  %v1298 = vpack.c.bf16 %v567, %v563
  %v1299 = vpack.c.bf16 %v569, %v565
  %v1300 = vpack.c.bf16 %v760, %v756
  %v1301 = vpack.c.bf16 %v762, %v758
  %v1302 = vpack.c.bf16 %v953, %v949
  %v1303 = vpack.c.bf16 %v955, %v951
  %v1304 = vpack.c.bf16 %v1146, %v1142
  %v1305 = vpack.c.bf16 %v1148, %v1144
  %v1306 = vpack.c.bf16 %v577, %v573
  %v1307 = vpack.c.bf16 %v579, %v575
  %v1308 = vpack.c.bf16 %v770, %v766
  %v1309 = vpack.c.bf16 %v772, %v768
  %v1310 = vpack.c.bf16 %v963, %v959
  %v1311 = vpack.c.bf16 %v965, %v961
  %v1312 = vpack.c.bf16 %v1156, %v1152
  %v1313 = vpack.c.bf16 %v1158, %v1154
  %v1314 = vpack.c.bf16 %v587, %v583
  %v1315 = vpack.c.bf16 %v589, %v585
  %v1316 = vpack.c.bf16 %v780, %v776
  %v1317 = vpack.c.bf16 %v782, %v778
  %v1318 = vpack.c.bf16 %v973, %v969
  %v1319 = vpack.c.bf16 %v975, %v971
  %v1320 = vpack.c.bf16 %v1166, %v1162
  %v1321 = vpack.c.bf16 %v1168, %v1164
  %v1322 = vpack.c.bf16 %v597, %v593
  %v1323 = vpack.c.bf16 %v599, %v595
  %v1324 = vpack.c.bf16 %v790, %v786
  %v1325 = vpack.c.bf16 %v792, %v788
  %v1326 = vpack.c.bf16 %v983, %v979
  %v1327 = vpack.c.bf16 %v985, %v981
  %v1328 = vpack.c.bf16 %v1176, %v1172
  %v1329 = vpack.c.bf16 %v1178, %v1174
  %v1330 = vpack.c.bf16 %v607, %v603
  %v1331 = vpack.c.bf16 %v609, %v605
  %v1332 = vpack.c.bf16 %v800, %v796
  %v1333 = vpack.c.bf16 %v802, %v798
  %v1334 = vpack.c.bf16 %v993, %v989
  %v1335 = vpack.c.bf16 %v995, %v991
  %v1336 = vpack.c.bf16 %v1186, %v1182
  %v1337 = vpack.c.bf16 %v1188, %v1184
  %v1338 = vpack.c.bf16 %v617, %v613
  %v1339 = vpack.c.bf16 %v619, %v615
  %v1340 = vpack.c.bf16 %v810, %v806
  %v1341 = vpack.c.bf16 %v812, %v808
  %v1342 = vpack.c.bf16 %v1003, %v999
  %v1343 = vpack.c.bf16 %v1005, %v1001
  %v1344 = vpack.c.bf16 %v1196, %v1192
  %v1345 = vpack.c.bf16 %v1198, %v1194
  %v1346 = vpack.c.bf16 %v627, %v623
  %v1347 = vpack.c.bf16 %v629, %v625
  %v1348 = vpack.c.bf16 %v820, %v816
  %v1349 = vpack.c.bf16 %v822, %v818
  %v1350 = vpack.c.bf16 %v1013, %v1009
  %v1351 = vpack.c.bf16 %v1015, %v1011
  %v1352 = vpack.c.bf16 %v1206, %v1202
  %v1353 = vpack.c.bf16 %v1208, %v1204
  %v1354 = vpack.c.bf16 %v637, %v633
  %v1355 = vpack.c.bf16 %v639, %v635
  %v1356 = vpack.c.bf16 %v830, %v826
  %v1357 = vpack.c.bf16 %v832, %v828
  %v1358 = vpack.c.bf16 %v1023, %v1019
  %v1359 = vpack.c.bf16 %v1025, %v1021
  %v1360 = vpack.c.bf16 %v1216, %v1212
  %v1361 = vpack.c.bf16 %v1218, %v1214
  %v1362 = vpack.c.bf16 %v647, %v643
  %v1363 = vpack.c.bf16 %v649, %v645
  %v1364 = vpack.c.bf16 %v840, %v836
  %v1365 = vpack.c.bf16 %v842, %v838
  %v1366 = vpack.c.bf16 %v1033, %v1029
  %v1367 = vpack.c.bf16 %v1035, %v1031
  %v1368 = vpack.c.bf16 %v1226, %v1222
  %v1369 = vpack.c.bf16 %v1228, %v1224
  %v1370 = vpack.c.bf16 %v657, %v653
  %v1371 = vpack.c.bf16 %v659, %v655
  %v1372 = vpack.c.bf16 %v850, %v846
  %v1373 = vpack.c.bf16 %v852, %v848
  %v1374 = vpack.c.bf16 %v1043, %v1039
  %v1375 = vpack.c.bf16 %v1045, %v1041
  %v1376 = vpack.c.bf16 %v1236, %v1232
  %v1377 = vpack.c.bf16 %v1238, %v1234
  %v1378 = vpack.c.bf16 %v667, %v663
  %v1379 = vpack.c.bf16 %v669, %v665
  %v1380 = vpack.c.bf16 %v860, %v856
  %v1381 = vpack.c.bf16 %v862, %v858
  %v1382 = vpack.c.bf16 %v1053, %v1049
  %v1383 = vpack.c.bf16 %v1055, %v1051
  %v1384 = vpack.c.bf16 %v1246, %v1242
  %v1385 = vpack.c.bf16 %v1248, %v1244
  %v1386 = vpack.c.bf16 %v677, %v673
  %v1387 = vpack.c.bf16 %v679, %v675
  %v1388 = vpack.c.bf16 %v870, %v866
  %v1389 = vpack.c.bf16 %v872, %v868
  %v1390 = vpack.c.bf16 %v1063, %v1059
  %v1391 = vpack.c.bf16 %v1065, %v1061
  %v1392 = vpack.c.bf16 %v1256, %v1252
  %v1393 = vpack.c.bf16 %v1258, %v1254
  %v1394 = vpack.c.bf16 %v687, %v683
  %v1395 = vpack.c.bf16 %v689, %v685
  %v1396 = vpack.c.bf16 %v880, %v876
  %v1397 = vpack.c.bf16 %v882, %v878
  %v1398 = vpack.c.bf16 %v1073, %v1069
  %v1399 = vpack.c.bf16 %v1075, %v1071
  %v1400 = vpack.c.bf16 %v1266, %v1262
  %v1401 = vpack.c.bf16 %v1268, %v1264
  %v1402 = vpack.c.bf16 %v697, %v693
  %v1403 = vpack.c.bf16 %v699, %v695
  %v1404 = vpack.c.bf16 %v890, %v886
  %v1405 = vpack.c.bf16 %v892, %v888
  %v1406 = vpack.c.bf16 %v1083, %v1079
  %v1407 = vpack.c.bf16 %v1085, %v1081
  %v1408 = vpack.c.bf16 %v1276, %v1272
  %v1409 = vpack.c.bf16 %v1278, %v1274
  %v1410 = vpack.c.bf16 %v707, %v703
  %v1411 = vpack.c.bf16 %v709, %v705
  %v1412 = vpack.c.bf16 %v900, %v896
  %v1413 = vpack.c.bf16 %v902, %v898
  %v1414 = vpack.c.bf16 %v1093, %v1089
  %v1415 = vpack.c.bf16 %v1095, %v1091
  %v1416 = vpack.c.bf16 %v1286, %v1282
  %v1417 = vpack.c.bf16 %v1288, %v1284
  %v1546 = vunpack.c.l.b16 %v1290
  %v1547 = vunpack.c.l.b16 %v1291
  %v1548 = vunpack.c.l.b16 %v1292
  %v1549 = vunpack.c.l.b16 %v1293
  %v1550 = vunpack.c.l.b16 %v1294
  %v1551 = vunpack.c.l.b16 %v1295
  %v1552 = vunpack.c.l.b16 %v1296
  %v1553 = vunpack.c.l.b16 %v1297
  %v1554 = vunpack.c.h.b16 %v1290
  %v1555 = vunpack.c.h.b16 %v1291
  %v1556 = vunpack.c.h.b16 %v1292
  %v1557 = vunpack.c.h.b16 %v1293
  %v1558 = vunpack.c.h.b16 %v1294
  %v1559 = vunpack.c.h.b16 %v1295
  %v1560 = vunpack.c.h.b16 %v1296
  %v1561 = vunpack.c.h.b16 %v1297
  %v1562 = vunpack.c.l.b16 %v1298
  %v1563 = vunpack.c.l.b16 %v1299
  %v1564 = vunpack.c.l.b16 %v1300
  %v1565 = vunpack.c.l.b16 %v1301
  %v1566 = vunpack.c.l.b16 %v1302
  %v1567 = vunpack.c.l.b16 %v1303
  %v1568 = vunpack.c.l.b16 %v1304
  %v1569 = vunpack.c.l.b16 %v1305
  %v1570 = vunpack.c.h.b16 %v1298
  %v1571 = vunpack.c.h.b16 %v1299
  %v1572 = vunpack.c.h.b16 %v1300
  %v1573 = vunpack.c.h.b16 %v1301
  %v1574 = vunpack.c.h.b16 %v1302
  %v1575 = vunpack.c.h.b16 %v1303
  %v1576 = vunpack.c.h.b16 %v1304
  %v1577 = vunpack.c.h.b16 %v1305
  %v1578 = vunpack.c.l.b16 %v1306
  %v1579 = vunpack.c.l.b16 %v1307
  %v1580 = vunpack.c.l.b16 %v1308
  %v1581 = vunpack.c.l.b16 %v1309
  %v1582 = vunpack.c.l.b16 %v1310
  %v1583 = vunpack.c.l.b16 %v1311
  %v1584 = vunpack.c.l.b16 %v1312
  %v1585 = vunpack.c.l.b16 %v1313
  %v1586 = vunpack.c.h.b16 %v1306
  %v1587 = vunpack.c.h.b16 %v1307
  %v1588 = vunpack.c.h.b16 %v1308
  %v1589 = vunpack.c.h.b16 %v1309
  %v1590 = vunpack.c.h.b16 %v1310
  %v1591 = vunpack.c.h.b16 %v1311
  %v1592 = vunpack.c.h.b16 %v1312
  %v1593 = vunpack.c.h.b16 %v1313
  %v1594 = vunpack.c.l.b16 %v1314
  %v1595 = vunpack.c.l.b16 %v1315
  %v1596 = vunpack.c.l.b16 %v1316
  %v1597 = vunpack.c.l.b16 %v1317
  %v1598 = vunpack.c.l.b16 %v1318
  %v1599 = vunpack.c.l.b16 %v1319
  %v1600 = vunpack.c.l.b16 %v1320
  %v1601 = vunpack.c.l.b16 %v1321
  %v1602 = vunpack.c.h.b16 %v1314
  %v1603 = vunpack.c.h.b16 %v1315
  %v1604 = vunpack.c.h.b16 %v1316
  %v1605 = vunpack.c.h.b16 %v1317
  %v1606 = vunpack.c.h.b16 %v1318
  %v1607 = vunpack.c.h.b16 %v1319
  %v1608 = vunpack.c.h.b16 %v1320
  %v1609 = vunpack.c.h.b16 %v1321
  %v1610 = vunpack.c.l.b16 %v1322
  %v1611 = vunpack.c.l.b16 %v1323
  %v1612 = vunpack.c.l.b16 %v1324
  %v1613 = vunpack.c.l.b16 %v1325
  %v1614 = vunpack.c.l.b16 %v1326
  %v1615 = vunpack.c.l.b16 %v1327
  %v1616 = vunpack.c.l.b16 %v1328
  %v1617 = vunpack.c.l.b16 %v1329
  %v1618 = vunpack.c.h.b16 %v1322
  %v1619 = vunpack.c.h.b16 %v1323
  %v1620 = vunpack.c.h.b16 %v1324
  %v1621 = vunpack.c.h.b16 %v1325
  %v1622 = vunpack.c.h.b16 %v1326
  %v1623 = vunpack.c.h.b16 %v1327
  %v1624 = vunpack.c.h.b16 %v1328
  %v1625 = vunpack.c.h.b16 %v1329
  %v1626 = vunpack.c.l.b16 %v1330
  %v1627 = vunpack.c.l.b16 %v1331
  %v1628 = vunpack.c.l.b16 %v1332
  %v1629 = vunpack.c.l.b16 %v1333
  %v1630 = vunpack.c.l.b16 %v1334
  %v1631 = vunpack.c.l.b16 %v1335
  %v1632 = vunpack.c.l.b16 %v1336
  %v1633 = vunpack.c.l.b16 %v1337
  %v1634 = vunpack.c.h.b16 %v1330
  %v1635 = vunpack.c.h.b16 %v1331
  %v1636 = vunpack.c.h.b16 %v1332
  %v1637 = vunpack.c.h.b16 %v1333
  %v1638 = vunpack.c.h.b16 %v1334
  %v1639 = vunpack.c.h.b16 %v1335
  %v1640 = vunpack.c.h.b16 %v1336
  %v1641 = vunpack.c.h.b16 %v1337
  %v1642 = vunpack.c.l.b16 %v1338
  %v1643 = vunpack.c.l.b16 %v1339
  %v1644 = vunpack.c.l.b16 %v1340
  %v1645 = vunpack.c.l.b16 %v1341
  %v1646 = vunpack.c.l.b16 %v1342
  %v1647 = vunpack.c.l.b16 %v1343
  %v1648 = vunpack.c.l.b16 %v1344
  %v1649 = vunpack.c.l.b16 %v1345
  %v1650 = vunpack.c.h.b16 %v1338
  %v1651 = vunpack.c.h.b16 %v1339
  %v1652 = vunpack.c.h.b16 %v1340
  %v1653 = vunpack.c.h.b16 %v1341
  %v1654 = vunpack.c.h.b16 %v1342
  %v1655 = vunpack.c.h.b16 %v1343
  %v1656 = vunpack.c.h.b16 %v1344
  %v1657 = vunpack.c.h.b16 %v1345
  %v1658 = vunpack.c.l.b16 %v1346
  %v1659 = vunpack.c.l.b16 %v1347
  %v1660 = vunpack.c.l.b16 %v1348
  %v1661 = vunpack.c.l.b16 %v1349
  %v1662 = vunpack.c.l.b16 %v1350
  %v1663 = vunpack.c.l.b16 %v1351
  %v1664 = vunpack.c.l.b16 %v1352
  %v1665 = vunpack.c.l.b16 %v1353
  %v1666 = vunpack.c.h.b16 %v1346
  %v1667 = vunpack.c.h.b16 %v1347
  %v1668 = vunpack.c.h.b16 %v1348
  %v1669 = vunpack.c.h.b16 %v1349
  %v1670 = vunpack.c.h.b16 %v1350
  %v1671 = vunpack.c.h.b16 %v1351
  %v1672 = vunpack.c.h.b16 %v1352
  %v1673 = vunpack.c.h.b16 %v1353
  %v1674 = vunpack.c.l.b16 %v1354
  %v1675 = vunpack.c.l.b16 %v1355
  %v1676 = vunpack.c.l.b16 %v1356
  %v1677 = vunpack.c.l.b16 %v1357
  %v1678 = vunpack.c.l.b16 %v1358
  %v1679 = vunpack.c.l.b16 %v1359
  %v1680 = vunpack.c.l.b16 %v1360
  %v1681 = vunpack.c.l.b16 %v1361
  %v1682 = vunpack.c.h.b16 %v1354
  %v1683 = vunpack.c.h.b16 %v1355
  %v1684 = vunpack.c.h.b16 %v1356
  %v1685 = vunpack.c.h.b16 %v1357
  %v1686 = vunpack.c.h.b16 %v1358
  %v1687 = vunpack.c.h.b16 %v1359
  %v1688 = vunpack.c.h.b16 %v1360
  %v1689 = vunpack.c.h.b16 %v1361
  %v1690 = vunpack.c.l.b16 %v1362
  %v1691 = vunpack.c.l.b16 %v1363
  %v1692 = vunpack.c.l.b16 %v1364
  %v1693 = vunpack.c.l.b16 %v1365
  %v1694 = vunpack.c.l.b16 %v1366
  %v1695 = vunpack.c.l.b16 %v1367
  %v1696 = vunpack.c.l.b16 %v1368
  %v1697 = vunpack.c.l.b16 %v1369
  %v1698 = vunpack.c.h.b16 %v1362
  %v1699 = vunpack.c.h.b16 %v1363
  %v1700 = vunpack.c.h.b16 %v1364
  %v1701 = vunpack.c.h.b16 %v1365
  %v1702 = vunpack.c.h.b16 %v1366
  %v1703 = vunpack.c.h.b16 %v1367
  %v1704 = vunpack.c.h.b16 %v1368
  %v1705 = vunpack.c.h.b16 %v1369
  %v1706 = vunpack.c.l.b16 %v1370
  %v1707 = vunpack.c.l.b16 %v1371
  %v1708 = vunpack.c.l.b16 %v1372
  %v1709 = vunpack.c.l.b16 %v1373
  %v1710 = vunpack.c.l.b16 %v1374
  %v1711 = vunpack.c.l.b16 %v1375
  %v1712 = vunpack.c.l.b16 %v1376
  %v1713 = vunpack.c.l.b16 %v1377
  %v1714 = vunpack.c.h.b16 %v1370
  %v1715 = vunpack.c.h.b16 %v1371
  %v1716 = vunpack.c.h.b16 %v1372
  %v1717 = vunpack.c.h.b16 %v1373
  %v1718 = vunpack.c.h.b16 %v1374
  %v1719 = vunpack.c.h.b16 %v1375
  %v1720 = vunpack.c.h.b16 %v1376
  %v1721 = vunpack.c.h.b16 %v1377
  %v1722 = vunpack.c.l.b16 %v1378
  %v1723 = vunpack.c.l.b16 %v1379
  %v1724 = vunpack.c.l.b16 %v1380
  %v1725 = vunpack.c.l.b16 %v1381
  %v1726 = vunpack.c.l.b16 %v1382
  %v1727 = vunpack.c.l.b16 %v1383
  %v1728 = vunpack.c.l.b16 %v1384
  %v1729 = vunpack.c.l.b16 %v1385
  %v1730 = vunpack.c.h.b16 %v1378
  %v1731 = vunpack.c.h.b16 %v1379
  %v1732 = vunpack.c.h.b16 %v1380
  %v1733 = vunpack.c.h.b16 %v1381
  %v1734 = vunpack.c.h.b16 %v1382
  %v1735 = vunpack.c.h.b16 %v1383
  %v1736 = vunpack.c.h.b16 %v1384
  %v1737 = vunpack.c.h.b16 %v1385
  %v1738 = vunpack.c.l.b16 %v1386
  %v1739 = vunpack.c.l.b16 %v1387
  %v1740 = vunpack.c.l.b16 %v1388
  %v1741 = vunpack.c.l.b16 %v1389
  %v1742 = vunpack.c.l.b16 %v1390
  %v1743 = vunpack.c.l.b16 %v1391
  %v1744 = vunpack.c.l.b16 %v1392
  %v1745 = vunpack.c.l.b16 %v1393
  %v1746 = vunpack.c.h.b16 %v1386
  %v1747 = vunpack.c.h.b16 %v1387
  %v1748 = vunpack.c.h.b16 %v1388
  %v1749 = vunpack.c.h.b16 %v1389
  %v1750 = vunpack.c.h.b16 %v1390
  %v1751 = vunpack.c.h.b16 %v1391
  %v1752 = vunpack.c.h.b16 %v1392
  %v1753 = vunpack.c.h.b16 %v1393
  %v1754 = vunpack.c.l.b16 %v1394
  %v1755 = vunpack.c.l.b16 %v1395
  %v1756 = vunpack.c.l.b16 %v1396
  %v1757 = vunpack.c.l.b16 %v1397
  %v1758 = vunpack.c.l.b16 %v1398
  %v1759 = vunpack.c.l.b16 %v1399
  %v1760 = vunpack.c.l.b16 %v1400
  %v1761 = vunpack.c.l.b16 %v1401
  %v1762 = vunpack.c.h.b16 %v1394
  %v1763 = vunpack.c.h.b16 %v1395
  %v1764 = vunpack.c.h.b16 %v1396
  %v1765 = vunpack.c.h.b16 %v1397
  %v1766 = vunpack.c.h.b16 %v1398
  %v1767 = vunpack.c.h.b16 %v1399
  %v1768 = vunpack.c.h.b16 %v1400
  %v1769 = vunpack.c.h.b16 %v1401
  %v1770 = vunpack.c.l.b16 %v1402
  %v1771 = vunpack.c.l.b16 %v1403
  %v1772 = vunpack.c.l.b16 %v1404
  %v1773 = vunpack.c.l.b16 %v1405
  %v1774 = vunpack.c.l.b16 %v1406
  %v1775 = vunpack.c.l.b16 %v1407
  %v1776 = vunpack.c.l.b16 %v1408
  %v1777 = vunpack.c.l.b16 %v1409
  %v1778 = vunpack.c.h.b16 %v1402
  %v1779 = vunpack.c.h.b16 %v1403
  %v1780 = vunpack.c.h.b16 %v1404
  %v1781 = vunpack.c.h.b16 %v1405
  %v1782 = vunpack.c.h.b16 %v1406
  %v1783 = vunpack.c.h.b16 %v1407
  %v1784 = vunpack.c.h.b16 %v1408
  %v1785 = vunpack.c.h.b16 %v1409
  %v1786 = vunpack.c.l.b16 %v1410
  %v1787 = vunpack.c.l.b16 %v1411
  %v1788 = vunpack.c.l.b16 %v1412
  %v1789 = vunpack.c.l.b16 %v1413
  %v1790 = vunpack.c.l.b16 %v1414
  %v1791 = vunpack.c.l.b16 %v1415
  %v1792 = vunpack.c.l.b16 %v1416
  %v1793 = vunpack.c.l.b16 %v1417
  %v1794 = vunpack.c.h.b16 %v1410
  %v1795 = vunpack.c.h.b16 %v1411
  %v1796 = vunpack.c.h.b16 %v1412
  %v1797 = vunpack.c.h.b16 %v1413
  %v1798 = vunpack.c.h.b16 %v1414
  %v1799 = vunpack.c.h.b16 %v1415
  %v1800 = vunpack.c.h.b16 %v1416
  %v1801 = vunpack.c.h.b16 %v1417
  %v1802 = vpack.c.b16 %v1547, %v1546
  %v1803 = vpack.c.b16 %v1549, %v1548
  %v1804 = vpack.c.b16 %v1551, %v1550
  %v1805 = vpack.c.b16 %v1553, %v1552
  %v1806 = vpack.c.b16 %v1555, %v1554
  %v1807 = vpack.c.b16 %v1557, %v1556
  %v1808 = vpack.c.b16 %v1559, %v1558
  %v1809 = vpack.c.b16 %v1561, %v1560
  %v1810 = vpack.c.b16 %v1563, %v1562
  %v1811 = vpack.c.b16 %v1565, %v1564
  %v1812 = vpack.c.b16 %v1567, %v1566
  %v1813 = vpack.c.b16 %v1569, %v1568
  %v1814 = vpack.c.b16 %v1571, %v1570
  %v1815 = vpack.c.b16 %v1573, %v1572
  %v1816 = vpack.c.b16 %v1575, %v1574
  %v1817 = vpack.c.b16 %v1577, %v1576
  %v1818 = vpack.c.b16 %v1579, %v1578
  %v1819 = vpack.c.b16 %v1581, %v1580
  %v1820 = vpack.c.b16 %v1583, %v1582
  %v1821 = vpack.c.b16 %v1585, %v1584
  %v1822 = vpack.c.b16 %v1587, %v1586
  %v1823 = vpack.c.b16 %v1589, %v1588
  %v1824 = vpack.c.b16 %v1591, %v1590
  %v1825 = vpack.c.b16 %v1593, %v1592
  %v1826 = vpack.c.b16 %v1595, %v1594
  %v1827 = vpack.c.b16 %v1597, %v1596
  %v1828 = vpack.c.b16 %v1599, %v1598
  %v1829 = vpack.c.b16 %v1601, %v1600
  %v1830 = vpack.c.b16 %v1603, %v1602
  %v1831 = vpack.c.b16 %v1605, %v1604
  %v1832 = vpack.c.b16 %v1607, %v1606
  %v1833 = vpack.c.b16 %v1609, %v1608
  %v1834 = vpack.c.b16 %v1611, %v1610
  %v1835 = vpack.c.b16 %v1613, %v1612
  %v1836 = vpack.c.b16 %v1615, %v1614
  %v1837 = vpack.c.b16 %v1617, %v1616
  %v1838 = vpack.c.b16 %v1619, %v1618
  %v1839 = vpack.c.b16 %v1621, %v1620
  %v1840 = vpack.c.b16 %v1623, %v1622
  %v1841 = vpack.c.b16 %v1625, %v1624
  %v1842 = vpack.c.b16 %v1627, %v1626
  %v1843 = vpack.c.b16 %v1629, %v1628
  %v1844 = vpack.c.b16 %v1631, %v1630
  %v1845 = vpack.c.b16 %v1633, %v1632
  %v1846 = vpack.c.b16 %v1635, %v1634
  %v1847 = vpack.c.b16 %v1637, %v1636
  %v1848 = vpack.c.b16 %v1639, %v1638
  %v1849 = vpack.c.b16 %v1641, %v1640
  %v1850 = vpack.c.b16 %v1643, %v1642
  %v1851 = vpack.c.b16 %v1645, %v1644
  %v1852 = vpack.c.b16 %v1647, %v1646
  %v1853 = vpack.c.b16 %v1649, %v1648
  %v1854 = vpack.c.b16 %v1651, %v1650
  %v1855 = vpack.c.b16 %v1653, %v1652
  %v1856 = vpack.c.b16 %v1655, %v1654
  %v1857 = vpack.c.b16 %v1657, %v1656
  %v1858 = vpack.c.b16 %v1659, %v1658
  %v1859 = vpack.c.b16 %v1661, %v1660
  %v1860 = vpack.c.b16 %v1663, %v1662
  %v1861 = vpack.c.b16 %v1665, %v1664
  %v1862 = vpack.c.b16 %v1667, %v1666
  %v1863 = vpack.c.b16 %v1669, %v1668
  %v1864 = vpack.c.b16 %v1671, %v1670
  %v1865 = vpack.c.b16 %v1673, %v1672
  %v1866 = vpack.c.b16 %v1675, %v1674
  %v1867 = vpack.c.b16 %v1677, %v1676
  %v1868 = vpack.c.b16 %v1679, %v1678
  %v1869 = vpack.c.b16 %v1681, %v1680
  %v1870 = vpack.c.b16 %v1683, %v1682
  %v1871 = vpack.c.b16 %v1685, %v1684
  %v1872 = vpack.c.b16 %v1687, %v1686
  %v1873 = vpack.c.b16 %v1689, %v1688
  %v1874 = vpack.c.b16 %v1691, %v1690
  %v1875 = vpack.c.b16 %v1693, %v1692
  %v1876 = vpack.c.b16 %v1695, %v1694
  %v1877 = vpack.c.b16 %v1697, %v1696
  %v1878 = vpack.c.b16 %v1699, %v1698
  %v1879 = vpack.c.b16 %v1701, %v1700
  %v1880 = vpack.c.b16 %v1703, %v1702
  %v1881 = vpack.c.b16 %v1705, %v1704
  %v1882 = vpack.c.b16 %v1707, %v1706
  %v1883 = vpack.c.b16 %v1709, %v1708
  %v1884 = vpack.c.b16 %v1711, %v1710
  %v1885 = vpack.c.b16 %v1713, %v1712
  %v1886 = vpack.c.b16 %v1715, %v1714
  %v1887 = vpack.c.b16 %v1717, %v1716
  %v1888 = vpack.c.b16 %v1719, %v1718
  %v1889 = vpack.c.b16 %v1721, %v1720
  %v1890 = vpack.c.b16 %v1723, %v1722
  %v1891 = vpack.c.b16 %v1725, %v1724
  %v1892 = vpack.c.b16 %v1727, %v1726
  %v1893 = vpack.c.b16 %v1729, %v1728
  %v1894 = vpack.c.b16 %v1731, %v1730
  %v1895 = vpack.c.b16 %v1733, %v1732
  %v1896 = vpack.c.b16 %v1735, %v1734
  %v1897 = vpack.c.b16 %v1737, %v1736
  %v1898 = vpack.c.b16 %v1739, %v1738
  %v1899 = vpack.c.b16 %v1741, %v1740
  %v1900 = vpack.c.b16 %v1743, %v1742
  %v1901 = vpack.c.b16 %v1745, %v1744
  %v1902 = vpack.c.b16 %v1747, %v1746
  %v1903 = vpack.c.b16 %v1749, %v1748
  %v1904 = vpack.c.b16 %v1751, %v1750
  %v1905 = vpack.c.b16 %v1753, %v1752
  %v1906 = vpack.c.b16 %v1755, %v1754
  %v1907 = vpack.c.b16 %v1757, %v1756
  %v1908 = vpack.c.b16 %v1759, %v1758
  %v1909 = vpack.c.b16 %v1761, %v1760
  %v1910 = vpack.c.b16 %v1763, %v1762
  %v1911 = vpack.c.b16 %v1765, %v1764
  %v1912 = vpack.c.b16 %v1767, %v1766
  %v1913 = vpack.c.b16 %v1769, %v1768
  %v1914 = vpack.c.b16 %v1771, %v1770
  %v1915 = vpack.c.b16 %v1773, %v1772
  %v1916 = vpack.c.b16 %v1775, %v1774
  %v1917 = vpack.c.b16 %v1777, %v1776
  %v1918 = vpack.c.b16 %v1779, %v1778
  %v1919 = vpack.c.b16 %v1781, %v1780
  %v1920 = vpack.c.b16 %v1783, %v1782
  %v1921 = vpack.c.b16 %v1785, %v1784
  %v1922 = vpack.c.b16 %v1787, %v1786
  %v1923 = vpack.c.b16 %v1789, %v1788
  %v1924 = vpack.c.b16 %v1791, %v1790
  %v1925 = vpack.c.b16 %v1793, %v1792
  %v1926 = vpack.c.b16 %v1795, %v1794
  %v1927 = vpack.c.b16 %v1797, %v1796
  %v1928 = vpack.c.b16 %v1799, %v1798
  %v1929 = vpack.c.b16 %v1801, %v1800
  %2058 = vst [vmem:[%s3] sm:$0xff] %v1802
  %2059 = vst [vmem:[%s3 + $0x8] sm:$0xff] %v1803
  %2060 = vst [vmem:[%s3 + $0x10] sm:$0xff] %v1804
  %2061 = vst [vmem:[%s3 + $0x18] sm:$0xff] %v1805
  %2062 = vst [vmem:[%s3 + $0x20] sm:$0xff] %v1806
  %2063 = vst [vmem:[%s3 + $0x28] sm:$0xff] %v1807
  %2064 = vst [vmem:[%s3 + $0x30] sm:$0xff] %v1808
  %2065 = vst [vmem:[%s3 + $0x38] sm:$0xff] %v1809
  %2066 = vst [vmem:[%s3 + $0x40] sm:$0xff] %v1810
  %2067 = vst [vmem:[%s3 + $0x48] sm:$0xff] %v1811
  %2068 = vst [vmem:[%s3 + $0x50] sm:$0xff] %v1812
  %2069 = vst [vmem:[%s3 + $0x58] sm:$0xff] %v1813
  %2070 = vst [vmem:[%s3 + $0x60] sm:$0xff] %v1814
  %2071 = vst [vmem:[%s3 + $0x68] sm:$0xff] %v1815
  %2072 = vst [vmem:[%s3 + $0x70] sm:$0xff] %v1816
  %2073 = vst [vmem:[%s3 + $0x78] sm:$0xff] %v1817
  %2074 = vst [vmem:[%s3 + $0x80] sm:$0xff] %v1818
  %2075 = vst [vmem:[%s3 + $0x88] sm:$0xff] %v1819
  %2076 = vst [vmem:[%s3 + $0x90] sm:$0xff] %v1820
  %2077 = vst [vmem:[%s3 + $0x98] sm:$0xff] %v1821
  %2078 = vst [vmem:[%s3 + $0xa0] sm:$0xff] %v1822
  %2079 = vst [vmem:[%s3 + $0xa8] sm:$0xff] %v1823
  %2080 = vst [vmem:[%s3 + $0xb0] sm:$0xff] %v1824
  %2081 = vst [vmem:[%s3 + $0xb8] sm:$0xff] %v1825
  %2082 = vst [vmem:[%s3 + $0xc0] sm:$0xff] %v1826
  %2083 = vst [vmem:[%s3 + $0xc8] sm:$0xff] %v1827
  %2084 = vst [vmem:[%s3 + $0xd0] sm:$0xff] %v1828
  %2085 = vst [vmem:[%s3 + $0xd8] sm:$0xff] %v1829
  %2086 = vst [vmem:[%s3 + $0xe0] sm:$0xff] %v1830
  %2087 = vst [vmem:[%s3 + $0xe8] sm:$0xff] %v1831
  %2088 = vst [vmem:[%s3 + $0xf0] sm:$0xff] %v1832
  %2089 = vst [vmem:[%s3 + $0xf8] sm:$0xff] %v1833
  %2090 = vst [vmem:[%s3 + $0x100] sm:$0xff] %v1834
  %2091 = vst [vmem:[%s3 + $0x108] sm:$0xff] %v1835
  %2092 = vst [vmem:[%s3 + $0x110] sm:$0xff] %v1836
  %2093 = vst [vmem:[%s3 + $0x118] sm:$0xff] %v1837
  %2094 = vst [vmem:[%s3 + $0x120] sm:$0xff] %v1838
  %2095 = vst [vmem:[%s3 + $0x128] sm:$0xff] %v1839
  %2096 = vst [vmem:[%s3 + $0x130] sm:$0xff] %v1840
  %2097 = vst [vmem:[%s3 + $0x138] sm:$0xff] %v1841
  %2098 = vst [vmem:[%s3 + $0x140] sm:$0xff] %v1842
  %2099 = vst [vmem:[%s3 + $0x148] sm:$0xff] %v1843
  %2100 = vst [vmem:[%s3 + $0x150] sm:$0xff] %v1844
  %2101 = vst [vmem:[%s3 + $0x158] sm:$0xff] %v1845
  %2102 = vst [vmem:[%s3 + $0x160] sm:$0xff] %v1846
  %2103 = vst [vmem:[%s3 + $0x168] sm:$0xff] %v1847
  %2104 = vst [vmem:[%s3 + $0x170] sm:$0xff] %v1848
  %2105 = vst [vmem:[%s3 + $0x178] sm:$0xff] %v1849
  %2106 = vst [vmem:[%s3 + $0x180] sm:$0xff] %v1850
  %2107 = vst [vmem:[%s3 + $0x188] sm:$0xff] %v1851
  %2108 = vst [vmem:[%s3 + $0x190] sm:$0xff] %v1852
  %2109 = vst [vmem:[%s3 + $0x198] sm:$0xff] %v1853
  %2110 = vst [vmem:[%s3 + $0x1a0] sm:$0xff] %v1854
  %2111 = vst [vmem:[%s3 + $0x1a8] sm:$0xff] %v1855
  %2112 = vst [vmem:[%s3 + $0x1b0] sm:$0xff] %v1856
  %2113 = vst [vmem:[%s3 + $0x1b8] sm:$0xff] %v1857
  %2114 = vst [vmem:[%s3 + $0x1c0] sm:$0xff] %v1858
  %2115 = vst [vmem:[%s3 + $0x1c8] sm:$0xff] %v1859
  %2116 = vst [vmem:[%s3 + $0x1d0] sm:$0xff] %v1860
  %2117 = vst [vmem:[%s3 + $0x1d8] sm:$0xff] %v1861
  %2118 = vst [vmem:[%s3 + $0x1e0] sm:$0xff] %v1862
  %2119 = vst [vmem:[%s3 + $0x1e8] sm:$0xff] %v1863
  %2120 = vst [vmem:[%s3 + $0x1f0] sm:$0xff] %v1864
  %2121 = vst [vmem:[%s3 + $0x1f8] sm:$0xff] %v1865
  %2122 = vst [vmem:[%s3 + $0x200] sm:$0xff] %v1866
  %2123 = vst [vmem:[%s3 + $0x208] sm:$0xff] %v1867
  %2124 = vst [vmem:[%s3 + $0x210] sm:$0xff] %v1868
  %2125 = vst [vmem:[%s3 + $0x218] sm:$0xff] %v1869
  %2126 = vst [vmem:[%s3 + $0x220] sm:$0xff] %v1870
  %2127 = vst [vmem:[%s3 + $0x228] sm:$0xff] %v1871
  %2128 = vst [vmem:[%s3 + $0x230] sm:$0xff] %v1872
  %2129 = vst [vmem:[%s3 + $0x238] sm:$0xff] %v1873
  %2130 = vst [vmem:[%s3 + $0x240] sm:$0xff] %v1874
  %2131 = vst [vmem:[%s3 + $0x248] sm:$0xff] %v1875
  %2132 = vst [vmem:[%s3 + $0x250] sm:$0xff] %v1876
  %2133 = vst [vmem:[%s3 + $0x258] sm:$0xff] %v1877
  %2134 = vst [vmem:[%s3 + $0x260] sm:$0xff] %v1878
  %2135 = vst [vmem:[%s3 + $0x268] sm:$0xff] %v1879
  %2136 = vst [vmem:[%s3 + $0x270] sm:$0xff] %v1880
  %2137 = vst [vmem:[%s3 + $0x278] sm:$0xff] %v1881
  %2138 = vst [vmem:[%s3 + $0x280] sm:$0xff] %v1882
  %2139 = vst [vmem:[%s3 + $0x288] sm:$0xff] %v1883
  %2140 = vst [vmem:[%s3 + $0x290] sm:$0xff] %v1884
  %2141 = vst [vmem:[%s3 + $0x298] sm:$0xff] %v1885
  %2142 = vst [vmem:[%s3 + $0x2a0] sm:$0xff] %v1886
  %2143 = vst [vmem:[%s3 + $0x2a8] sm:$0xff] %v1887
  %2144 = vst [vmem:[%s3 + $0x2b0] sm:$0xff] %v1888
  %2145 = vst [vmem:[%s3 + $0x2b8] sm:$0xff] %v1889
  %2146 = vst [vmem:[%s3 + $0x2c0] sm:$0xff] %v1890
  %2147 = vst [vmem:[%s3 + $0x2c8] sm:$0xff] %v1891
  %2148 = vst [vmem:[%s3 + $0x2d0] sm:$0xff] %v1892
  %2149 = vst [vmem:[%s3 + $0x2d8] sm:$0xff] %v1893
  %2150 = vst [vmem:[%s3 + $0x2e0] sm:$0xff] %v1894
  %2151 = vst [vmem:[%s3 + $0x2e8] sm:$0xff] %v1895
  %2152 = vst [vmem:[%s3 + $0x2f0] sm:$0xff] %v1896
  %2153 = vst [vmem:[%s3 + $0x2f8] sm:$0xff] %v1897
  %2154 = vst [vmem:[%s3 + $0x300] sm:$0xff] %v1898
  %2155 = vst [vmem:[%s3 + $0x308] sm:$0xff] %v1899
  %2156 = vst [vmem:[%s3 + $0x310] sm:$0xff] %v1900
  %2157 = vst [vmem:[%s3 + $0x318] sm:$0xff] %v1901
  %2158 = vst [vmem:[%s3 + $0x320] sm:$0xff] %v1902
  %2159 = vst [vmem:[%s3 + $0x328] sm:$0xff] %v1903
  %2160 = vst [vmem:[%s3 + $0x330] sm:$0xff] %v1904
  %2161 = vst [vmem:[%s3 + $0x338] sm:$0xff] %v1905
  %2162 = vst [vmem:[%s3 + $0x340] sm:$0xff] %v1906
  %2163 = vst [vmem:[%s3 + $0x348] sm:$0xff] %v1907
  %2164 = vst [vmem:[%s3 + $0x350] sm:$0xff] %v1908
  %2165 = vst [vmem:[%s3 + $0x358] sm:$0xff] %v1909
  %2166 = vst [vmem:[%s3 + $0x360] sm:$0xff] %v1910
  %2167 = vst [vmem:[%s3 + $0x368] sm:$0xff] %v1911
  %2168 = vst [vmem:[%s3 + $0x370] sm:$0xff] %v1912
  %2169 = vst [vmem:[%s3 + $0x378] sm:$0xff] %v1913
  %2170 = vst [vmem:[%s3 + $0x380] sm:$0xff] %v1914
  %2171 = vst [vmem:[%s3 + $0x388] sm:$0xff] %v1915
  %2172 = vst [vmem:[%s3 + $0x390] sm:$0xff] %v1916
  %2173 = vst [vmem:[%s3 + $0x398] sm:$0xff] %v1917
  %2174 = vst [vmem:[%s3 + $0x3a0] sm:$0xff] %v1918
  %2175 = vst [vmem:[%s3 + $0x3a8] sm:$0xff] %v1919
  %2176 = vst [vmem:[%s3 + $0x3b0] sm:$0xff] %v1920
  %2177 = vst [vmem:[%s3 + $0x3b8] sm:$0xff] %v1921
  %2178 = vst [vmem:[%s3 + $0x3c0] sm:$0xff] %v1922
  %2179 = vst [vmem:[%s3 + $0x3c8] sm:$0xff] %v1923
  %2180 = vst [vmem:[%s3 + $0x3d0] sm:$0xff] %v1924
  %2181 = vst [vmem:[%s3 + $0x3d8] sm:$0xff] %v1925
  %2182 = vst [vmem:[%s3 + $0x3e0] sm:$0xff] %v1926
  %2183 = vst [vmem:[%s3 + $0x3e8] sm:$0xff] %v1927
  %2184 = vst [vmem:[%s3 + $0x3f0] sm:$0xff] %v1928
  %2185 = vst [vmem:[%s3 + $0x3f8] sm:$0xff] %v1929
  // Predicated region
  $region14: #{generator_forward.9} parent=0 // pred_check
    _
  $region15: #{generator_forward.9} parent=0 // pred_check_branch
    %2187 = sbr.rel (0) target = $region17
  $region16: #{generator_forward.9} parent=0 // pred_region
    _
  $region17: #{generator_forward.9} parent=0 // pred_fallthru
    _
  // Predicated region
  $region18: #{generator_forward.9} parent=0 // pred_check
    _
  $region19: #{generator_forward.9} parent=0 // pred_check_branch
    %2189 = sbr.rel (0) target = $region21
  $region20: #{generator_forward.9} parent=0 // pred_region
    _
  $region21: #{generator_forward.9} parent=0 // pred_fallthru
    _

// kernel: generator_forward.10
$region0: #{generator_forward.10}
  #allocation0 [shape = 'u32[]', space=smem, size = 0x4, offset = 0x4, fixed_abs, tag = 'smem constant byte address 0x4 - core index']
  #allocation1 [shape = 'u32[144,128]{1,0:T(1,128)}', space=vmem, size = 0x12000, scoped, tag = 'internal scratch']
  %s0 = inlined_call_operand.vmem [shape: f32[672,256], index: 0, kind: input, shape index: {}]
  %s1 = inlined_call_operand.vmem [shape: f32[1,256], index: 1, kind: input, shape index: {}]
  %s2 = inlined_call_operand.vmem [shape: bf16[256,1152], index: 2, kind: input, shape index: {}]
  %s3 = inlined_call_operand.vmem [shape: bf16[672,1152], index: 3, kind: output, shape index: {}]
  %s4 = sld [smem:[#allocation0]]
  $region45: #{generator_forward.10} parent=0
    _
  %s6 = ssub.s32 1, %s4
  %s7 = scalar_select 0, %s6, %s4
  loop: start=0, step=1, limit=5
  $region2: #{generator_forward.10} parent=0 // loop_pre_header
    _
  $region3: #{generator_forward.10} parent=0 // loop_header
    %s9 = sphi 0, %s13
    %p10 = scmp.ge.s32.totalorder %s9, 5
    %s19 = sphi 0, %s21
    %s22 = sphi 0, %s19
    %s23 = sphi 0, %s22
    %s39 = sphi 0, %s23
    %s43 = sphi 0, %s43
    %s45 = sphi 0, %s43
    %s46 = sphi 0, %s45
    %s60 = sphi 0, %s46
    %s64 = sphi 0, %s64
    %s66 = sphi 0, %s64
    %s67 = sphi 0, %s66
    %s81 = sphi 0, %s67
    %s87 = sphi 0, %s89
    %s90 = sphi 0, %s87
    %s91 = sphi 0, %s90
    %s107 = sphi 0, %s91
  $region4: #{generator_forward.10} parent=0 // loop_header_branch
    %12 = sbr.rel (%p10) target = $region8
  $region5: #{generator_forward.10} parent=0 // loop_body
    %s14 = ssub.s32 %s9, 1
    %s15 = ssub.s32 %s9, 2
    %s16 = sadd.s32 %s9, 1
    %s17 = ssub.s32 %s9, %s16
    %p18 = scmp.eq.s32.totalorder %s17, 0
    %s20 = sadd.s32 %s19, 1
    %s21 = scalar_select %p18, %s19, %s20
    %p24 = pneg %p18
    %p25 = scmp.eq.s32.totalorder %s9, 2
    %p26 = por %p24, %p25
    %p27 = scmp.ne.s32.totalorder %s19, %s22
    %p28 = scmp.eq.s32.totalorder %s9, 0
    %p29 = por %p27, %p28
    %p30 = scmp.ne.s32.totalorder %s19, %s22
    %p31 = scmp.eq.s32.totalorder %s14, 2
    %p32 = por %p30, %p31
    %p33 = scmp.ne.s32.totalorder %s22, %s23
    %p34 = scmp.eq.s32.totalorder %s14, 0
    %p35 = por %p33, %p34
    %p36 = scmp.ne.s32.totalorder %s22, %s23
    %p37 = scmp.eq.s32.totalorder %s15, 2
    %p38 = por %p36, %p37
    %p40 = scmp.ne.s32.totalorder %s23, %s39
    %p41 = scmp.eq.s32.totalorder %s15, 0
    %p42 = por %p40, %p41
    %s44 = sadd.s32 %s43, 1
    %p47 = scmp.eq.s32.totalorder %s9, 2
    %p48 = scmp.ne.s32.totalorder %s43, %s45
    %p49 = scmp.eq.s32.totalorder %s9, 0
    %p50 = por %p48, %p49
    %p51 = scmp.ne.s32.totalorder %s43, %s45
    %p52 = scmp.eq.s32.totalorder %s14, 2
    %p53 = por %p51, %p52
    %p54 = scmp.ne.s32.totalorder %s45, %s46
    %p55 = scmp.eq.s32.totalorder %s14, 0
    %p56 = por %p54, %p55
    %p57 = scmp.ne.s32.totalorder %s45, %s46
    %p58 = scmp.eq.s32.totalorder %s15, 2
    %p59 = por %p57, %p58
    %p61 = scmp.ne.s32.totalorder %s46, %s60
    %p62 = scmp.eq.s32.totalorder %s15, 0
    %p63 = por %p61, %p62
    %s65 = sadd.s32 %s64, 1
    %p68 = scmp.eq.s32.totalorder %s9, 2
    %p69 = scmp.ne.s32.totalorder %s64, %s66
    %p70 = scmp.eq.s32.totalorder %s9, 0
    %p71 = por %p69, %p70
    %p72 = scmp.ne.s32.totalorder %s64, %s66
    %p73 = scmp.eq.s32.totalorder %s14, 2
    %p74 = por %p72, %p73
    %p75 = scmp.ne.s32.totalorder %s66, %s67
    %p76 = scmp.eq.s32.totalorder %s14, 0
    %p77 = por %p75, %p76
    %p78 = scmp.ne.s32.totalorder %s66, %s67
    %p79 = scmp.eq.s32.totalorder %s15, 2
    %p80 = por %p78, %p79
    %p82 = scmp.ne.s32.totalorder %s67, %s81
    %p83 = scmp.eq.s32.totalorder %s15, 0
    %p84 = por %p82, %p83
    %s85 = ssub.s32 %s9, %s16
    %p86 = scmp.eq.s32.totalorder %s85, 0
    %s88 = sadd.s32 %s87, 1
    %s89 = scalar_select %p86, %s87, %s88
    %p92 = pneg %p86
    %p93 = scmp.eq.s32.totalorder %s9, 2
    %p94 = por %p92, %p93
    %p95 = scmp.ne.s32.totalorder %s87, %s90
    %p96 = scmp.eq.s32.totalorder %s9, 0
    %p97 = por %p95, %p96
    %p98 = scmp.ne.s32.totalorder %s87, %s90
    %p99 = scmp.eq.s32.totalorder %s14, 2
    %p100 = por %p98, %p99
    %p101 = scmp.ne.s32.totalorder %s90, %s91
    %p102 = scmp.eq.s32.totalorder %s14, 0
    %p103 = por %p101, %p102
    %p104 = scmp.ne.s32.totalorder %s90, %s91
    %p105 = scmp.eq.s32.totalorder %s15, 2
    %p106 = por %p104, %p105
    %p108 = scmp.ne.s32.totalorder %s91, %s107
    %p109 = scmp.eq.s32.totalorder %s15, 0
    %p110 = por %p108, %p109
    %p111 = scmp.le.s32.totalorder 1, %s9
    %p112 = scmp.lt.s32.totalorder %s9, 4
    %p113 = pnand %p111, %p112
    %p114 = pneg %p113
    // Predicated region
    $region9: #{generator_forward.10} parent=5 // pred_check
      _
    $region10: #{generator_forward.10} parent=5 // pred_check_branch
      %116 = sbr.rel (%p113) target = $region12
    $region11: #{generator_forward.10} parent=5 // pred_region
      %s117 = ssub.s32 %s9, 1
      // Predicated region
      $region13: #{generator_forward.10} parent=11 // pred_check
        %p118 = pneg %p56
      $region14: #{generator_forward.10} parent=11 // pred_check_branch
        %120 = sbr.rel (%p118) target = $region16
      $region15: #{generator_forward.10} parent=11 // pred_region
        _
      $region16: #{generator_forward.10} parent=11 // pred_fallthru
        _
      // Predicated region
      $region17: #{generator_forward.10} parent=11 // pred_check
        %p121 = pneg %p77
      $region18: #{generator_forward.10} parent=11 // pred_check_branch
        %123 = sbr.rel (%p121) target = $region20
      $region19: #{generator_forward.10} parent=11 // pred_region
        _
      $region20: #{generator_forward.10} parent=11 // pred_fallthru
        _
    $region12: #{generator_forward.10} parent=5 // pred_fallthru
      _
    %p124 = scmp.lt.s32.totalorder %s9, 3
    // Predicated region
    $region21: #{generator_forward.10} parent=5 // pred_check
      %p125 = pneg %p124
    $region22: #{generator_forward.10} parent=5 // pred_check_branch
      %127 = sbr.rel (%p125) target = $region24
    $region23: #{generator_forward.10} parent=5 // pred_region
      // Predicated region
      $region25: #{generator_forward.10} parent=23 // pred_check
        %p128 = pneg %p29
      $region26: #{generator_forward.10} parent=23 // pred_check_branch
        %130 = sbr.rel (%p128) target = $region28
      $region27: #{generator_forward.10} parent=23 // pred_region
        %s131 = smul.u32 28, %s9
        %p132 = scmp.lt.s32.totalorder %s131, 83
        %s133 = scalar_select %p132, %s131, 83
        %s134 = smul.addr %s133, 2
        %s135 = smul.addr %s134, 8
        %s136 = scalar_lea.vmem %s0, %s135
        %s137 = smul.u32 28, %s9
      $region28: #{generator_forward.10} parent=23 // pred_fallthru
        _
    $region24: #{generator_forward.10} parent=5 // pred_fallthru
      _
    %p138 = scmp.le.s32.totalorder 1, %s9
    %p139 = scmp.lt.s32.totalorder %s9, 4
    %p140 = pnand %p138, %p139
    %p141 = pneg %p140
    // Predicated region
    $region29: #{generator_forward.10} parent=5 // pred_check
      _
    $region30: #{generator_forward.10} parent=5 // pred_check_branch
      %143 = sbr.rel (%p140) target = $region32
    $region31: #{generator_forward.10} parent=5 // pred_region
      %s144 = ssub.s32 %s9, 1
      %s145 = smul.u32 28, %s14
      %p146 = scmp.lt.s32.totalorder %s145, 83
      %s147 = scalar_select %p146, %s145, 83
      %s148 = smul.addr %s147, 2
      %s149 = smul.addr %s148, 8
      %s150 = scalar_lea.vmem %s0, %s149
      %p151 = pneg %p35
      %p152 = pneg %p32
      %p153 = pneg %p56
      %p154 = pneg %p53
      %p155 = pneg %p77
      %p156 = pneg %p74
      %p157 = pneg %p103
      %p158 = pneg %p100
      %s159 = smul.u32 28, %s14
      %p160 = scmp.lt.s32.totalorder %s159, 83
      %s161 = scalar_select %p160, %s159, 83
      %s162 = smul.addr %s161, 9
      %s163 = smul.addr %s162, 4
      %s164 = scalar_lea.vmem %s3, %s163
      %s165 = smul.u32 28, %s14
      %p166 = scmp.lt.s32.totalorder %s165, 83
      %s167 = scalar_select %p166, %s165, 83
      %s168 = smul.addr %s167, 2
      %s169 = smul.addr %s168, 8
      %s170 = scalar_lea.vmem %s0, %s169
      %s171 = smul.u32 28, %s14
      %s172 = smul.u32 28, %s14
      %p173 = scmp.lt.s32.totalorder %s172, 83
      %s174 = scalar_select %p173, %s172, 83
      %s175 = smul.addr %s174, 9
      %s176 = smul.addr %s175, 4
      %s177 = scalar_lea.vmem %s3, %s176
      %s178 = smul.u32 28, %s14
      %v180 = vld [vmem:[%s170] sm:$0xff]
      %v181 = vld [vmem:[%s170 + $0x8] sm:$0xff]
      %v182 = vld [vmem:[%s170 + $0x10] sm:$0xff]
      %v183 = vld [vmem:[%s170 + $0x18] sm:$0xff]
      %v184 = vld [vmem:[%s170 + $0x20] sm:$0xff]
      %v185 = vld [vmem:[%s170 + $0x28] sm:$0xff]
      %v186 = vld [vmem:[%s170 + $0x30] sm:$0xff]
      %v187 = vld [vmem:[%s170 + $0x38] sm:$0xff]
      %v188 = vld [vmem:[%s170 + $0x40] sm:$0xff]
      %v189 = vld [vmem:[%s170 + $0x48] sm:$0xff]
      %v190 = vld [vmem:[%s170 + $0x50] sm:$0xff]
      %v191 = vld [vmem:[%s170 + $0x58] sm:$0xff]
      %v192 = vld [vmem:[%s170 + $0x60] sm:$0xff]
      %v193 = vld [vmem:[%s170 + $0x68] sm:$0xff]
      %v194 = vld [vmem:[%s170 + $0x70] sm:$0xff]
      %v195 = vld [vmem:[%s170 + $0x78] sm:$0xff]
      %v196 = vld [vmem:[%s170 + $0x80] sm:$0xff]
      %v197 = vld [vmem:[%s170 + $0x88] sm:$0xff]
      %v198 = vld [vmem:[%s170 + $0x90] sm:$0xff]
      %v199 = vld [vmem:[%s170 + $0x98] sm:$0xff]
      %v200 = vld [vmem:[%s170 + $0xa0] sm:$0xff]
      %v201 = vld [vmem:[%s170 + $0xa8] sm:$0xff]
      %v202 = vld [vmem:[%s170 + $0xb0] sm:$0xff]
      %v203 = vld [vmem:[%s170 + $0xb8] sm:$0xff]
      %v204 = vld [vmem:[%s170 + $0xc0] sm:$0xff]
      %v205 = vld [vmem:[%s170 + $0xc8] sm:$0xff]
      %v206 = vld [vmem:[%s170 + $0xd0] sm:$0xff]
      %v207 = vld [vmem:[%s170 + $0xd8] sm:$0xff]
      %v208 = vld [vmem:[%s170 + $0xe0] sm:$0xff]
      %v209 = vld [vmem:[%s170 + $0xe8] sm:$0xff]
      %v210 = vld [vmem:[%s170 + $0xf0] sm:$0xff]
      %v211 = vld [vmem:[%s170 + $0xf8] sm:$0xff]
      %v212 = vld [vmem:[%s170 + $0x100] sm:$0xff]
      %v213 = vld [vmem:[%s170 + $0x108] sm:$0xff]
      %v214 = vld [vmem:[%s170 + $0x110] sm:$0xff]
      %v215 = vld [vmem:[%s170 + $0x118] sm:$0xff]
      %v216 = vld [vmem:[%s170 + $0x120] sm:$0xff]
      %v217 = vld [vmem:[%s170 + $0x128] sm:$0xff]
      %v218 = vld [vmem:[%s170 + $0x130] sm:$0xff]
      %v219 = vld [vmem:[%s170 + $0x138] sm:$0xff]
      %v220 = vld [vmem:[%s170 + $0x140] sm:$0xff]
      %v221 = vld [vmem:[%s170 + $0x148] sm:$0xff]
      %v222 = vld [vmem:[%s170 + $0x150] sm:$0xff]
      %v223 = vld [vmem:[%s170 + $0x158] sm:$0xff]
      %v224 = vld [vmem:[%s170 + $0x160] sm:$0xff]
      %v225 = vld [vmem:[%s170 + $0x168] sm:$0xff]
      %v226 = vld [vmem:[%s170 + $0x170] sm:$0xff]
      %v227 = vld [vmem:[%s170 + $0x178] sm:$0xff]
      %v228 = vld [vmem:[%s170 + $0x180] sm:$0xff]
      %v229 = vld [vmem:[%s170 + $0x188] sm:$0xff]
      %v230 = vld [vmem:[%s170 + $0x190] sm:$0xff]
      %v231 = vld [vmem:[%s170 + $0x198] sm:$0xff]
      %v232 = vld [vmem:[%s170 + $0x1a0] sm:$0xff]
      %v233 = vld [vmem:[%s170 + $0x1a8] sm:$0xff]
      %v234 = vld [vmem:[%s170 + $0x1b0] sm:$0xff]
      %v235 = vld [vmem:[%s170 + $0x1b8] sm:$0xff]
      %v236 = vld [vmem:[%s1] sm:$0x3]
      %v238 = vlaneseq
      %v239 = vshrl.u32 %v238, 7
      %v240 = vsub.s32 0, %v239
      %v241 = vrot.slane %v236, %v240
      %v242 = vlaneseq
      %v243 = vshrl.u32 %v242, 7
      %v244 = vsub.s32 1, %v243
      %v245 = vrot.slane %v236, %v244
      %v248 = vadd.f32 %v180, %v241
      %v249 = vadd.f32 %v181, %v245
      %v250 = vadd.f32 %v182, %v241
      %v251 = vadd.f32 %v183, %v245
      %v252 = vadd.f32 %v184, %v241
      %v253 = vadd.f32 %v185, %v245
      %v254 = vadd.f32 %v186, %v241
      %v255 = vadd.f32 %v187, %v245
      %v256 = vadd.f32 %v188, %v241
      %v257 = vadd.f32 %v189, %v245
      %v258 = vadd.f32 %v190, %v241
      %v259 = vadd.f32 %v191, %v245
      %v260 = vadd.f32 %v192, %v241
      %v261 = vadd.f32 %v193, %v245
      %v262 = vadd.f32 %v194, %v241
      %v263 = vadd.f32 %v195, %v245
      %v264 = vadd.f32 %v196, %v241
      %v265 = vadd.f32 %v197, %v245
      %v266 = vadd.f32 %v198, %v241
      %v267 = vadd.f32 %v199, %v245
      %v268 = vadd.f32 %v200, %v241
      %v269 = vadd.f32 %v201, %v245
      %v270 = vadd.f32 %v202, %v241
      %v271 = vadd.f32 %v203, %v245
      %v272 = vadd.f32 %v204, %v241
      %v273 = vadd.f32 %v205, %v245
      %v274 = vadd.f32 %v206, %v241
      %v275 = vadd.f32 %v207, %v245
      %v276 = vadd.f32 %v208, %v241
      %v277 = vadd.f32 %v209, %v245
      %v278 = vadd.f32 %v210, %v241
      %v279 = vadd.f32 %v211, %v245
      %v280 = vadd.f32 %v212, %v241
      %v281 = vadd.f32 %v213, %v245
      %v282 = vadd.f32 %v214, %v241
      %v283 = vadd.f32 %v215, %v245
      %v284 = vadd.f32 %v216, %v241
      %v285 = vadd.f32 %v217, %v245
      %v286 = vadd.f32 %v218, %v241
      %v287 = vadd.f32 %v219, %v245
      %v288 = vadd.f32 %v220, %v241
      %v289 = vadd.f32 %v221, %v245
      %v290 = vadd.f32 %v222, %v241
      %v291 = vadd.f32 %v223, %v245
      %v292 = vadd.f32 %v224, %v241
      %v293 = vadd.f32 %v225, %v245
      %v294 = vadd.f32 %v226, %v241
      %v295 = vadd.f32 %v227, %v245
      %v296 = vadd.f32 %v228, %v241
      %v297 = vadd.f32 %v229, %v245
      %v298 = vadd.f32 %v230, %v241
      %v299 = vadd.f32 %v231, %v245
      %v300 = vadd.f32 %v232, %v241
      %v301 = vadd.f32 %v233, %v245
      %v302 = vadd.f32 %v234, %v241
      %v303 = vadd.f32 %v235, %v245
      %v304 = vmax.f32 %v248, 0.0
      %v305 = vmax.f32 %v249, 0.0
      %v306 = vmax.f32 %v250, 0.0
      %v307 = vmax.f32 %v251, 0.0
      %v308 = vmax.f32 %v252, 0.0
      %v309 = vmax.f32 %v253, 0.0
      %v310 = vmax.f32 %v254, 0.0
      %v311 = vmax.f32 %v255, 0.0
      %v312 = vmax.f32 %v256, 0.0
      %v313 = vmax.f32 %v257, 0.0
      %v314 = vmax.f32 %v258, 0.0
      %v315 = vmax.f32 %v259, 0.0
      %v316 = vmax.f32 %v260, 0.0
      %v317 = vmax.f32 %v261, 0.0
      %v318 = vmax.f32 %v262, 0.0
      %v319 = vmax.f32 %v263, 0.0
      %v320 = vmax.f32 %v264, 0.0
      %v321 = vmax.f32 %v265, 0.0
      %v322 = vmax.f32 %v266, 0.0
      %v323 = vmax.f32 %v267, 0.0
      %v324 = vmax.f32 %v268, 0.0
      %v325 = vmax.f32 %v269, 0.0
      %v326 = vmax.f32 %v270, 0.0
      %v327 = vmax.f32 %v271, 0.0
      %v328 = vmax.f32 %v272, 0.0
      %v329 = vmax.f32 %v273, 0.0
      %v330 = vmax.f32 %v274, 0.0
      %v331 = vmax.f32 %v275, 0.0
      %v332 = vmax.f32 %v276, 0.0
      %v333 = vmax.f32 %v277, 0.0
      %v334 = vmax.f32 %v278, 0.0
      %v335 = vmax.f32 %v279, 0.0
      %v336 = vmax.f32 %v280, 0.0
      %v337 = vmax.f32 %v281, 0.0
      %v338 = vmax.f32 %v282, 0.0
      %v339 = vmax.f32 %v283, 0.0
      %v340 = vmax.f32 %v284, 0.0
      %v341 = vmax.f32 %v285, 0.0
      %v342 = vmax.f32 %v286, 0.0
      %v343 = vmax.f32 %v287, 0.0
      %v344 = vmax.f32 %v288, 0.0
      %v345 = vmax.f32 %v289, 0.0
      %v346 = vmax.f32 %v290, 0.0
      %v347 = vmax.f32 %v291, 0.0
      %v348 = vmax.f32 %v292, 0.0
      %v349 = vmax.f32 %v293, 0.0
      %v350 = vmax.f32 %v294, 0.0
      %v351 = vmax.f32 %v295, 0.0
      %v352 = vmax.f32 %v296, 0.0
      %v353 = vmax.f32 %v297, 0.0
      %v354 = vmax.f32 %v298, 0.0
      %v355 = vmax.f32 %v299, 0.0
      %v356 = vmax.f32 %v300, 0.0
      %v357 = vmax.f32 %v301, 0.0
      %v358 = vmax.f32 %v302, 0.0
      %v359 = vmax.f32 %v303, 0.0
      %v360 = vpack.c.bf16 %v306, %v304
      %v361 = vpack.c.bf16 %v307, %v305
      %v362 = vpack.c.bf16 %v310, %v308
      %v363 = vpack.c.bf16 %v311, %v309
      %v364 = vpack.c.bf16 %v314, %v312
      %v365 = vpack.c.bf16 %v315, %v313
      %v366 = vpack.c.bf16 %v318, %v316
      %v367 = vpack.c.bf16 %v319, %v317
      %v368 = vpack.c.bf16 %v322, %v320
      %v369 = vpack.c.bf16 %v323, %v321
      %v370 = vpack.c.bf16 %v326, %v324
      %v371 = vpack.c.bf16 %v327, %v325
      %v372 = vpack.c.bf16 %v330, %v328
      %v373 = vpack.c.bf16 %v331, %v329
      %v374 = vpack.c.bf16 %v334, %v332
      %v375 = vpack.c.bf16 %v335, %v333
      %v376 = vpack.c.bf16 %v338, %v336
      %v377 = vpack.c.bf16 %v339, %v337
      %v378 = vpack.c.bf16 %v342, %v340
      %v379 = vpack.c.bf16 %v343, %v341
      %v380 = vpack.c.bf16 %v346, %v344
      %v381 = vpack.c.bf16 %v347, %v345
      %v382 = vpack.c.bf16 %v350, %v348
      %v383 = vpack.c.bf16 %v351, %v349
      %v384 = vpack.c.bf16 %v354, %v352
      %v385 = vpack.c.bf16 %v355, %v353
      %v386 = vpack.c.bf16 %v358, %v356
      %v387 = vpack.c.bf16 %v359, %v357
      %v388 = vld [vmem:[%s2] sm:$0xff]
      %v389 = vld [vmem:[%s2 + $0x8] sm:$0xff]
      %v390 = vld [vmem:[%s2 + $0x10] sm:$0xff]
      %v391 = vld [vmem:[%s2 + $0x18] sm:$0xff]
      %v392 = vld [vmem:[%s2 + $0x20] sm:$0xf]
      %v393 = vld [vmem:[%s2 + $0x24] sm:$0xff]
      %v394 = vld [vmem:[%s2 + $0x2c] sm:$0xff]
      %v395 = vld [vmem:[%s2 + $0x34] sm:$0xff]
      %v396 = vld [vmem:[%s2 + $0x3c] sm:$0xff]
      %v397 = vld [vmem:[%s2 + $0x44] sm:$0xf]
      %v398 = vld [vmem:[%s2 + $0x48] sm:$0xff]
      %v399 = vld [vmem:[%s2 + $0x50] sm:$0xff]
      %v400 = vld [vmem:[%s2 + $0x58] sm:$0xff]
      %v401 = vld [vmem:[%s2 + $0x60] sm:$0xff]
      %v402 = vld [vmem:[%s2 + $0x68] sm:$0xf]
      %v403 = vld [vmem:[%s2 + $0x6c] sm:$0xff]
      %v404 = vld [vmem:[%s2 + $0x74] sm:$0xff]
      %v405 = vld [vmem:[%s2 + $0x7c] sm:$0xff]
      %v406 = vld [vmem:[%s2 + $0x84] sm:$0xff]
      %v407 = vld [vmem:[%s2 + $0x8c] sm:$0xf]
      %v408 = vld [vmem:[%s2 + $0x90] sm:$0xff]
      %v409 = vld [vmem:[%s2 + $0x98] sm:$0xff]
      %v410 = vld [vmem:[%s2 + $0xa0] sm:$0xff]
      %v411 = vld [vmem:[%s2 + $0xa8] sm:$0xff]
      %v412 = vld [vmem:[%s2 + $0xb0] sm:$0xf]
      %v413 = vld [vmem:[%s2 + $0xb4] sm:$0xff]
      %v414 = vld [vmem:[%s2 + $0xbc] sm:$0xff]
      %v415 = vld [vmem:[%s2 + $0xc4] sm:$0xff]
      %v416 = vld [vmem:[%s2 + $0xcc] sm:$0xff]
      %v417 = vld [vmem:[%s2 + $0xd4] sm:$0xf]
      %v418 = vld [vmem:[%s2 + $0xd8] sm:$0xff]
      %v419 = vld [vmem:[%s2 + $0xe0] sm:$0xff]
      %v420 = vld [vmem:[%s2 + $0xe8] sm:$0xff]
      %v421 = vld [vmem:[%s2 + $0xf0] sm:$0xff]
      %v422 = vld [vmem:[%s2 + $0xf8] sm:$0xf]
      %v423 = vld [vmem:[%s2 + $0xfc] sm:$0xff]
      %v424 = vld [vmem:[%s2 + $0x104] sm:$0xff]
      %v425 = vld [vmem:[%s2 + $0x10c] sm:$0xff]
      %v426 = vld [vmem:[%s2 + $0x114] sm:$0xff]
      %v427 = vld [vmem:[%s2 + $0x11c] sm:$0xf]
      %v428 = vld [vmem:[%s2 + $0x120] sm:$0xff]
      %v429 = vld [vmem:[%s2 + $0x128] sm:$0xff]
      %v430 = vld [vmem:[%s2 + $0x130] sm:$0xff]
      %v431 = vld [vmem:[%s2 + $0x138] sm:$0xff]
      %v432 = vld [vmem:[%s2 + $0x140] sm:$0xf]
      %v433 = vld [vmem:[%s2 + $0x144] sm:$0xff]
      %v434 = vld [vmem:[%s2 + $0x14c] sm:$0xff]
      %v435 = vld [vmem:[%s2 + $0x154] sm:$0xff]
      %v436 = vld [vmem:[%s2 + $0x15c] sm:$0xff]
      %v437 = vld [vmem:[%s2 + $0x164] sm:$0xf]
      %v438 = vld [vmem:[%s2 + $0x168] sm:$0xff]
      %v439 = vld [vmem:[%s2 + $0x170] sm:$0xff]
      %v440 = vld [vmem:[%s2 + $0x178] sm:$0xff]
      %v441 = vld [vmem:[%s2 + $0x180] sm:$0xff]
      %v442 = vld [vmem:[%s2 + $0x188] sm:$0xf]
      %v443 = vld [vmem:[%s2 + $0x18c] sm:$0xff]
      %v444 = vld [vmem:[%s2 + $0x194] sm:$0xff]
      %v445 = vld [vmem:[%s2 + $0x19c] sm:$0xff]
      %v446 = vld [vmem:[%s2 + $0x1a4] sm:$0xff]
      %v447 = vld [vmem:[%s2 + $0x1ac] sm:$0xf]
      %v448 = vld [vmem:[%s2 + $0x1b0] sm:$0xff]
      %v449 = vld [vmem:[%s2 + $0x1b8] sm:$0xff]
      %v450 = vld [vmem:[%s2 + $0x1c0] sm:$0xff]
      %v451 = vld [vmem:[%s2 + $0x1c8] sm:$0xff]
      %v452 = vld [vmem:[%s2 + $0x1d0] sm:$0xf]
      %v453 = vld [vmem:[%s2 + $0x1d4] sm:$0xff]
      %v454 = vld [vmem:[%s2 + $0x1dc] sm:$0xff]
      %v455 = vld [vmem:[%s2 + $0x1e4] sm:$0xff]
      %v456 = vld [vmem:[%s2 + $0x1ec] sm:$0xff]
      %v457 = vld [vmem:[%s2 + $0x1f4] sm:$0xf]
      %v458 = vld [vmem:[%s2 + $0x1f8] sm:$0xff]
      %v459 = vld [vmem:[%s2 + $0x200] sm:$0xff]
      %v460 = vld [vmem:[%s2 + $0x208] sm:$0xff]
      %v461 = vld [vmem:[%s2 + $0x210] sm:$0xff]
      %v462 = vld [vmem:[%s2 + $0x218] sm:$0xf]
      %v463 = vld [vmem:[%s2 + $0x21c] sm:$0xff]
      %v464 = vld [vmem:[%s2 + $0x224] sm:$0xff]
      %v465 = vld [vmem:[%s2 + $0x22c] sm:$0xff]
      %v466 = vld [vmem:[%s2 + $0x234] sm:$0xff]
      %v467 = vld [vmem:[%s2 + $0x23c] sm:$0xf]
      %v468 = vld [vmem:[%s2 + $0x240] sm:$0xff]
      %v469 = vld [vmem:[%s2 + $0x248] sm:$0xff]
      %v470 = vld [vmem:[%s2 + $0x250] sm:$0xff]
      %v471 = vld [vmem:[%s2 + $0x258] sm:$0xff]
      %v472 = vld [vmem:[%s2 + $0x260] sm:$0xf]
      %v473 = vld [vmem:[%s2 + $0x264] sm:$0xff]
      %v474 = vld [vmem:[%s2 + $0x26c] sm:$0xff]
      %v475 = vld [vmem:[%s2 + $0x274] sm:$0xff]
      %v476 = vld [vmem:[%s2 + $0x27c] sm:$0xff]
      %v477 = vld [vmem:[%s2 + $0x284] sm:$0xf]
      %v478 = vld [vmem:[%s2 + $0x288] sm:$0xff]
      %v479 = vld [vmem:[%s2 + $0x290] sm:$0xff]
      %v480 = vld [vmem:[%s2 + $0x298] sm:$0xff]
      %v481 = vld [vmem:[%s2 + $0x2a0] sm:$0xff]
      %v482 = vld [vmem:[%s2 + $0x2a8] sm:$0xf]
      %v483 = vld [vmem:[%s2 + $0x2ac] sm:$0xff]
      %v484 = vld [vmem:[%s2 + $0x2b4] sm:$0xff]
      %v485 = vld [vmem:[%s2 + $0x2bc] sm:$0xff]
      %v486 = vld [vmem:[%s2 + $0x2c4] sm:$0xff]
      %v487 = vld [vmem:[%s2 + $0x2cc] sm:$0xf]
      %v488 = vld [vmem:[%s2 + $0x2d0] sm:$0xff]
      %v489 = vld [vmem:[%s2 + $0x2d8] sm:$0xff]
      %v490 = vld [vmem:[%s2 + $0x2e0] sm:$0xff]
      %v491 = vld [vmem:[%s2 + $0x2e8] sm:$0xff]
      %v492 = vld [vmem:[%s2 + $0x2f0] sm:$0xf]
      %v493 = vld [vmem:[%s2 + $0x2f4] sm:$0xff]
      %v494 = vld [vmem:[%s2 + $0x2fc] sm:$0xff]
      %v495 = vld [vmem:[%s2 + $0x304] sm:$0xff]
      %v496 = vld [vmem:[%s2 + $0x30c] sm:$0xff]
      %v497 = vld [vmem:[%s2 + $0x314] sm:$0xf]
      %v498 = vld [vmem:[%s2 + $0x318] sm:$0xff]
      %v499 = vld [vmem:[%s2 + $0x320] sm:$0xff]
      %v500 = vld [vmem:[%s2 + $0x328] sm:$0xff]
      %v501 = vld [vmem:[%s2 + $0x330] sm:$0xff]
      %v502 = vld [vmem:[%s2 + $0x338] sm:$0xf]
      %v503 = vld [vmem:[%s2 + $0x33c] sm:$0xff]
      %v504 = vld [vmem:[%s2 + $0x344] sm:$0xff]
      %v505 = vld [vmem:[%s2 + $0x34c] sm:$0xff]
      %v506 = vld [vmem:[%s2 + $0x354] sm:$0xff]
      %v507 = vld [vmem:[%s2 + $0x35c] sm:$0xf]
      %v508 = vld [vmem:[%s2 + $0x360] sm:$0xff]
      %v509 = vld [vmem:[%s2 + $0x368] sm:$0xff]
      %v510 = vld [vmem:[%s2 + $0x370] sm:$0xff]
      %v511 = vld [vmem:[%s2 + $0x378] sm:$0xff]
      %v512 = vld [vmem:[%s2 + $0x380] sm:$0xf]
      %v513 = vld [vmem:[%s2 + $0x384] sm:$0xff]
      %v514 = vld [vmem:[%s2 + $0x38c] sm:$0xff]
      %v515 = vld [vmem:[%s2 + $0x394] sm:$0xff]
      %v516 = vld [vmem:[%s2 + $0x39c] sm:$0xff]
      %v517 = vld [vmem:[%s2 + $0x3a4] sm:$0xf]
      %v518 = vld [vmem:[%s2 + $0x3a8] sm:$0xff]
      %v519 = vld [vmem:[%s2 + $0x3b0] sm:$0xff]
      %v520 = vld [vmem:[%s2 + $0x3b8] sm:$0xff]
      %v521 = vld [vmem:[%s2 + $0x3c0] sm:$0xff]
      %v522 = vld [vmem:[%s2 + $0x3c8] sm:$0xf]
      %v523 = vld [vmem:[%s2 + $0x3cc] sm:$0xff]
      %v524 = vld [vmem:[%s2 + $0x3d4] sm:$0xff]
      %v525 = vld [vmem:[%s2 + $0x3dc] sm:$0xff]
      %v526 = vld [vmem:[%s2 + $0x3e4] sm:$0xff]
      %v527 = vld [vmem:[%s2 + $0x3ec] sm:$0xf]
      %v528 = vld [vmem:[%s2 + $0x3f0] sm:$0xff]
      %v529 = vld [vmem:[%s2 + $0x3f8] sm:$0xff]
      %v530 = vld [vmem:[%s2 + $0x400] sm:$0xff]
      %v531 = vld [vmem:[%s2 + $0x408] sm:$0xff]
      %v532 = vld [vmem:[%s2 + $0x410] sm:$0xf]
      %v533 = vld [vmem:[%s2 + $0x414] sm:$0xff]
      %v534 = vld [vmem:[%s2 + $0x41c] sm:$0xff]
      %v535 = vld [vmem:[%s2 + $0x424] sm:$0xff]
      %v536 = vld [vmem:[%s2 + $0x42c] sm:$0xff]
      %v537 = vld [vmem:[%s2 + $0x434] sm:$0xf]
      %v538 = vld [vmem:[%s2 + $0x438] sm:$0xff]
      %v539 = vld [vmem:[%s2 + $0x440] sm:$0xff]
      %v540 = vld [vmem:[%s2 + $0x448] sm:$0xff]
      %v541 = vld [vmem:[%s2 + $0x450] sm:$0xff]
      %v542 = vld [vmem:[%s2 + $0x458] sm:$0xf]
      %v543 = vld [vmem:[%s2 + $0x45c] sm:$0xff]
      %v544 = vld [vmem:[%s2 + $0x464] sm:$0xff]
      %v545 = vld [vmem:[%s2 + $0x46c] sm:$0xff]
      %v546 = vld [vmem:[%s2 + $0x474] sm:$0xff]
      %v547 = vld [vmem:[%s2 + $0x47c] sm:$0xf]
      %v708 = vunpack.c.l.b16 %v388
      %v709 = vunpack.c.h.b16 %v388
      %v710 = vunpack.c.l.b16 %v389
      %v711 = vunpack.c.h.b16 %v389
      %v712 = vunpack.c.l.b16 %v390
      %v713 = vunpack.c.h.b16 %v390
      %v714 = vunpack.c.l.b16 %v391
      %v715 = vunpack.c.h.b16 %v391
      %v716 = vunpack.c.l.b16 %v392
      %v717 = vunpack.c.l.b16 %v393
      %v718 = vunpack.c.h.b16 %v393
      %v719 = vunpack.c.l.b16 %v394
      %v720 = vunpack.c.h.b16 %v394
      %v721 = vunpack.c.l.b16 %v395
      %v722 = vunpack.c.h.b16 %v395
      %v723 = vunpack.c.l.b16 %v396
      %v724 = vunpack.c.h.b16 %v396
      %v725 = vunpack.c.l.b16 %v397
      %v726 = vunpack.c.l.b16 %v398
      %v727 = vunpack.c.h.b16 %v398
      %v728 = vunpack.c.l.b16 %v399
      %v729 = vunpack.c.h.b16 %v399
      %v730 = vunpack.c.l.b16 %v400
      %v731 = vunpack.c.h.b16 %v400
      %v732 = vunpack.c.l.b16 %v401
      %v733 = vunpack.c.h.b16 %v401
      %v734 = vunpack.c.l.b16 %v402
      %v735 = vunpack.c.l.b16 %v403
      %v736 = vunpack.c.h.b16 %v403
      %v737 = vunpack.c.l.b16 %v404
      %v738 = vunpack.c.h.b16 %v404
      %v739 = vunpack.c.l.b16 %v405
      %v740 = vunpack.c.h.b16 %v405
      %v741 = vunpack.c.l.b16 %v406
      %v742 = vunpack.c.h.b16 %v406
      %v743 = vunpack.c.l.b16 %v407
      %v744 = vunpack.c.l.b16 %v408
      %v745 = vunpack.c.h.b16 %v408
      %v746 = vunpack.c.l.b16 %v409
      %v747 = vunpack.c.h.b16 %v409
      %v748 = vunpack.c.l.b16 %v410
      %v749 = vunpack.c.h.b16 %v410
      %v750 = vunpack.c.l.b16 %v411
      %v751 = vunpack.c.h.b16 %v411
      %v752 = vunpack.c.l.b16 %v412
      %v753 = vunpack.c.l.b16 %v413
      %v754 = vunpack.c.h.b16 %v413
      %v755 = vunpack.c.l.b16 %v414
      %v756 = vunpack.c.h.b16 %v414
      %v757 = vunpack.c.l.b16 %v415
      %v758 = vunpack.c.h.b16 %v415
      %v759 = vunpack.c.l.b16 %v416
      %v760 = vunpack.c.h.b16 %v416
      %v761 = vunpack.c.l.b16 %v417
      %v762 = vunpack.c.l.b16 %v418
      %v763 = vunpack.c.h.b16 %v418
      %v764 = vunpack.c.l.b16 %v419
      %v765 = vunpack.c.h.b16 %v419
      %v766 = vunpack.c.l.b16 %v420
      %v767 = vunpack.c.h.b16 %v420
      %v768 = vunpack.c.l.b16 %v421
      %v769 = vunpack.c.h.b16 %v421
      %v770 = vunpack.c.l.b16 %v422
      %v771 = vunpack.c.l.b16 %v423
      %v772 = vunpack.c.h.b16 %v423
      %v773 = vunpack.c.l.b16 %v424
      %v774 = vunpack.c.h.b16 %v424
      %v775 = vunpack.c.l.b16 %v425
      %v776 = vunpack.c.h.b16 %v425
      %v777 = vunpack.c.l.b16 %v426
      %v778 = vunpack.c.h.b16 %v426
      %v779 = vunpack.c.l.b16 %v427
      %v780 = vunpack.c.l.b16 %v428
      %v781 = vunpack.c.h.b16 %v428
      %v782 = vunpack.c.l.b16 %v429
      %v783 = vunpack.c.h.b16 %v429
      %v784 = vunpack.c.l.b16 %v430
      %v785 = vunpack.c.h.b16 %v430
      %v786 = vunpack.c.l.b16 %v431
      %v787 = vunpack.c.h.b16 %v431
      %v788 = vunpack.c.l.b16 %v432
      %v789 = vunpack.c.l.b16 %v433
      %v790 = vunpack.c.h.b16 %v433
      %v791 = vunpack.c.l.b16 %v434
      %v792 = vunpack.c.h.b16 %v434
      %v793 = vunpack.c.l.b16 %v435
      %v794 = vunpack.c.h.b16 %v435
      %v795 = vunpack.c.l.b16 %v436
      %v796 = vunpack.c.h.b16 %v436
      %v797 = vunpack.c.l.b16 %v437
      %v798 = vunpack.c.l.b16 %v438
      %v799 = vunpack.c.h.b16 %v438
      %v800 = vunpack.c.l.b16 %v439
      %v801 = vunpack.c.h.b16 %v439
      %v802 = vunpack.c.l.b16 %v440
      %v803 = vunpack.c.h.b16 %v440
      %v804 = vunpack.c.l.b16 %v441
      %v805 = vunpack.c.h.b16 %v441
      %v806 = vunpack.c.l.b16 %v442
      %v807 = vunpack.c.l.b16 %v443
      %v808 = vunpack.c.h.b16 %v443
      %v809 = vunpack.c.l.b16 %v444
      %v810 = vunpack.c.h.b16 %v444
      %v811 = vunpack.c.l.b16 %v445
      %v812 = vunpack.c.h.b16 %v445
      %v813 = vunpack.c.l.b16 %v446
      %v814 = vunpack.c.h.b16 %v446
      %v815 = vunpack.c.l.b16 %v447
      %v816 = vunpack.c.l.b16 %v448
      %v817 = vunpack.c.h.b16 %v448
      %v818 = vunpack.c.l.b16 %v449
      %v819 = vunpack.c.h.b16 %v449
      %v820 = vunpack.c.l.b16 %v450
      %v821 = vunpack.c.h.b16 %v450
      %v822 = vunpack.c.l.b16 %v451
      %v823 = vunpack.c.h.b16 %v451
      %v824 = vunpack.c.l.b16 %v452
      %v825 = vunpack.c.l.b16 %v453
      %v826 = vunpack.c.h.b16 %v453
      %v827 = vunpack.c.l.b16 %v454
      %v828 = vunpack.c.h.b16 %v454
      %v829 = vunpack.c.l.b16 %v455
      %v830 = vunpack.c.h.b16 %v455
      %v831 = vunpack.c.l.b16 %v456
      %v832 = vunpack.c.h.b16 %v456
      %v833 = vunpack.c.l.b16 %v457
      %v834 = vunpack.c.l.b16 %v458
      %v835 = vunpack.c.h.b16 %v458
      %v836 = vunpack.c.l.b16 %v459
      %v837 = vunpack.c.h.b16 %v459
      %v838 = vunpack.c.l.b16 %v460
      %v839 = vunpack.c.h.b16 %v460
      %v840 = vunpack.c.l.b16 %v461
      %v841 = vunpack.c.h.b16 %v461
      %v842 = vunpack.c.l.b16 %v462
      %v843 = vunpack.c.l.b16 %v463
      %v844 = vunpack.c.h.b16 %v463
      %v845 = vunpack.c.l.b16 %v464
      %v846 = vunpack.c.h.b16 %v464
      %v847 = vunpack.c.l.b16 %v465
      %v848 = vunpack.c.h.b16 %v465
      %v849 = vunpack.c.l.b16 %v466
      %v850 = vunpack.c.h.b16 %v466
      %v851 = vunpack.c.l.b16 %v467
      %v852 = vunpack.c.l.b16 %v468
      %v853 = vunpack.c.h.b16 %v468
      %v854 = vunpack.c.l.b16 %v469
      %v855 = vunpack.c.h.b16 %v469
      %v856 = vunpack.c.l.b16 %v470
      %v857 = vunpack.c.h.b16 %v470
      %v858 = vunpack.c.l.b16 %v471
      %v859 = vunpack.c.h.b16 %v471
      %v860 = vunpack.c.l.b16 %v472
      %v861 = vunpack.c.l.b16 %v473
      %v862 = vunpack.c.h.b16 %v473
      %v863 = vunpack.c.l.b16 %v474
      %v864 = vunpack.c.h.b16 %v474
      %v865 = vunpack.c.l.b16 %v475
      %v866 = vunpack.c.h.b16 %v475
      %v867 = vunpack.c.l.b16 %v476
      %v868 = vunpack.c.h.b16 %v476
      %v869 = vunpack.c.l.b16 %v477
      %v870 = vunpack.c.l.b16 %v478
      %v871 = vunpack.c.h.b16 %v478
      %v872 = vunpack.c.l.b16 %v479
      %v873 = vunpack.c.h.b16 %v479
      %v874 = vunpack.c.l.b16 %v480
      %v875 = vunpack.c.h.b16 %v480
      %v876 = vunpack.c.l.b16 %v481
      %v877 = vunpack.c.h.b16 %v481
      %v878 = vunpack.c.l.b16 %v482
      %v879 = vunpack.c.l.b16 %v483
      %v880 = vunpack.c.h.b16 %v483
      %v881 = vunpack.c.l.b16 %v484
      %v882 = vunpack.c.h.b16 %v484
      %v883 = vunpack.c.l.b16 %v485
      %v884 = vunpack.c.h.b16 %v485
      %v885 = vunpack.c.l.b16 %v486
      %v886 = vunpack.c.h.b16 %v486
      %v887 = vunpack.c.l.b16 %v487
      %v888 = vunpack.c.l.b16 %v488
      %v889 = vunpack.c.h.b16 %v488
      %v890 = vunpack.c.l.b16 %v489
      %v891 = vunpack.c.h.b16 %v489
      %v892 = vunpack.c.l.b16 %v490
      %v893 = vunpack.c.h.b16 %v490
      %v894 = vunpack.c.l.b16 %v491
      %v895 = vunpack.c.h.b16 %v491
      %v896 = vunpack.c.l.b16 %v492
      %v897 = vunpack.c.l.b16 %v493
      %v898 = vunpack.c.h.b16 %v493
      %v899 = vunpack.c.l.b16 %v494
      %v900 = vunpack.c.h.b16 %v494
      %v901 = vunpack.c.l.b16 %v495
      %v902 = vunpack.c.h.b16 %v495
      %v903 = vunpack.c.l.b16 %v496
      %v904 = vunpack.c.h.b16 %v496
      %v905 = vunpack.c.l.b16 %v497
      %v906 = vunpack.c.l.b16 %v498
      %v907 = vunpack.c.h.b16 %v498
      %v908 = vunpack.c.l.b16 %v499
      %v909 = vunpack.c.h.b16 %v499
      %v910 = vunpack.c.l.b16 %v500
      %v911 = vunpack.c.h.b16 %v500
      %v912 = vunpack.c.l.b16 %v501
      %v913 = vunpack.c.h.b16 %v501
      %v914 = vunpack.c.l.b16 %v502
      %v915 = vunpack.c.l.b16 %v503
      %v916 = vunpack.c.h.b16 %v503
      %v917 = vunpack.c.l.b16 %v504
      %v918 = vunpack.c.h.b16 %v504
      %v919 = vunpack.c.l.b16 %v505
      %v920 = vunpack.c.h.b16 %v505
      %v921 = vunpack.c.l.b16 %v506
      %v922 = vunpack.c.h.b16 %v506
      %v923 = vunpack.c.l.b16 %v507
      %v924 = vunpack.c.l.b16 %v508
      %v925 = vunpack.c.h.b16 %v508
      %v926 = vunpack.c.l.b16 %v509
      %v927 = vunpack.c.h.b16 %v509
      %v928 = vunpack.c.l.b16 %v510
      %v929 = vunpack.c.h.b16 %v510
      %v930 = vunpack.c.l.b16 %v511
      %v931 = vunpack.c.h.b16 %v511
      %v932 = vunpack.c.l.b16 %v512
      %v933 = vunpack.c.l.b16 %v513
      %v934 = vunpack.c.h.b16 %v513
      %v935 = vunpack.c.l.b16 %v514
      %v936 = vunpack.c.h.b16 %v514
      %v937 = vunpack.c.l.b16 %v515
      %v938 = vunpack.c.h.b16 %v515
      %v939 = vunpack.c.l.b16 %v516
      %v940 = vunpack.c.h.b16 %v516
      %v941 = vunpack.c.l.b16 %v517
      %v942 = vunpack.c.l.b16 %v518
      %v943 = vunpack.c.h.b16 %v518
      %v944 = vunpack.c.l.b16 %v519
      %v945 = vunpack.c.h.b16 %v519
      %v946 = vunpack.c.l.b16 %v520
      %v947 = vunpack.c.h.b16 %v520
      %v948 = vunpack.c.l.b16 %v521
      %v949 = vunpack.c.h.b16 %v521
      %v950 = vunpack.c.l.b16 %v522
      %v951 = vunpack.c.l.b16 %v523
      %v952 = vunpack.c.h.b16 %v523
      %v953 = vunpack.c.l.b16 %v524
      %v954 = vunpack.c.h.b16 %v524
      %v955 = vunpack.c.l.b16 %v525
      %v956 = vunpack.c.h.b16 %v525
      %v957 = vunpack.c.l.b16 %v526
      %v958 = vunpack.c.h.b16 %v526
      %v959 = vunpack.c.l.b16 %v527
      %v960 = vunpack.c.l.b16 %v528
      %v961 = vunpack.c.h.b16 %v528
      %v962 = vunpack.c.l.b16 %v529
      %v963 = vunpack.c.h.b16 %v529
      %v964 = vunpack.c.l.b16 %v530
      %v965 = vunpack.c.h.b16 %v530
      %v966 = vunpack.c.l.b16 %v531
      %v967 = vunpack.c.h.b16 %v531
      %v968 = vunpack.c.l.b16 %v532
      %v969 = vunpack.c.l.b16 %v533
      %v970 = vunpack.c.h.b16 %v533
      %v971 = vunpack.c.l.b16 %v534
      %v972 = vunpack.c.h.b16 %v534
      %v973 = vunpack.c.l.b16 %v535
      %v974 = vunpack.c.h.b16 %v535
      %v975 = vunpack.c.l.b16 %v536
      %v976 = vunpack.c.h.b16 %v536
      %v977 = vunpack.c.l.b16 %v537
      %v978 = vunpack.c.l.b16 %v538
      %v979 = vunpack.c.h.b16 %v538
      %v980 = vunpack.c.l.b16 %v539
      %v981 = vunpack.c.h.b16 %v539
      %v982 = vunpack.c.l.b16 %v540
      %v983 = vunpack.c.h.b16 %v540
      %v984 = vunpack.c.l.b16 %v541
      %v985 = vunpack.c.h.b16 %v541
      %v986 = vunpack.c.l.b16 %v542
      %v987 = vunpack.c.l.b16 %v543
      %v988 = vunpack.c.h.b16 %v543
      %v989 = vunpack.c.l.b16 %v544
      %v990 = vunpack.c.h.b16 %v544
      %v991 = vunpack.c.l.b16 %v545
      %v992 = vunpack.c.h.b16 %v545
      %v993 = vunpack.c.l.b16 %v546
      %v994 = vunpack.c.h.b16 %v546
      %v995 = vunpack.c.l.b16 %v547
      %v996 = vpack.c.b16 %v717, %v708
      %v997 = vpack.c.b16 %v718, %v709
      %v998 = vpack.c.b16 %v719, %v710
      %v999 = vpack.c.b16 %v720, %v711
      %v1000 = vpack.c.b16 %v721, %v712
      %v1001 = vpack.c.b16 %v722, %v713
      %v1002 = vpack.c.b16 %v723, %v714
      %v1003 = vpack.c.b16 %v724, %v715
      %v1004 = vpack.c.b16 %v725, %v716
      %v1005 = vpack.c.b16 %v735, %v726
      %v1006 = vpack.c.b16 %v736, %v727
      %v1007 = vpack.c.b16 %v737, %v728
      %v1008 = vpack.c.b16 %v738, %v729
      %v1009 = vpack.c.b16 %v739, %v730
      %v1010 = vpack.c.b16 %v740, %v731
      %v1011 = vpack.c.b16 %v741, %v732
      %v1012 = vpack.c.b16 %v742, %v733
      %v1013 = vpack.c.b16 %v743, %v734
      %v1014 = vpack.c.b16 %v753, %v744
      %v1015 = vpack.c.b16 %v754, %v745
      %v1016 = vpack.c.b16 %v755, %v746
      %v1017 = vpack.c.b16 %v756, %v747
      %v1018 = vpack.c.b16 %v757, %v748
      %v1019 = vpack.c.b16 %v758, %v749
      %v1020 = vpack.c.b16 %v759, %v750
      %v1021 = vpack.c.b16 %v760, %v751
      %v1022 = vpack.c.b16 %v761, %v752
      %v1023 = vpack.c.b16 %v771, %v762
      %v1024 = vpack.c.b16 %v772, %v763
      %v1025 = vpack.c.b16 %v773, %v764
      %v1026 = vpack.c.b16 %v774, %v765
      %v1027 = vpack.c.b16 %v775, %v766
      %v1028 = vpack.c.b16 %v776, %v767
      %v1029 = vpack.c.b16 %v777, %v768
      %v1030 = vpack.c.b16 %v778, %v769
      %v1031 = vpack.c.b16 %v779, %v770
      %v1032 = vpack.c.b16 %v789, %v780
      %v1033 = vpack.c.b16 %v790, %v781
      %v1034 = vpack.c.b16 %v791, %v782
      %v1035 = vpack.c.b16 %v792, %v783
      %v1036 = vpack.c.b16 %v793, %v784
      %v1037 = vpack.c.b16 %v794, %v785
      %v1038 = vpack.c.b16 %v795, %v786
      %v1039 = vpack.c.b16 %v796, %v787
      %v1040 = vpack.c.b16 %v797, %v788
      %v1041 = vpack.c.b16 %v807, %v798
      %v1042 = vpack.c.b16 %v808, %v799
      %v1043 = vpack.c.b16 %v809, %v800
      %v1044 = vpack.c.b16 %v810, %v801
      %v1045 = vpack.c.b16 %v811, %v802
      %v1046 = vpack.c.b16 %v812, %v803
      %v1047 = vpack.c.b16 %v813, %v804
      %v1048 = vpack.c.b16 %v814, %v805
      %v1049 = vpack.c.b16 %v815, %v806
      %v1050 = vpack.c.b16 %v825, %v816
      %v1051 = vpack.c.b16 %v826, %v817
      %v1052 = vpack.c.b16 %v827, %v818
      %v1053 = vpack.c.b16 %v828, %v819
      %v1054 = vpack.c.b16 %v829, %v820
      %v1055 = vpack.c.b16 %v830, %v821
      %v1056 = vpack.c.b16 %v831, %v822
      %v1057 = vpack.c.b16 %v832, %v823
      %v1058 = vpack.c.b16 %v833, %v824
      %v1059 = vpack.c.b16 %v843, %v834
      %v1060 = vpack.c.b16 %v844, %v835
      %v1061 = vpack.c.b16 %v845, %v836
      %v1062 = vpack.c.b16 %v846, %v837
      %v1063 = vpack.c.b16 %v847, %v838
      %v1064 = vpack.c.b16 %v848, %v839
      %v1065 = vpack.c.b16 %v849, %v840
      %v1066 = vpack.c.b16 %v850, %v841
      %v1067 = vpack.c.b16 %v851, %v842
      %v1068 = vpack.c.b16 %v861, %v852
      %v1069 = vpack.c.b16 %v862, %v853
      %v1070 = vpack.c.b16 %v863, %v854
      %v1071 = vpack.c.b16 %v864, %v855
      %v1072 = vpack.c.b16 %v865, %v856
      %v1073 = vpack.c.b16 %v866, %v857
      %v1074 = vpack.c.b16 %v867, %v858
      %v1075 = vpack.c.b16 %v868, %v859
      %v1076 = vpack.c.b16 %v869, %v860
      %v1077 = vpack.c.b16 %v879, %v870
      %v1078 = vpack.c.b16 %v880, %v871
      %v1079 = vpack.c.b16 %v881, %v872
      %v1080 = vpack.c.b16 %v882, %v873
      %v1081 = vpack.c.b16 %v883, %v874
      %v1082 = vpack.c.b16 %v884, %v875
      %v1083 = vpack.c.b16 %v885, %v876
      %v1084 = vpack.c.b16 %v886, %v877
      %v1085 = vpack.c.b16 %v887, %v878
      %v1086 = vpack.c.b16 %v897, %v888
      %v1087 = vpack.c.b16 %v898, %v889
      %v1088 = vpack.c.b16 %v899, %v890
      %v1089 = vpack.c.b16 %v900, %v891
      %v1090 = vpack.c.b16 %v901, %v892
      %v1091 = vpack.c.b16 %v902, %v893
      %v1092 = vpack.c.b16 %v903, %v894
      %v1093 = vpack.c.b16 %v904, %v895
      %v1094 = vpack.c.b16 %v905, %v896
      %v1095 = vpack.c.b16 %v915, %v906
      %v1096 = vpack.c.b16 %v916, %v907
      %v1097 = vpack.c.b16 %v917, %v908
      %v1098 = vpack.c.b16 %v918, %v909
      %v1099 = vpack.c.b16 %v919, %v910
      %v1100 = vpack.c.b16 %v920, %v911
      %v1101 = vpack.c.b16 %v921, %v912
      %v1102 = vpack.c.b16 %v922, %v913
      %v1103 = vpack.c.b16 %v923, %v914
      %v1104 = vpack.c.b16 %v933, %v924
      %v1105 = vpack.c.b16 %v934, %v925
      %v1106 = vpack.c.b16 %v935, %v926
      %v1107 = vpack.c.b16 %v936, %v927
      %v1108 = vpack.c.b16 %v937, %v928
      %v1109 = vpack.c.b16 %v938, %v929
      %v1110 = vpack.c.b16 %v939, %v930
      %v1111 = vpack.c.b16 %v940, %v931
      %v1112 = vpack.c.b16 %v941, %v932
      %v1113 = vpack.c.b16 %v951, %v942
      %v1114 = vpack.c.b16 %v952, %v943
      %v1115 = vpack.c.b16 %v953, %v944
      %v1116 = vpack.c.b16 %v954, %v945
      %v1117 = vpack.c.b16 %v955, %v946
      %v1118 = vpack.c.b16 %v956, %v947
      %v1119 = vpack.c.b16 %v957, %v948
      %v1120 = vpack.c.b16 %v958, %v949
      %v1121 = vpack.c.b16 %v959, %v950
      %v1122 = vpack.c.b16 %v969, %v960
      %v1123 = vpack.c.b16 %v970, %v961
      %v1124 = vpack.c.b16 %v971, %v962
      %v1125 = vpack.c.b16 %v972, %v963
      %v1126 = vpack.c.b16 %v973, %v964
      %v1127 = vpack.c.b16 %v974, %v965
      %v1128 = vpack.c.b16 %v975, %v966
      %v1129 = vpack.c.b16 %v976, %v967
      %v1130 = vpack.c.b16 %v977, %v968
      %v1131 = vpack.c.b16 %v987, %v978
      %v1132 = vpack.c.b16 %v988, %v979
      %v1133 = vpack.c.b16 %v989, %v980
      %v1134 = vpack.c.b16 %v990, %v981
      %v1135 = vpack.c.b16 %v991, %v982
      %v1136 = vpack.c.b16 %v992, %v983
      %v1137 = vpack.c.b16 %v993, %v984
      %v1138 = vpack.c.b16 %v994, %v985
      %v1139 = vpack.c.b16 %v995, %v986
      %1284 = vmatprep.subr.bf16.mxu0 %v997
      %1285 = vmatpush1.bf16.msra.mxu0 %v996
      %1286 = vmatprep.subr.bf16.mxu0 %v1006
      %1287 = vmatpush1.bf16.msra.mxu0 %v1005
      %1288 = vmatprep.subr.bf16.mxu0 %v1015
      %1289 = vmatpush1.bf16.msra.mxu0 %v1014
      %1290 = vmatprep.subr.bf16.mxu0 %v1024
      %1291 = vmatpush1.bf16.msra.mxu0 %v1023
      %1292 = vmatprep.subr.bf16.mxu0 %v1033
      %1293 = vmatpush1.bf16.msra.mxu0 %v1032
      %1294 = vmatprep.subr.bf16.mxu0 %v1042
      %1295 = vmatpush1.bf16.msra.mxu0 %v1041
      %1296 = vmatprep.subr.bf16.mxu0 %v1051
      %1297 = vmatpush1.bf16.msra.mxu0 %v1050
      %1298 = vmatprep.subr.bf16.mxu0 %v1060
      %1299 = vmatpush1.bf16.msra.mxu0 %v1059
      %1300 = vmatprep.subr.bf16.mxu0 %v1069
      %1301 = vmatpush1.bf16.msra.mxu0 %v1068
      %1302 = vmatprep.subr.bf16.mxu0 %v1078
      %1303 = vmatpush1.bf16.msra.mxu0 %v1077
      %1304 = vmatprep.subr.bf16.mxu0 %v1087
      %1305 = vmatpush1.bf16.msra.mxu0 %v1086
      %1306 = vmatprep.subr.bf16.mxu0 %v1096
      %1307 = vmatpush1.bf16.msra.mxu0 %v1095
      %1308 = vmatprep.subr.bf16.mxu0 %v1105
      %1309 = vmatpush1.bf16.msra.mxu0 %v1104
      %1310 = vmatprep.subr.bf16.mxu0 %v1114
      %1311 = vmatpush1.bf16.msra.mxu0 %v1113
      %1312 = vmatprep.subr.bf16.mxu0 %v1123
      %1313 = vmatpush1.bf16.msra.mxu0 %v1122
      %1314 = vmatprep.subr.bf16.mxu0 %v1132
      %1315 = vmatpush1.bf16.msra.mxu0 %v1131
      %1316 = vmatprep.mubr.bf16.mxu0 %v361
      %1317 = vmatmul.mubr.bf16.gmra.mrb[0].mxu0 %v360
      %v1318 = vpop.f32.mrb[0].mxu0
      %v1319 = vadd.f32 0.0, %v1318
      %v1320 = vpop.f32.mrb[0].mxu0
      %v1321 = vadd.f32 0.0, %v1320
      %v1322 = vpop.f32.mrb[0].mxu0
      %v1323 = vadd.f32 0.0, %v1322
      %v1324 = vpop.f32.mrb[0].mxu0
      %v1325 = vadd.f32 0.0, %v1324
      %1326 = vmatprep.mubr.bf16.mxu0 %v363
      %1327 = vmatmul.mubr.bf16.gmra.mrb[0].mxu0 %v362
      %v1328 = vpop.f32.mrb[0].mxu0
      %v1329 = vadd.f32 0.0, %v1328
      %v1330 = vpop.f32.mrb[0].mxu0
      %v1331 = vadd.f32 0.0, %v1330
      %v1332 = vpop.f32.mrb[0].mxu0
      %v1333 = vadd.f32 0.0, %v1332
      %v1334 = vpop.f32.mrb[0].mxu0
      %v1335 = vadd.f32 0.0, %v1334
      %1336 = vmatprep.mubr.bf16.mxu0 %v365
      %1337 = vmatmul.mubr.bf16.gmra.mrb[0].mxu0 %v364
      %v1338 = vpop.f32.mrb[0].mxu0
      %v1339 = vadd.f32 0.0, %v1338
      %v1340 = vpop.f32.mrb[0].mxu0
      %v1341 = vadd.f32 0.0, %v1340
      %v1342 = vpop.f32.mrb[0].mxu0
      %v1343 = vadd.f32 0.0, %v1342
      %v1344 = vpop.f32.mrb[0].mxu0
      %v1345 = vadd.f32 0.0, %v1344
      %1346 = vmatprep.mubr.bf16.mxu0 %v367
      %1347 = vmatmul.mubr.bf16.gmra.mrb[0].mxu0 %v366
      %v1348 = vpop.f32.mrb[0].mxu0
      %v1349 = vadd.f32 0.0, %v1348
      %v1350 = vpop.f32.mrb[0].mxu0
      %v1351 = vadd.f32 0.0, %v1350
      %v1352 = vpop.f32.mrb[0].mxu0
      %v1353 = vadd.f32 0.0, %v1352
      %v1354 = vpop.f32.mrb[0].mxu0
      %v1355 = vadd.f32 0.0, %v1354
      %1356 = vmatprep.mubr.bf16.mxu0 %v369
      %1357 = vmatmul.mubr.bf16.gmra.mrb[0].mxu0 %v368
      %v1358 = vpop.f32.mrb[0].mxu0
      %v1359 = vadd.f32 0.0, %v1358
      %v1360 = vpop.f32.mrb[0].mxu0
      %v1361 = vadd.f32 0.0, %v1360
      %v1362 = vpop.f32.mrb[0].mxu0
      %v1363 = vadd.f32 0.0, %v1362
      %v1364 = vpop.f32.mrb[0].mxu0
      %v1365 = vadd.f32 0.0, %v1364
      %1366 = vmatprep.mubr.bf16.mxu0 %v371
      %1367 = vmatmul.mubr.bf16.gmra.mrb[0].mxu0 %v370
      %v1368 = vpop.f32.mrb[0].mxu0
      %v1369 = vadd.f32 0.0, %v1368
      %v1370 = vpop.f32.mrb[0].mxu0
      %v1371 = vadd.f32 0.0, %v1370
      %v1372 = vpop.f32.mrb[0].mxu0
      %v1373 = vadd.f32 0.0, %v1372
      %v1374 = vpop.f32.mrb[0].mxu0
      %v1375 = vadd.f32 0.0, %v1374
      %1376 = vmatprep.mubr.bf16.mxu0 %v373
      %1377 = vmatmul.mubr.bf16.gmra.mrb[0].mxu0 %v372
      %v1378 = vpop.f32.mrb[0].mxu0
      %v1379 = vadd.f32 0.0, %v1378
      %v1380 = vpop.f32.mrb[0].mxu0
      %v1381 = vadd.f32 0.0, %v1380
      %v1382 = vpop.f32.mrb[0].mxu0
      %v1383 = vadd.f32 0.0, %v1382
      %v1384 = vpop.f32.mrb[0].mxu0
      %v1385 = vadd.f32 0.0, %v1384
      %1386 = vmatprep.mubr.bf16.mxu0 %v375
      %1387 = vmatmul.mubr.bf16.gmra.mrb[0].mxu0 %v374
      %v1388 = vpop.f32.mrb[0].mxu0
      %v1389 = vadd.f32 0.0, %v1388
      %v1390 = vpop.f32.mrb[0].mxu0
      %v1391 = vadd.f32 0.0, %v1390
      %v1392 = vpop.f32.mrb[0].mxu0
      %v1393 = vadd.f32 0.0, %v1392
      %v1394 = vpop.f32.mrb[0].mxu0
      %v1395 = vadd.f32 0.0, %v1394
      %1396 = vmatprep.mubr.bf16.mxu0 %v377
      %1397 = vmatmul.mubr.bf16.gmra.mrb[0].mxu0 %v376
      %v1398 = vpop.f32.mrb[0].mxu0
      %v1399 = vadd.f32 0.0, %v1398
      %v1400 = vpop.f32.mrb[0].mxu0
      %v1401 = vadd.f32 0.0, %v1400
      %v1402 = vpop.f32.mrb[0].mxu0
      %v1403 = vadd.f32 0.0, %v1402
      %v1404 = vpop.f32.mrb[0].mxu0
      %v1405 = vadd.f32 0.0, %v1404
      %1406 = vmatprep.mubr.bf16.mxu0 %v379
      %1407 = vmatmul.mubr.bf16.gmra.mrb[0].mxu0 %v378
      %v1408 = vpop.f32.mrb[0].mxu0
      %v1409 = vadd.f32 0.0, %v1408
      %v1410 = vpop.f32.mrb[0].mxu0
      %v1411 = vadd.f32 0.0, %v1410
      %v1412 = vpop.f32.mrb[0].mxu0
      %v1413 = vadd.f32 0.0, %v1412
      %v1414 = vpop.f32.mrb[0].mxu0
      %v1415 = vadd.f32 0.0, %v1414
      %1416 = vmatprep.mubr.bf16.mxu0 %v381
      %1417 = vmatmul.mubr.bf16.gmra.mrb[0].mxu0 %v380
      %v1418 = vpop.f32.mrb[0].mxu0
      %v1419 = vadd.f32 0.0, %v1418
      %v1420 = vpop.f32.mrb[0].mxu0
      %v1421 = vadd.f32 0.0, %v1420
      %v1422 = vpop.f32.mrb[0].mxu0
      %v1423 = vadd.f32 0.0, %v1422
      %v1424 = vpop.f32.mrb[0].mxu0
      %v1425 = vadd.f32 0.0, %v1424
      %1426 = vmatprep.mubr.bf16.mxu0 %v383
      %1427 = vmatmul.mubr.bf16.gmra.mrb[0].mxu0 %v382
      %v1428 = vpop.f32.mrb[0].mxu0
      %v1429 = vadd.f32 0.0, %v1428
      %v1430 = vpop.f32.mrb[0].mxu0
      %v1431 = vadd.f32 0.0, %v1430
      %v1432 = vpop.f32.mrb[0].mxu0
      %v1433 = vadd.f32 0.0, %v1432
      %v1434 = vpop.f32.mrb[0].mxu0
      %v1435 = vadd.f32 0.0, %v1434
      %1436 = vmatprep.mubr.bf16.mxu0 %v385
      %1437 = vmatmul.mubr.bf16.gmra.mrb[0].mxu0 %v384
      %v1438 = vpop.f32.mrb[0].mxu0
      %v1439 = vadd.f32 0.0, %v1438
      %v1440 = vpop.f32.mrb[0].mxu0
      %v1441 = vadd.f32 0.0, %v1440
      %v1442 = vpop.f32.mrb[0].mxu0
      %v1443 = vadd.f32 0.0, %v1442
      %v1444 = vpop.f32.mrb[0].mxu0
      %v1445 = vadd.f32 0.0, %v1444
      %1446 = vmatprep.mubr.bf16.mxu0 %v387
      %1447 = vmatmul.mubr.bf16.gmra.mrb[0].mxu0 %v386
      %v1448 = vpop.f32.mrb[0].mxu0
      %v1449 = vadd.f32 0.0, %v1448
      %v1450 = vpop.f32.mrb[0].mxu0
      %v1451 = vadd.f32 0.0, %v1450
      %v1452 = vpop.f32.mrb[0].mxu0
      %v1453 = vadd.f32 0.0, %v1452
      %v1454 = vpop.f32.mrb[0].mxu0
      %v1455 = vadd.f32 0.0, %v1454
      %1456 = vdwg.mxu0
      %1457 = vmatprep.subr.bf16.mxu0 %v999
      %1458 = vmatpush1.bf16.msra.mxu0 %v998
      %1459 = vmatprep.subr.bf16.mxu0 %v1008
      %1460 = vmatpush1.bf16.msra.mxu0 %v1007
      %1461 = vmatprep.subr.bf16.mxu0 %v1017
      %1462 = vmatpush1.bf16.msra.mxu0 %v1016
      %1463 = vmatprep.subr.bf16.mxu0 %v1026
      %1464 = vmatpush1.bf16.msra.mxu0 %v1025
      %1465 = vmatprep.subr.bf16.mxu0 %v1035
      %1466 = vmatpush1.bf16.msra.mxu0 %v1034
      %1467 = vmatprep.subr.bf16.mxu0 %v1044
      %1468 = vmatpush1.bf16.msra.mxu0 %v1043
      %1469 = vmatprep.subr.bf16.mxu0 %v1053
      %1470 = vmatpush1.bf16.msra.mxu0 %v1052
      %1471 = vmatprep.subr.bf16.mxu0 %v1062
      %1472 = vmatpush1.bf16.msra.mxu0 %v1061
      %1473 = vmatprep.subr.bf16.mxu0 %v1071
      %1474 = vmatpush1.bf16.msra.mxu0 %v1070
      %1475 = vmatprep.subr.bf16.mxu0 %v1080
      %1476 = vmatpush1.bf16.msra.mxu0 %v1079
      %1477 = vmatprep.subr.bf16.mxu0 %v1089
      %1478 = vmatpush1.bf16.msra.mxu0 %v1088
      %1479 = vmatprep.subr.bf16.mxu0 %v1098
      %1480 = vmatpush1.bf16.msra.mxu0 %v1097
      %1481 = vmatprep.subr.bf16.mxu0 %v1107
      %1482 = vmatpush1.bf16.msra.mxu0 %v1106
      %1483 = vmatprep.subr.bf16.mxu0 %v1116
      %1484 = vmatpush1.bf16.msra.mxu0 %v1115
      %1485 = vmatprep.subr.bf16.mxu0 %v1125
      %1486 = vmatpush1.bf16.msra.mxu0 %v1124
      %1487 = vmatprep.subr.bf16.mxu0 %v1134
      %1488 = vmatpush1.bf16.msra.mxu0 %v1133
      %1489 = vmatprep.mubr.bf16.mxu0 %v361
      %1490 = vmatmul.mubr.bf16.gmra.mrb[0].mxu0 %v360
      %v1491 = vpop.f32.mrb[0].mxu0
      %v1492 = vadd.f32 0.0, %v1491
      %v1493 = vpop.f32.mrb[0].mxu0
      %v1494 = vadd.f32 0.0, %v1493
      %v1495 = vpop.f32.mrb[0].mxu0
      %v1496 = vadd.f32 0.0, %v1495
      %v1497 = vpop.f32.mrb[0].mxu0
      %v1498 = vadd.f32 0.0, %v1497
      %1499 = vmatprep.mubr.bf16.mxu0 %v363
      %1500 = vmatmul.mubr.bf16.gmra.mrb[0].mxu0 %v362
      %v1501 = vpop.f32.mrb[0].mxu0
      %v1502 = vadd.f32 0.0, %v1501
      %v1503 = vpop.f32.mrb[0].mxu0
      %v1504 = vadd.f32 0.0, %v1503
      %v1505 = vpop.f32.mrb[0].mxu0
      %v1506 = vadd.f32 0.0, %v1505
      %v1507 = vpop.f32.mrb[0].mxu0
      %v1508 = vadd.f32 0.0, %v1507
      %1509 = vmatprep.mubr.bf16.mxu0 %v365
      %1510 = vmatmul.mubr.bf16.gmra.mrb[0].mxu0 %v364
      %v1511 = vpop.f32.mrb[0].mxu0
      %v1512 = vadd.f32 0.0, %v1511
      %v1513 = vpop.f32.mrb[0].mxu0
      %v1514 = vadd.f32 0.0, %v1513
      %v1515 = vpop.f32.mrb[0].mxu0
      %v1516 = vadd.f32 0.0, %v1515
      %v1517 = vpop.f32.mrb[0].mxu0
      %v1518 = vadd.f32 0.0, %v1517
      %1519 = vmatprep.mubr.bf16.mxu0 %v367
      %1520 = vmatmul.mubr.bf16.gmra.mrb[0].mxu0 %v366
      %v1521 = vpop.f32.mrb[0].mxu0
      %v1522 = vadd.f32 0.0, %v1521
      %v1523 = vpop.f32.mrb[0].mxu0
      %v1524 = vadd.f32 0.0, %v1523
      %v1525 = vpop.f32.mrb[0].mxu0
      %v1526 = vadd.f32 0.0, %v1525
      %v1527 = vpop.f32.mrb[0].mxu0
      %v1528 = vadd.f32 0.0, %v1527
      %1529 = vmatprep.mubr.bf16.mxu0 %v369
      %1530 = vmatmul.mubr.bf16.gmra.mrb[0].mxu0 %v368
      %v1531 = vpop.f32.mrb[0].mxu0
      %v1532 = vadd.f32 0.0, %v1531
      %v1533 = vpop.f32.mrb[0].mxu0
      %v1534 = vadd.f32 0.0, %v1533
      %v1535 = vpop.f32.mrb[0].mxu0
      %v1536 = vadd.f32 0.0, %v1535
      %v1537 = vpop.f32.mrb[0].mxu0
      %v1538 = vadd.f32 0.0, %v1537
      %1539 = vmatprep.mubr.bf16.mxu0 %v371
      %1540 = vmatmul.mubr.bf16.gmra.mrb[0].mxu0 %v370
      %v1541 = vpop.f32.mrb[0].mxu0
      %v1542 = vadd.f32 0.0, %v1541
      %v1543 = vpop.f32.mrb[0].mxu0
      %v1544 = vadd.f32 0.0, %v1543
      %v1545 = vpop.f32.mrb[0].mxu0
      %v1546 = vadd.f32 0.0, %v1545
      %v1547 = vpop.f32.mrb[0].mxu0
      %v1548 = vadd.f32 0.0, %v1547
      %1549 = vmatprep.mubr.bf16.mxu0 %v373
      %1550 = vmatmul.mubr.bf16.gmra.mrb[0].mxu0 %v372
      %v1551 = vpop.f32.mrb[0].mxu0
      %v1552 = vadd.f32 0.0, %v1551
      %v1553 = vpop.f32.mrb[0].mxu0
      %v1554 = vadd.f32 0.0, %v1553
      %v1555 = vpop.f32.mrb[0].mxu0
      %v1556 = vadd.f32 0.0, %v1555
      %v1557 = vpop.f32.mrb[0].mxu0
      %v1558 = vadd.f32 0.0, %v1557
      %1559 = vmatprep.mubr.bf16.mxu0 %v375
      %1560 = vmatmul.mubr.bf16.gmra.mrb[0].mxu0 %v374
      %v1561 = vpop.f32.mrb[0].mxu0
      %v1562 = vadd.f32 0.0, %v1561
      %v1563 = vpop.f32.mrb[0].mxu0
      %v1564 = vadd.f32 0.0, %v1563
      %v1565 = vpop.f32.mrb[0].mxu0
      %v1566 = vadd.f32 0.0, %v1565
      %v1567 = vpop.f32.mrb[0].mxu0
      %v1568 = vadd.f32 0.0, %v1567
      %1569 = vmatprep.mubr.bf16.mxu0 %v377
      %1570 = vmatmul.mubr.bf16.gmra.mrb[0].mxu0 %v376
      %v1571 = vpop.f32.mrb[0].mxu0
      %v1572 = vadd.f32 0.0, %v1571
      %v1573 = vpop.f32.mrb[0].mxu0
      %v1574 = vadd.f32 0.0, %v1573
      %v1575 = vpop.f32.mrb[0].mxu0
      %v1576 = vadd.f32 0.0, %v1575
      %v1577 = vpop.f32.mrb[0].mxu0
      %v1578 = vadd.f32 0.0, %v1577
      %1579 = vmatprep.mubr.bf16.mxu0 %v379
      %1580 = vmatmul.mubr.bf16.gmra.mrb[0].mxu0 %v378
      %v1581 = vpop.f32.mrb[0].mxu0
      %v1582 = vadd.f32 0.0, %v1581
      %v1583 = vpop.f32.mrb[0].mxu0
      %v1584 = vadd.f32 0.0, %v1583
      %v1585 = vpop.f32.mrb[0].mxu0
      %v1586 = vadd.f32 0.0, %v1585
      %v1587 = vpop.f32.mrb[0].mxu0
      %v1588 = vadd.f32 0.0, %v1587
      %1589 = vmatprep.mubr.bf16.mxu0 %v381
      %1590 = vmatmul.mubr.bf16.gmra.mrb[0].mxu0 %v380
      %v1591 = vpop.f32.mrb[0].mxu0
      %v1592 = vadd.f32 0.0, %v1591
      %v1593 = vpop.f32.mrb[0].mxu0
      %v1594 = vadd.f32 0.0, %v1593
      %v1595 = vpop.f32.mrb[0].mxu0
      %v1596 = vadd.f32 0.0, %v1595
      %v1597 = vpop.f32.mrb[0].mxu0
      %v1598 = vadd.f32 0.0, %v1597
      %1599 = vmatprep.mubr.bf16.mxu0 %v383
      %1600 = vmatmul.mubr.bf16.gmra.mrb[0].mxu0 %v382
      %v1601 = vpop.f32.mrb[0].mxu0
      %v1602 = vadd.f32 0.0, %v1601
      %v1603 = vpop.f32.mrb[0].mxu0
      %v1604 = vadd.f32 0.0, %v1603
      %v1605 = vpop.f32.mrb[0].mxu0
      %v1606 = vadd.f32 0.0, %v1605
      %v1607 = vpop.f32.mrb[0].mxu0
      %v1608 = vadd.f32 0.0, %v1607
      %1609 = vmatprep.mubr.bf16.mxu0 %v385
      %1610 = vmatmul.mubr.bf16.gmra.mrb[0].mxu0 %v384
      %v1611 = vpop.f32.mrb[0].mxu0
      %v1612 = vadd.f32 0.0, %v1611
      %v1613 = vpop.f32.mrb[0].mxu0
      %v1614 = vadd.f32 0.0, %v1613
      %v1615 = vpop.f32.mrb[0].mxu0
      %v1616 = vadd.f32 0.0, %v1615
      %v1617 = vpop.f32.mrb[0].mxu0
      %v1618 = vadd.f32 0.0, %v1617
      %1619 = vmatprep.mubr.bf16.mxu0 %v387
      %1620 = vmatmul.mubr.bf16.gmra.mrb[0].mxu0 %v386
      %v1621 = vpop.f32.mrb[0].mxu0
      %v1622 = vadd.f32 0.0, %v1621
      %v1623 = vpop.f32.mrb[0].mxu0
      %v1624 = vadd.f32 0.0, %v1623
      %v1625 = vpop.f32.mrb[0].mxu0
      %v1626 = vadd.f32 0.0, %v1625
      %v1627 = vpop.f32.mrb[0].mxu0
      %v1628 = vadd.f32 0.0, %v1627
      %1629 = vdwg.mxu0
      %1630 = vmatprep.subr.bf16.mxu0 %v1001
      %1631 = vmatpush1.bf16.msra.mxu0 %v1000
      %1632 = vmatprep.subr.bf16.mxu0 %v1010
      %1633 = vmatpush1.bf16.msra.mxu0 %v1009
      %1634 = vmatprep.subr.bf16.mxu0 %v1019
      %1635 = vmatpush1.bf16.msra.mxu0 %v1018
      %1636 = vmatprep.subr.bf16.mxu0 %v1028
      %1637 = vmatpush1.bf16.msra.mxu0 %v1027
      %1638 = vmatprep.subr.bf16.mxu0 %v1037
      %1639 = vmatpush1.bf16.msra.mxu0 %v1036
      %1640 = vmatprep.subr.bf16.mxu0 %v1046
      %1641 = vmatpush1.bf16.msra.mxu0 %v1045
      %1642 = vmatprep.subr.bf16.mxu0 %v1055
      %1643 = vmatpush1.bf16.msra.mxu0 %v1054
      %1644 = vmatprep.subr.bf16.mxu0 %v1064
      %1645 = vmatpush1.bf16.msra.mxu0 %v1063
      %1646 = vmatprep.subr.bf16.mxu0 %v1073
      %1647 = vmatpush1.bf16.msra.mxu0 %v1072
      %1648 = vmatprep.subr.bf16.mxu0 %v1082
      %1649 = vmatpush1.bf16.msra.mxu0 %v1081
      %1650 = vmatprep.subr.bf16.mxu0 %v1091
      %1651 = vmatpush1.bf16.msra.mxu0 %v1090
      %1652 = vmatprep.subr.bf16.mxu0 %v1100
      %1653 = vmatpush1.bf16.msra.mxu0 %v1099
      %1654 = vmatprep.subr.bf16.mxu0 %v1109
      %1655 = vmatpush1.bf16.msra.mxu0 %v1108
      %1656 = vmatprep.subr.bf16.mxu0 %v1118
      %1657 = vmatpush1.bf16.msra.mxu0 %v1117
      %1658 = vmatprep.subr.bf16.mxu0 %v1127
      %1659 = vmatpush1.bf16.msra.mxu0 %v1126
      %1660 = vmatprep.subr.bf16.mxu0 %v1136
      %1661 = vmatpush1.bf16.msra.mxu0 %v1135
      %1662 = vmatprep.mubr.bf16.mxu0 %v361
      %1663 = vmatmul.mubr.bf16.gmra.mrb[0].mxu0 %v360
      %v1664 = vpop.f32.mrb[0].mxu0
      %v1665 = vadd.f32 0.0, %v1664
      %v1666 = vpop.f32.mrb[0].mxu0
      %v1667 = vadd.f32 0.0, %v1666
      %v1668 = vpop.f32.mrb[0].mxu0
      %v1669 = vadd.f32 0.0, %v1668
      %v1670 = vpop.f32.mrb[0].mxu0
      %v1671 = vadd.f32 0.0, %v1670
      %1672 = vmatprep.mubr.bf16.mxu0 %v363
      %1673 = vmatmul.mubr.bf16.gmra.mrb[0].mxu0 %v362
      %v1674 = vpop.f32.mrb[0].mxu0
      %v1675 = vadd.f32 0.0, %v1674
      %v1676 = vpop.f32.mrb[0].mxu0
      %v1677 = vadd.f32 0.0, %v1676
      %v1678 = vpop.f32.mrb[0].mxu0
      %v1679 = vadd.f32 0.0, %v1678
      %v1680 = vpop.f32.mrb[0].mxu0
      %v1681 = vadd.f32 0.0, %v1680
      %1682 = vmatprep.mubr.bf16.mxu0 %v365
      %1683 = vmatmul.mubr.bf16.gmra.mrb[0].mxu0 %v364
      %v1684 = vpop.f32.mrb[0].mxu0
      %v1685 = vadd.f32 0.0, %v1684
      %v1686 = vpop.f32.mrb[0].mxu0
      %v1687 = vadd.f32 0.0, %v1686
      %v1688 = vpop.f32.mrb[0].mxu0
      %v1689 = vadd.f32 0.0, %v1688
      %v1690 = vpop.f32.mrb[0].mxu0
      %v1691 = vadd.f32 0.0, %v1690
      %1692 = vmatprep.mubr.bf16.mxu0 %v367
      %1693 = vmatmul.mubr.bf16.gmra.mrb[0].mxu0 %v366
      %v1694 = vpop.f32.mrb[0].mxu0
      %v1695 = vadd.f32 0.0, %v1694
      %v1696 = vpop.f32.mrb[0].mxu0
      %v1697 = vadd.f32 0.0, %v1696
      %v1698 = vpop.f32.mrb[0].mxu0
      %v1699 = vadd.f32 0.0, %v1698
      %v1700 = vpop.f32.mrb[0].mxu0
      %v1701 = vadd.f32 0.0, %v1700
      %1702 = vmatprep.mubr.bf16.mxu0 %v369
      %1703 = vmatmul.mubr.bf16.gmra.mrb[0].mxu0 %v368
      %v1704 = vpop.f32.mrb[0].mxu0
      %v1705 = vadd.f32 0.0, %v1704
      %v1706 = vpop.f32.mrb[0].mxu0
      %v1707 = vadd.f32 0.0, %v1706
      %v1708 = vpop.f32.mrb[0].mxu0
      %v1709 = vadd.f32 0.0, %v1708
      %v1710 = vpop.f32.mrb[0].mxu0
      %v1711 = vadd.f32 0.0, %v1710
      %1712 = vmatprep.mubr.bf16.mxu0 %v371
      %1713 = vmatmul.mubr.bf16.gmra.mrb[0].mxu0 %v370
      %v1714 = vpop.f32.mrb[0].mxu0
      %v1715 = vadd.f32 0.0, %v1714
      %v1716 = vpop.f32.mrb[0].mxu0
      %v1717 = vadd.f32 0.0, %v1716
      %v1718 = vpop.f32.mrb[0].mxu0
      %v1719 = vadd.f32 0.0, %v1718
      %v1720 = vpop.f32.mrb[0].mxu0
      %v1721 = vadd.f32 0.0, %v1720
      %1722 = vmatprep.mubr.bf16.mxu0 %v373
      %1723 = vmatmul.mubr.bf16.gmra.mrb[0].mxu0 %v372
      %v1724 = vpop.f32.mrb[0].mxu0
      %v1725 = vadd.f32 0.0, %v1724
      %v1726 = vpop.f32.mrb[0].mxu0
      %v1727 = vadd.f32 0.0, %v1726
      %v1728 = vpop.f32.mrb[0].mxu0
      %v1729 = vadd.f32 0.0, %v1728
      %v1730 = vpop.f32.mrb[0].mxu0
      %v1731 = vadd.f32 0.0, %v1730
      %1732 = vmatprep.mubr.bf16.mxu0 %v375
      %1733 = vmatmul.mubr.bf16.gmra.mrb[0].mxu0 %v374
      %v1734 = vpop.f32.mrb[0].mxu0
      %v1735 = vadd.f32 0.0, %v1734
      %v1736 = vpop.f32.mrb[0].mxu0
      %v1737 = vadd.f32 0.0, %v1736
      %v1738 = vpop.f32.mrb[0].mxu0
      %v1739 = vadd.f32 0.0, %v1738
      %v1740 = vpop.f32.mrb[0].mxu0
      %v1741 = vadd.f32 0.0, %v1740
      %1742 = vmatprep.mubr.bf16.mxu0 %v377
      %1743 = vmatmul.mubr.bf16.gmra.mrb[0].mxu0 %v376
      %v1744 = vpop.f32.mrb[0].mxu0
      %v1745 = vadd.f32 0.0, %v1744
      %v1746 = vpop.f32.mrb[0].mxu0
      %v1747 = vadd.f32 0.0, %v1746
      %v1748 = vpop.f32.mrb[0].mxu0
      %v1749 = vadd.f32 0.0, %v1748
      %v1750 = vpop.f32.mrb[0].mxu0
      %v1751 = vadd.f32 0.0, %v1750
      %1752 = vmatprep.mubr.bf16.mxu0 %v379
      %1753 = vmatmul.mubr.bf16.gmra.mrb[0].mxu0 %v378
      %v1754 = vpop.f32.mrb[0].mxu0
      %v1755 = vadd.f32 0.0, %v1754
      %v1756 = vpop.f32.mrb[0].mxu0
      %v1757 = vadd.f32 0.0, %v1756
      %v1758 = vpop.f32.mrb[0].mxu0
      %v1759 = vadd.f32 0.0, %v1758
      %v1760 = vpop.f32.mrb[0].mxu0
      %v1761 = vadd.f32 0.0, %v1760
      %1762 = vmatprep.mubr.bf16.mxu0 %v381
      %1763 = vmatmul.mubr.bf16.gmra.mrb[0].mxu0 %v380
      %v1764 = vpop.f32.mrb[0].mxu0
      %v1765 = vadd.f32 0.0, %v1764
      %v1766 = vpop.f32.mrb[0].mxu0
      %v1767 = vadd.f32 0.0, %v1766
      %v1768 = vpop.f32.mrb[0].mxu0
      %v1769 = vadd.f32 0.0, %v1768
      %v1770 = vpop.f32.mrb[0].mxu0
      %v1771 = vadd.f32 0.0, %v1770
      %1772 = vmatprep.mubr.bf16.mxu0 %v383
      %1773 = vmatmul.mubr.bf16.gmra.mrb[0].mxu0 %v382
      %v1774 = vpop.f32.mrb[0].mxu0
      %v1775 = vadd.f32 0.0, %v1774
      %v1776 = vpop.f32.mrb[0].mxu0
      %v1777 = vadd.f32 0.0, %v1776
      %v1778 = vpop.f32.mrb[0].mxu0
      %v1779 = vadd.f32 0.0, %v1778
      %v1780 = vpop.f32.mrb[0].mxu0
      %v1781 = vadd.f32 0.0, %v1780
      %1782 = vmatprep.mubr.bf16.mxu0 %v385
      %1783 = vmatmul.mubr.bf16.gmra.mrb[0].mxu0 %v384
      %v1784 = vpop.f32.mrb[0].mxu0
      %v1785 = vadd.f32 0.0, %v1784
      %v1786 = vpop.f32.mrb[0].mxu0
      %v1787 = vadd.f32 0.0, %v1786
      %v1788 = vpop.f32.mrb[0].mxu0
      %v1789 = vadd.f32 0.0, %v1788
      %v1790 = vpop.f32.mrb[0].mxu0
      %v1791 = vadd.f32 0.0, %v1790
      %1792 = vmatprep.mubr.bf16.mxu0 %v387
      %1793 = vmatmul.mubr.bf16.gmra.mrb[0].mxu0 %v386
      %v1794 = vpop.f32.mrb[0].mxu0
      %v1795 = vadd.f32 0.0, %v1794
      %v1796 = vpop.f32.mrb[0].mxu0
      %v1797 = vadd.f32 0.0, %v1796
      %v1798 = vpop.f32.mrb[0].mxu0
      %v1799 = vadd.f32 0.0, %v1798
      %v1800 = vpop.f32.mrb[0].mxu0
      %v1801 = vadd.f32 0.0, %v1800
      %1802 = vdwg.mxu0
      %1803 = vmatprep.subr.bf16.mxu0 %v1003
      %1804 = vmatpush1.bf16.msra.mxu0 %v1002
      %1805 = vmatprep.subr.bf16.mxu0 %v1012
      %1806 = vmatpush1.bf16.msra.mxu0 %v1011
      %1807 = vmatprep.subr.bf16.mxu0 %v1021
      %1808 = vmatpush1.bf16.msra.mxu0 %v1020
      %1809 = vmatprep.subr.bf16.mxu0 %v1030
      %1810 = vmatpush1.bf16.msra.mxu0 %v1029
      %1811 = vmatprep.subr.bf16.mxu0 %v1039
      %1812 = vmatpush1.bf16.msra.mxu0 %v1038
      %1813 = vmatprep.subr.bf16.mxu0 %v1048
      %1814 = vmatpush1.bf16.msra.mxu0 %v1047
      %1815 = vmatprep.subr.bf16.mxu0 %v1057
      %1816 = vmatpush1.bf16.msra.mxu0 %v1056
      %1817 = vmatprep.subr.bf16.mxu0 %v1066
      %1818 = vmatpush1.bf16.msra.mxu0 %v1065
      %1819 = vmatprep.subr.bf16.mxu0 %v1075
      %1820 = vmatpush1.bf16.msra.mxu0 %v1074
      %1821 = vmatprep.subr.bf16.mxu0 %v1084
      %1822 = vmatpush1.bf16.msra.mxu0 %v1083
      %1823 = vmatprep.subr.bf16.mxu0 %v1093
      %1824 = vmatpush1.bf16.msra.mxu0 %v1092
      %1825 = vmatprep.subr.bf16.mxu0 %v1102
      %1826 = vmatpush1.bf16.msra.mxu0 %v1101
      %1827 = vmatprep.subr.bf16.mxu0 %v1111
      %1828 = vmatpush1.bf16.msra.mxu0 %v1110
      %1829 = vmatprep.subr.bf16.mxu0 %v1120
      %1830 = vmatpush1.bf16.msra.mxu0 %v1119
      %1831 = vmatprep.subr.bf16.mxu0 %v1129
      %1832 = vmatpush1.bf16.msra.mxu0 %v1128
      %1833 = vmatprep.subr.bf16.mxu0 %v1138
      %1834 = vmatpush1.bf16.msra.mxu0 %v1137
      %1835 = vmatprep.mubr.bf16.mxu0 %v361
      %1836 = vmatmul.mubr.bf16.gmra.mrb[0].mxu0 %v360
      %v1837 = vpop.f32.mrb[0].mxu0
      %v1838 = vadd.f32 0.0, %v1837
      %v1839 = vpop.f32.mrb[0].mxu0
      %v1840 = vadd.f32 0.0, %v1839
      %v1841 = vpop.f32.mrb[0].mxu0
      %v1842 = vadd.f32 0.0, %v1841
      %v1843 = vpop.f32.mrb[0].mxu0
      %v1844 = vadd.f32 0.0, %v1843
      %1845 = vmatprep.mubr.bf16.mxu0 %v363
      %1846 = vmatmul.mubr.bf16.gmra.mrb[0].mxu0 %v362
      %v1847 = vpop.f32.mrb[0].mxu0
      %v1848 = vadd.f32 0.0, %v1847
      %v1849 = vpop.f32.mrb[0].mxu0
      %v1850 = vadd.f32 0.0, %v1849
      %v1851 = vpop.f32.mrb[0].mxu0
      %v1852 = vadd.f32 0.0, %v1851
      %v1853 = vpop.f32.mrb[0].mxu0
      %v1854 = vadd.f32 0.0, %v1853
      %1855 = vmatprep.mubr.bf16.mxu0 %v365
      %1856 = vmatmul.mubr.bf16.gmra.mrb[0].mxu0 %v364
      %v1857 = vpop.f32.mrb[0].mxu0
      %v1858 = vadd.f32 0.0, %v1857
      %v1859 = vpop.f32.mrb[0].mxu0
      %v1860 = vadd.f32 0.0, %v1859
      %v1861 = vpop.f32.mrb[0].mxu0
      %v1862 = vadd.f32 0.0, %v1861
      %v1863 = vpop.f32.mrb[0].mxu0
      %v1864 = vadd.f32 0.0, %v1863
      %1865 = vmatprep.mubr.bf16.mxu0 %v367
      %1866 = vmatmul.mubr.bf16.gmra.mrb[0].mxu0 %v366
      %v1867 = vpop.f32.mrb[0].mxu0
      %v1868 = vadd.f32 0.0, %v1867
      %v1869 = vpop.f32.mrb[0].mxu0
      %v1870 = vadd.f32 0.0, %v1869
      %v1871 = vpop.f32.mrb[0].mxu0
      %v1872 = vadd.f32 0.0, %v1871
      %v1873 = vpop.f32.mrb[0].mxu0
      %v1874 = vadd.f32 0.0, %v1873
      %1875 = vmatprep.mubr.bf16.mxu0 %v369
      %1876 = vmatmul.mubr.bf16.gmra.mrb[0].mxu0 %v368
      %v1877 = vpop.f32.mrb[0].mxu0
      %v1878 = vadd.f32 0.0, %v1877
      %v1879 = vpop.f32.mrb[0].mxu0
      %v1880 = vadd.f32 0.0, %v1879
      %v1881 = vpop.f32.mrb[0].mxu0
      %v1882 = vadd.f32 0.0, %v1881
      %v1883 = vpop.f32.mrb[0].mxu0
      %v1884 = vadd.f32 0.0, %v1883
      %1885 = vmatprep.mubr.bf16.mxu0 %v371
      %1886 = vmatmul.mubr.bf16.gmra.mrb[0].mxu0 %v370
      %v1887 = vpop.f32.mrb[0].mxu0
      %v1888 = vadd.f32 0.0, %v1887
      %v1889 = vpop.f32.mrb[0].mxu0
      %v1890 = vadd.f32 0.0, %v1889
      %v1891 = vpop.f32.mrb[0].mxu0
      %v1892 = vadd.f32 0.0, %v1891
      %v1893 = vpop.f32.mrb[0].mxu0
      %v1894 = vadd.f32 0.0, %v1893
      %1895 = vmatprep.mubr.bf16.mxu0 %v373
      %1896 = vmatmul.mubr.bf16.gmra.mrb[0].mxu0 %v372
      %v1897 = vpop.f32.mrb[0].mxu0
      %v1898 = vadd.f32 0.0, %v1897
      %v1899 = vpop.f32.mrb[0].mxu0
      %v1900 = vadd.f32 0.0, %v1899
      %v1901 = vpop.f32.mrb[0].mxu0
      %v1902 = vadd.f32 0.0, %v1901
      %v1903 = vpop.f32.mrb[0].mxu0
      %v1904 = vadd.f32 0.0, %v1903
      %1905 = vmatprep.mubr.bf16.mxu0 %v375
      %1906 = vmatmul.mubr.bf16.gmra.mrb[0].mxu0 %v374
      %v1907 = vpop.f32.mrb[0].mxu0
      %v1908 = vadd.f32 0.0, %v1907
      %v1909 = vpop.f32.mrb[0].mxu0
      %v1910 = vadd.f32 0.0, %v1909
      %v1911 = vpop.f32.mrb[0].mxu0
      %v1912 = vadd.f32 0.0, %v1911
      %v1913 = vpop.f32.mrb[0].mxu0
      %v1914 = vadd.f32 0.0, %v1913
      %1915 = vmatprep.mubr.bf16.mxu0 %v377
      %1916 = vmatmul.mubr.bf16.gmra.mrb[0].mxu0 %v376
      %v1917 = vpop.f32.mrb[0].mxu0
      %v1918 = vadd.f32 0.0, %v1917
      %v1919 = vpop.f32.mrb[0].mxu0
      %v1920 = vadd.f32 0.0, %v1919
      %v1921 = vpop.f32.mrb[0].mxu0
      %v1922 = vadd.f32 0.0, %v1921
      %v1923 = vpop.f32.mrb[0].mxu0
      %v1924 = vadd.f32 0.0, %v1923
      %1925 = vmatprep.mubr.bf16.mxu0 %v379
      %1926 = vmatmul.mubr.bf16.gmra.mrb[0].mxu0 %v378
      %v1927 = vpop.f32.mrb[0].mxu0
      %v1928 = vadd.f32 0.0, %v1927
      %v1929 = vpop.f32.mrb[0].mxu0
      %v1930 = vadd.f32 0.0, %v1929
      %v1931 = vpop.f32.mrb[0].mxu0
      %v1932 = vadd.f32 0.0, %v1931
      %v1933 = vpop.f32.mrb[0].mxu0
      %v1934 = vadd.f32 0.0, %v1933
      %1935 = vmatprep.mubr.bf16.mxu0 %v381
      %1936 = vmatmul.mubr.bf16.gmra.mrb[0].mxu0 %v380
      %v1937 = vpop.f32.mrb[0].mxu0
      %v1938 = vadd.f32 0.0, %v1937
      %v1939 = vpop.f32.mrb[0].mxu0
      %v1940 = vadd.f32 0.0, %v1939
      %v1941 = vpop.f32.mrb[0].mxu0
      %v1942 = vadd.f32 0.0, %v1941
      %v1943 = vpop.f32.mrb[0].mxu0
      %v1944 = vadd.f32 0.0, %v1943
      %1945 = vmatprep.mubr.bf16.mxu0 %v383
      %1946 = vmatmul.mubr.bf16.gmra.mrb[0].mxu0 %v382
      %v1947 = vpop.f32.mrb[0].mxu0
      %v1948 = vadd.f32 0.0, %v1947
      %v1949 = vpop.f32.mrb[0].mxu0
      %v1950 = vadd.f32 0.0, %v1949
      %v1951 = vpop.f32.mrb[0].mxu0
      %v1952 = vadd.f32 0.0, %v1951
      %v1953 = vpop.f32.mrb[0].mxu0
      %v1954 = vadd.f32 0.0, %v1953
      %1955 = vmatprep.mubr.bf16.mxu0 %v385
      %1956 = vmatmul.mubr.bf16.gmra.mrb[0].mxu0 %v384
      %v1957 = vpop.f32.mrb[0].mxu0
      %v1958 = vadd.f32 0.0, %v1957
      %v1959 = vpop.f32.mrb[0].mxu0
      %v1960 = vadd.f32 0.0, %v1959
      %v1961 = vpop.f32.mrb[0].mxu0
      %v1962 = vadd.f32 0.0, %v1961
      %v1963 = vpop.f32.mrb[0].mxu0
      %v1964 = vadd.f32 0.0, %v1963
      %1965 = vmatprep.mubr.bf16.mxu0 %v387
      %1966 = vmatmul.mubr.bf16.gmra.mrb[0].mxu0 %v386
      %v1967 = vpop.f32.mrb[0].mxu0
      %v1968 = vadd.f32 0.0, %v1967
      %v1969 = vpop.f32.mrb[0].mxu0
      %v1970 = vadd.f32 0.0, %v1969
      %v1971 = vpop.f32.mrb[0].mxu0
      %v1972 = vadd.f32 0.0, %v1971
      %v1973 = vpop.f32.mrb[0].mxu0
      %v1974 = vadd.f32 0.0, %v1973
      %1975 = vdwg.mxu0
      %1976 = vmatprep.subr.bf16.mxu0 0
      %1977 = vmatpush1.bf16.msra.mxu0 %v1004
      %1978 = vmatprep.subr.bf16.mxu0 0
      %1979 = vmatpush1.bf16.msra.mxu0 %v1013
      %1980 = vmatprep.subr.bf16.mxu0 0
      %1981 = vmatpush1.bf16.msra.mxu0 %v1022
      %1982 = vmatprep.subr.bf16.mxu0 0
      %1983 = vmatpush1.bf16.msra.mxu0 %v1031
      %1984 = vmatprep.subr.bf16.mxu0 0
      %1985 = vmatpush1.bf16.msra.mxu0 %v1040
      %1986 = vmatprep.subr.bf16.mxu0 0
      %1987 = vmatpush1.bf16.msra.mxu0 %v1049
      %1988 = vmatprep.subr.bf16.mxu0 0
      %1989 = vmatpush1.bf16.msra.mxu0 %v1058
      %1990 = vmatprep.subr.bf16.mxu0 0
      %1991 = vmatpush1.bf16.msra.mxu0 %v1067
      %1992 = vmatprep.subr.bf16.mxu0 0
      %1993 = vmatpush1.bf16.msra.mxu0 %v1076
      %1994 = vmatprep.subr.bf16.mxu0 0
      %1995 = vmatpush1.bf16.msra.mxu0 %v1085
      %1996 = vmatprep.subr.bf16.mxu0 0
      %1997 = vmatpush1.bf16.msra.mxu0 %v1094
      %1998 = vmatprep.subr.bf16.mxu0 0
      %1999 = vmatpush1.bf16.msra.mxu0 %v1103
      %2000 = vmatprep.subr.bf16.mxu0 0
      %2001 = vmatpush1.bf16.msra.mxu0 %v1112
      %2002 = vmatprep.subr.bf16.mxu0 0
      %2003 = vmatpush1.bf16.msra.mxu0 %v1121
      %2004 = vmatprep.subr.bf16.mxu0 0
      %2005 = vmatpush1.bf16.msra.mxu0 %v1130
      %2006 = vmatprep.subr.bf16.mxu0 0
      %2007 = vmatpush1.bf16.msra.mxu0 %v1139
      %2008 = vmatprep.mubr.bf16.mxu0 %v361
      %2009 = vmatmul.mubr.bf16.gmra.mrb[0].mxu0 %v360
      %v2010 = vpop.f32.mrb[0].mxu0
      %v2011 = vadd.f32 0.0, %v2010
      %v2012 = vpop.f32.mrb[0].mxu0
      %v2013 = vpop.f32.mrb[0].mxu0
      %v2014 = vadd.f32 0.0, %v2013
      %v2015 = vpop.f32.mrb[0].mxu0
      %2016 = vmatprep.mubr.bf16.mxu0 %v363
      %2017 = vmatmul.mubr.bf16.gmra.mrb[0].mxu0 %v362
      %v2018 = vpop.f32.mrb[0].mxu0
      %v2019 = vadd.f32 0.0, %v2018
      %v2020 = vpop.f32.mrb[0].mxu0
      %v2021 = vpop.f32.mrb[0].mxu0
      %v2022 = vadd.f32 0.0, %v2021
      %v2023 = vpop.f32.mrb[0].mxu0
      %2024 = vmatprep.mubr.bf16.mxu0 %v365
      %2025 = vmatmul.mubr.bf16.gmra.mrb[0].mxu0 %v364
      %v2026 = vpop.f32.mrb[0].mxu0
      %v2027 = vadd.f32 0.0, %v2026
      %v2028 = vpop.f32.mrb[0].mxu0
      %v2029 = vpop.f32.mrb[0].mxu0
      %v2030 = vadd.f32 0.0, %v2029
      %v2031 = vpop.f32.mrb[0].mxu0
      %2032 = vmatprep.mubr.bf16.mxu0 %v367
      %2033 = vmatmul.mubr.bf16.gmra.mrb[0].mxu0 %v366
      %v2034 = vpop.f32.mrb[0].mxu0
      %v2035 = vadd.f32 0.0, %v2034
      %v2036 = vpop.f32.mrb[0].mxu0
      %v2037 = vpop.f32.mrb[0].mxu0
      %v2038 = vadd.f32 0.0, %v2037
      %v2039 = vpop.f32.mrb[0].mxu0
      %2040 = vmatprep.mubr.bf16.mxu0 %v369
      %2041 = vmatmul.mubr.bf16.gmra.mrb[0].mxu0 %v368
      %v2042 = vpop.f32.mrb[0].mxu0
      %v2043 = vadd.f32 0.0, %v2042
      %v2044 = vpop.f32.mrb[0].mxu0
      %v2045 = vpop.f32.mrb[0].mxu0
      %v2046 = vadd.f32 0.0, %v2045
      %v2047 = vpop.f32.mrb[0].mxu0
      %2048 = vmatprep.mubr.bf16.mxu0 %v371
      %2049 = vmatmul.mubr.bf16.gmra.mrb[0].mxu0 %v370
      %v2050 = vpop.f32.mrb[0].mxu0
      %v2051 = vadd.f32 0.0, %v2050
      %v2052 = vpop.f32.mrb[0].mxu0
      %v2053 = vpop.f32.mrb[0].mxu0
      %v2054 = vadd.f32 0.0, %v2053
      %v2055 = vpop.f32.mrb[0].mxu0
      %2056 = vmatprep.mubr.bf16.mxu0 %v373
      %2057 = vmatmul.mubr.bf16.gmra.mrb[0].mxu0 %v372
      %v2058 = vpop.f32.mrb[0].mxu0
      %v2059 = vadd.f32 0.0, %v2058
      %v2060 = vpop.f32.mrb[0].mxu0
      %v2061 = vpop.f32.mrb[0].mxu0
      %v2062 = vadd.f32 0.0, %v2061
      %v2063 = vpop.f32.mrb[0].mxu0
      %2064 = vmatprep.mubr.bf16.mxu0 %v375
      %2065 = vmatmul.mubr.bf16.gmra.mrb[0].mxu0 %v374
      %v2066 = vpop.f32.mrb[0].mxu0
      %v2067 = vadd.f32 0.0, %v2066
      %v2068 = vpop.f32.mrb[0].mxu0
      %v2069 = vpop.f32.mrb[0].mxu0
      %v2070 = vadd.f32 0.0, %v2069
      %v2071 = vpop.f32.mrb[0].mxu0
      %2072 = vmatprep.mubr.bf16.mxu0 %v377
      %2073 = vmatmul.mubr.bf16.gmra.mrb[0].mxu0 %v376
      %v2074 = vpop.f32.mrb[0].mxu0
      %v2075 = vadd.f32 0.0, %v2074
      %v2076 = vpop.f32.mrb[0].mxu0
      %v2077 = vpop.f32.mrb[0].mxu0
      %v2078 = vadd.f32 0.0, %v2077
      %v2079 = vpop.f32.mrb[0].mxu0
      %2080 = vmatprep.mubr.bf16.mxu0 %v379
      %2081 = vmatmul.mubr.bf16.gmra.mrb[0].mxu0 %v378
      %v2082 = vpop.f32.mrb[0].mxu0
      %v2083 = vadd.f32 0.0, %v2082
      %v2084 = vpop.f32.mrb[0].mxu0
      %v2085 = vpop.f32.mrb[0].mxu0
      %v2086 = vadd.f32 0.0, %v2085
      %v2087 = vpop.f32.mrb[0].mxu0
      %2088 = vmatprep.mubr.bf16.mxu0 %v381
      %2089 = vmatmul.mubr.bf16.gmra.mrb[0].mxu0 %v380
      %v2090 = vpop.f32.mrb[0].mxu0
      %v2091 = vadd.f32 0.0, %v2090
      %v2092 = vpop.f32.mrb[0].mxu0
      %v2093 = vpop.f32.mrb[0].mxu0
      %v2094 = vadd.f32 0.0, %v2093
      %v2095 = vpop.f32.mrb[0].mxu0
      %2096 = vmatprep.mubr.bf16.mxu0 %v383
      %2097 = vmatmul.mubr.bf16.gmra.mrb[0].mxu0 %v382
      %v2098 = vpop.f32.mrb[0].mxu0
      %v2099 = vadd.f32 0.0, %v2098
      %v2100 = vpop.f32.mrb[0].mxu0
      %v2101 = vpop.f32.mrb[0].mxu0
      %v2102 = vadd.f32 0.0, %v2101
      %v2103 = vpop.f32.mrb[0].mxu0
      %2104 = vmatprep.mubr.bf16.mxu0 %v385
      %2105 = vmatmul.mubr.bf16.gmra.mrb[0].mxu0 %v384
      %v2106 = vpop.f32.mrb[0].mxu0
      %v2107 = vadd.f32 0.0, %v2106
      %v2108 = vpop.f32.mrb[0].mxu0
      %v2109 = vpop.f32.mrb[0].mxu0
      %v2110 = vadd.f32 0.0, %v2109
      %v2111 = vpop.f32.mrb[0].mxu0
      %2112 = vmatprep.mubr.bf16.mxu0 %v387
      %2113 = vmatmul.mubr.bf16.gmra.mrb[0].mxu0 %v386
      %v2114 = vpop.f32.mrb[0].mxu0
      %v2115 = vadd.f32 0.0, %v2114
      %v2116 = vpop.f32.mrb[0].mxu0
      %v2117 = vpop.f32.mrb[0].mxu0
      %v2118 = vadd.f32 0.0, %v2117
      %v2119 = vpop.f32.mrb[0].mxu0
      %2120 = vdwg.mxu0
      %v2121 = vpack.c.bf16 %v1323, %v1319
      %v2122 = vpack.c.bf16 %v1325, %v1321
      %v2123 = vpack.c.bf16 %v1496, %v1492
      %v2124 = vpack.c.bf16 %v1498, %v1494
      %v2125 = vpack.c.bf16 %v1669, %v1665
      %v2126 = vpack.c.bf16 %v1671, %v1667
      %v2127 = vpack.c.bf16 %v1842, %v1838
      %v2128 = vpack.c.bf16 %v1844, %v1840
      %v2129 = vpack.c.bf16 %v2014, %v2011
      %v2130 = vpack.c.bf16 %v1333, %v1329
      %v2131 = vpack.c.bf16 %v1335, %v1331
      %v2132 = vpack.c.bf16 %v1506, %v1502
      %v2133 = vpack.c.bf16 %v1508, %v1504
      %v2134 = vpack.c.bf16 %v1679, %v1675
      %v2135 = vpack.c.bf16 %v1681, %v1677
      %v2136 = vpack.c.bf16 %v1852, %v1848
      %v2137 = vpack.c.bf16 %v1854, %v1850
      %v2138 = vpack.c.bf16 %v2022, %v2019
      %v2139 = vpack.c.bf16 %v1343, %v1339
      %v2140 = vpack.c.bf16 %v1345, %v1341
      %v2141 = vpack.c.bf16 %v1516, %v1512
      %v2142 = vpack.c.bf16 %v1518, %v1514
      %v2143 = vpack.c.bf16 %v1689, %v1685
      %v2144 = vpack.c.bf16 %v1691, %v1687
      %v2145 = vpack.c.bf16 %v1862, %v1858
      %v2146 = vpack.c.bf16 %v1864, %v1860
      %v2147 = vpack.c.bf16 %v2030, %v2027
      %v2148 = vpack.c.bf16 %v1353, %v1349
      %v2149 = vpack.c.bf16 %v1355, %v1351
      %v2150 = vpack.c.bf16 %v1526, %v1522
      %v2151 = vpack.c.bf16 %v1528, %v1524
      %v2152 = vpack.c.bf16 %v1699, %v1695
      %v2153 = vpack.c.bf16 %v1701, %v1697
      %v2154 = vpack.c.bf16 %v1872, %v1868
      %v2155 = vpack.c.bf16 %v1874, %v1870
      %v2156 = vpack.c.bf16 %v2038, %v2035
      %v2157 = vpack.c.bf16 %v1363, %v1359
      %v2158 = vpack.c.bf16 %v1365, %v1361
      %v2159 = vpack.c.bf16 %v1536, %v1532
      %v2160 = vpack.c.bf16 %v1538, %v1534
      %v2161 = vpack.c.bf16 %v1709, %v1705
      %v2162 = vpack.c.bf16 %v1711, %v1707
      %v2163 = vpack.c.bf16 %v1882, %v1878
      %v2164 = vpack.c.bf16 %v1884, %v1880
      %v2165 = vpack.c.bf16 %v2046, %v2043
      %v2166 = vpack.c.bf16 %v1373, %v1369
      %v2167 = vpack.c.bf16 %v1375, %v1371
      %v2168 = vpack.c.bf16 %v1546, %v1542
      %v2169 = vpack.c.bf16 %v1548, %v1544
      %v2170 = vpack.c.bf16 %v1719, %v1715
      %v2171 = vpack.c.bf16 %v1721, %v1717
      %v2172 = vpack.c.bf16 %v1892, %v1888
      %v2173 = vpack.c.bf16 %v1894, %v1890
      %v2174 = vpack.c.bf16 %v2054, %v2051
      %v2175 = vpack.c.bf16 %v1383, %v1379
      %v2176 = vpack.c.bf16 %v1385, %v1381
      %v2177 = vpack.c.bf16 %v1556, %v1552
      %v2178 = vpack.c.bf16 %v1558, %v1554
      %v2179 = vpack.c.bf16 %v1729, %v1725
      %v2180 = vpack.c.bf16 %v1731, %v1727
      %v2181 = vpack.c.bf16 %v1902, %v1898
      %v2182 = vpack.c.bf16 %v1904, %v1900
      %v2183 = vpack.c.bf16 %v2062, %v2059
      %v2184 = vpack.c.bf16 %v1393, %v1389
      %v2185 = vpack.c.bf16 %v1395, %v1391
      %v2186 = vpack.c.bf16 %v1566, %v1562
      %v2187 = vpack.c.bf16 %v1568, %v1564
      %v2188 = vpack.c.bf16 %v1739, %v1735
      %v2189 = vpack.c.bf16 %v1741, %v1737
      %v2190 = vpack.c.bf16 %v1912, %v1908
      %v2191 = vpack.c.bf16 %v1914, %v1910
      %v2192 = vpack.c.bf16 %v2070, %v2067
      %v2193 = vpack.c.bf16 %v1403, %v1399
      %v2194 = vpack.c.bf16 %v1405, %v1401
      %v2195 = vpack.c.bf16 %v1576, %v1572
      %v2196 = vpack.c.bf16 %v1578, %v1574
      %v2197 = vpack.c.bf16 %v1749, %v1745
      %v2198 = vpack.c.bf16 %v1751, %v1747
      %v2199 = vpack.c.bf16 %v1922, %v1918
      %v2200 = vpack.c.bf16 %v1924, %v1920
      %v2201 = vpack.c.bf16 %v2078, %v2075
      %v2202 = vpack.c.bf16 %v1413, %v1409
      %v2203 = vpack.c.bf16 %v1415, %v1411
      %v2204 = vpack.c.bf16 %v1586, %v1582
      %v2205 = vpack.c.bf16 %v1588, %v1584
      %v2206 = vpack.c.bf16 %v1759, %v1755
      %v2207 = vpack.c.bf16 %v1761, %v1757
      %v2208 = vpack.c.bf16 %v1932, %v1928
      %v2209 = vpack.c.bf16 %v1934, %v1930
      %v2210 = vpack.c.bf16 %v2086, %v2083
      %v2211 = vpack.c.bf16 %v1423, %v1419
      %v2212 = vpack.c.bf16 %v1425, %v1421
      %v2213 = vpack.c.bf16 %v1596, %v1592
      %v2214 = vpack.c.bf16 %v1598, %v1594
      %v2215 = vpack.c.bf16 %v1769, %v1765
      %v2216 = vpack.c.bf16 %v1771, %v1767
      %v2217 = vpack.c.bf16 %v1942, %v1938
      %v2218 = vpack.c.bf16 %v1944, %v1940
      %v2219 = vpack.c.bf16 %v2094, %v2091
      %v2220 = vpack.c.bf16 %v1433, %v1429
      %v2221 = vpack.c.bf16 %v1435, %v1431
      %v2222 = vpack.c.bf16 %v1606, %v1602
      %v2223 = vpack.c.bf16 %v1608, %v1604
      %v2224 = vpack.c.bf16 %v1779, %v1775
      %v2225 = vpack.c.bf16 %v1781, %v1777
      %v2226 = vpack.c.bf16 %v1952, %v1948
      %v2227 = vpack.c.bf16 %v1954, %v1950
      %v2228 = vpack.c.bf16 %v2102, %v2099
      %v2229 = vpack.c.bf16 %v1443, %v1439
      %v2230 = vpack.c.bf16 %v1445, %v1441
      %v2231 = vpack.c.bf16 %v1616, %v1612
      %v2232 = vpack.c.bf16 %v1618, %v1614
      %v2233 = vpack.c.bf16 %v1789, %v1785
      %v2234 = vpack.c.bf16 %v1791, %v1787
      %v2235 = vpack.c.bf16 %v1962, %v1958
      %v2236 = vpack.c.bf16 %v1964, %v1960
      %v2237 = vpack.c.bf16 %v2110, %v2107
      %v2238 = vpack.c.bf16 %v1453, %v1449
      %v2239 = vpack.c.bf16 %v1455, %v1451
      %v2240 = vpack.c.bf16 %v1626, %v1622
      %v2241 = vpack.c.bf16 %v1628, %v1624
      %v2242 = vpack.c.bf16 %v1799, %v1795
      %v2243 = vpack.c.bf16 %v1801, %v1797
      %v2244 = vpack.c.bf16 %v1972, %v1968
      %v2245 = vpack.c.bf16 %v1974, %v1970
      %v2246 = vpack.c.bf16 %v2118, %v2115
      %v2373 = vunpack.c.l.b16 %v2121
      %v2374 = vunpack.c.l.b16 %v2122
      %v2375 = vunpack.c.l.b16 %v2123
      %v2376 = vunpack.c.l.b16 %v2124
      %v2377 = vunpack.c.l.b16 %v2125
      %v2378 = vunpack.c.l.b16 %v2126
      %v2379 = vunpack.c.l.b16 %v2127
      %v2380 = vunpack.c.l.b16 %v2128
      %v2381 = vunpack.c.l.b16 %v2129
      %v2382 = vunpack.c.h.b16 %v2121
      %v2383 = vunpack.c.h.b16 %v2122
      %v2384 = vunpack.c.h.b16 %v2123
      %v2385 = vunpack.c.h.b16 %v2124
      %v2386 = vunpack.c.h.b16 %v2125
      %v2387 = vunpack.c.h.b16 %v2126
      %v2388 = vunpack.c.h.b16 %v2127
      %v2389 = vunpack.c.h.b16 %v2128
      %v2390 = vunpack.c.h.b16 %v2129
      %v2391 = vunpack.c.l.b16 %v2130
      %v2392 = vunpack.c.l.b16 %v2131
      %v2393 = vunpack.c.l.b16 %v2132
      %v2394 = vunpack.c.l.b16 %v2133
      %v2395 = vunpack.c.l.b16 %v2134
      %v2396 = vunpack.c.l.b16 %v2135
      %v2397 = vunpack.c.l.b16 %v2136
      %v2398 = vunpack.c.l.b16 %v2137
      %v2399 = vunpack.c.l.b16 %v2138
      %v2400 = vunpack.c.h.b16 %v2130
      %v2401 = vunpack.c.h.b16 %v2131
      %v2402 = vunpack.c.h.b16 %v2132
      %v2403 = vunpack.c.h.b16 %v2133
      %v2404 = vunpack.c.h.b16 %v2134
      %v2405 = vunpack.c.h.b16 %v2135
      %v2406 = vunpack.c.h.b16 %v2136
      %v2407 = vunpack.c.h.b16 %v2137
      %v2408 = vunpack.c.h.b16 %v2138
      %v2409 = vunpack.c.l.b16 %v2139
      %v2410 = vunpack.c.l.b16 %v2140
      %v2411 = vunpack.c.l.b16 %v2141
      %v2412 = vunpack.c.l.b16 %v2142
      %v2413 = vunpack.c.l.b16 %v2143
      %v2414 = vunpack.c.l.b16 %v2144
      %v2415 = vunpack.c.l.b16 %v2145
      %v2416 = vunpack.c.l.b16 %v2146
      %v2417 = vunpack.c.l.b16 %v2147
      %v2418 = vunpack.c.h.b16 %v2139
      %v2419 = vunpack.c.h.b16 %v2140
      %v2420 = vunpack.c.h.b16 %v2141
      %v2421 = vunpack.c.h.b16 %v2142
      %v2422 = vunpack.c.h.b16 %v2143
      %v2423 = vunpack.c.h.b16 %v2144
      %v2424 = vunpack.c.h.b16 %v2145
      %v2425 = vunpack.c.h.b16 %v2146
      %v2426 = vunpack.c.h.b16 %v2147
      %v2427 = vunpack.c.l.b16 %v2148
      %v2428 = vunpack.c.l.b16 %v2149
      %v2429 = vunpack.c.l.b16 %v2150
      %v2430 = vunpack.c.l.b16 %v2151
      %v2431 = vunpack.c.l.b16 %v2152
      %v2432 = vunpack.c.l.b16 %v2153
      %v2433 = vunpack.c.l.b16 %v2154
      %v2434 = vunpack.c.l.b16 %v2155
      %v2435 = vunpack.c.l.b16 %v2156
      %v2436 = vunpack.c.h.b16 %v2148
      %v2437 = vunpack.c.h.b16 %v2149
      %v2438 = vunpack.c.h.b16 %v2150
      %v2439 = vunpack.c.h.b16 %v2151
      %v2440 = vunpack.c.h.b16 %v2152
      %v2441 = vunpack.c.h.b16 %v2153
      %v2442 = vunpack.c.h.b16 %v2154
      %v2443 = vunpack.c.h.b16 %v2155
      %v2444 = vunpack.c.h.b16 %v2156
      %v2445 = vunpack.c.l.b16 %v2157
      %v2446 = vunpack.c.l.b16 %v2158
      %v2447 = vunpack.c.l.b16 %v2159
      %v2448 = vunpack.c.l.b16 %v2160
      %v2449 = vunpack.c.l.b16 %v2161
      %v2450 = vunpack.c.l.b16 %v2162
      %v2451 = vunpack.c.l.b16 %v2163
      %v2452 = vunpack.c.l.b16 %v2164
      %v2453 = vunpack.c.l.b16 %v2165
      %v2454 = vunpack.c.h.b16 %v2157
      %v2455 = vunpack.c.h.b16 %v2158
      %v2456 = vunpack.c.h.b16 %v2159
      %v2457 = vunpack.c.h.b16 %v2160
      %v2458 = vunpack.c.h.b16 %v2161
      %v2459 = vunpack.c.h.b16 %v2162
      %v2460 = vunpack.c.h.b16 %v2163
      %v2461 = vunpack.c.h.b16 %v2164
      %v2462 = vunpack.c.h.b16 %v2165
      %v2463 = vunpack.c.l.b16 %v2166
      %v2464 = vunpack.c.l.b16 %v2167
      %v2465 = vunpack.c.l.b16 %v2168
      %v2466 = vunpack.c.l.b16 %v2169
      %v2467 = vunpack.c.l.b16 %v2170
      %v2468 = vunpack.c.l.b16 %v2171
      %v2469 = vunpack.c.l.b16 %v2172
      %v2470 = vunpack.c.l.b16 %v2173
      %v2471 = vunpack.c.l.b16 %v2174
      %v2472 = vunpack.c.h.b16 %v2166
      %v2473 = vunpack.c.h.b16 %v2167
      %v2474 = vunpack.c.h.b16 %v2168
      %v2475 = vunpack.c.h.b16 %v2169
      %v2476 = vunpack.c.h.b16 %v2170
      %v2477 = vunpack.c.h.b16 %v2171
      %v2478 = vunpack.c.h.b16 %v2172
      %v2479 = vunpack.c.h.b16 %v2173
      %v2480 = vunpack.c.h.b16 %v2174
      %v2481 = vunpack.c.l.b16 %v2175
      %v2482 = vunpack.c.l.b16 %v2176
      %v2483 = vunpack.c.l.b16 %v2177
      %v2484 = vunpack.c.l.b16 %v2178
      %v2485 = vunpack.c.l.b16 %v2179
      %v2486 = vunpack.c.l.b16 %v2180
      %v2487 = vunpack.c.l.b16 %v2181
      %v2488 = vunpack.c.l.b16 %v2182
      %v2489 = vunpack.c.l.b16 %v2183
      %v2490 = vunpack.c.h.b16 %v2175
      %v2491 = vunpack.c.h.b16 %v2176
      %v2492 = vunpack.c.h.b16 %v2177
      %v2493 = vunpack.c.h.b16 %v2178
      %v2494 = vunpack.c.h.b16 %v2179
      %v2495 = vunpack.c.h.b16 %v2180
      %v2496 = vunpack.c.h.b16 %v2181
      %v2497 = vunpack.c.h.b16 %v2182
      %v2498 = vunpack.c.h.b16 %v2183
      %v2499 = vunpack.c.l.b16 %v2184
      %v2500 = vunpack.c.l.b16 %v2185
      %v2501 = vunpack.c.l.b16 %v2186
      %v2502 = vunpack.c.l.b16 %v2187
      %v2503 = vunpack.c.l.b16 %v2188
      %v2504 = vunpack.c.l.b16 %v2189
      %v2505 = vunpack.c.l.b16 %v2190
      %v2506 = vunpack.c.l.b16 %v2191
      %v2507 = vunpack.c.l.b16 %v2192
      %v2508 = vunpack.c.h.b16 %v2184
      %v2509 = vunpack.c.h.b16 %v2185
      %v2510 = vunpack.c.h.b16 %v2186
      %v2511 = vunpack.c.h.b16 %v2187
      %v2512 = vunpack.c.h.b16 %v2188
      %v2513 = vunpack.c.h.b16 %v2189
      %v2514 = vunpack.c.h.b16 %v2190
      %v2515 = vunpack.c.h.b16 %v2191
      %v2516 = vunpack.c.h.b16 %v2192
      %v2517 = vunpack.c.l.b16 %v2193
      %v2518 = vunpack.c.l.b16 %v2194
      %v2519 = vunpack.c.l.b16 %v2195
      %v2520 = vunpack.c.l.b16 %v2196
      %v2521 = vunpack.c.l.b16 %v2197
      %v2522 = vunpack.c.l.b16 %v2198
      %v2523 = vunpack.c.l.b16 %v2199
      %v2524 = vunpack.c.l.b16 %v2200
      %v2525 = vunpack.c.l.b16 %v2201
      %v2526 = vunpack.c.h.b16 %v2193
      %v2527 = vunpack.c.h.b16 %v2194
      %v2528 = vunpack.c.h.b16 %v2195
      %v2529 = vunpack.c.h.b16 %v2196
      %v2530 = vunpack.c.h.b16 %v2197
      %v2531 = vunpack.c.h.b16 %v2198
      %v2532 = vunpack.c.h.b16 %v2199
      %v2533 = vunpack.c.h.b16 %v2200
      %v2534 = vunpack.c.h.b16 %v2201
      %v2535 = vunpack.c.l.b16 %v2202
      %v2536 = vunpack.c.l.b16 %v2203
      %v2537 = vunpack.c.l.b16 %v2204
      %v2538 = vunpack.c.l.b16 %v2205
      %v2539 = vunpack.c.l.b16 %v2206
      %v2540 = vunpack.c.l.b16 %v2207
      %v2541 = vunpack.c.l.b16 %v2208
      %v2542 = vunpack.c.l.b16 %v2209
      %v2543 = vunpack.c.l.b16 %v2210
      %v2544 = vunpack.c.h.b16 %v2202
      %v2545 = vunpack.c.h.b16 %v2203
      %v2546 = vunpack.c.h.b16 %v2204
      %v2547 = vunpack.c.h.b16 %v2205
      %v2548 = vunpack.c.h.b16 %v2206
      %v2549 = vunpack.c.h.b16 %v2207
      %v2550 = vunpack.c.h.b16 %v2208
      %v2551 = vunpack.c.h.b16 %v2209
      %v2552 = vunpack.c.h.b16 %v2210
      %v2553 = vunpack.c.l.b16 %v2211
      %v2554 = vunpack.c.l.b16 %v2212
      %v2555 = vunpack.c.l.b16 %v2213
      %v2556 = vunpack.c.l.b16 %v2214
      %v2557 = vunpack.c.l.b16 %v2215
      %v2558 = vunpack.c.l.b16 %v2216
      %v2559 = vunpack.c.l.b16 %v2217
      %v2560 = vunpack.c.l.b16 %v2218
      %v2561 = vunpack.c.l.b16 %v2219
      %v2562 = vunpack.c.h.b16 %v2211
      %v2563 = vunpack.c.h.b16 %v2212
      %v2564 = vunpack.c.h.b16 %v2213
      %v2565 = vunpack.c.h.b16 %v2214
      %v2566 = vunpack.c.h.b16 %v2215
      %v2567 = vunpack.c.h.b16 %v2216
      %v2568 = vunpack.c.h.b16 %v2217
      %v2569 = vunpack.c.h.b16 %v2218
      %v2570 = vunpack.c.h.b16 %v2219
      %v2571 = vunpack.c.l.b16 %v2220
      %v2572 = vunpack.c.l.b16 %v2221
      %v2573 = vunpack.c.l.b16 %v2222
      %v2574 = vunpack.c.l.b16 %v2223
      %v2575 = vunpack.c.l.b16 %v2224
      %v2576 = vunpack.c.l.b16 %v2225
      %v2577 = vunpack.c.l.b16 %v2226
      %v2578 = vunpack.c.l.b16 %v2227
      %v2579 = vunpack.c.l.b16 %v2228
      %v2580 = vunpack.c.h.b16 %v2220
      %v2581 = vunpack.c.h.b16 %v2221
      %v2582 = vunpack.c.h.b16 %v2222
      %v2583 = vunpack.c.h.b16 %v2223
      %v2584 = vunpack.c.h.b16 %v2224
      %v2585 = vunpack.c.h.b16 %v2225
      %v2586 = vunpack.c.h.b16 %v2226
      %v2587 = vunpack.c.h.b16 %v2227
      %v2588 = vunpack.c.h.b16 %v2228
      %v2589 = vunpack.c.l.b16 %v2229
      %v2590 = vunpack.c.l.b16 %v2230
      %v2591 = vunpack.c.l.b16 %v2231
      %v2592 = vunpack.c.l.b16 %v2232
      %v2593 = vunpack.c.l.b16 %v2233
      %v2594 = vunpack.c.l.b16 %v2234
      %v2595 = vunpack.c.l.b16 %v2235
      %v2596 = vunpack.c.l.b16 %v2236
      %v2597 = vunpack.c.l.b16 %v2237
      %v2598 = vunpack.c.h.b16 %v2229
      %v2599 = vunpack.c.h.b16 %v2230
      %v2600 = vunpack.c.h.b16 %v2231
      %v2601 = vunpack.c.h.b16 %v2232
      %v2602 = vunpack.c.h.b16 %v2233
      %v2603 = vunpack.c.h.b16 %v2234
      %v2604 = vunpack.c.h.b16 %v2235
      %v2605 = vunpack.c.h.b16 %v2236
      %v2606 = vunpack.c.h.b16 %v2237
      %v2607 = vunpack.c.l.b16 %v2238
      %v2608 = vunpack.c.l.b16 %v2239
      %v2609 = vunpack.c.l.b16 %v2240
      %v2610 = vunpack.c.l.b16 %v2241
      %v2611 = vunpack.c.l.b16 %v2242
      %v2612 = vunpack.c.l.b16 %v2243
      %v2613 = vunpack.c.l.b16 %v2244
      %v2614 = vunpack.c.l.b16 %v2245
      %v2615 = vunpack.c.l.b16 %v2246
      %v2616 = vunpack.c.h.b16 %v2238
      %v2617 = vunpack.c.h.b16 %v2239
      %v2618 = vunpack.c.h.b16 %v2240
      %v2619 = vunpack.c.h.b16 %v2241
      %v2620 = vunpack.c.h.b16 %v2242
      %v2621 = vunpack.c.h.b16 %v2243
      %v2622 = vunpack.c.h.b16 %v2244
      %v2623 = vunpack.c.h.b16 %v2245
      %v2624 = vunpack.c.h.b16 %v2246
      %v2625 = vpack.c.b16 %v2374, %v2373
      %v2626 = vpack.c.b16 %v2376, %v2375
      %v2627 = vpack.c.b16 %v2378, %v2377
      %v2628 = vpack.c.b16 %v2380, %v2379
      %v2629 = vpack.c.b16 %v2381, %v2381
      %v2630 = vpack.c.b16 %v2383, %v2382
      %v2631 = vpack.c.b16 %v2385, %v2384
      %v2632 = vpack.c.b16 %v2387, %v2386
      %v2633 = vpack.c.b16 %v2389, %v2388
      %v2634 = vpack.c.b16 %v2390, %v2390
      %v2635 = vpack.c.b16 %v2392, %v2391
      %v2636 = vpack.c.b16 %v2394, %v2393
      %v2637 = vpack.c.b16 %v2396, %v2395
      %v2638 = vpack.c.b16 %v2398, %v2397
      %v2639 = vpack.c.b16 %v2399, %v2399
      %v2640 = vpack.c.b16 %v2401, %v2400
      %v2641 = vpack.c.b16 %v2403, %v2402
      %v2642 = vpack.c.b16 %v2405, %v2404
      %v2643 = vpack.c.b16 %v2407, %v2406
      %v2644 = vpack.c.b16 %v2408, %v2408
      %v2645 = vpack.c.b16 %v2410, %v2409
      %v2646 = vpack.c.b16 %v2412, %v2411
      %v2647 = vpack.c.b16 %v2414, %v2413
      %v2648 = vpack.c.b16 %v2416, %v2415
      %v2649 = vpack.c.b16 %v2417, %v2417
      %v2650 = vpack.c.b16 %v2419, %v2418
      %v2651 = vpack.c.b16 %v2421, %v2420
      %v2652 = vpack.c.b16 %v2423, %v2422
      %v2653 = vpack.c.b16 %v2425, %v2424
      %v2654 = vpack.c.b16 %v2426, %v2426
      %v2655 = vpack.c.b16 %v2428, %v2427
      %v2656 = vpack.c.b16 %v2430, %v2429
      %v2657 = vpack.c.b16 %v2432, %v2431
      %v2658 = vpack.c.b16 %v2434, %v2433
      %v2659 = vpack.c.b16 %v2435, %v2435
      %v2660 = vpack.c.b16 %v2437, %v2436
      %v2661 = vpack.c.b16 %v2439, %v2438
      %v2662 = vpack.c.b16 %v2441, %v2440
      %v2663 = vpack.c.b16 %v2443, %v2442
      %v2664 = vpack.c.b16 %v2444, %v2444
      %v2665 = vpack.c.b16 %v2446, %v2445
      %v2666 = vpack.c.b16 %v2448, %v2447
      %v2667 = vpack.c.b16 %v2450, %v2449
      %v2668 = vpack.c.b16 %v2452, %v2451
      %v2669 = vpack.c.b16 %v2453, %v2453
      %v2670 = vpack.c.b16 %v2455, %v2454
      %v2671 = vpack.c.b16 %v2457, %v2456
      %v2672 = vpack.c.b16 %v2459, %v2458
      %v2673 = vpack.c.b16 %v2461, %v2460
      %v2674 = vpack.c.b16 %v2462, %v2462
      %v2675 = vpack.c.b16 %v2464, %v2463
      %v2676 = vpack.c.b16 %v2466, %v2465
      %v2677 = vpack.c.b16 %v2468, %v2467
      %v2678 = vpack.c.b16 %v2470, %v2469
      %v2679 = vpack.c.b16 %v2471, %v2471
      %v2680 = vpack.c.b16 %v2473, %v2472
      %v2681 = vpack.c.b16 %v2475, %v2474
      %v2682 = vpack.c.b16 %v2477, %v2476
      %v2683 = vpack.c.b16 %v2479, %v2478
      %v2684 = vpack.c.b16 %v2480, %v2480
      %v2685 = vpack.c.b16 %v2482, %v2481
      %v2686 = vpack.c.b16 %v2484, %v2483
      %v2687 = vpack.c.b16 %v2486, %v2485
      %v2688 = vpack.c.b16 %v2488, %v2487
      %v2689 = vpack.c.b16 %v2489, %v2489
      %v2690 = vpack.c.b16 %v2491, %v2490
      %v2691 = vpack.c.b16 %v2493, %v2492
      %v2692 = vpack.c.b16 %v2495, %v2494
      %v2693 = vpack.c.b16 %v2497, %v2496
      %v2694 = vpack.c.b16 %v2498, %v2498
      %v2695 = vpack.c.b16 %v2500, %v2499
      %v2696 = vpack.c.b16 %v2502, %v2501
      %v2697 = vpack.c.b16 %v2504, %v2503
      %v2698 = vpack.c.b16 %v2506, %v2505
      %v2699 = vpack.c.b16 %v2507, %v2507
      %v2700 = vpack.c.b16 %v2509, %v2508
      %v2701 = vpack.c.b16 %v2511, %v2510
      %v2702 = vpack.c.b16 %v2513, %v2512
      %v2703 = vpack.c.b16 %v2515, %v2514
      %v2704 = vpack.c.b16 %v2516, %v2516
      %v2705 = vpack.c.b16 %v2518, %v2517
      %v2706 = vpack.c.b16 %v2520, %v2519
      %v2707 = vpack.c.b16 %v2522, %v2521
      %v2708 = vpack.c.b16 %v2524, %v2523
      %v2709 = vpack.c.b16 %v2525, %v2525
      %v2710 = vpack.c.b16 %v2527, %v2526
      %v2711 = vpack.c.b16 %v2529, %v2528
      %v2712 = vpack.c.b16 %v2531, %v2530
      %v2713 = vpack.c.b16 %v2533, %v2532
      %v2714 = vpack.c.b16 %v2534, %v2534
      %v2715 = vpack.c.b16 %v2536, %v2535
      %v2716 = vpack.c.b16 %v2538, %v2537
      %v2717 = vpack.c.b16 %v2540, %v2539
      %v2718 = vpack.c.b16 %v2542, %v2541
      %v2719 = vpack.c.b16 %v2543, %v2543
      %v2720 = vpack.c.b16 %v2545, %v2544
      %v2721 = vpack.c.b16 %v2547, %v2546
      %v2722 = vpack.c.b16 %v2549, %v2548
      %v2723 = vpack.c.b16 %v2551, %v2550
      %v2724 = vpack.c.b16 %v2552, %v2552
      %v2725 = vpack.c.b16 %v2554, %v2553
      %v2726 = vpack.c.b16 %v2556, %v2555
      %v2727 = vpack.c.b16 %v2558, %v2557
      %v2728 = vpack.c.b16 %v2560, %v2559
      %v2729 = vpack.c.b16 %v2561, %v2561
      %v2730 = vpack.c.b16 %v2563, %v2562
      %v2731 = vpack.c.b16 %v2565, %v2564
      %v2732 = vpack.c.b16 %v2567, %v2566
      %v2733 = vpack.c.b16 %v2569, %v2568
      %v2734 = vpack.c.b16 %v2570, %v2570
      %v2735 = vpack.c.b16 %v2572, %v2571
      %v2736 = vpack.c.b16 %v2574, %v2573
      %v2737 = vpack.c.b16 %v2576, %v2575
      %v2738 = vpack.c.b16 %v2578, %v2577
      %v2739 = vpack.c.b16 %v2579, %v2579
      %v2740 = vpack.c.b16 %v2581, %v2580
      %v2741 = vpack.c.b16 %v2583, %v2582
      %v2742 = vpack.c.b16 %v2585, %v2584
      %v2743 = vpack.c.b16 %v2587, %v2586
      %v2744 = vpack.c.b16 %v2588, %v2588
      %v2745 = vpack.c.b16 %v2590, %v2589
      %v2746 = vpack.c.b16 %v2592, %v2591
      %v2747 = vpack.c.b16 %v2594, %v2593
      %v2748 = vpack.c.b16 %v2596, %v2595
      %v2749 = vpack.c.b16 %v2597, %v2597
      %v2750 = vpack.c.b16 %v2599, %v2598
      %v2751 = vpack.c.b16 %v2601, %v2600
      %v2752 = vpack.c.b16 %v2603, %v2602
      %v2753 = vpack.c.b16 %v2605, %v2604
      %v2754 = vpack.c.b16 %v2606, %v2606
      %v2755 = vpack.c.b16 %v2608, %v2607
      %v2756 = vpack.c.b16 %v2610, %v2609
      %v2757 = vpack.c.b16 %v2612, %v2611
      %v2758 = vpack.c.b16 %v2614, %v2613
      %v2759 = vpack.c.b16 %v2615, %v2615
      %v2760 = vpack.c.b16 %v2617, %v2616
      %v2761 = vpack.c.b16 %v2619, %v2618
      %v2762 = vpack.c.b16 %v2621, %v2620
      %v2763 = vpack.c.b16 %v2623, %v2622
      %v2764 = vpack.c.b16 %v2624, %v2624
      %2905 = vst [vmem:[%s177] sm:$0xff] %v2625
      %2906 = vst [vmem:[%s177 + $0x8] sm:$0xff] %v2626
      %2907 = vst [vmem:[%s177 + $0x10] sm:$0xff] %v2627
      %2908 = vst [vmem:[%s177 + $0x18] sm:$0xff] %v2628
      %2909 = vst [vmem:[%s177 + $0x20] sm:$0xf] %v2629
      %2910 = vst [vmem:[%s177 + $0x24] sm:$0xff] %v2630
      %2911 = vst [vmem:[%s177 + $0x2c] sm:$0xff] %v2631
      %2912 = vst [vmem:[%s177 + $0x34] sm:$0xff] %v2632
      %2913 = vst [vmem:[%s177 + $0x3c] sm:$0xff] %v2633
      %2914 = vst [vmem:[%s177 + $0x44] sm:$0xf] %v2634
      %2915 = vst [vmem:[%s177 + $0x48] sm:$0xff] %v2635
      %2916 = vst [vmem:[%s177 + $0x50] sm:$0xff] %v2636
      %2917 = vst [vmem:[%s177 + $0x58] sm:$0xff] %v2637
      %2918 = vst [vmem:[%s177 + $0x60] sm:$0xff] %v2638
      %2919 = vst [vmem:[%s177 + $0x68] sm:$0xf] %v2639
      %2920 = vst [vmem:[%s177 + $0x6c] sm:$0xff] %v2640
      %2921 = vst [vmem:[%s177 + $0x74] sm:$0xff] %v2641
      %2922 = vst [vmem:[%s177 + $0x7c] sm:$0xff] %v2642
      %2923 = vst [vmem:[%s177 + $0x84] sm:$0xff] %v2643
      %2924 = vst [vmem:[%s177 + $0x8c] sm:$0xf] %v2644
      %2925 = vst [vmem:[%s177 + $0x90] sm:$0xff] %v2645
      %2926 = vst [vmem:[%s177 + $0x98] sm:$0xff] %v2646
      %2927 = vst [vmem:[%s177 + $0xa0] sm:$0xff] %v2647
      %2928 = vst [vmem:[%s177 + $0xa8] sm:$0xff] %v2648
      %2929 = vst [vmem:[%s177 + $0xb0] sm:$0xf] %v2649
      %2930 = vst [vmem:[%s177 + $0xb4] sm:$0xff] %v2650
      %2931 = vst [vmem:[%s177 + $0xbc] sm:$0xff] %v2651
      %2932 = vst [vmem:[%s177 + $0xc4] sm:$0xff] %v2652
      %2933 = vst [vmem:[%s177 + $0xcc] sm:$0xff] %v2653
      %2934 = vst [vmem:[%s177 + $0xd4] sm:$0xf] %v2654
      %2935 = vst [vmem:[%s177 + $0xd8] sm:$0xff] %v2655
      %2936 = vst [vmem:[%s177 + $0xe0] sm:$0xff] %v2656
      %2937 = vst [vmem:[%s177 + $0xe8] sm:$0xff] %v2657
      %2938 = vst [vmem:[%s177 + $0xf0] sm:$0xff] %v2658
      %2939 = vst [vmem:[%s177 + $0xf8] sm:$0xf] %v2659
      %2940 = vst [vmem:[%s177 + $0xfc] sm:$0xff] %v2660
      %2941 = vst [vmem:[%s177 + $0x104] sm:$0xff] %v2661
      %2942 = vst [vmem:[%s177 + $0x10c] sm:$0xff] %v2662
      %2943 = vst [vmem:[%s177 + $0x114] sm:$0xff] %v2663
      %2944 = vst [vmem:[%s177 + $0x11c] sm:$0xf] %v2664
      %2945 = vst [vmem:[%s177 + $0x120] sm:$0xff] %v2665
      %2946 = vst [vmem:[%s177 + $0x128] sm:$0xff] %v2666
      %2947 = vst [vmem:[%s177 + $0x130] sm:$0xff] %v2667
      %2948 = vst [vmem:[%s177 + $0x138] sm:$0xff] %v2668
      %2949 = vst [vmem:[%s177 + $0x140] sm:$0xf] %v2669
      %2950 = vst [vmem:[%s177 + $0x144] sm:$0xff] %v2670
      %2951 = vst [vmem:[%s177 + $0x14c] sm:$0xff] %v2671
      %2952 = vst [vmem:[%s177 + $0x154] sm:$0xff] %v2672
      %2953 = vst [vmem:[%s177 + $0x15c] sm:$0xff] %v2673
      %2954 = vst [vmem:[%s177 + $0x164] sm:$0xf] %v2674
      %2955 = vst [vmem:[%s177 + $0x168] sm:$0xff] %v2675
      %2956 = vst [vmem:[%s177 + $0x170] sm:$0xff] %v2676
      %2957 = vst [vmem:[%s177 + $0x178] sm:$0xff] %v2677
      %2958 = vst [vmem:[%s177 + $0x180] sm:$0xff] %v2678
      %2959 = vst [vmem:[%s177 + $0x188] sm:$0xf] %v2679
      %2960 = vst [vmem:[%s177 + $0x18c] sm:$0xff] %v2680
      %2961 = vst [vmem:[%s177 + $0x194] sm:$0xff] %v2681
      %2962 = vst [vmem:[%s177 + $0x19c] sm:$0xff] %v2682
      %2963 = vst [vmem:[%s177 + $0x1a4] sm:$0xff] %v2683
      %2964 = vst [vmem:[%s177 + $0x1ac] sm:$0xf] %v2684
      %2965 = vst [vmem:[%s177 + $0x1b0] sm:$0xff] %v2685
      %2966 = vst [vmem:[%s177 + $0x1b8] sm:$0xff] %v2686
      %2967 = vst [vmem:[%s177 + $0x1c0] sm:$0xff] %v2687
      %2968 = vst [vmem:[%s177 + $0x1c8] sm:$0xff] %v2688
      %2969 = vst [vmem:[%s177 + $0x1d0] sm:$0xf] %v2689
      %2970 = vst [vmem:[%s177 + $0x1d4] sm:$0xff] %v2690
      %2971 = vst [vmem:[%s177 + $0x1dc] sm:$0xff] %v2691
      %2972 = vst [vmem:[%s177 + $0x1e4] sm:$0xff] %v2692
      %2973 = vst [vmem:[%s177 + $0x1ec] sm:$0xff] %v2693
      %2974 = vst [vmem:[%s177 + $0x1f4] sm:$0xf] %v2694
      %2975 = vst [vmem:[%s177 + $0x1f8] sm:$0xff] %v2695
      %2976 = vst [vmem:[%s177 + $0x200] sm:$0xff] %v2696
      %2977 = vst [vmem:[%s177 + $0x208] sm:$0xff] %v2697
      %2978 = vst [vmem:[%s177 + $0x210] sm:$0xff] %v2698
      %2979 = vst [vmem:[%s177 + $0x218] sm:$0xf] %v2699
      %2980 = vst [vmem:[%s177 + $0x21c] sm:$0xff] %v2700
      %2981 = vst [vmem:[%s177 + $0x224] sm:$0xff] %v2701
      %2982 = vst [vmem:[%s177 + $0x22c] sm:$0xff] %v2702
      %2983 = vst [vmem:[%s177 + $0x234] sm:$0xff] %v2703
      %2984 = vst [vmem:[%s177 + $0x23c] sm:$0xf] %v2704
      %2985 = vst [vmem:[%s177 + $0x240] sm:$0xff] %v2705
      %2986 = vst [vmem:[%s177 + $0x248] sm:$0xff] %v2706
      %2987 = vst [vmem:[%s177 + $0x250] sm:$0xff] %v2707
      %2988 = vst [vmem:[%s177 + $0x258] sm:$0xff] %v2708
      %2989 = vst [vmem:[%s177 + $0x260] sm:$0xf] %v2709
      %2990 = vst [vmem:[%s177 + $0x264] sm:$0xff] %v2710
      %2991 = vst [vmem:[%s177 + $0x26c] sm:$0xff] %v2711
      %2992 = vst [vmem:[%s177 + $0x274] sm:$0xff] %v2712
      %2993 = vst [vmem:[%s177 + $0x27c] sm:$0xff] %v2713
      %2994 = vst [vmem:[%s177 + $0x284] sm:$0xf] %v2714
      %2995 = vst [vmem:[%s177 + $0x288] sm:$0xff] %v2715
      %2996 = vst [vmem:[%s177 + $0x290] sm:$0xff] %v2716
      %2997 = vst [vmem:[%s177 + $0x298] sm:$0xff] %v2717
      %2998 = vst [vmem:[%s177 + $0x2a0] sm:$0xff] %v2718
      %2999 = vst [vmem:[%s177 + $0x2a8] sm:$0xf] %v2719
      %3000 = vst [vmem:[%s177 + $0x2ac] sm:$0xff] %v2720
      %3001 = vst [vmem:[%s177 + $0x2b4] sm:$0xff] %v2721
      %3002 = vst [vmem:[%s177 + $0x2bc] sm:$0xff] %v2722
      %3003 = vst [vmem:[%s177 + $0x2c4] sm:$0xff] %v2723
      %3004 = vst [vmem:[%s177 + $0x2cc] sm:$0xf] %v2724
      %3005 = vst [vmem:[%s177 + $0x2d0] sm:$0xff] %v2725
      %3006 = vst [vmem:[%s177 + $0x2d8] sm:$0xff] %v2726
      %3007 = vst [vmem:[%s177 + $0x2e0] sm:$0xff] %v2727
      %3008 = vst [vmem:[%s177 + $0x2e8] sm:$0xff] %v2728
      %3009 = vst [vmem:[%s177 + $0x2f0] sm:$0xf] %v2729
      %3010 = vst [vmem:[%s177 + $0x2f4] sm:$0xff] %v2730
      %3011 = vst [vmem:[%s177 + $0x2fc] sm:$0xff] %v2731
      %3012 = vst [vmem:[%s177 + $0x304] sm:$0xff] %v2732
      %3013 = vst [vmem:[%s177 + $0x30c] sm:$0xff] %v2733
      %3014 = vst [vmem:[%s177 + $0x314] sm:$0xf] %v2734
      %3015 = vst [vmem:[%s177 + $0x318] sm:$0xff] %v2735
      %3016 = vst [vmem:[%s177 + $0x320] sm:$0xff] %v2736
      %3017 = vst [vmem:[%s177 + $0x328] sm:$0xff] %v2737
      %3018 = vst [vmem:[%s177 + $0x330] sm:$0xff] %v2738
      %3019 = vst [vmem:[%s177 + $0x338] sm:$0xf] %v2739
      %3020 = vst [vmem:[%s177 + $0x33c] sm:$0xff] %v2740
      %3021 = vst [vmem:[%s177 + $0x344] sm:$0xff] %v2741
      %3022 = vst [vmem:[%s177 + $0x34c] sm:$0xff] %v2742
      %3023 = vst [vmem:[%s177 + $0x354] sm:$0xff] %v2743
      %3024 = vst [vmem:[%s177 + $0x35c] sm:$0xf] %v2744
      %3025 = vst [vmem:[%s177 + $0x360] sm:$0xff] %v2745
      %3026 = vst [vmem:[%s177 + $0x368] sm:$0xff] %v2746
      %3027 = vst [vmem:[%s177 + $0x370] sm:$0xff] %v2747
      %3028 = vst [vmem:[%s177 + $0x378] sm:$0xff] %v2748
      %3029 = vst [vmem:[%s177 + $0x380] sm:$0xf] %v2749
      %3030 = vst [vmem:[%s177 + $0x384] sm:$0xff] %v2750
      %3031 = vst [vmem:[%s177 + $0x38c] sm:$0xff] %v2751
      %3032 = vst [vmem:[%s177 + $0x394] sm:$0xff] %v2752
      %3033 = vst [vmem:[%s177 + $0x39c] sm:$0xff] %v2753
      %3034 = vst [vmem:[%s177 + $0x3a4] sm:$0xf] %v2754
      %3035 = vst [vmem:[%s177 + $0x3a8] sm:$0xff] %v2755
      %3036 = vst [vmem:[%s177 + $0x3b0] sm:$0xff] %v2756
      %3037 = vst [vmem:[%s177 + $0x3b8] sm:$0xff] %v2757
      %3038 = vst [vmem:[%s177 + $0x3c0] sm:$0xff] %v2758
      %3039 = vst [vmem:[%s177 + $0x3c8] sm:$0xf] %v2759
      %3040 = vst [vmem:[%s177 + $0x3cc] sm:$0xff] %v2760
      %3041 = vst [vmem:[%s177 + $0x3d4] sm:$0xff] %v2761
      %3042 = vst [vmem:[%s177 + $0x3dc] sm:$0xff] %v2762
      %3043 = vst [vmem:[%s177 + $0x3e4] sm:$0xff] %v2763
      %3044 = vst [vmem:[%s177 + $0x3ec] sm:$0xf] %v2764
      %s3045 = smul.u32 28, %s14
      %p3046 = scmp.lt.s32.totalorder %s3045, 83
      %s3047 = scalar_select %p3046, %s3045, 83
      %s3048 = smul.addr %s3047, 9
      %s3049 = smul.addr %s3048, 4
      %s3050 = scalar_lea.vmem %s3, %s3049
      // Predicated region
      $region33: #{generator_forward.10} parent=31 // pred_check
        %p3051 = pneg %p100
      $region34: #{generator_forward.10} parent=31 // pred_check_branch
        %3053 = sbr.rel (%p3051) target = $region36
      $region35: #{generator_forward.10} parent=31 // pred_region
        %s3054 = smul.u32 28, %s14
      $region36: #{generator_forward.10} parent=31 // pred_fallthru
        _
    $region32: #{generator_forward.10} parent=5 // pred_fallthru
      _
    %p3055 = scmp.le.s32.totalorder 2, %s9
    // Predicated region
    $region37: #{generator_forward.10} parent=5 // pred_check
      %p3056 = pneg %p3055
    $region38: #{generator_forward.10} parent=5 // pred_check_branch
      %3058 = sbr.rel (%p3056) target = $region40
    $region39: #{generator_forward.10} parent=5 // pred_region
      %s3059 = ssub.s32 %s9, 2
      // Predicated region
      $region41: #{generator_forward.10} parent=39 // pred_check
        %p3060 = pneg %p106
      $region42: #{generator_forward.10} parent=39 // pred_check_branch
        %3062 = sbr.rel (%p3060) target = $region44
      $region43: #{generator_forward.10} parent=39 // pred_region
        %s3063 = smul.u32 28, %s15
        %p3064 = scmp.lt.s32.totalorder %s3063, 83
        %s3065 = scalar_select %p3064, %s3063, 83
        %s3066 = smul.addr %s3065, 9
        %s3067 = smul.addr %s3066, 4
        %s3068 = scalar_lea.vmem %s3, %s3067
      $region44: #{generator_forward.10} parent=39 // pred_fallthru
        _
    $region40: #{generator_forward.10} parent=5 // pred_fallthru
      _
  $region6: #{generator_forward.10} parent=0 // loop_footer
    %s13 = sadd.s32 1, %s9
  $region7: #{generator_forward.10} parent=0 // loop_footer_branch
    %8 = sbr.rel target = $region3
  $region8: #{generator_forward.10} parent=0 // loop_exit
    _

// kernel: generator_forward.11
$region0: #{generator_forward.11}
  #allocation0 [shape = 'u32[]', space=smem, size = 0x4, offset = 0x4, fixed_abs, tag = 'smem constant byte address 0x4 - core index']
  #allocation1 [shape = 'u32[144,128]{1,0:T(1,128)}', space=vmem, size = 0x12000, scoped, tag = 'internal scratch']
  %s0 = inlined_call_operand.vmem [shape: f32[512,128], index: 0, kind: input, shape index: {}]
  %s1 = inlined_call_operand.vmem [shape: f32[1,128], index: 1, kind: input, shape index: {}]
  %s2 = inlined_call_operand.vmem [shape: bf16[128,1024], index: 2, kind: input, shape index: {}]
  %s3 = inlined_call_operand.vmem [shape: bf16[512,1024], index: 3, kind: output, shape index: {}]
  %s4 = sld [smem:[#allocation0]]
  $region45: #{generator_forward.11} parent=0
    _
  %s6 = ssub.s32 1, %s4
  %s7 = scalar_select 0, %s6, %s4
  loop: start=0, step=1, limit=4
  $region2: #{generator_forward.11} parent=0 // loop_pre_header
    _
  $region3: #{generator_forward.11} parent=0 // loop_header
    %s9 = sphi 0, %s13
    %p10 = scmp.ge.s32.totalorder %s9, 4
    %s19 = sphi 0, %s21
    %s22 = sphi 0, %s19
    %s23 = sphi 0, %s22
    %s39 = sphi 0, %s23
    %s43 = sphi 0, %s43
    %s45 = sphi 0, %s43
    %s46 = sphi 0, %s45
    %s60 = sphi 0, %s46
    %s64 = sphi 0, %s64
    %s66 = sphi 0, %s64
    %s67 = sphi 0, %s66
    %s81 = sphi 0, %s67
    %s87 = sphi 0, %s89
    %s90 = sphi 0, %s87
    %s91 = sphi 0, %s90
    %s107 = sphi 0, %s91
  $region4: #{generator_forward.11} parent=0 // loop_header_branch
    %12 = sbr.rel (%p10) target = $region8
  $region5: #{generator_forward.11} parent=0 // loop_body
    %s14 = ssub.s32 %s9, 1
    %s15 = ssub.s32 %s9, 2
    %s16 = sadd.s32 %s9, 1
    %s17 = ssub.s32 %s9, %s16
    %p18 = scmp.eq.s32.totalorder %s17, 0
    %s20 = sadd.s32 %s19, 1
    %s21 = scalar_select %p18, %s19, %s20
    %p24 = pneg %p18
    %p25 = scmp.eq.s32.totalorder %s9, 1
    %p26 = por %p24, %p25
    %p27 = scmp.ne.s32.totalorder %s19, %s22
    %p28 = scmp.eq.s32.totalorder %s9, 0
    %p29 = por %p27, %p28
    %p30 = scmp.ne.s32.totalorder %s19, %s22
    %p31 = scmp.eq.s32.totalorder %s14, 1
    %p32 = por %p30, %p31
    %p33 = scmp.ne.s32.totalorder %s22, %s23
    %p34 = scmp.eq.s32.totalorder %s14, 0
    %p35 = por %p33, %p34
    %p36 = scmp.ne.s32.totalorder %s22, %s23
    %p37 = scmp.eq.s32.totalorder %s15, 1
    %p38 = por %p36, %p37
    %p40 = scmp.ne.s32.totalorder %s23, %s39
    %p41 = scmp.eq.s32.totalorder %s15, 0
    %p42 = por %p40, %p41
    %s44 = sadd.s32 %s43, 1
    %p47 = scmp.eq.s32.totalorder %s9, 1
    %p48 = scmp.ne.s32.totalorder %s43, %s45
    %p49 = scmp.eq.s32.totalorder %s9, 0
    %p50 = por %p48, %p49
    %p51 = scmp.ne.s32.totalorder %s43, %s45
    %p52 = scmp.eq.s32.totalorder %s14, 1
    %p53 = por %p51, %p52
    %p54 = scmp.ne.s32.totalorder %s45, %s46
    %p55 = scmp.eq.s32.totalorder %s14, 0
    %p56 = por %p54, %p55
    %p57 = scmp.ne.s32.totalorder %s45, %s46
    %p58 = scmp.eq.s32.totalorder %s15, 1
    %p59 = por %p57, %p58
    %p61 = scmp.ne.s32.totalorder %s46, %s60
    %p62 = scmp.eq.s32.totalorder %s15, 0
    %p63 = por %p61, %p62
    %s65 = sadd.s32 %s64, 1
    %p68 = scmp.eq.s32.totalorder %s9, 1
    %p69 = scmp.ne.s32.totalorder %s64, %s66
    %p70 = scmp.eq.s32.totalorder %s9, 0
    %p71 = por %p69, %p70
    %p72 = scmp.ne.s32.totalorder %s64, %s66
    %p73 = scmp.eq.s32.totalorder %s14, 1
    %p74 = por %p72, %p73
    %p75 = scmp.ne.s32.totalorder %s66, %s67
    %p76 = scmp.eq.s32.totalorder %s14, 0
    %p77 = por %p75, %p76
    %p78 = scmp.ne.s32.totalorder %s66, %s67
    %p79 = scmp.eq.s32.totalorder %s15, 1
    %p80 = por %p78, %p79
    %p82 = scmp.ne.s32.totalorder %s67, %s81
    %p83 = scmp.eq.s32.totalorder %s15, 0
    %p84 = por %p82, %p83
    %s85 = ssub.s32 %s9, %s16
    %p86 = scmp.eq.s32.totalorder %s85, 0
    %s88 = sadd.s32 %s87, 1
    %s89 = scalar_select %p86, %s87, %s88
    %p92 = pneg %p86
    %p93 = scmp.eq.s32.totalorder %s9, 1
    %p94 = por %p92, %p93
    %p95 = scmp.ne.s32.totalorder %s87, %s90
    %p96 = scmp.eq.s32.totalorder %s9, 0
    %p97 = por %p95, %p96
    %p98 = scmp.ne.s32.totalorder %s87, %s90
    %p99 = scmp.eq.s32.totalorder %s14, 1
    %p100 = por %p98, %p99
    %p101 = scmp.ne.s32.totalorder %s90, %s91
    %p102 = scmp.eq.s32.totalorder %s14, 0
    %p103 = por %p101, %p102
    %p104 = scmp.ne.s32.totalorder %s90, %s91
    %p105 = scmp.eq.s32.totalorder %s15, 1
    %p106 = por %p104, %p105
    %p108 = scmp.ne.s32.totalorder %s91, %s107
    %p109 = scmp.eq.s32.totalorder %s15, 0
    %p110 = por %p108, %p109
    %p111 = scmp.le.s32.totalorder 1, %s9
    %p112 = scmp.lt.s32.totalorder %s9, 3
    %p113 = pnand %p111, %p112
    %p114 = pneg %p113
    // Predicated region
    $region9: #{generator_forward.11} parent=5 // pred_check
      _
    $region10: #{generator_forward.11} parent=5 // pred_check_branch
      %116 = sbr.rel (%p113) target = $region12
    $region11: #{generator_forward.11} parent=5 // pred_region
      %s117 = ssub.s32 %s9, 1
      // Predicated region
      $region13: #{generator_forward.11} parent=11 // pred_check
        %p118 = pneg %p56
      $region14: #{generator_forward.11} parent=11 // pred_check_branch
        %120 = sbr.rel (%p118) target = $region16
      $region15: #{generator_forward.11} parent=11 // pred_region
        _
      $region16: #{generator_forward.11} parent=11 // pred_fallthru
        _
      // Predicated region
      $region17: #{generator_forward.11} parent=11 // pred_check
        %p121 = pneg %p77
      $region18: #{generator_forward.11} parent=11 // pred_check_branch
        %123 = sbr.rel (%p121) target = $region20
      $region19: #{generator_forward.11} parent=11 // pred_region
        _
      $region20: #{generator_forward.11} parent=11 // pred_fallthru
        _
    $region12: #{generator_forward.11} parent=5 // pred_fallthru
      _
    %p124 = scmp.lt.s32.totalorder %s9, 2
    // Predicated region
    $region21: #{generator_forward.11} parent=5 // pred_check
      %p125 = pneg %p124
    $region22: #{generator_forward.11} parent=5 // pred_check_branch
      %127 = sbr.rel (%p125) target = $region24
    $region23: #{generator_forward.11} parent=5 // pred_region
      // Predicated region
      $region25: #{generator_forward.11} parent=23 // pred_check
        %p128 = pneg %p29
      $region26: #{generator_forward.11} parent=23 // pred_check_branch
        %130 = sbr.rel (%p128) target = $region28
      $region27: #{generator_forward.11} parent=23 // pred_region
        %s131 = smul.u32 32, %s9
        %p132 = scmp.lt.s32.totalorder %s131, 63
        %s133 = scalar_select %p132, %s131, 63
        %s134 = smul.addr %s133, 8
        %s135 = scalar_lea.vmem %s0, %s134
        %s136 = smul.u32 32, %s9
      $region28: #{generator_forward.11} parent=23 // pred_fallthru
        _
    $region24: #{generator_forward.11} parent=5 // pred_fallthru
      _
    %p137 = scmp.le.s32.totalorder 1, %s9
    %p138 = scmp.lt.s32.totalorder %s9, 3
    %p139 = pnand %p137, %p138
    %p140 = pneg %p139
    // Predicated region
    $region29: #{generator_forward.11} parent=5 // pred_check
      _
    $region30: #{generator_forward.11} parent=5 // pred_check_branch
      %142 = sbr.rel (%p139) target = $region32
    $region31: #{generator_forward.11} parent=5 // pred_region
      %s143 = ssub.s32 %s9, 1
      %s144 = smul.u32 32, %s14
      %p145 = scmp.lt.s32.totalorder %s144, 63
      %s146 = scalar_select %p145, %s144, 63
      %s147 = smul.addr %s146, 8
      %s148 = scalar_lea.vmem %s0, %s147
      %p149 = pneg %p35
      %p150 = pneg %p32
      %p151 = pneg %p56
      %p152 = pneg %p53
      %p153 = pneg %p77
      %p154 = pneg %p74
      %p155 = pneg %p103
      %p156 = pneg %p100
      %s157 = smul.u32 32, %s14
      %p158 = scmp.lt.s32.totalorder %s157, 63
      %s159 = scalar_select %p158, %s157, 63
      %s160 = smul.addr %s159, 8
      %s161 = smul.addr %s160, 4
      %s162 = scalar_lea.vmem %s3, %s161
      %s163 = smul.u32 32, %s14
      %p164 = scmp.lt.s32.totalorder %s163, 63
      %s165 = scalar_select %p164, %s163, 63
      %s166 = smul.addr %s165, 8
      %s167 = scalar_lea.vmem %s0, %s166
      %s168 = smul.u32 32, %s14
      %s169 = smul.u32 32, %s14
      %p170 = scmp.lt.s32.totalorder %s169, 63
      %s171 = scalar_select %p170, %s169, 63
      %s172 = smul.addr %s171, 8
      %s173 = smul.addr %s172, 4
      %s174 = scalar_lea.vmem %s3, %s173
      %s175 = smul.u32 32, %s14
      %v177 = vld [vmem:[%s167] sm:$0xff]
      %v178 = vld [vmem:[%s167 + $0x8] sm:$0xff]
      %v179 = vld [vmem:[%s167 + $0x10] sm:$0xff]
      %v180 = vld [vmem:[%s167 + $0x18] sm:$0xff]
      %v181 = vld [vmem:[%s167 + $0x20] sm:$0xff]
      %v182 = vld [vmem:[%s167 + $0x28] sm:$0xff]
      %v183 = vld [vmem:[%s167 + $0x30] sm:$0xff]
      %v184 = vld [vmem:[%s167 + $0x38] sm:$0xff]
      %v185 = vld [vmem:[%s167 + $0x40] sm:$0xff]
      %v186 = vld [vmem:[%s167 + $0x48] sm:$0xff]
      %v187 = vld [vmem:[%s167 + $0x50] sm:$0xff]
      %v188 = vld [vmem:[%s167 + $0x58] sm:$0xff]
      %v189 = vld [vmem:[%s167 + $0x60] sm:$0xff]
      %v190 = vld [vmem:[%s167 + $0x68] sm:$0xff]
      %v191 = vld [vmem:[%s167 + $0x70] sm:$0xff]
      %v192 = vld [vmem:[%s167 + $0x78] sm:$0xff]
      %v193 = vld [vmem:[%s167 + $0x80] sm:$0xff]
      %v194 = vld [vmem:[%s167 + $0x88] sm:$0xff]
      %v195 = vld [vmem:[%s167 + $0x90] sm:$0xff]
      %v196 = vld [vmem:[%s167 + $0x98] sm:$0xff]
      %v197 = vld [vmem:[%s167 + $0xa0] sm:$0xff]
      %v198 = vld [vmem:[%s167 + $0xa8] sm:$0xff]
      %v199 = vld [vmem:[%s167 + $0xb0] sm:$0xff]
      %v200 = vld [vmem:[%s167 + $0xb8] sm:$0xff]
      %v201 = vld [vmem:[%s167 + $0xc0] sm:$0xff]
      %v202 = vld [vmem:[%s167 + $0xc8] sm:$0xff]
      %v203 = vld [vmem:[%s167 + $0xd0] sm:$0xff]
      %v204 = vld [vmem:[%s167 + $0xd8] sm:$0xff]
      %v205 = vld [vmem:[%s167 + $0xe0] sm:$0xff]
      %v206 = vld [vmem:[%s167 + $0xe8] sm:$0xff]
      %v207 = vld [vmem:[%s167 + $0xf0] sm:$0xff]
      %v208 = vld [vmem:[%s167 + $0xf8] sm:$0xff]
      %v209 = vld [vmem:[%s1] sm:$0x1]
      %v211 = vlaneseq
      %v212 = vshrl.u32 %v211, 7
      %v213 = vsub.s32 0, %v212
      %v214 = vrot.slane %v209, %v213
      %v216 = vadd.f32 %v177, %v214
      %v217 = vadd.f32 %v178, %v214
      %v218 = vadd.f32 %v179, %v214
      %v219 = vadd.f32 %v180, %v214
      %v220 = vadd.f32 %v181, %v214
      %v221 = vadd.f32 %v182, %v214
      %v222 = vadd.f32 %v183, %v214
      %v223 = vadd.f32 %v184, %v214
      %v224 = vadd.f32 %v185, %v214
      %v225 = vadd.f32 %v186, %v214
      %v226 = vadd.f32 %v187, %v214
      %v227 = vadd.f32 %v188, %v214
      %v228 = vadd.f32 %v189, %v214
      %v229 = vadd.f32 %v190, %v214
      %v230 = vadd.f32 %v191, %v214
      %v231 = vadd.f32 %v192, %v214
      %v232 = vadd.f32 %v193, %v214
      %v233 = vadd.f32 %v194, %v214
      %v234 = vadd.f32 %v195, %v214
      %v235 = vadd.f32 %v196, %v214
      %v236 = vadd.f32 %v197, %v214
      %v237 = vadd.f32 %v198, %v214
      %v238 = vadd.f32 %v199, %v214
      %v239 = vadd.f32 %v200, %v214
      %v240 = vadd.f32 %v201, %v214
      %v241 = vadd.f32 %v202, %v214
      %v242 = vadd.f32 %v203, %v214
      %v243 = vadd.f32 %v204, %v214
      %v244 = vadd.f32 %v205, %v214
      %v245 = vadd.f32 %v206, %v214
      %v246 = vadd.f32 %v207, %v214
      %v247 = vadd.f32 %v208, %v214
      %v248 = vmax.f32 %v216, 0.0
      %v249 = vmax.f32 %v217, 0.0
      %v250 = vmax.f32 %v218, 0.0
      %v251 = vmax.f32 %v219, 0.0
      %v252 = vmax.f32 %v220, 0.0
      %v253 = vmax.f32 %v221, 0.0
      %v254 = vmax.f32 %v222, 0.0
      %v255 = vmax.f32 %v223, 0.0
      %v256 = vmax.f32 %v224, 0.0
      %v257 = vmax.f32 %v225, 0.0
      %v258 = vmax.f32 %v226, 0.0
      %v259 = vmax.f32 %v227, 0.0
      %v260 = vmax.f32 %v228, 0.0
      %v261 = vmax.f32 %v229, 0.0
      %v262 = vmax.f32 %v230, 0.0
      %v263 = vmax.f32 %v231, 0.0
      %v264 = vmax.f32 %v232, 0.0
      %v265 = vmax.f32 %v233, 0.0
      %v266 = vmax.f32 %v234, 0.0
      %v267 = vmax.f32 %v235, 0.0
      %v268 = vmax.f32 %v236, 0.0
      %v269 = vmax.f32 %v237, 0.0
      %v270 = vmax.f32 %v238, 0.0
      %v271 = vmax.f32 %v239, 0.0
      %v272 = vmax.f32 %v240, 0.0
      %v273 = vmax.f32 %v241, 0.0
      %v274 = vmax.f32 %v242, 0.0
      %v275 = vmax.f32 %v243, 0.0
      %v276 = vmax.f32 %v244, 0.0
      %v277 = vmax.f32 %v245, 0.0
      %v278 = vmax.f32 %v246, 0.0
      %v279 = vmax.f32 %v247, 0.0
      %v280 = vpack.c.bf16 %v249, %v248
      %v281 = vpack.c.bf16 %v251, %v250
      %v282 = vpack.c.bf16 %v253, %v252
      %v283 = vpack.c.bf16 %v255, %v254
      %v284 = vpack.c.bf16 %v257, %v256
      %v285 = vpack.c.bf16 %v259, %v258
      %v286 = vpack.c.bf16 %v261, %v260
      %v287 = vpack.c.bf16 %v263, %v262
      %v288 = vpack.c.bf16 %v265, %v264
      %v289 = vpack.c.bf16 %v267, %v266
      %v290 = vpack.c.bf16 %v269, %v268
      %v291 = vpack.c.bf16 %v271, %v270
      %v292 = vpack.c.bf16 %v273, %v272
      %v293 = vpack.c.bf16 %v275, %v274
      %v294 = vpack.c.bf16 %v277, %v276
      %v295 = vpack.c.bf16 %v279, %v278
      %v296 = vld [vmem:[%s2] sm:$0xff]
      %v297 = vld [vmem:[%s2 + $0x8] sm:$0xff]
      %v298 = vld [vmem:[%s2 + $0x10] sm:$0xff]
      %v299 = vld [vmem:[%s2 + $0x18] sm:$0xff]
      %v300 = vld [vmem:[%s2 + $0x20] sm:$0xff]
      %v301 = vld [vmem:[%s2 + $0x28] sm:$0xff]
      %v302 = vld [vmem:[%s2 + $0x30] sm:$0xff]
      %v303 = vld [vmem:[%s2 + $0x38] sm:$0xff]
      %v304 = vld [vmem:[%s2 + $0x40] sm:$0xff]
      %v305 = vld [vmem:[%s2 + $0x48] sm:$0xff]
      %v306 = vld [vmem:[%s2 + $0x50] sm:$0xff]
      %v307 = vld [vmem:[%s2 + $0x58] sm:$0xff]
      %v308 = vld [vmem:[%s2 + $0x60] sm:$0xff]
      %v309 = vld [vmem:[%s2 + $0x68] sm:$0xff]
      %v310 = vld [vmem:[%s2 + $0x70] sm:$0xff]
      %v311 = vld [vmem:[%s2 + $0x78] sm:$0xff]
      %v312 = vld [vmem:[%s2 + $0x80] sm:$0xff]
      %v313 = vld [vmem:[%s2 + $0x88] sm:$0xff]
      %v314 = vld [vmem:[%s2 + $0x90] sm:$0xff]
      %v315 = vld [vmem:[%s2 + $0x98] sm:$0xff]
      %v316 = vld [vmem:[%s2 + $0xa0] sm:$0xff]
      %v317 = vld [vmem:[%s2 + $0xa8] sm:$0xff]
      %v318 = vld [vmem:[%s2 + $0xb0] sm:$0xff]
      %v319 = vld [vmem:[%s2 + $0xb8] sm:$0xff]
      %v320 = vld [vmem:[%s2 + $0xc0] sm:$0xff]
      %v321 = vld [vmem:[%s2 + $0xc8] sm:$0xff]
      %v322 = vld [vmem:[%s2 + $0xd0] sm:$0xff]
      %v323 = vld [vmem:[%s2 + $0xd8] sm:$0xff]
      %v324 = vld [vmem:[%s2 + $0xe0] sm:$0xff]
      %v325 = vld [vmem:[%s2 + $0xe8] sm:$0xff]
      %v326 = vld [vmem:[%s2 + $0xf0] sm:$0xff]
      %v327 = vld [vmem:[%s2 + $0xf8] sm:$0xff]
      %v328 = vld [vmem:[%s2 + $0x100] sm:$0xff]
      %v329 = vld [vmem:[%s2 + $0x108] sm:$0xff]
      %v330 = vld [vmem:[%s2 + $0x110] sm:$0xff]
      %v331 = vld [vmem:[%s2 + $0x118] sm:$0xff]
      %v332 = vld [vmem:[%s2 + $0x120] sm:$0xff]
      %v333 = vld [vmem:[%s2 + $0x128] sm:$0xff]
      %v334 = vld [vmem:[%s2 + $0x130] sm:$0xff]
      %v335 = vld [vmem:[%s2 + $0x138] sm:$0xff]
      %v336 = vld [vmem:[%s2 + $0x140] sm:$0xff]
      %v337 = vld [vmem:[%s2 + $0x148] sm:$0xff]
      %v338 = vld [vmem:[%s2 + $0x150] sm:$0xff]
      %v339 = vld [vmem:[%s2 + $0x158] sm:$0xff]
      %v340 = vld [vmem:[%s2 + $0x160] sm:$0xff]
      %v341 = vld [vmem:[%s2 + $0x168] sm:$0xff]
      %v342 = vld [vmem:[%s2 + $0x170] sm:$0xff]
      %v343 = vld [vmem:[%s2 + $0x178] sm:$0xff]
      %v344 = vld [vmem:[%s2 + $0x180] sm:$0xff]
      %v345 = vld [vmem:[%s2 + $0x188] sm:$0xff]
      %v346 = vld [vmem:[%s2 + $0x190] sm:$0xff]
      %v347 = vld [vmem:[%s2 + $0x198] sm:$0xff]
      %v348 = vld [vmem:[%s2 + $0x1a0] sm:$0xff]
      %v349 = vld [vmem:[%s2 + $0x1a8] sm:$0xff]
      %v350 = vld [vmem:[%s2 + $0x1b0] sm:$0xff]
      %v351 = vld [vmem:[%s2 + $0x1b8] sm:$0xff]
      %v352 = vld [vmem:[%s2 + $0x1c0] sm:$0xff]
      %v353 = vld [vmem:[%s2 + $0x1c8] sm:$0xff]
      %v354 = vld [vmem:[%s2 + $0x1d0] sm:$0xff]
      %v355 = vld [vmem:[%s2 + $0x1d8] sm:$0xff]
      %v356 = vld [vmem:[%s2 + $0x1e0] sm:$0xff]
      %v357 = vld [vmem:[%s2 + $0x1e8] sm:$0xff]
      %v358 = vld [vmem:[%s2 + $0x1f0] sm:$0xff]
      %v359 = vld [vmem:[%s2 + $0x1f8] sm:$0xff]
      %v424 = vunpack.c.l.b16 %v296
      %v425 = vunpack.c.h.b16 %v296
      %v426 = vunpack.c.l.b16 %v297
      %v427 = vunpack.c.h.b16 %v297
      %v428 = vunpack.c.l.b16 %v298
      %v429 = vunpack.c.h.b16 %v298
      %v430 = vunpack.c.l.b16 %v299
      %v431 = vunpack.c.h.b16 %v299
      %v432 = vunpack.c.l.b16 %v300
      %v433 = vunpack.c.h.b16 %v300
      %v434 = vunpack.c.l.b16 %v301
      %v435 = vunpack.c.h.b16 %v301
      %v436 = vunpack.c.l.b16 %v302
      %v437 = vunpack.c.h.b16 %v302
      %v438 = vunpack.c.l.b16 %v303
      %v439 = vunpack.c.h.b16 %v303
      %v440 = vunpack.c.l.b16 %v304
      %v441 = vunpack.c.h.b16 %v304
      %v442 = vunpack.c.l.b16 %v305
      %v443 = vunpack.c.h.b16 %v305
      %v444 = vunpack.c.l.b16 %v306
      %v445 = vunpack.c.h.b16 %v306
      %v446 = vunpack.c.l.b16 %v307
      %v447 = vunpack.c.h.b16 %v307
      %v448 = vunpack.c.l.b16 %v308
      %v449 = vunpack.c.h.b16 %v308
      %v450 = vunpack.c.l.b16 %v309
      %v451 = vunpack.c.h.b16 %v309
      %v452 = vunpack.c.l.b16 %v310
      %v453 = vunpack.c.h.b16 %v310
      %v454 = vunpack.c.l.b16 %v311
      %v455 = vunpack.c.h.b16 %v311
      %v456 = vunpack.c.l.b16 %v312
      %v457 = vunpack.c.h.b16 %v312
      %v458 = vunpack.c.l.b16 %v313
      %v459 = vunpack.c.h.b16 %v313
      %v460 = vunpack.c.l.b16 %v314
      %v461 = vunpack.c.h.b16 %v314
      %v462 = vunpack.c.l.b16 %v315
      %v463 = vunpack.c.h.b16 %v315
      %v464 = vunpack.c.l.b16 %v316
      %v465 = vunpack.c.h.b16 %v316
      %v466 = vunpack.c.l.b16 %v317
      %v467 = vunpack.c.h.b16 %v317
      %v468 = vunpack.c.l.b16 %v318
      %v469 = vunpack.c.h.b16 %v318
      %v470 = vunpack.c.l.b16 %v319
      %v471 = vunpack.c.h.b16 %v319
      %v472 = vunpack.c.l.b16 %v320
      %v473 = vunpack.c.h.b16 %v320
      %v474 = vunpack.c.l.b16 %v321
      %v475 = vunpack.c.h.b16 %v321
      %v476 = vunpack.c.l.b16 %v322
      %v477 = vunpack.c.h.b16 %v322
      %v478 = vunpack.c.l.b16 %v323
      %v479 = vunpack.c.h.b16 %v323
      %v480 = vunpack.c.l.b16 %v324
      %v481 = vunpack.c.h.b16 %v324
      %v482 = vunpack.c.l.b16 %v325
      %v483 = vunpack.c.h.b16 %v325
      %v484 = vunpack.c.l.b16 %v326
      %v485 = vunpack.c.h.b16 %v326
      %v486 = vunpack.c.l.b16 %v327
      %v487 = vunpack.c.h.b16 %v327
      %v488 = vunpack.c.l.b16 %v328
      %v489 = vunpack.c.h.b16 %v328
      %v490 = vunpack.c.l.b16 %v329
      %v491 = vunpack.c.h.b16 %v329
      %v492 = vunpack.c.l.b16 %v330
      %v493 = vunpack.c.h.b16 %v330
      %v494 = vunpack.c.l.b16 %v331
      %v495 = vunpack.c.h.b16 %v331
      %v496 = vunpack.c.l.b16 %v332
      %v497 = vunpack.c.h.b16 %v332
      %v498 = vunpack.c.l.b16 %v333
      %v499 = vunpack.c.h.b16 %v333
      %v500 = vunpack.c.l.b16 %v334
      %v501 = vunpack.c.h.b16 %v334
      %v502 = vunpack.c.l.b16 %v335
      %v503 = vunpack.c.h.b16 %v335
      %v504 = vunpack.c.l.b16 %v336
      %v505 = vunpack.c.h.b16 %v336
      %v506 = vunpack.c.l.b16 %v337
      %v507 = vunpack.c.h.b16 %v337
      %v508 = vunpack.c.l.b16 %v338
      %v509 = vunpack.c.h.b16 %v338
      %v510 = vunpack.c.l.b16 %v339
      %v511 = vunpack.c.h.b16 %v339
      %v512 = vunpack.c.l.b16 %v340
      %v513 = vunpack.c.h.b16 %v340
      %v514 = vunpack.c.l.b16 %v341
      %v515 = vunpack.c.h.b16 %v341
      %v516 = vunpack.c.l.b16 %v342
      %v517 = vunpack.c.h.b16 %v342
      %v518 = vunpack.c.l.b16 %v343
      %v519 = vunpack.c.h.b16 %v343
      %v520 = vunpack.c.l.b16 %v344
      %v521 = vunpack.c.h.b16 %v344
      %v522 = vunpack.c.l.b16 %v345
      %v523 = vunpack.c.h.b16 %v345
      %v524 = vunpack.c.l.b16 %v346
      %v525 = vunpack.c.h.b16 %v346
      %v526 = vunpack.c.l.b16 %v347
      %v527 = vunpack.c.h.b16 %v347
      %v528 = vunpack.c.l.b16 %v348
      %v529 = vunpack.c.h.b16 %v348
      %v530 = vunpack.c.l.b16 %v349
      %v531 = vunpack.c.h.b16 %v349
      %v532 = vunpack.c.l.b16 %v350
      %v533 = vunpack.c.h.b16 %v350
      %v534 = vunpack.c.l.b16 %v351
      %v535 = vunpack.c.h.b16 %v351
      %v536 = vunpack.c.l.b16 %v352
      %v537 = vunpack.c.h.b16 %v352
      %v538 = vunpack.c.l.b16 %v353
      %v539 = vunpack.c.h.b16 %v353
      %v540 = vunpack.c.l.b16 %v354
      %v541 = vunpack.c.h.b16 %v354
      %v542 = vunpack.c.l.b16 %v355
      %v543 = vunpack.c.h.b16 %v355
      %v544 = vunpack.c.l.b16 %v356
      %v545 = vunpack.c.h.b16 %v356
      %v546 = vunpack.c.l.b16 %v357
      %v547 = vunpack.c.h.b16 %v357
      %v548 = vunpack.c.l.b16 %v358
      %v549 = vunpack.c.h.b16 %v358
      %v550 = vunpack.c.l.b16 %v359
      %v551 = vunpack.c.h.b16 %v359
      %v552 = vpack.c.b16 %v432, %v424
      %v553 = vpack.c.b16 %v433, %v425
      %v554 = vpack.c.b16 %v434, %v426
      %v555 = vpack.c.b16 %v435, %v427
      %v556 = vpack.c.b16 %v436, %v428
      %v557 = vpack.c.b16 %v437, %v429
      %v558 = vpack.c.b16 %v438, %v430
      %v559 = vpack.c.b16 %v439, %v431
      %v560 = vpack.c.b16 %v448, %v440
      %v561 = vpack.c.b16 %v449, %v441
      %v562 = vpack.c.b16 %v450, %v442
      %v563 = vpack.c.b16 %v451, %v443
      %v564 = vpack.c.b16 %v452, %v444
      %v565 = vpack.c.b16 %v453, %v445
      %v566 = vpack.c.b16 %v454, %v446
      %v567 = vpack.c.b16 %v455, %v447
      %v568 = vpack.c.b16 %v464, %v456
      %v569 = vpack.c.b16 %v465, %v457
      %v570 = vpack.c.b16 %v466, %v458
      %v571 = vpack.c.b16 %v467, %v459
      %v572 = vpack.c.b16 %v468, %v460
      %v573 = vpack.c.b16 %v469, %v461
      %v574 = vpack.c.b16 %v470, %v462
      %v575 = vpack.c.b16 %v471, %v463
      %v576 = vpack.c.b16 %v480, %v472
      %v577 = vpack.c.b16 %v481, %v473
      %v578 = vpack.c.b16 %v482, %v474
      %v579 = vpack.c.b16 %v483, %v475
      %v580 = vpack.c.b16 %v484, %v476
      %v581 = vpack.c.b16 %v485, %v477
      %v582 = vpack.c.b16 %v486, %v478
      %v583 = vpack.c.b16 %v487, %v479
      %v584 = vpack.c.b16 %v496, %v488
      %v585 = vpack.c.b16 %v497, %v489
      %v586 = vpack.c.b16 %v498, %v490
      %v587 = vpack.c.b16 %v499, %v491
      %v588 = vpack.c.b16 %v500, %v492
      %v589 = vpack.c.b16 %v501, %v493
      %v590 = vpack.c.b16 %v502, %v494
      %v591 = vpack.c.b16 %v503, %v495
      %v592 = vpack.c.b16 %v512, %v504
      %v593 = vpack.c.b16 %v513, %v505
      %v594 = vpack.c.b16 %v514, %v506
      %v595 = vpack.c.b16 %v515, %v507
      %v596 = vpack.c.b16 %v516, %v508
      %v597 = vpack.c.b16 %v517, %v509
      %v598 = vpack.c.b16 %v518, %v510
      %v599 = vpack.c.b16 %v519, %v511
      %v600 = vpack.c.b16 %v528, %v520
      %v601 = vpack.c.b16 %v529, %v521
      %v602 = vpack.c.b16 %v530, %v522
      %v603 = vpack.c.b16 %v531, %v523
      %v604 = vpack.c.b16 %v532, %v524
      %v605 = vpack.c.b16 %v533, %v525
      %v606 = vpack.c.b16 %v534, %v526
      %v607 = vpack.c.b16 %v535, %v527
      %v608 = vpack.c.b16 %v544, %v536
      %v609 = vpack.c.b16 %v545, %v537
      %v610 = vpack.c.b16 %v546, %v538
      %v611 = vpack.c.b16 %v547, %v539
      %v612 = vpack.c.b16 %v548, %v540
      %v613 = vpack.c.b16 %v549, %v541
      %v614 = vpack.c.b16 %v550, %v542
      %v615 = vpack.c.b16 %v551, %v543
      %680 = vmatprep.subr.bf16.mxu0 %v553
      %681 = vmatpush1.bf16.msra.mxu0 %v552
      %682 = vmatprep.subr.bf16.mxu0 %v561
      %683 = vmatpush1.bf16.msra.mxu0 %v560
      %684 = vmatprep.subr.bf16.mxu0 %v569
      %685 = vmatpush1.bf16.msra.mxu0 %v568
      %686 = vmatprep.subr.bf16.mxu0 %v577
      %687 = vmatpush1.bf16.msra.mxu0 %v576
      %688 = vmatprep.subr.bf16.mxu0 %v585
      %689 = vmatpush1.bf16.msra.mxu0 %v584
      %690 = vmatprep.subr.bf16.mxu0 %v593
      %691 = vmatpush1.bf16.msra.mxu0 %v592
      %692 = vmatprep.subr.bf16.mxu0 %v601
      %693 = vmatpush1.bf16.msra.mxu0 %v600
      %694 = vmatprep.subr.bf16.mxu0 %v609
      %695 = vmatpush1.bf16.msra.mxu0 %v608
      %696 = vmatprep.subr.bf16.mxu0 0
      %697 = vmatpush1.bf16.msra.mxu0 0
      %698 = vmatprep.subr.bf16.mxu0 0
      %699 = vmatpush1.bf16.msra.mxu0 0
      %700 = vmatprep.subr.bf16.mxu0 0
      %701 = vmatpush1.bf16.msra.mxu0 0
      %702 = vmatprep.subr.bf16.mxu0 0
      %703 = vmatpush1.bf16.msra.mxu0 0
      %704 = vmatprep.subr.bf16.mxu0 0
      %705 = vmatpush1.bf16.msra.mxu0 0
      %706 = vmatprep.subr.bf16.mxu0 0
      %707 = vmatpush1.bf16.msra.mxu0 0
      %708 = vmatprep.subr.bf16.mxu0 0
      %709 = vmatpush1.bf16.msra.mxu0 0
      %710 = vmatprep.subr.bf16.mxu0 0
      %711 = vmatpush1.bf16.msra.mxu0 0
      %712 = vmatprep.mubr.bf16.mxu0 0
      %713 = vmatmul.mubr.bf16.gmra.mrb[0].mxu0 %v280
      %v714 = vpop.f32.mrb[0].mxu0
      %v715 = vadd.f32 0.0, %v714
      %v716 = vpop.f32.mrb[0].mxu0
      %v717 = vadd.f32 0.0, %v716
      %v718 = vpop.f32.mrb[0].mxu0
      %v719 = vadd.f32 0.0, %v718
      %v720 = vpop.f32.mrb[0].mxu0
      %v721 = vadd.f32 0.0, %v720
      %722 = vmatprep.mubr.bf16.mxu0 0
      %723 = vmatmul.mubr.bf16.gmra.mrb[0].mxu0 %v281
      %v724 = vpop.f32.mrb[0].mxu0
      %v725 = vadd.f32 0.0, %v724
      %v726 = vpop.f32.mrb[0].mxu0
      %v727 = vadd.f32 0.0, %v726
      %v728 = vpop.f32.mrb[0].mxu0
      %v729 = vadd.f32 0.0, %v728
      %v730 = vpop.f32.mrb[0].mxu0
      %v731 = vadd.f32 0.0, %v730
      %732 = vmatprep.mubr.bf16.mxu0 0
      %733 = vmatmul.mubr.bf16.gmra.mrb[0].mxu0 %v282
      %v734 = vpop.f32.mrb[0].mxu0
      %v735 = vadd.f32 0.0, %v734
      %v736 = vpop.f32.mrb[0].mxu0
      %v737 = vadd.f32 0.0, %v736
      %v738 = vpop.f32.mrb[0].mxu0
      %v739 = vadd.f32 0.0, %v738
      %v740 = vpop.f32.mrb[0].mxu0
      %v741 = vadd.f32 0.0, %v740
      %742 = vmatprep.mubr.bf16.mxu0 0
      %743 = vmatmul.mubr.bf16.gmra.mrb[0].mxu0 %v283
      %v744 = vpop.f32.mrb[0].mxu0
      %v745 = vadd.f32 0.0, %v744
      %v746 = vpop.f32.mrb[0].mxu0
      %v747 = vadd.f32 0.0, %v746
      %v748 = vpop.f32.mrb[0].mxu0
      %v749 = vadd.f32 0.0, %v748
      %v750 = vpop.f32.mrb[0].mxu0
      %v751 = vadd.f32 0.0, %v750
      %752 = vmatprep.mubr.bf16.mxu0 0
      %753 = vmatmul.mubr.bf16.gmra.mrb[0].mxu0 %v284
      %v754 = vpop.f32.mrb[0].mxu0
      %v755 = vadd.f32 0.0, %v754
      %v756 = vpop.f32.mrb[0].mxu0
      %v757 = vadd.f32 0.0, %v756
      %v758 = vpop.f32.mrb[0].mxu0
      %v759 = vadd.f32 0.0, %v758
      %v760 = vpop.f32.mrb[0].mxu0
      %v761 = vadd.f32 0.0, %v760
      %762 = vmatprep.mubr.bf16.mxu0 0
      %763 = vmatmul.mubr.bf16.gmra.mrb[0].mxu0 %v285
      %v764 = vpop.f32.mrb[0].mxu0
      %v765 = vadd.f32 0.0, %v764
      %v766 = vpop.f32.mrb[0].mxu0
      %v767 = vadd.f32 0.0, %v766
      %v768 = vpop.f32.mrb[0].mxu0
      %v769 = vadd.f32 0.0, %v768
      %v770 = vpop.f32.mrb[0].mxu0
      %v771 = vadd.f32 0.0, %v770
      %772 = vmatprep.mubr.bf16.mxu0 0
      %773 = vmatmul.mubr.bf16.gmra.mrb[0].mxu0 %v286
      %v774 = vpop.f32.mrb[0].mxu0
      %v775 = vadd.f32 0.0, %v774
      %v776 = vpop.f32.mrb[0].mxu0
      %v777 = vadd.f32 0.0, %v776
      %v778 = vpop.f32.mrb[0].mxu0
      %v779 = vadd.f32 0.0, %v778
      %v780 = vpop.f32.mrb[0].mxu0
      %v781 = vadd.f32 0.0, %v780
      %782 = vmatprep.mubr.bf16.mxu0 0
      %783 = vmatmul.mubr.bf16.gmra.mrb[0].mxu0 %v287
      %v784 = vpop.f32.mrb[0].mxu0
      %v785 = vadd.f32 0.0, %v784
      %v786 = vpop.f32.mrb[0].mxu0
      %v787 = vadd.f32 0.0, %v786
      %v788 = vpop.f32.mrb[0].mxu0
      %v789 = vadd.f32 0.0, %v788
      %v790 = vpop.f32.mrb[0].mxu0
      %v791 = vadd.f32 0.0, %v790
      %792 = vmatprep.mubr.bf16.mxu0 0
      %793 = vmatmul.mubr.bf16.gmra.mrb[0].mxu0 %v288
      %v794 = vpop.f32.mrb[0].mxu0
      %v795 = vadd.f32 0.0, %v794
      %v796 = vpop.f32.mrb[0].mxu0
      %v797 = vadd.f32 0.0, %v796
      %v798 = vpop.f32.mrb[0].mxu0
      %v799 = vadd.f32 0.0, %v798
      %v800 = vpop.f32.mrb[0].mxu0
      %v801 = vadd.f32 0.0, %v800
      %802 = vmatprep.mubr.bf16.mxu0 0
      %803 = vmatmul.mubr.bf16.gmra.mrb[0].mxu0 %v289
      %v804 = vpop.f32.mrb[0].mxu0
      %v805 = vadd.f32 0.0, %v804
      %v806 = vpop.f32.mrb[0].mxu0
      %v807 = vadd.f32 0.0, %v806
      %v808 = vpop.f32.mrb[0].mxu0
      %v809 = vadd.f32 0.0, %v808
      %v810 = vpop.f32.mrb[0].mxu0
      %v811 = vadd.f32 0.0, %v810
      %812 = vmatprep.mubr.bf16.mxu0 0
      %813 = vmatmul.mubr.bf16.gmra.mrb[0].mxu0 %v290
      %v814 = vpop.f32.mrb[0].mxu0
      %v815 = vadd.f32 0.0, %v814
      %v816 = vpop.f32.mrb[0].mxu0
      %v817 = vadd.f32 0.0, %v816
      %v818 = vpop.f32.mrb[0].mxu0
      %v819 = vadd.f32 0.0, %v818
      %v820 = vpop.f32.mrb[0].mxu0
      %v821 = vadd.f32 0.0, %v820
      %822 = vmatprep.mubr.bf16.mxu0 0
      %823 = vmatmul.mubr.bf16.gmra.mrb[0].mxu0 %v291
      %v824 = vpop.f32.mrb[0].mxu0
      %v825 = vadd.f32 0.0, %v824
      %v826 = vpop.f32.mrb[0].mxu0
      %v827 = vadd.f32 0.0, %v826
      %v828 = vpop.f32.mrb[0].mxu0
      %v829 = vadd.f32 0.0, %v828
      %v830 = vpop.f32.mrb[0].mxu0
      %v831 = vadd.f32 0.0, %v830
      %832 = vmatprep.mubr.bf16.mxu0 0
      %833 = vmatmul.mubr.bf16.gmra.mrb[0].mxu0 %v292
      %v834 = vpop.f32.mrb[0].mxu0
      %v835 = vadd.f32 0.0, %v834
      %v836 = vpop.f32.mrb[0].mxu0
      %v837 = vadd.f32 0.0, %v836
      %v838 = vpop.f32.mrb[0].mxu0
      %v839 = vadd.f32 0.0, %v838
      %v840 = vpop.f32.mrb[0].mxu0
      %v841 = vadd.f32 0.0, %v840
      %842 = vmatprep.mubr.bf16.mxu0 0
      %843 = vmatmul.mubr.bf16.gmra.mrb[0].mxu0 %v293
      %v844 = vpop.f32.mrb[0].mxu0
      %v845 = vadd.f32 0.0, %v844
      %v846 = vpop.f32.mrb[0].mxu0
      %v847 = vadd.f32 0.0, %v846
      %v848 = vpop.f32.mrb[0].mxu0
      %v849 = vadd.f32 0.0, %v848
      %v850 = vpop.f32.mrb[0].mxu0
      %v851 = vadd.f32 0.0, %v850
      %852 = vmatprep.mubr.bf16.mxu0 0
      %853 = vmatmul.mubr.bf16.gmra.mrb[0].mxu0 %v294
      %v854 = vpop.f32.mrb[0].mxu0
      %v855 = vadd.f32 0.0, %v854
      %v856 = vpop.f32.mrb[0].mxu0
      %v857 = vadd.f32 0.0, %v856
      %v858 = vpop.f32.mrb[0].mxu0
      %v859 = vadd.f32 0.0, %v858
      %v860 = vpop.f32.mrb[0].mxu0
      %v861 = vadd.f32 0.0, %v860
      %862 = vmatprep.mubr.bf16.mxu0 0
      %863 = vmatmul.mubr.bf16.gmra.mrb[0].mxu0 %v295
      %v864 = vpop.f32.mrb[0].mxu0
      %v865 = vadd.f32 0.0, %v864
      %v866 = vpop.f32.mrb[0].mxu0
      %v867 = vadd.f32 0.0, %v866
      %v868 = vpop.f32.mrb[0].mxu0
      %v869 = vadd.f32 0.0, %v868
      %v870 = vpop.f32.mrb[0].mxu0
      %v871 = vadd.f32 0.0, %v870
      %872 = vdwg.mxu0
      %873 = vmatprep.subr.bf16.mxu0 %v555
      %874 = vmatpush1.bf16.msra.mxu0 %v554
      %875 = vmatprep.subr.bf16.mxu0 %v563
      %876 = vmatpush1.bf16.msra.mxu0 %v562
      %877 = vmatprep.subr.bf16.mxu0 %v571
      %878 = vmatpush1.bf16.msra.mxu0 %v570
      %879 = vmatprep.subr.bf16.mxu0 %v579
      %880 = vmatpush1.bf16.msra.mxu0 %v578
      %881 = vmatprep.subr.bf16.mxu0 %v587
      %882 = vmatpush1.bf16.msra.mxu0 %v586
      %883 = vmatprep.subr.bf16.mxu0 %v595
      %884 = vmatpush1.bf16.msra.mxu0 %v594
      %885 = vmatprep.subr.bf16.mxu0 %v603
      %886 = vmatpush1.bf16.msra.mxu0 %v602
      %887 = vmatprep.subr.bf16.mxu0 %v611
      %888 = vmatpush1.bf16.msra.mxu0 %v610
      %889 = vmatprep.subr.bf16.mxu0 0
      %890 = vmatpush1.bf16.msra.mxu0 0
      %891 = vmatprep.subr.bf16.mxu0 0
      %892 = vmatpush1.bf16.msra.mxu0 0
      %893 = vmatprep.subr.bf16.mxu0 0
      %894 = vmatpush1.bf16.msra.mxu0 0
      %895 = vmatprep.subr.bf16.mxu0 0
      %896 = vmatpush1.bf16.msra.mxu0 0
      %897 = vmatprep.subr.bf16.mxu0 0
      %898 = vmatpush1.bf16.msra.mxu0 0
      %899 = vmatprep.subr.bf16.mxu0 0
      %900 = vmatpush1.bf16.msra.mxu0 0
      %901 = vmatprep.subr.bf16.mxu0 0
      %902 = vmatpush1.bf16.msra.mxu0 0
      %903 = vmatprep.subr.bf16.mxu0 0
      %904 = vmatpush1.bf16.msra.mxu0 0
      %905 = vmatprep.mubr.bf16.mxu0 0
      %906 = vmatmul.mubr.bf16.gmra.mrb[0].mxu0 %v280
      %v907 = vpop.f32.mrb[0].mxu0
      %v908 = vadd.f32 0.0, %v907
      %v909 = vpop.f32.mrb[0].mxu0
      %v910 = vadd.f32 0.0, %v909
      %v911 = vpop.f32.mrb[0].mxu0
      %v912 = vadd.f32 0.0, %v911
      %v913 = vpop.f32.mrb[0].mxu0
      %v914 = vadd.f32 0.0, %v913
      %915 = vmatprep.mubr.bf16.mxu0 0
      %916 = vmatmul.mubr.bf16.gmra.mrb[0].mxu0 %v281
      %v917 = vpop.f32.mrb[0].mxu0
      %v918 = vadd.f32 0.0, %v917
      %v919 = vpop.f32.mrb[0].mxu0
      %v920 = vadd.f32 0.0, %v919
      %v921 = vpop.f32.mrb[0].mxu0
      %v922 = vadd.f32 0.0, %v921
      %v923 = vpop.f32.mrb[0].mxu0
      %v924 = vadd.f32 0.0, %v923
      %925 = vmatprep.mubr.bf16.mxu0 0
      %926 = vmatmul.mubr.bf16.gmra.mrb[0].mxu0 %v282
      %v927 = vpop.f32.mrb[0].mxu0
      %v928 = vadd.f32 0.0, %v927
      %v929 = vpop.f32.mrb[0].mxu0
      %v930 = vadd.f32 0.0, %v929
      %v931 = vpop.f32.mrb[0].mxu0
      %v932 = vadd.f32 0.0, %v931
      %v933 = vpop.f32.mrb[0].mxu0
      %v934 = vadd.f32 0.0, %v933
      %935 = vmatprep.mubr.bf16.mxu0 0
      %936 = vmatmul.mubr.bf16.gmra.mrb[0].mxu0 %v283
      %v937 = vpop.f32.mrb[0].mxu0
      %v938 = vadd.f32 0.0, %v937
      %v939 = vpop.f32.mrb[0].mxu0
      %v940 = vadd.f32 0.0, %v939
      %v941 = vpop.f32.mrb[0].mxu0
      %v942 = vadd.f32 0.0, %v941
      %v943 = vpop.f32.mrb[0].mxu0
      %v944 = vadd.f32 0.0, %v943
      %945 = vmatprep.mubr.bf16.mxu0 0
      %946 = vmatmul.mubr.bf16.gmra.mrb[0].mxu0 %v284
      %v947 = vpop.f32.mrb[0].mxu0
      %v948 = vadd.f32 0.0, %v947
      %v949 = vpop.f32.mrb[0].mxu0
      %v950 = vadd.f32 0.0, %v949
      %v951 = vpop.f32.mrb[0].mxu0
      %v952 = vadd.f32 0.0, %v951
      %v953 = vpop.f32.mrb[0].mxu0
      %v954 = vadd.f32 0.0, %v953
      %955 = vmatprep.mubr.bf16.mxu0 0
      %956 = vmatmul.mubr.bf16.gmra.mrb[0].mxu0 %v285
      %v957 = vpop.f32.mrb[0].mxu0
      %v958 = vadd.f32 0.0, %v957
      %v959 = vpop.f32.mrb[0].mxu0
      %v960 = vadd.f32 0.0, %v959
      %v961 = vpop.f32.mrb[0].mxu0
      %v962 = vadd.f32 0.0, %v961
      %v963 = vpop.f32.mrb[0].mxu0
      %v964 = vadd.f32 0.0, %v963
      %965 = vmatprep.mubr.bf16.mxu0 0
      %966 = vmatmul.mubr.bf16.gmra.mrb[0].mxu0 %v286
      %v967 = vpop.f32.mrb[0].mxu0
      %v968 = vadd.f32 0.0, %v967
      %v969 = vpop.f32.mrb[0].mxu0
      %v970 = vadd.f32 0.0, %v969
      %v971 = vpop.f32.mrb[0].mxu0
      %v972 = vadd.f32 0.0, %v971
      %v973 = vpop.f32.mrb[0].mxu0
      %v974 = vadd.f32 0.0, %v973
      %975 = vmatprep.mubr.bf16.mxu0 0
      %976 = vmatmul.mubr.bf16.gmra.mrb[0].mxu0 %v287
      %v977 = vpop.f32.mrb[0].mxu0
      %v978 = vadd.f32 0.0, %v977
      %v979 = vpop.f32.mrb[0].mxu0
      %v980 = vadd.f32 0.0, %v979
      %v981 = vpop.f32.mrb[0].mxu0
      %v982 = vadd.f32 0.0, %v981
      %v983 = vpop.f32.mrb[0].mxu0
      %v984 = vadd.f32 0.0, %v983
      %985 = vmatprep.mubr.bf16.mxu0 0
      %986 = vmatmul.mubr.bf16.gmra.mrb[0].mxu0 %v288
      %v987 = vpop.f32.mrb[0].mxu0
      %v988 = vadd.f32 0.0, %v987
      %v989 = vpop.f32.mrb[0].mxu0
      %v990 = vadd.f32 0.0, %v989
      %v991 = vpop.f32.mrb[0].mxu0
      %v992 = vadd.f32 0.0, %v991
      %v993 = vpop.f32.mrb[0].mxu0
      %v994 = vadd.f32 0.0, %v993
      %995 = vmatprep.mubr.bf16.mxu0 0
      %996 = vmatmul.mubr.bf16.gmra.mrb[0].mxu0 %v289
      %v997 = vpop.f32.mrb[0].mxu0
      %v998 = vadd.f32 0.0, %v997
      %v999 = vpop.f32.mrb[0].mxu0
      %v1000 = vadd.f32 0.0, %v999
      %v1001 = vpop.f32.mrb[0].mxu0
      %v1002 = vadd.f32 0.0, %v1001
      %v1003 = vpop.f32.mrb[0].mxu0
      %v1004 = vadd.f32 0.0, %v1003
      %1005 = vmatprep.mubr.bf16.mxu0 0
      %1006 = vmatmul.mubr.bf16.gmra.mrb[0].mxu0 %v290
      %v1007 = vpop.f32.mrb[0].mxu0
      %v1008 = vadd.f32 0.0, %v1007
      %v1009 = vpop.f32.mrb[0].mxu0
      %v1010 = vadd.f32 0.0, %v1009
      %v1011 = vpop.f32.mrb[0].mxu0
      %v1012 = vadd.f32 0.0, %v1011
      %v1013 = vpop.f32.mrb[0].mxu0
      %v1014 = vadd.f32 0.0, %v1013
      %1015 = vmatprep.mubr.bf16.mxu0 0
      %1016 = vmatmul.mubr.bf16.gmra.mrb[0].mxu0 %v291
      %v1017 = vpop.f32.mrb[0].mxu0
      %v1018 = vadd.f32 0.0, %v1017
      %v1019 = vpop.f32.mrb[0].mxu0
      %v1020 = vadd.f32 0.0, %v1019
      %v1021 = vpop.f32.mrb[0].mxu0
      %v1022 = vadd.f32 0.0, %v1021
      %v1023 = vpop.f32.mrb[0].mxu0
      %v1024 = vadd.f32 0.0, %v1023
      %1025 = vmatprep.mubr.bf16.mxu0 0
      %1026 = vmatmul.mubr.bf16.gmra.mrb[0].mxu0 %v292
      %v1027 = vpop.f32.mrb[0].mxu0
      %v1028 = vadd.f32 0.0, %v1027
      %v1029 = vpop.f32.mrb[0].mxu0
      %v1030 = vadd.f32 0.0, %v1029
      %v1031 = vpop.f32.mrb[0].mxu0
      %v1032 = vadd.f32 0.0, %v1031
      %v1033 = vpop.f32.mrb[0].mxu0
      %v1034 = vadd.f32 0.0, %v1033
      %1035 = vmatprep.mubr.bf16.mxu0 0
      %1036 = vmatmul.mubr.bf16.gmra.mrb[0].mxu0 %v293
      %v1037 = vpop.f32.mrb[0].mxu0
      %v1038 = vadd.f32 0.0, %v1037
      %v1039 = vpop.f32.mrb[0].mxu0
      %v1040 = vadd.f32 0.0, %v1039
      %v1041 = vpop.f32.mrb[0].mxu0
      %v1042 = vadd.f32 0.0, %v1041
      %v1043 = vpop.f32.mrb[0].mxu0
      %v1044 = vadd.f32 0.0, %v1043
      %1045 = vmatprep.mubr.bf16.mxu0 0
      %1046 = vmatmul.mubr.bf16.gmra.mrb[0].mxu0 %v294
      %v1047 = vpop.f32.mrb[0].mxu0
      %v1048 = vadd.f32 0.0, %v1047
      %v1049 = vpop.f32.mrb[0].mxu0
      %v1050 = vadd.f32 0.0, %v1049
      %v1051 = vpop.f32.mrb[0].mxu0
      %v1052 = vadd.f32 0.0, %v1051
      %v1053 = vpop.f32.mrb[0].mxu0
      %v1054 = vadd.f32 0.0, %v1053
      %1055 = vmatprep.mubr.bf16.mxu0 0
      %1056 = vmatmul.mubr.bf16.gmra.mrb[0].mxu0 %v295
      %v1057 = vpop.f32.mrb[0].mxu0
      %v1058 = vadd.f32 0.0, %v1057
      %v1059 = vpop.f32.mrb[0].mxu0
      %v1060 = vadd.f32 0.0, %v1059
      %v1061 = vpop.f32.mrb[0].mxu0
      %v1062 = vadd.f32 0.0, %v1061
      %v1063 = vpop.f32.mrb[0].mxu0
      %v1064 = vadd.f32 0.0, %v1063
      %1065 = vdwg.mxu0
      %1066 = vmatprep.subr.bf16.mxu0 %v557
      %1067 = vmatpush1.bf16.msra.mxu0 %v556
      %1068 = vmatprep.subr.bf16.mxu0 %v565
      %1069 = vmatpush1.bf16.msra.mxu0 %v564
      %1070 = vmatprep.subr.bf16.mxu0 %v573
      %1071 = vmatpush1.bf16.msra.mxu0 %v572
      %1072 = vmatprep.subr.bf16.mxu0 %v581
      %1073 = vmatpush1.bf16.msra.mxu0 %v580
      %1074 = vmatprep.subr.bf16.mxu0 %v589
      %1075 = vmatpush1.bf16.msra.mxu0 %v588
      %1076 = vmatprep.subr.bf16.mxu0 %v597
      %1077 = vmatpush1.bf16.msra.mxu0 %v596
      %1078 = vmatprep.subr.bf16.mxu0 %v605
      %1079 = vmatpush1.bf16.msra.mxu0 %v604
      %1080 = vmatprep.subr.bf16.mxu0 %v613
      %1081 = vmatpush1.bf16.msra.mxu0 %v612
      %1082 = vmatprep.subr.bf16.mxu0 0
      %1083 = vmatpush1.bf16.msra.mxu0 0
      %1084 = vmatprep.subr.bf16.mxu0 0
      %1085 = vmatpush1.bf16.msra.mxu0 0
      %1086 = vmatprep.subr.bf16.mxu0 0
      %1087 = vmatpush1.bf16.msra.mxu0 0
      %1088 = vmatprep.subr.bf16.mxu0 0
      %1089 = vmatpush1.bf16.msra.mxu0 0
      %1090 = vmatprep.subr.bf16.mxu0 0
      %1091 = vmatpush1.bf16.msra.mxu0 0
      %1092 = vmatprep.subr.bf16.mxu0 0
      %1093 = vmatpush1.bf16.msra.mxu0 0
      %1094 = vmatprep.subr.bf16.mxu0 0
      %1095 = vmatpush1.bf16.msra.mxu0 0
      %1096 = vmatprep.subr.bf16.mxu0 0
      %1097 = vmatpush1.bf16.msra.mxu0 0
      %1098 = vmatprep.mubr.bf16.mxu0 0
      %1099 = vmatmul.mubr.bf16.gmra.mrb[0].mxu0 %v280
      %v1100 = vpop.f32.mrb[0].mxu0
      %v1101 = vadd.f32 0.0, %v1100
      %v1102 = vpop.f32.mrb[0].mxu0
      %v1103 = vadd.f32 0.0, %v1102
      %v1104 = vpop.f32.mrb[0].mxu0
      %v1105 = vadd.f32 0.0, %v1104
      %v1106 = vpop.f32.mrb[0].mxu0
      %v1107 = vadd.f32 0.0, %v1106
      %1108 = vmatprep.mubr.bf16.mxu0 0
      %1109 = vmatmul.mubr.bf16.gmra.mrb[0].mxu0 %v281
      %v1110 = vpop.f32.mrb[0].mxu0
      %v1111 = vadd.f32 0.0, %v1110
      %v1112 = vpop.f32.mrb[0].mxu0
      %v1113 = vadd.f32 0.0, %v1112
      %v1114 = vpop.f32.mrb[0].mxu0
      %v1115 = vadd.f32 0.0, %v1114
      %v1116 = vpop.f32.mrb[0].mxu0
      %v1117 = vadd.f32 0.0, %v1116
      %1118 = vmatprep.mubr.bf16.mxu0 0
      %1119 = vmatmul.mubr.bf16.gmra.mrb[0].mxu0 %v282
      %v1120 = vpop.f32.mrb[0].mxu0
      %v1121 = vadd.f32 0.0, %v1120
      %v1122 = vpop.f32.mrb[0].mxu0
      %v1123 = vadd.f32 0.0, %v1122
      %v1124 = vpop.f32.mrb[0].mxu0
      %v1125 = vadd.f32 0.0, %v1124
      %v1126 = vpop.f32.mrb[0].mxu0
      %v1127 = vadd.f32 0.0, %v1126
      %1128 = vmatprep.mubr.bf16.mxu0 0
      %1129 = vmatmul.mubr.bf16.gmra.mrb[0].mxu0 %v283
      %v1130 = vpop.f32.mrb[0].mxu0
      %v1131 = vadd.f32 0.0, %v1130
      %v1132 = vpop.f32.mrb[0].mxu0
      %v1133 = vadd.f32 0.0, %v1132
      %v1134 = vpop.f32.mrb[0].mxu0
      %v1135 = vadd.f32 0.0, %v1134
      %v1136 = vpop.f32.mrb[0].mxu0
      %v1137 = vadd.f32 0.0, %v1136
      %1138 = vmatprep.mubr.bf16.mxu0 0
      %1139 = vmatmul.mubr.bf16.gmra.mrb[0].mxu0 %v284
      %v1140 = vpop.f32.mrb[0].mxu0
      %v1141 = vadd.f32 0.0, %v1140
      %v1142 = vpop.f32.mrb[0].mxu0
      %v1143 = vadd.f32 0.0, %v1142
      %v1144 = vpop.f32.mrb[0].mxu0
      %v1145 = vadd.f32 0.0, %v1144
      %v1146 = vpop.f32.mrb[0].mxu0
      %v1147 = vadd.f32 0.0, %v1146
      %1148 = vmatprep.mubr.bf16.mxu0 0
      %1149 = vmatmul.mubr.bf16.gmra.mrb[0].mxu0 %v285
      %v1150 = vpop.f32.mrb[0].mxu0
      %v1151 = vadd.f32 0.0, %v1150
      %v1152 = vpop.f32.mrb[0].mxu0
      %v1153 = vadd.f32 0.0, %v1152
      %v1154 = vpop.f32.mrb[0].mxu0
      %v1155 = vadd.f32 0.0, %v1154
      %v1156 = vpop.f32.mrb[0].mxu0
      %v1157 = vadd.f32 0.0, %v1156
      %1158 = vmatprep.mubr.bf16.mxu0 0
      %1159 = vmatmul.mubr.bf16.gmra.mrb[0].mxu0 %v286
      %v1160 = vpop.f32.mrb[0].mxu0
      %v1161 = vadd.f32 0.0, %v1160
      %v1162 = vpop.f32.mrb[0].mxu0
      %v1163 = vadd.f32 0.0, %v1162
      %v1164 = vpop.f32.mrb[0].mxu0
      %v1165 = vadd.f32 0.0, %v1164
      %v1166 = vpop.f32.mrb[0].mxu0
      %v1167 = vadd.f32 0.0, %v1166
      %1168 = vmatprep.mubr.bf16.mxu0 0
      %1169 = vmatmul.mubr.bf16.gmra.mrb[0].mxu0 %v287
      %v1170 = vpop.f32.mrb[0].mxu0
      %v1171 = vadd.f32 0.0, %v1170
      %v1172 = vpop.f32.mrb[0].mxu0
      %v1173 = vadd.f32 0.0, %v1172
      %v1174 = vpop.f32.mrb[0].mxu0
      %v1175 = vadd.f32 0.0, %v1174
      %v1176 = vpop.f32.mrb[0].mxu0
      %v1177 = vadd.f32 0.0, %v1176
      %1178 = vmatprep.mubr.bf16.mxu0 0
      %1179 = vmatmul.mubr.bf16.gmra.mrb[0].mxu0 %v288
      %v1180 = vpop.f32.mrb[0].mxu0
      %v1181 = vadd.f32 0.0, %v1180
      %v1182 = vpop.f32.mrb[0].mxu0
      %v1183 = vadd.f32 0.0, %v1182
      %v1184 = vpop.f32.mrb[0].mxu0
      %v1185 = vadd.f32 0.0, %v1184
      %v1186 = vpop.f32.mrb[0].mxu0
      %v1187 = vadd.f32 0.0, %v1186
      %1188 = vmatprep.mubr.bf16.mxu0 0
      %1189 = vmatmul.mubr.bf16.gmra.mrb[0].mxu0 %v289
      %v1190 = vpop.f32.mrb[0].mxu0
      %v1191 = vadd.f32 0.0, %v1190
      %v1192 = vpop.f32.mrb[0].mxu0
      %v1193 = vadd.f32 0.0, %v1192
      %v1194 = vpop.f32.mrb[0].mxu0
      %v1195 = vadd.f32 0.0, %v1194
      %v1196 = vpop.f32.mrb[0].mxu0
      %v1197 = vadd.f32 0.0, %v1196
      %1198 = vmatprep.mubr.bf16.mxu0 0
      %1199 = vmatmul.mubr.bf16.gmra.mrb[0].mxu0 %v290
      %v1200 = vpop.f32.mrb[0].mxu0
      %v1201 = vadd.f32 0.0, %v1200
      %v1202 = vpop.f32.mrb[0].mxu0
      %v1203 = vadd.f32 0.0, %v1202
      %v1204 = vpop.f32.mrb[0].mxu0
      %v1205 = vadd.f32 0.0, %v1204
      %v1206 = vpop.f32.mrb[0].mxu0
      %v1207 = vadd.f32 0.0, %v1206
      %1208 = vmatprep.mubr.bf16.mxu0 0
      %1209 = vmatmul.mubr.bf16.gmra.mrb[0].mxu0 %v291
      %v1210 = vpop.f32.mrb[0].mxu0
      %v1211 = vadd.f32 0.0, %v1210
      %v1212 = vpop.f32.mrb[0].mxu0
      %v1213 = vadd.f32 0.0, %v1212
      %v1214 = vpop.f32.mrb[0].mxu0
      %v1215 = vadd.f32 0.0, %v1214
      %v1216 = vpop.f32.mrb[0].mxu0
      %v1217 = vadd.f32 0.0, %v1216
      %1218 = vmatprep.mubr.bf16.mxu0 0
      %1219 = vmatmul.mubr.bf16.gmra.mrb[0].mxu0 %v292
      %v1220 = vpop.f32.mrb[0].mxu0
      %v1221 = vadd.f32 0.0, %v1220
      %v1222 = vpop.f32.mrb[0].mxu0
      %v1223 = vadd.f32 0.0, %v1222
      %v1224 = vpop.f32.mrb[0].mxu0
      %v1225 = vadd.f32 0.0, %v1224
      %v1226 = vpop.f32.mrb[0].mxu0
      %v1227 = vadd.f32 0.0, %v1226
      %1228 = vmatprep.mubr.bf16.mxu0 0
      %1229 = vmatmul.mubr.bf16.gmra.mrb[0].mxu0 %v293
      %v1230 = vpop.f32.mrb[0].mxu0
      %v1231 = vadd.f32 0.0, %v1230
      %v1232 = vpop.f32.mrb[0].mxu0
      %v1233 = vadd.f32 0.0, %v1232
      %v1234 = vpop.f32.mrb[0].mxu0
      %v1235 = vadd.f32 0.0, %v1234
      %v1236 = vpop.f32.mrb[0].mxu0
      %v1237 = vadd.f32 0.0, %v1236
      %1238 = vmatprep.mubr.bf16.mxu0 0
      %1239 = vmatmul.mubr.bf16.gmra.mrb[0].mxu0 %v294
      %v1240 = vpop.f32.mrb[0].mxu0
      %v1241 = vadd.f32 0.0, %v1240
      %v1242 = vpop.f32.mrb[0].mxu0
      %v1243 = vadd.f32 0.0, %v1242
      %v1244 = vpop.f32.mrb[0].mxu0
      %v1245 = vadd.f32 0.0, %v1244
      %v1246 = vpop.f32.mrb[0].mxu0
      %v1247 = vadd.f32 0.0, %v1246
      %1248 = vmatprep.mubr.bf16.mxu0 0
      %1249 = vmatmul.mubr.bf16.gmra.mrb[0].mxu0 %v295
      %v1250 = vpop.f32.mrb[0].mxu0
      %v1251 = vadd.f32 0.0, %v1250
      %v1252 = vpop.f32.mrb[0].mxu0
      %v1253 = vadd.f32 0.0, %v1252
      %v1254 = vpop.f32.mrb[0].mxu0
      %v1255 = vadd.f32 0.0, %v1254
      %v1256 = vpop.f32.mrb[0].mxu0
      %v1257 = vadd.f32 0.0, %v1256
      %1258 = vdwg.mxu0
      %1259 = vmatprep.subr.bf16.mxu0 %v559
      %1260 = vmatpush1.bf16.msra.mxu0 %v558
      %1261 = vmatprep.subr.bf16.mxu0 %v567
      %1262 = vmatpush1.bf16.msra.mxu0 %v566
      %1263 = vmatprep.subr.bf16.mxu0 %v575
      %1264 = vmatpush1.bf16.msra.mxu0 %v574
      %1265 = vmatprep.subr.bf16.mxu0 %v583
      %1266 = vmatpush1.bf16.msra.mxu0 %v582
      %1267 = vmatprep.subr.bf16.mxu0 %v591
      %1268 = vmatpush1.bf16.msra.mxu0 %v590
      %1269 = vmatprep.subr.bf16.mxu0 %v599
      %1270 = vmatpush1.bf16.msra.mxu0 %v598
      %1271 = vmatprep.subr.bf16.mxu0 %v607
      %1272 = vmatpush1.bf16.msra.mxu0 %v606
      %1273 = vmatprep.subr.bf16.mxu0 %v615
      %1274 = vmatpush1.bf16.msra.mxu0 %v614
      %1275 = vmatprep.subr.bf16.mxu0 0
      %1276 = vmatpush1.bf16.msra.mxu0 0
      %1277 = vmatprep.subr.bf16.mxu0 0
      %1278 = vmatpush1.bf16.msra.mxu0 0
      %1279 = vmatprep.subr.bf16.mxu0 0
      %1280 = vmatpush1.bf16.msra.mxu0 0
      %1281 = vmatprep.subr.bf16.mxu0 0
      %1282 = vmatpush1.bf16.msra.mxu0 0
      %1283 = vmatprep.subr.bf16.mxu0 0
      %1284 = vmatpush1.bf16.msra.mxu0 0
      %1285 = vmatprep.subr.bf16.mxu0 0
      %1286 = vmatpush1.bf16.msra.mxu0 0
      %1287 = vmatprep.subr.bf16.mxu0 0
      %1288 = vmatpush1.bf16.msra.mxu0 0
      %1289 = vmatprep.subr.bf16.mxu0 0
      %1290 = vmatpush1.bf16.msra.mxu0 0
      %1291 = vmatprep.mubr.bf16.mxu0 0
      %1292 = vmatmul.mubr.bf16.gmra.mrb[0].mxu0 %v280
      %v1293 = vpop.f32.mrb[0].mxu0
      %v1294 = vadd.f32 0.0, %v1293
      %v1295 = vpop.f32.mrb[0].mxu0
      %v1296 = vadd.f32 0.0, %v1295
      %v1297 = vpop.f32.mrb[0].mxu0
      %v1298 = vadd.f32 0.0, %v1297
      %v1299 = vpop.f32.mrb[0].mxu0
      %v1300 = vadd.f32 0.0, %v1299
      %1301 = vmatprep.mubr.bf16.mxu0 0
      %1302 = vmatmul.mubr.bf16.gmra.mrb[0].mxu0 %v281
      %v1303 = vpop.f32.mrb[0].mxu0
      %v1304 = vadd.f32 0.0, %v1303
      %v1305 = vpop.f32.mrb[0].mxu0
      %v1306 = vadd.f32 0.0, %v1305
      %v1307 = vpop.f32.mrb[0].mxu0
      %v1308 = vadd.f32 0.0, %v1307
      %v1309 = vpop.f32.mrb[0].mxu0
      %v1310 = vadd.f32 0.0, %v1309
      %1311 = vmatprep.mubr.bf16.mxu0 0
      %1312 = vmatmul.mubr.bf16.gmra.mrb[0].mxu0 %v282
      %v1313 = vpop.f32.mrb[0].mxu0
      %v1314 = vadd.f32 0.0, %v1313
      %v1315 = vpop.f32.mrb[0].mxu0
      %v1316 = vadd.f32 0.0, %v1315
      %v1317 = vpop.f32.mrb[0].mxu0
      %v1318 = vadd.f32 0.0, %v1317
      %v1319 = vpop.f32.mrb[0].mxu0
      %v1320 = vadd.f32 0.0, %v1319
      %1321 = vmatprep.mubr.bf16.mxu0 0
      %1322 = vmatmul.mubr.bf16.gmra.mrb[0].mxu0 %v283
      %v1323 = vpop.f32.mrb[0].mxu0
      %v1324 = vadd.f32 0.0, %v1323
      %v1325 = vpop.f32.mrb[0].mxu0
      %v1326 = vadd.f32 0.0, %v1325
      %v1327 = vpop.f32.mrb[0].mxu0
      %v1328 = vadd.f32 0.0, %v1327
      %v1329 = vpop.f32.mrb[0].mxu0
      %v1330 = vadd.f32 0.0, %v1329
      %1331 = vmatprep.mubr.bf16.mxu0 0
      %1332 = vmatmul.mubr.bf16.gmra.mrb[0].mxu0 %v284
      %v1333 = vpop.f32.mrb[0].mxu0
      %v1334 = vadd.f32 0.0, %v1333
      %v1335 = vpop.f32.mrb[0].mxu0
      %v1336 = vadd.f32 0.0, %v1335
      %v1337 = vpop.f32.mrb[0].mxu0
      %v1338 = vadd.f32 0.0, %v1337
      %v1339 = vpop.f32.mrb[0].mxu0
      %v1340 = vadd.f32 0.0, %v1339
      %1341 = vmatprep.mubr.bf16.mxu0 0
      %1342 = vmatmul.mubr.bf16.gmra.mrb[0].mxu0 %v285
      %v1343 = vpop.f32.mrb[0].mxu0
      %v1344 = vadd.f32 0.0, %v1343
      %v1345 = vpop.f32.mrb[0].mxu0
      %v1346 = vadd.f32 0.0, %v1345
      %v1347 = vpop.f32.mrb[0].mxu0
      %v1348 = vadd.f32 0.0, %v1347
      %v1349 = vpop.f32.mrb[0].mxu0
      %v1350 = vadd.f32 0.0, %v1349
      %1351 = vmatprep.mubr.bf16.mxu0 0
      %1352 = vmatmul.mubr.bf16.gmra.mrb[0].mxu0 %v286
      %v1353 = vpop.f32.mrb[0].mxu0
      %v1354 = vadd.f32 0.0, %v1353
      %v1355 = vpop.f32.mrb[0].mxu0
      %v1356 = vadd.f32 0.0, %v1355
      %v1357 = vpop.f32.mrb[0].mxu0
      %v1358 = vadd.f32 0.0, %v1357
      %v1359 = vpop.f32.mrb[0].mxu0
      %v1360 = vadd.f32 0.0, %v1359
      %1361 = vmatprep.mubr.bf16.mxu0 0
      %1362 = vmatmul.mubr.bf16.gmra.mrb[0].mxu0 %v287
      %v1363 = vpop.f32.mrb[0].mxu0
      %v1364 = vadd.f32 0.0, %v1363
      %v1365 = vpop.f32.mrb[0].mxu0
      %v1366 = vadd.f32 0.0, %v1365
      %v1367 = vpop.f32.mrb[0].mxu0
      %v1368 = vadd.f32 0.0, %v1367
      %v1369 = vpop.f32.mrb[0].mxu0
      %v1370 = vadd.f32 0.0, %v1369
      %1371 = vmatprep.mubr.bf16.mxu0 0
      %1372 = vmatmul.mubr.bf16.gmra.mrb[0].mxu0 %v288
      %v1373 = vpop.f32.mrb[0].mxu0
      %v1374 = vadd.f32 0.0, %v1373
      %v1375 = vpop.f32.mrb[0].mxu0
      %v1376 = vadd.f32 0.0, %v1375
      %v1377 = vpop.f32.mrb[0].mxu0
      %v1378 = vadd.f32 0.0, %v1377
      %v1379 = vpop.f32.mrb[0].mxu0
      %v1380 = vadd.f32 0.0, %v1379
      %1381 = vmatprep.mubr.bf16.mxu0 0
      %1382 = vmatmul.mubr.bf16.gmra.mrb[0].mxu0 %v289
      %v1383 = vpop.f32.mrb[0].mxu0
      %v1384 = vadd.f32 0.0, %v1383
      %v1385 = vpop.f32.mrb[0].mxu0
      %v1386 = vadd.f32 0.0, %v1385
      %v1387 = vpop.f32.mrb[0].mxu0
      %v1388 = vadd.f32 0.0, %v1387
      %v1389 = vpop.f32.mrb[0].mxu0
      %v1390 = vadd.f32 0.0, %v1389
      %1391 = vmatprep.mubr.bf16.mxu0 0
      %1392 = vmatmul.mubr.bf16.gmra.mrb[0].mxu0 %v290
      %v1393 = vpop.f32.mrb[0].mxu0
      %v1394 = vadd.f32 0.0, %v1393
      %v1395 = vpop.f32.mrb[0].mxu0
      %v1396 = vadd.f32 0.0, %v1395
      %v1397 = vpop.f32.mrb[0].mxu0
      %v1398 = vadd.f32 0.0, %v1397
      %v1399 = vpop.f32.mrb[0].mxu0
      %v1400 = vadd.f32 0.0, %v1399
      %1401 = vmatprep.mubr.bf16.mxu0 0
      %1402 = vmatmul.mubr.bf16.gmra.mrb[0].mxu0 %v291
      %v1403 = vpop.f32.mrb[0].mxu0
      %v1404 = vadd.f32 0.0, %v1403
      %v1405 = vpop.f32.mrb[0].mxu0
      %v1406 = vadd.f32 0.0, %v1405
      %v1407 = vpop.f32.mrb[0].mxu0
      %v1408 = vadd.f32 0.0, %v1407
      %v1409 = vpop.f32.mrb[0].mxu0
      %v1410 = vadd.f32 0.0, %v1409
      %1411 = vmatprep.mubr.bf16.mxu0 0
      %1412 = vmatmul.mubr.bf16.gmra.mrb[0].mxu0 %v292
      %v1413 = vpop.f32.mrb[0].mxu0
      %v1414 = vadd.f32 0.0, %v1413
      %v1415 = vpop.f32.mrb[0].mxu0
      %v1416 = vadd.f32 0.0, %v1415
      %v1417 = vpop.f32.mrb[0].mxu0
      %v1418 = vadd.f32 0.0, %v1417
      %v1419 = vpop.f32.mrb[0].mxu0
      %v1420 = vadd.f32 0.0, %v1419
      %1421 = vmatprep.mubr.bf16.mxu0 0
      %1422 = vmatmul.mubr.bf16.gmra.mrb[0].mxu0 %v293
      %v1423 = vpop.f32.mrb[0].mxu0
      %v1424 = vadd.f32 0.0, %v1423
      %v1425 = vpop.f32.mrb[0].mxu0
      %v1426 = vadd.f32 0.0, %v1425
      %v1427 = vpop.f32.mrb[0].mxu0
      %v1428 = vadd.f32 0.0, %v1427
      %v1429 = vpop.f32.mrb[0].mxu0
      %v1430 = vadd.f32 0.0, %v1429
      %1431 = vmatprep.mubr.bf16.mxu0 0
      %1432 = vmatmul.mubr.bf16.gmra.mrb[0].mxu0 %v294
      %v1433 = vpop.f32.mrb[0].mxu0
      %v1434 = vadd.f32 0.0, %v1433
      %v1435 = vpop.f32.mrb[0].mxu0
      %v1436 = vadd.f32 0.0, %v1435
      %v1437 = vpop.f32.mrb[0].mxu0
      %v1438 = vadd.f32 0.0, %v1437
      %v1439 = vpop.f32.mrb[0].mxu0
      %v1440 = vadd.f32 0.0, %v1439
      %1441 = vmatprep.mubr.bf16.mxu0 0
      %1442 = vmatmul.mubr.bf16.gmra.mrb[0].mxu0 %v295
      %v1443 = vpop.f32.mrb[0].mxu0
      %v1444 = vadd.f32 0.0, %v1443
      %v1445 = vpop.f32.mrb[0].mxu0
      %v1446 = vadd.f32 0.0, %v1445
      %v1447 = vpop.f32.mrb[0].mxu0
      %v1448 = vadd.f32 0.0, %v1447
      %v1449 = vpop.f32.mrb[0].mxu0
      %v1450 = vadd.f32 0.0, %v1449
      %1451 = vdwg.mxu0
      %v1452 = vpack.c.bf16 %v719, %v715
      %v1453 = vpack.c.bf16 %v721, %v717
      %v1454 = vpack.c.bf16 %v912, %v908
      %v1455 = vpack.c.bf16 %v914, %v910
      %v1456 = vpack.c.bf16 %v1105, %v1101
      %v1457 = vpack.c.bf16 %v1107, %v1103
      %v1458 = vpack.c.bf16 %v1298, %v1294
      %v1459 = vpack.c.bf16 %v1300, %v1296
      %v1460 = vpack.c.bf16 %v729, %v725
      %v1461 = vpack.c.bf16 %v731, %v727
      %v1462 = vpack.c.bf16 %v922, %v918
      %v1463 = vpack.c.bf16 %v924, %v920
      %v1464 = vpack.c.bf16 %v1115, %v1111
      %v1465 = vpack.c.bf16 %v1117, %v1113
      %v1466 = vpack.c.bf16 %v1308, %v1304
      %v1467 = vpack.c.bf16 %v1310, %v1306
      %v1468 = vpack.c.bf16 %v739, %v735
      %v1469 = vpack.c.bf16 %v741, %v737
      %v1470 = vpack.c.bf16 %v932, %v928
      %v1471 = vpack.c.bf16 %v934, %v930
      %v1472 = vpack.c.bf16 %v1125, %v1121
      %v1473 = vpack.c.bf16 %v1127, %v1123
      %v1474 = vpack.c.bf16 %v1318, %v1314
      %v1475 = vpack.c.bf16 %v1320, %v1316
      %v1476 = vpack.c.bf16 %v749, %v745
      %v1477 = vpack.c.bf16 %v751, %v747
      %v1478 = vpack.c.bf16 %v942, %v938
      %v1479 = vpack.c.bf16 %v944, %v940
      %v1480 = vpack.c.bf16 %v1135, %v1131
      %v1481 = vpack.c.bf16 %v1137, %v1133
      %v1482 = vpack.c.bf16 %v1328, %v1324
      %v1483 = vpack.c.bf16 %v1330, %v1326
      %v1484 = vpack.c.bf16 %v759, %v755
      %v1485 = vpack.c.bf16 %v761, %v757
      %v1486 = vpack.c.bf16 %v952, %v948
      %v1487 = vpack.c.bf16 %v954, %v950
      %v1488 = vpack.c.bf16 %v1145, %v1141
      %v1489 = vpack.c.bf16 %v1147, %v1143
      %v1490 = vpack.c.bf16 %v1338, %v1334
      %v1491 = vpack.c.bf16 %v1340, %v1336
      %v1492 = vpack.c.bf16 %v769, %v765
      %v1493 = vpack.c.bf16 %v771, %v767
      %v1494 = vpack.c.bf16 %v962, %v958
      %v1495 = vpack.c.bf16 %v964, %v960
      %v1496 = vpack.c.bf16 %v1155, %v1151
      %v1497 = vpack.c.bf16 %v1157, %v1153
      %v1498 = vpack.c.bf16 %v1348, %v1344
      %v1499 = vpack.c.bf16 %v1350, %v1346
      %v1500 = vpack.c.bf16 %v779, %v775
      %v1501 = vpack.c.bf16 %v781, %v777
      %v1502 = vpack.c.bf16 %v972, %v968
      %v1503 = vpack.c.bf16 %v974, %v970
      %v1504 = vpack.c.bf16 %v1165, %v1161
      %v1505 = vpack.c.bf16 %v1167, %v1163
      %v1506 = vpack.c.bf16 %v1358, %v1354
      %v1507 = vpack.c.bf16 %v1360, %v1356
      %v1508 = vpack.c.bf16 %v789, %v785
      %v1509 = vpack.c.bf16 %v791, %v787
      %v1510 = vpack.c.bf16 %v982, %v978
      %v1511 = vpack.c.bf16 %v984, %v980
      %v1512 = vpack.c.bf16 %v1175, %v1171
      %v1513 = vpack.c.bf16 %v1177, %v1173
      %v1514 = vpack.c.bf16 %v1368, %v1364
      %v1515 = vpack.c.bf16 %v1370, %v1366
      %v1516 = vpack.c.bf16 %v799, %v795
      %v1517 = vpack.c.bf16 %v801, %v797
      %v1518 = vpack.c.bf16 %v992, %v988
      %v1519 = vpack.c.bf16 %v994, %v990
      %v1520 = vpack.c.bf16 %v1185, %v1181
      %v1521 = vpack.c.bf16 %v1187, %v1183
      %v1522 = vpack.c.bf16 %v1378, %v1374
      %v1523 = vpack.c.bf16 %v1380, %v1376
      %v1524 = vpack.c.bf16 %v809, %v805
      %v1525 = vpack.c.bf16 %v811, %v807
      %v1526 = vpack.c.bf16 %v1002, %v998
      %v1527 = vpack.c.bf16 %v1004, %v1000
      %v1528 = vpack.c.bf16 %v1195, %v1191
      %v1529 = vpack.c.bf16 %v1197, %v1193
      %v1530 = vpack.c.bf16 %v1388, %v1384
      %v1531 = vpack.c.bf16 %v1390, %v1386
      %v1532 = vpack.c.bf16 %v819, %v815
      %v1533 = vpack.c.bf16 %v821, %v817
      %v1534 = vpack.c.bf16 %v1012, %v1008
      %v1535 = vpack.c.bf16 %v1014, %v1010
      %v1536 = vpack.c.bf16 %v1205, %v1201
      %v1537 = vpack.c.bf16 %v1207, %v1203
      %v1538 = vpack.c.bf16 %v1398, %v1394
      %v1539 = vpack.c.bf16 %v1400, %v1396
      %v1540 = vpack.c.bf16 %v829, %v825
      %v1541 = vpack.c.bf16 %v831, %v827
      %v1542 = vpack.c.bf16 %v1022, %v1018
      %v1543 = vpack.c.bf16 %v1024, %v1020
      %v1544 = vpack.c.bf16 %v1215, %v1211
      %v1545 = vpack.c.bf16 %v1217, %v1213
      %v1546 = vpack.c.bf16 %v1408, %v1404
      %v1547 = vpack.c.bf16 %v1410, %v1406
      %v1548 = vpack.c.bf16 %v839, %v835
      %v1549 = vpack.c.bf16 %v841, %v837
      %v1550 = vpack.c.bf16 %v1032, %v1028
      %v1551 = vpack.c.bf16 %v1034, %v1030
      %v1552 = vpack.c.bf16 %v1225, %v1221
      %v1553 = vpack.c.bf16 %v1227, %v1223
      %v1554 = vpack.c.bf16 %v1418, %v1414
      %v1555 = vpack.c.bf16 %v1420, %v1416
      %v1556 = vpack.c.bf16 %v849, %v845
      %v1557 = vpack.c.bf16 %v851, %v847
      %v1558 = vpack.c.bf16 %v1042, %v1038
      %v1559 = vpack.c.bf16 %v1044, %v1040
      %v1560 = vpack.c.bf16 %v1235, %v1231
      %v1561 = vpack.c.bf16 %v1237, %v1233
      %v1562 = vpack.c.bf16 %v1428, %v1424
      %v1563 = vpack.c.bf16 %v1430, %v1426
      %v1564 = vpack.c.bf16 %v859, %v855
      %v1565 = vpack.c.bf16 %v861, %v857
      %v1566 = vpack.c.bf16 %v1052, %v1048
      %v1567 = vpack.c.bf16 %v1054, %v1050
      %v1568 = vpack.c.bf16 %v1245, %v1241
      %v1569 = vpack.c.bf16 %v1247, %v1243
      %v1570 = vpack.c.bf16 %v1438, %v1434
      %v1571 = vpack.c.bf16 %v1440, %v1436
      %v1572 = vpack.c.bf16 %v869, %v865
      %v1573 = vpack.c.bf16 %v871, %v867
      %v1574 = vpack.c.bf16 %v1062, %v1058
      %v1575 = vpack.c.bf16 %v1064, %v1060
      %v1576 = vpack.c.bf16 %v1255, %v1251
      %v1577 = vpack.c.bf16 %v1257, %v1253
      %v1578 = vpack.c.bf16 %v1448, %v1444
      %v1579 = vpack.c.bf16 %v1450, %v1446
      %v1708 = vunpack.c.l.b16 %v1452
      %v1709 = vunpack.c.l.b16 %v1453
      %v1710 = vunpack.c.l.b16 %v1454
      %v1711 = vunpack.c.l.b16 %v1455
      %v1712 = vunpack.c.l.b16 %v1456
      %v1713 = vunpack.c.l.b16 %v1457
      %v1714 = vunpack.c.l.b16 %v1458
      %v1715 = vunpack.c.l.b16 %v1459
      %v1716 = vunpack.c.h.b16 %v1452
      %v1717 = vunpack.c.h.b16 %v1453
      %v1718 = vunpack.c.h.b16 %v1454
      %v1719 = vunpack.c.h.b16 %v1455
      %v1720 = vunpack.c.h.b16 %v1456
      %v1721 = vunpack.c.h.b16 %v1457
      %v1722 = vunpack.c.h.b16 %v1458
      %v1723 = vunpack.c.h.b16 %v1459
      %v1724 = vunpack.c.l.b16 %v1460
      %v1725 = vunpack.c.l.b16 %v1461
      %v1726 = vunpack.c.l.b16 %v1462
      %v1727 = vunpack.c.l.b16 %v1463
      %v1728 = vunpack.c.l.b16 %v1464
      %v1729 = vunpack.c.l.b16 %v1465
      %v1730 = vunpack.c.l.b16 %v1466
      %v1731 = vunpack.c.l.b16 %v1467
      %v1732 = vunpack.c.h.b16 %v1460
      %v1733 = vunpack.c.h.b16 %v1461
      %v1734 = vunpack.c.h.b16 %v1462
      %v1735 = vunpack.c.h.b16 %v1463
      %v1736 = vunpack.c.h.b16 %v1464
      %v1737 = vunpack.c.h.b16 %v1465
      %v1738 = vunpack.c.h.b16 %v1466
      %v1739 = vunpack.c.h.b16 %v1467
      %v1740 = vunpack.c.l.b16 %v1468
      %v1741 = vunpack.c.l.b16 %v1469
      %v1742 = vunpack.c.l.b16 %v1470
      %v1743 = vunpack.c.l.b16 %v1471
      %v1744 = vunpack.c.l.b16 %v1472
      %v1745 = vunpack.c.l.b16 %v1473
      %v1746 = vunpack.c.l.b16 %v1474
      %v1747 = vunpack.c.l.b16 %v1475
      %v1748 = vunpack.c.h.b16 %v1468
      %v1749 = vunpack.c.h.b16 %v1469
      %v1750 = vunpack.c.h.b16 %v1470
      %v1751 = vunpack.c.h.b16 %v1471
      %v1752 = vunpack.c.h.b16 %v1472
      %v1753 = vunpack.c.h.b16 %v1473
      %v1754 = vunpack.c.h.b16 %v1474
      %v1755 = vunpack.c.h.b16 %v1475
      %v1756 = vunpack.c.l.b16 %v1476
      %v1757 = vunpack.c.l.b16 %v1477
      %v1758 = vunpack.c.l.b16 %v1478
      %v1759 = vunpack.c.l.b16 %v1479
      %v1760 = vunpack.c.l.b16 %v1480
      %v1761 = vunpack.c.l.b16 %v1481
      %v1762 = vunpack.c.l.b16 %v1482
      %v1763 = vunpack.c.l.b16 %v1483
      %v1764 = vunpack.c.h.b16 %v1476
      %v1765 = vunpack.c.h.b16 %v1477
      %v1766 = vunpack.c.h.b16 %v1478
      %v1767 = vunpack.c.h.b16 %v1479
      %v1768 = vunpack.c.h.b16 %v1480
      %v1769 = vunpack.c.h.b16 %v1481
      %v1770 = vunpack.c.h.b16 %v1482
      %v1771 = vunpack.c.h.b16 %v1483
      %v1772 = vunpack.c.l.b16 %v1484
      %v1773 = vunpack.c.l.b16 %v1485
      %v1774 = vunpack.c.l.b16 %v1486
      %v1775 = vunpack.c.l.b16 %v1487
      %v1776 = vunpack.c.l.b16 %v1488
      %v1777 = vunpack.c.l.b16 %v1489
      %v1778 = vunpack.c.l.b16 %v1490
      %v1779 = vunpack.c.l.b16 %v1491
      %v1780 = vunpack.c.h.b16 %v1484
      %v1781 = vunpack.c.h.b16 %v1485
      %v1782 = vunpack.c.h.b16 %v1486
      %v1783 = vunpack.c.h.b16 %v1487
      %v1784 = vunpack.c.h.b16 %v1488
      %v1785 = vunpack.c.h.b16 %v1489
      %v1786 = vunpack.c.h.b16 %v1490
      %v1787 = vunpack.c.h.b16 %v1491
      %v1788 = vunpack.c.l.b16 %v1492
      %v1789 = vunpack.c.l.b16 %v1493
      %v1790 = vunpack.c.l.b16 %v1494
      %v1791 = vunpack.c.l.b16 %v1495
      %v1792 = vunpack.c.l.b16 %v1496
      %v1793 = vunpack.c.l.b16 %v1497
      %v1794 = vunpack.c.l.b16 %v1498
      %v1795 = vunpack.c.l.b16 %v1499
      %v1796 = vunpack.c.h.b16 %v1492
      %v1797 = vunpack.c.h.b16 %v1493
      %v1798 = vunpack.c.h.b16 %v1494
      %v1799 = vunpack.c.h.b16 %v1495
      %v1800 = vunpack.c.h.b16 %v1496
      %v1801 = vunpack.c.h.b16 %v1497
      %v1802 = vunpack.c.h.b16 %v1498
      %v1803 = vunpack.c.h.b16 %v1499
      %v1804 = vunpack.c.l.b16 %v1500
      %v1805 = vunpack.c.l.b16 %v1501
      %v1806 = vunpack.c.l.b16 %v1502
      %v1807 = vunpack.c.l.b16 %v1503
      %v1808 = vunpack.c.l.b16 %v1504
      %v1809 = vunpack.c.l.b16 %v1505
      %v1810 = vunpack.c.l.b16 %v1506
      %v1811 = vunpack.c.l.b16 %v1507
      %v1812 = vunpack.c.h.b16 %v1500
      %v1813 = vunpack.c.h.b16 %v1501
      %v1814 = vunpack.c.h.b16 %v1502
      %v1815 = vunpack.c.h.b16 %v1503
      %v1816 = vunpack.c.h.b16 %v1504
      %v1817 = vunpack.c.h.b16 %v1505
      %v1818 = vunpack.c.h.b16 %v1506
      %v1819 = vunpack.c.h.b16 %v1507
      %v1820 = vunpack.c.l.b16 %v1508
      %v1821 = vunpack.c.l.b16 %v1509
      %v1822 = vunpack.c.l.b16 %v1510
      %v1823 = vunpack.c.l.b16 %v1511
      %v1824 = vunpack.c.l.b16 %v1512
      %v1825 = vunpack.c.l.b16 %v1513
      %v1826 = vunpack.c.l.b16 %v1514
      %v1827 = vunpack.c.l.b16 %v1515
      %v1828 = vunpack.c.h.b16 %v1508
      %v1829 = vunpack.c.h.b16 %v1509
      %v1830 = vunpack.c.h.b16 %v1510
      %v1831 = vunpack.c.h.b16 %v1511
      %v1832 = vunpack.c.h.b16 %v1512
      %v1833 = vunpack.c.h.b16 %v1513
      %v1834 = vunpack.c.h.b16 %v1514
      %v1835 = vunpack.c.h.b16 %v1515
      %v1836 = vunpack.c.l.b16 %v1516
      %v1837 = vunpack.c.l.b16 %v1517
      %v1838 = vunpack.c.l.b16 %v1518
      %v1839 = vunpack.c.l.b16 %v1519
      %v1840 = vunpack.c.l.b16 %v1520
      %v1841 = vunpack.c.l.b16 %v1521
      %v1842 = vunpack.c.l.b16 %v1522
      %v1843 = vunpack.c.l.b16 %v1523
      %v1844 = vunpack.c.h.b16 %v1516
      %v1845 = vunpack.c.h.b16 %v1517
      %v1846 = vunpack.c.h.b16 %v1518
      %v1847 = vunpack.c.h.b16 %v1519
      %v1848 = vunpack.c.h.b16 %v1520
      %v1849 = vunpack.c.h.b16 %v1521
      %v1850 = vunpack.c.h.b16 %v1522
      %v1851 = vunpack.c.h.b16 %v1523
      %v1852 = vunpack.c.l.b16 %v1524
      %v1853 = vunpack.c.l.b16 %v1525
      %v1854 = vunpack.c.l.b16 %v1526
      %v1855 = vunpack.c.l.b16 %v1527
      %v1856 = vunpack.c.l.b16 %v1528
      %v1857 = vunpack.c.l.b16 %v1529
      %v1858 = vunpack.c.l.b16 %v1530
      %v1859 = vunpack.c.l.b16 %v1531
      %v1860 = vunpack.c.h.b16 %v1524
      %v1861 = vunpack.c.h.b16 %v1525
      %v1862 = vunpack.c.h.b16 %v1526
      %v1863 = vunpack.c.h.b16 %v1527
      %v1864 = vunpack.c.h.b16 %v1528
      %v1865 = vunpack.c.h.b16 %v1529
      %v1866 = vunpack.c.h.b16 %v1530
      %v1867 = vunpack.c.h.b16 %v1531
      %v1868 = vunpack.c.l.b16 %v1532
      %v1869 = vunpack.c.l.b16 %v1533
      %v1870 = vunpack.c.l.b16 %v1534
      %v1871 = vunpack.c.l.b16 %v1535
      %v1872 = vunpack.c.l.b16 %v1536
      %v1873 = vunpack.c.l.b16 %v1537
      %v1874 = vunpack.c.l.b16 %v1538
      %v1875 = vunpack.c.l.b16 %v1539
      %v1876 = vunpack.c.h.b16 %v1532
      %v1877 = vunpack.c.h.b16 %v1533
      %v1878 = vunpack.c.h.b16 %v1534
      %v1879 = vunpack.c.h.b16 %v1535
      %v1880 = vunpack.c.h.b16 %v1536
      %v1881 = vunpack.c.h.b16 %v1537
      %v1882 = vunpack.c.h.b16 %v1538
      %v1883 = vunpack.c.h.b16 %v1539
      %v1884 = vunpack.c.l.b16 %v1540
      %v1885 = vunpack.c.l.b16 %v1541
      %v1886 = vunpack.c.l.b16 %v1542
      %v1887 = vunpack.c.l.b16 %v1543
      %v1888 = vunpack.c.l.b16 %v1544
      %v1889 = vunpack.c.l.b16 %v1545
      %v1890 = vunpack.c.l.b16 %v1546
      %v1891 = vunpack.c.l.b16 %v1547
      %v1892 = vunpack.c.h.b16 %v1540
      %v1893 = vunpack.c.h.b16 %v1541
      %v1894 = vunpack.c.h.b16 %v1542
      %v1895 = vunpack.c.h.b16 %v1543
      %v1896 = vunpack.c.h.b16 %v1544
      %v1897 = vunpack.c.h.b16 %v1545
      %v1898 = vunpack.c.h.b16 %v1546
      %v1899 = vunpack.c.h.b16 %v1547
      %v1900 = vunpack.c.l.b16 %v1548
      %v1901 = vunpack.c.l.b16 %v1549
      %v1902 = vunpack.c.l.b16 %v1550
      %v1903 = vunpack.c.l.b16 %v1551
      %v1904 = vunpack.c.l.b16 %v1552
      %v1905 = vunpack.c.l.b16 %v1553
      %v1906 = vunpack.c.l.b16 %v1554
      %v1907 = vunpack.c.l.b16 %v1555
      %v1908 = vunpack.c.h.b16 %v1548
      %v1909 = vunpack.c.h.b16 %v1549
      %v1910 = vunpack.c.h.b16 %v1550
      %v1911 = vunpack.c.h.b16 %v1551
      %v1912 = vunpack.c.h.b16 %v1552
      %v1913 = vunpack.c.h.b16 %v1553
      %v1914 = vunpack.c.h.b16 %v1554
      %v1915 = vunpack.c.h.b16 %v1555
      %v1916 = vunpack.c.l.b16 %v1556
      %v1917 = vunpack.c.l.b16 %v1557
      %v1918 = vunpack.c.l.b16 %v1558
      %v1919 = vunpack.c.l.b16 %v1559
      %v1920 = vunpack.c.l.b16 %v1560
      %v1921 = vunpack.c.l.b16 %v1561
      %v1922 = vunpack.c.l.b16 %v1562
      %v1923 = vunpack.c.l.b16 %v1563
      %v1924 = vunpack.c.h.b16 %v1556
      %v1925 = vunpack.c.h.b16 %v1557
      %v1926 = vunpack.c.h.b16 %v1558
      %v1927 = vunpack.c.h.b16 %v1559
      %v1928 = vunpack.c.h.b16 %v1560
      %v1929 = vunpack.c.h.b16 %v1561
      %v1930 = vunpack.c.h.b16 %v1562
      %v1931 = vunpack.c.h.b16 %v1563
      %v1932 = vunpack.c.l.b16 %v1564
      %v1933 = vunpack.c.l.b16 %v1565
      %v1934 = vunpack.c.l.b16 %v1566
      %v1935 = vunpack.c.l.b16 %v1567
      %v1936 = vunpack.c.l.b16 %v1568
      %v1937 = vunpack.c.l.b16 %v1569
      %v1938 = vunpack.c.l.b16 %v1570
      %v1939 = vunpack.c.l.b16 %v1571
      %v1940 = vunpack.c.h.b16 %v1564
      %v1941 = vunpack.c.h.b16 %v1565
      %v1942 = vunpack.c.h.b16 %v1566
      %v1943 = vunpack.c.h.b16 %v1567
      %v1944 = vunpack.c.h.b16 %v1568
      %v1945 = vunpack.c.h.b16 %v1569
      %v1946 = vunpack.c.h.b16 %v1570
      %v1947 = vunpack.c.h.b16 %v1571
      %v1948 = vunpack.c.l.b16 %v1572
      %v1949 = vunpack.c.l.b16 %v1573
      %v1950 = vunpack.c.l.b16 %v1574
      %v1951 = vunpack.c.l.b16 %v1575
      %v1952 = vunpack.c.l.b16 %v1576
      %v1953 = vunpack.c.l.b16 %v1577
      %v1954 = vunpack.c.l.b16 %v1578
      %v1955 = vunpack.c.l.b16 %v1579
      %v1956 = vunpack.c.h.b16 %v1572
      %v1957 = vunpack.c.h.b16 %v1573
      %v1958 = vunpack.c.h.b16 %v1574
      %v1959 = vunpack.c.h.b16 %v1575
      %v1960 = vunpack.c.h.b16 %v1576
      %v1961 = vunpack.c.h.b16 %v1577
      %v1962 = vunpack.c.h.b16 %v1578
      %v1963 = vunpack.c.h.b16 %v1579
      %v1964 = vpack.c.b16 %v1709, %v1708
      %v1965 = vpack.c.b16 %v1711, %v1710
      %v1966 = vpack.c.b16 %v1713, %v1712
      %v1967 = vpack.c.b16 %v1715, %v1714
      %v1968 = vpack.c.b16 %v1717, %v1716
      %v1969 = vpack.c.b16 %v1719, %v1718
      %v1970 = vpack.c.b16 %v1721, %v1720
      %v1971 = vpack.c.b16 %v1723, %v1722
      %v1972 = vpack.c.b16 %v1725, %v1724
      %v1973 = vpack.c.b16 %v1727, %v1726
      %v1974 = vpack.c.b16 %v1729, %v1728
      %v1975 = vpack.c.b16 %v1731, %v1730
      %v1976 = vpack.c.b16 %v1733, %v1732
      %v1977 = vpack.c.b16 %v1735, %v1734
      %v1978 = vpack.c.b16 %v1737, %v1736
      %v1979 = vpack.c.b16 %v1739, %v1738
      %v1980 = vpack.c.b16 %v1741, %v1740
      %v1981 = vpack.c.b16 %v1743, %v1742
      %v1982 = vpack.c.b16 %v1745, %v1744
      %v1983 = vpack.c.b16 %v1747, %v1746
      %v1984 = vpack.c.b16 %v1749, %v1748
      %v1985 = vpack.c.b16 %v1751, %v1750
      %v1986 = vpack.c.b16 %v1753, %v1752
      %v1987 = vpack.c.b16 %v1755, %v1754
      %v1988 = vpack.c.b16 %v1757, %v1756
      %v1989 = vpack.c.b16 %v1759, %v1758
      %v1990 = vpack.c.b16 %v1761, %v1760
      %v1991 = vpack.c.b16 %v1763, %v1762
      %v1992 = vpack.c.b16 %v1765, %v1764
      %v1993 = vpack.c.b16 %v1767, %v1766
      %v1994 = vpack.c.b16 %v1769, %v1768
      %v1995 = vpack.c.b16 %v1771, %v1770
      %v1996 = vpack.c.b16 %v1773, %v1772
      %v1997 = vpack.c.b16 %v1775, %v1774
      %v1998 = vpack.c.b16 %v1777, %v1776
      %v1999 = vpack.c.b16 %v1779, %v1778
      %v2000 = vpack.c.b16 %v1781, %v1780
      %v2001 = vpack.c.b16 %v1783, %v1782
      %v2002 = vpack.c.b16 %v1785, %v1784
      %v2003 = vpack.c.b16 %v1787, %v1786
      %v2004 = vpack.c.b16 %v1789, %v1788
      %v2005 = vpack.c.b16 %v1791, %v1790
      %v2006 = vpack.c.b16 %v1793, %v1792
      %v2007 = vpack.c.b16 %v1795, %v1794
      %v2008 = vpack.c.b16 %v1797, %v1796
      %v2009 = vpack.c.b16 %v1799, %v1798
      %v2010 = vpack.c.b16 %v1801, %v1800
      %v2011 = vpack.c.b16 %v1803, %v1802
      %v2012 = vpack.c.b16 %v1805, %v1804
      %v2013 = vpack.c.b16 %v1807, %v1806
      %v2014 = vpack.c.b16 %v1809, %v1808
      %v2015 = vpack.c.b16 %v1811, %v1810
      %v2016 = vpack.c.b16 %v1813, %v1812
      %v2017 = vpack.c.b16 %v1815, %v1814
      %v2018 = vpack.c.b16 %v1817, %v1816
      %v2019 = vpack.c.b16 %v1819, %v1818
      %v2020 = vpack.c.b16 %v1821, %v1820
      %v2021 = vpack.c.b16 %v1823, %v1822
      %v2022 = vpack.c.b16 %v1825, %v1824
      %v2023 = vpack.c.b16 %v1827, %v1826
      %v2024 = vpack.c.b16 %v1829, %v1828
      %v2025 = vpack.c.b16 %v1831, %v1830
      %v2026 = vpack.c.b16 %v1833, %v1832
      %v2027 = vpack.c.b16 %v1835, %v1834
      %v2028 = vpack.c.b16 %v1837, %v1836
      %v2029 = vpack.c.b16 %v1839, %v1838
      %v2030 = vpack.c.b16 %v1841, %v1840
      %v2031 = vpack.c.b16 %v1843, %v1842
      %v2032 = vpack.c.b16 %v1845, %v1844
      %v2033 = vpack.c.b16 %v1847, %v1846
      %v2034 = vpack.c.b16 %v1849, %v1848
      %v2035 = vpack.c.b16 %v1851, %v1850
      %v2036 = vpack.c.b16 %v1853, %v1852
      %v2037 = vpack.c.b16 %v1855, %v1854
      %v2038 = vpack.c.b16 %v1857, %v1856
      %v2039 = vpack.c.b16 %v1859, %v1858
      %v2040 = vpack.c.b16 %v1861, %v1860
      %v2041 = vpack.c.b16 %v1863, %v1862
      %v2042 = vpack.c.b16 %v1865, %v1864
      %v2043 = vpack.c.b16 %v1867, %v1866
      %v2044 = vpack.c.b16 %v1869, %v1868
      %v2045 = vpack.c.b16 %v1871, %v1870
      %v2046 = vpack.c.b16 %v1873, %v1872
      %v2047 = vpack.c.b16 %v1875, %v1874
      %v2048 = vpack.c.b16 %v1877, %v1876
      %v2049 = vpack.c.b16 %v1879, %v1878
      %v2050 = vpack.c.b16 %v1881, %v1880
      %v2051 = vpack.c.b16 %v1883, %v1882
      %v2052 = vpack.c.b16 %v1885, %v1884
      %v2053 = vpack.c.b16 %v1887, %v1886
      %v2054 = vpack.c.b16 %v1889, %v1888
      %v2055 = vpack.c.b16 %v1891, %v1890
      %v2056 = vpack.c.b16 %v1893, %v1892
      %v2057 = vpack.c.b16 %v1895, %v1894
      %v2058 = vpack.c.b16 %v1897, %v1896
      %v2059 = vpack.c.b16 %v1899, %v1898
      %v2060 = vpack.c.b16 %v1901, %v1900
      %v2061 = vpack.c.b16 %v1903, %v1902
      %v2062 = vpack.c.b16 %v1905, %v1904
      %v2063 = vpack.c.b16 %v1907, %v1906
      %v2064 = vpack.c.b16 %v1909, %v1908
      %v2065 = vpack.c.b16 %v1911, %v1910
      %v2066 = vpack.c.b16 %v1913, %v1912
      %v2067 = vpack.c.b16 %v1915, %v1914
      %v2068 = vpack.c.b16 %v1917, %v1916
      %v2069 = vpack.c.b16 %v1919, %v1918
      %v2070 = vpack.c.b16 %v1921, %v1920
      %v2071 = vpack.c.b16 %v1923, %v1922
      %v2072 = vpack.c.b16 %v1925, %v1924
      %v2073 = vpack.c.b16 %v1927, %v1926
      %v2074 = vpack.c.b16 %v1929, %v1928
      %v2075 = vpack.c.b16 %v1931, %v1930
      %v2076 = vpack.c.b16 %v1933, %v1932
      %v2077 = vpack.c.b16 %v1935, %v1934
      %v2078 = vpack.c.b16 %v1937, %v1936
      %v2079 = vpack.c.b16 %v1939, %v1938
      %v2080 = vpack.c.b16 %v1941, %v1940
      %v2081 = vpack.c.b16 %v1943, %v1942
      %v2082 = vpack.c.b16 %v1945, %v1944
      %v2083 = vpack.c.b16 %v1947, %v1946
      %v2084 = vpack.c.b16 %v1949, %v1948
      %v2085 = vpack.c.b16 %v1951, %v1950
      %v2086 = vpack.c.b16 %v1953, %v1952
      %v2087 = vpack.c.b16 %v1955, %v1954
      %v2088 = vpack.c.b16 %v1957, %v1956
      %v2089 = vpack.c.b16 %v1959, %v1958
      %v2090 = vpack.c.b16 %v1961, %v1960
      %v2091 = vpack.c.b16 %v1963, %v1962
      %2220 = vst [vmem:[%s174] sm:$0xff] %v1964
      %2221 = vst [vmem:[%s174 + $0x8] sm:$0xff] %v1965
      %2222 = vst [vmem:[%s174 + $0x10] sm:$0xff] %v1966
      %2223 = vst [vmem:[%s174 + $0x18] sm:$0xff] %v1967
      %2224 = vst [vmem:[%s174 + $0x20] sm:$0xff] %v1968
      %2225 = vst [vmem:[%s174 + $0x28] sm:$0xff] %v1969
      %2226 = vst [vmem:[%s174 + $0x30] sm:$0xff] %v1970
      %2227 = vst [vmem:[%s174 + $0x38] sm:$0xff] %v1971
      %2228 = vst [vmem:[%s174 + $0x40] sm:$0xff] %v1972
      %2229 = vst [vmem:[%s174 + $0x48] sm:$0xff] %v1973
      %2230 = vst [vmem:[%s174 + $0x50] sm:$0xff] %v1974
      %2231 = vst [vmem:[%s174 + $0x58] sm:$0xff] %v1975
      %2232 = vst [vmem:[%s174 + $0x60] sm:$0xff] %v1976
      %2233 = vst [vmem:[%s174 + $0x68] sm:$0xff] %v1977
      %2234 = vst [vmem:[%s174 + $0x70] sm:$0xff] %v1978
      %2235 = vst [vmem:[%s174 + $0x78] sm:$0xff] %v1979
      %2236 = vst [vmem:[%s174 + $0x80] sm:$0xff] %v1980
      %2237 = vst [vmem:[%s174 + $0x88] sm:$0xff] %v1981
      %2238 = vst [vmem:[%s174 + $0x90] sm:$0xff] %v1982
      %2239 = vst [vmem:[%s174 + $0x98] sm:$0xff] %v1983
      %2240 = vst [vmem:[%s174 + $0xa0] sm:$0xff] %v1984
      %2241 = vst [vmem:[%s174 + $0xa8] sm:$0xff] %v1985
      %2242 = vst [vmem:[%s174 + $0xb0] sm:$0xff] %v1986
      %2243 = vst [vmem:[%s174 + $0xb8] sm:$0xff] %v1987
      %2244 = vst [vmem:[%s174 + $0xc0] sm:$0xff] %v1988
      %2245 = vst [vmem:[%s174 + $0xc8] sm:$0xff] %v1989
      %2246 = vst [vmem:[%s174 + $0xd0] sm:$0xff] %v1990
      %2247 = vst [vmem:[%s174 + $0xd8] sm:$0xff] %v1991
      %2248 = vst [vmem:[%s174 + $0xe0] sm:$0xff] %v1992
      %2249 = vst [vmem:[%s174 + $0xe8] sm:$0xff] %v1993
      %2250 = vst [vmem:[%s174 + $0xf0] sm:$0xff] %v1994
      %2251 = vst [vmem:[%s174 + $0xf8] sm:$0xff] %v1995
      %2252 = vst [vmem:[%s174 + $0x100] sm:$0xff] %v1996
      %2253 = vst [vmem:[%s174 + $0x108] sm:$0xff] %v1997
      %2254 = vst [vmem:[%s174 + $0x110] sm:$0xff] %v1998
      %2255 = vst [vmem:[%s174 + $0x118] sm:$0xff] %v1999
      %2256 = vst [vmem:[%s174 + $0x120] sm:$0xff] %v2000
      %2257 = vst [vmem:[%s174 + $0x128] sm:$0xff] %v2001
      %2258 = vst [vmem:[%s174 + $0x130] sm:$0xff] %v2002
      %2259 = vst [vmem:[%s174 + $0x138] sm:$0xff] %v2003
      %2260 = vst [vmem:[%s174 + $0x140] sm:$0xff] %v2004
      %2261 = vst [vmem:[%s174 + $0x148] sm:$0xff] %v2005
      %2262 = vst [vmem:[%s174 + $0x150] sm:$0xff] %v2006
      %2263 = vst [vmem:[%s174 + $0x158] sm:$0xff] %v2007
      %2264 = vst [vmem:[%s174 + $0x160] sm:$0xff] %v2008
      %2265 = vst [vmem:[%s174 + $0x168] sm:$0xff] %v2009
      %2266 = vst [vmem:[%s174 + $0x170] sm:$0xff] %v2010
      %2267 = vst [vmem:[%s174 + $0x178] sm:$0xff] %v2011
      %2268 = vst [vmem:[%s174 + $0x180] sm:$0xff] %v2012
      %2269 = vst [vmem:[%s174 + $0x188] sm:$0xff] %v2013
      %2270 = vst [vmem:[%s174 + $0x190] sm:$0xff] %v2014
      %2271 = vst [vmem:[%s174 + $0x198] sm:$0xff] %v2015
      %2272 = vst [vmem:[%s174 + $0x1a0] sm:$0xff] %v2016
      %2273 = vst [vmem:[%s174 + $0x1a8] sm:$0xff] %v2017
      %2274 = vst [vmem:[%s174 + $0x1b0] sm:$0xff] %v2018
      %2275 = vst [vmem:[%s174 + $0x1b8] sm:$0xff] %v2019
      %2276 = vst [vmem:[%s174 + $0x1c0] sm:$0xff] %v2020
      %2277 = vst [vmem:[%s174 + $0x1c8] sm:$0xff] %v2021
      %2278 = vst [vmem:[%s174 + $0x1d0] sm:$0xff] %v2022
      %2279 = vst [vmem:[%s174 + $0x1d8] sm:$0xff] %v2023
      %2280 = vst [vmem:[%s174 + $0x1e0] sm:$0xff] %v2024
      %2281 = vst [vmem:[%s174 + $0x1e8] sm:$0xff] %v2025
      %2282 = vst [vmem:[%s174 + $0x1f0] sm:$0xff] %v2026
      %2283 = vst [vmem:[%s174 + $0x1f8] sm:$0xff] %v2027
      %2284 = vst [vmem:[%s174 + $0x200] sm:$0xff] %v2028
      %2285 = vst [vmem:[%s174 + $0x208] sm:$0xff] %v2029
      %2286 = vst [vmem:[%s174 + $0x210] sm:$0xff] %v2030
      %2287 = vst [vmem:[%s174 + $0x218] sm:$0xff] %v2031
      %2288 = vst [vmem:[%s174 + $0x220] sm:$0xff] %v2032
      %2289 = vst [vmem:[%s174 + $0x228] sm:$0xff] %v2033
      %2290 = vst [vmem:[%s174 + $0x230] sm:$0xff] %v2034
      %2291 = vst [vmem:[%s174 + $0x238] sm:$0xff] %v2035
      %2292 = vst [vmem:[%s174 + $0x240] sm:$0xff] %v2036
      %2293 = vst [vmem:[%s174 + $0x248] sm:$0xff] %v2037
      %2294 = vst [vmem:[%s174 + $0x250] sm:$0xff] %v2038
      %2295 = vst [vmem:[%s174 + $0x258] sm:$0xff] %v2039
      %2296 = vst [vmem:[%s174 + $0x260] sm:$0xff] %v2040
      %2297 = vst [vmem:[%s174 + $0x268] sm:$0xff] %v2041
      %2298 = vst [vmem:[%s174 + $0x270] sm:$0xff] %v2042
      %2299 = vst [vmem:[%s174 + $0x278] sm:$0xff] %v2043
      %2300 = vst [vmem:[%s174 + $0x280] sm:$0xff] %v2044
      %2301 = vst [vmem:[%s174 + $0x288] sm:$0xff] %v2045
      %2302 = vst [vmem:[%s174 + $0x290] sm:$0xff] %v2046
      %2303 = vst [vmem:[%s174 + $0x298] sm:$0xff] %v2047
      %2304 = vst [vmem:[%s174 + $0x2a0] sm:$0xff] %v2048
      %2305 = vst [vmem:[%s174 + $0x2a8] sm:$0xff] %v2049
      %2306 = vst [vmem:[%s174 + $0x2b0] sm:$0xff] %v2050
      %2307 = vst [vmem:[%s174 + $0x2b8] sm:$0xff] %v2051
      %2308 = vst [vmem:[%s174 + $0x2c0] sm:$0xff] %v2052
      %2309 = vst [vmem:[%s174 + $0x2c8] sm:$0xff] %v2053
      %2310 = vst [vmem:[%s174 + $0x2d0] sm:$0xff] %v2054
      %2311 = vst [vmem:[%s174 + $0x2d8] sm:$0xff] %v2055
      %2312 = vst [vmem:[%s174 + $0x2e0] sm:$0xff] %v2056
      %2313 = vst [vmem:[%s174 + $0x2e8] sm:$0xff] %v2057
      %2314 = vst [vmem:[%s174 + $0x2f0] sm:$0xff] %v2058
      %2315 = vst [vmem:[%s174 + $0x2f8] sm:$0xff] %v2059
      %2316 = vst [vmem:[%s174 + $0x300] sm:$0xff] %v2060
      %2317 = vst [vmem:[%s174 + $0x308] sm:$0xff] %v2061
      %2318 = vst [vmem:[%s174 + $0x310] sm:$0xff] %v2062
      %2319 = vst [vmem:[%s174 + $0x318] sm:$0xff] %v2063
      %2320 = vst [vmem:[%s174 + $0x320] sm:$0xff] %v2064
      %2321 = vst [vmem:[%s174 + $0x328] sm:$0xff] %v2065
      %2322 = vst [vmem:[%s174 + $0x330] sm:$0xff] %v2066
      %2323 = vst [vmem:[%s174 + $0x338] sm:$0xff] %v2067
      %2324 = vst [vmem:[%s174 + $0x340] sm:$0xff] %v2068
      %2325 = vst [vmem:[%s174 + $0x348] sm:$0xff] %v2069
      %2326 = vst [vmem:[%s174 + $0x350] sm:$0xff] %v2070
      %2327 = vst [vmem:[%s174 + $0x358] sm:$0xff] %v2071
      %2328 = vst [vmem:[%s174 + $0x360] sm:$0xff] %v2072
      %2329 = vst [vmem:[%s174 + $0x368] sm:$0xff] %v2073
      %2330 = vst [vmem:[%s174 + $0x370] sm:$0xff] %v2074
      %2331 = vst [vmem:[%s174 + $0x378] sm:$0xff] %v2075
      %2332 = vst [vmem:[%s174 + $0x380] sm:$0xff] %v2076
      %2333 = vst [vmem:[%s174 + $0x388] sm:$0xff] %v2077
      %2334 = vst [vmem:[%s174 + $0x390] sm:$0xff] %v2078
      %2335 = vst [vmem:[%s174 + $0x398] sm:$0xff] %v2079
      %2336 = vst [vmem:[%s174 + $0x3a0] sm:$0xff] %v2080
      %2337 = vst [vmem:[%s174 + $0x3a8] sm:$0xff] %v2081
      %2338 = vst [vmem:[%s174 + $0x3b0] sm:$0xff] %v2082
      %2339 = vst [vmem:[%s174 + $0x3b8] sm:$0xff] %v2083
      %2340 = vst [vmem:[%s174 + $0x3c0] sm:$0xff] %v2084
      %2341 = vst [vmem:[%s174 + $0x3c8] sm:$0xff] %v2085
      %2342 = vst [vmem:[%s174 + $0x3d0] sm:$0xff] %v2086
      %2343 = vst [vmem:[%s174 + $0x3d8] sm:$0xff] %v2087
      %2344 = vst [vmem:[%s174 + $0x3e0] sm:$0xff] %v2088
      %2345 = vst [vmem:[%s174 + $0x3e8] sm:$0xff] %v2089
      %2346 = vst [vmem:[%s174 + $0x3f0] sm:$0xff] %v2090
      %2347 = vst [vmem:[%s174 + $0x3f8] sm:$0xff] %v2091
      %s2348 = smul.u32 32, %s14
      %p2349 = scmp.lt.s32.totalorder %s2348, 63
      %s2350 = scalar_select %p2349, %s2348, 63
      %s2351 = smul.addr %s2350, 8
      %s2352 = smul.addr %s2351, 4
      %s2353 = scalar_lea.vmem %s3, %s2352
      // Predicated region
      $region33: #{generator_forward.11} parent=31 // pred_check
        %p2354 = pneg %p100
      $region34: #{generator_forward.11} parent=31 // pred_check_branch
        %2356 = sbr.rel (%p2354) target = $region36
      $region35: #{generator_forward.11} parent=31 // pred_region
        %s2357 = smul.u32 32, %s14
      $region36: #{generator_forward.11} parent=31 // pred_fallthru
        _
    $region32: #{generator_forward.11} parent=5 // pred_fallthru
      _
    %p2358 = scmp.le.s32.totalorder 2, %s9
    // Predicated region
    $region37: #{generator_forward.11} parent=5 // pred_check
      %p2359 = pneg %p2358
    $region38: #{generator_forward.11} parent=5 // pred_check_branch
      %2361 = sbr.rel (%p2359) target = $region40
    $region39: #{generator_forward.11} parent=5 // pred_region
      %s2362 = ssub.s32 %s9, 2
      // Predicated region
      $region41: #{generator_forward.11} parent=39 // pred_check
        %p2363 = pneg %p106
      $region42: #{generator_forward.11} parent=39 // pred_check_branch
        %2365 = sbr.rel (%p2363) target = $region44
      $region43: #{generator_forward.11} parent=39 // pred_region
        %s2366 = smul.u32 32, %s15
        %p2367 = scmp.lt.s32.totalorder %s2366, 63
        %s2368 = scalar_select %p2367, %s2366, 63
        %s2369 = smul.addr %s2368, 8
        %s2370 = smul.addr %s2369, 4
        %s2371 = scalar_lea.vmem %s3, %s2370
      $region44: #{generator_forward.11} parent=39 // pred_fallthru
        _
    $region40: #{generator_forward.11} parent=5 // pred_fallthru
      _
  $region6: #{generator_forward.11} parent=0 // loop_footer
    %s13 = sadd.s32 1, %s9
  $region7: #{generator_forward.11} parent=0 // loop_footer_branch
    %8 = sbr.rel target = $region3
  $region8: #{generator_forward.11} parent=0 // loop_exit
    _

// kernel: generator_forward.12
$region0: #{generator_forward.12}
  #allocation0 [shape = 'u32[]', space=smem, size = 0x4, offset = 0x4, fixed_abs, tag = 'smem constant byte address 0x4 - core index']
  #allocation1 [shape = 'u32[144,128]{1,0:T(1,128)}', space=vmem, size = 0x12000, scoped, tag = 'internal scratch']
  %s0 = inlined_call_operand.vmem [shape: f32[2048,64], index: 0, kind: input, shape index: {}]
  %s1 = inlined_call_operand.vmem [shape: f32[1,64], index: 1, kind: input, shape index: {}]
  %s2 = inlined_call_operand.vmem [shape: bf16[64,512], index: 2, kind: input, shape index: {}]
  %s3 = inlined_call_operand.vmem [shape: bf16[2048,512], index: 3, kind: output, shape index: {}]
  %s4 = sld [smem:[#allocation0]]
  $region45: #{generator_forward.12} parent=0
    _
  %s6 = ssub.s32 1, %s4
  %s7 = scalar_select 0, %s6, %s4
  loop: start=0, step=1, limit=10
  $region2: #{generator_forward.12} parent=0 // loop_pre_header
    _
  $region3: #{generator_forward.12} parent=0 // loop_header
    %s9 = sphi 0, %s13
    %p10 = scmp.ge.s32.totalorder %s9, 10
    %s19 = sphi 0, %s21
    %s22 = sphi 0, %s19
    %s23 = sphi 0, %s22
    %s39 = sphi 0, %s23
    %s43 = sphi 0, %s43
    %s45 = sphi 0, %s43
    %s46 = sphi 0, %s45
    %s60 = sphi 0, %s46
    %s64 = sphi 0, %s64
    %s66 = sphi 0, %s64
    %s67 = sphi 0, %s66
    %s81 = sphi 0, %s67
    %s87 = sphi 0, %s89
    %s90 = sphi 0, %s87
    %s91 = sphi 0, %s90
    %s107 = sphi 0, %s91
  $region4: #{generator_forward.12} parent=0 // loop_header_branch
    %12 = sbr.rel (%p10) target = $region8
  $region5: #{generator_forward.12} parent=0 // loop_body
    %s14 = ssub.s32 %s9, 1
    %s15 = ssub.s32 %s9, 2
    %s16 = sadd.s32 %s9, 1
    %s17 = ssub.s32 %s9, %s16
    %p18 = scmp.eq.s32.totalorder %s17, 0
    %s20 = sadd.s32 %s19, 1
    %s21 = scalar_select %p18, %s19, %s20
    %p24 = pneg %p18
    %p25 = scmp.eq.s32.totalorder %s9, 7
    %p26 = por %p24, %p25
    %p27 = scmp.ne.s32.totalorder %s19, %s22
    %p28 = scmp.eq.s32.totalorder %s9, 0
    %p29 = por %p27, %p28
    %p30 = scmp.ne.s32.totalorder %s19, %s22
    %p31 = scmp.eq.s32.totalorder %s14, 7
    %p32 = por %p30, %p31
    %p33 = scmp.ne.s32.totalorder %s22, %s23
    %p34 = scmp.eq.s32.totalorder %s14, 0
    %p35 = por %p33, %p34
    %p36 = scmp.ne.s32.totalorder %s22, %s23
    %p37 = scmp.eq.s32.totalorder %s15, 7
    %p38 = por %p36, %p37
    %p40 = scmp.ne.s32.totalorder %s23, %s39
    %p41 = scmp.eq.s32.totalorder %s15, 0
    %p42 = por %p40, %p41
    %s44 = sadd.s32 %s43, 1
    %p47 = scmp.eq.s32.totalorder %s9, 7
    %p48 = scmp.ne.s32.totalorder %s43, %s45
    %p49 = scmp.eq.s32.totalorder %s9, 0
    %p50 = por %p48, %p49
    %p51 = scmp.ne.s32.totalorder %s43, %s45
    %p52 = scmp.eq.s32.totalorder %s14, 7
    %p53 = por %p51, %p52
    %p54 = scmp.ne.s32.totalorder %s45, %s46
    %p55 = scmp.eq.s32.totalorder %s14, 0
    %p56 = por %p54, %p55
    %p57 = scmp.ne.s32.totalorder %s45, %s46
    %p58 = scmp.eq.s32.totalorder %s15, 7
    %p59 = por %p57, %p58
    %p61 = scmp.ne.s32.totalorder %s46, %s60
    %p62 = scmp.eq.s32.totalorder %s15, 0
    %p63 = por %p61, %p62
    %s65 = sadd.s32 %s64, 1
    %p68 = scmp.eq.s32.totalorder %s9, 7
    %p69 = scmp.ne.s32.totalorder %s64, %s66
    %p70 = scmp.eq.s32.totalorder %s9, 0
    %p71 = por %p69, %p70
    %p72 = scmp.ne.s32.totalorder %s64, %s66
    %p73 = scmp.eq.s32.totalorder %s14, 7
    %p74 = por %p72, %p73
    %p75 = scmp.ne.s32.totalorder %s66, %s67
    %p76 = scmp.eq.s32.totalorder %s14, 0
    %p77 = por %p75, %p76
    %p78 = scmp.ne.s32.totalorder %s66, %s67
    %p79 = scmp.eq.s32.totalorder %s15, 7
    %p80 = por %p78, %p79
    %p82 = scmp.ne.s32.totalorder %s67, %s81
    %p83 = scmp.eq.s32.totalorder %s15, 0
    %p84 = por %p82, %p83
    %s85 = ssub.s32 %s9, %s16
    %p86 = scmp.eq.s32.totalorder %s85, 0
    %s88 = sadd.s32 %s87, 1
    %s89 = scalar_select %p86, %s87, %s88
    %p92 = pneg %p86
    %p93 = scmp.eq.s32.totalorder %s9, 7
    %p94 = por %p92, %p93
    %p95 = scmp.ne.s32.totalorder %s87, %s90
    %p96 = scmp.eq.s32.totalorder %s9, 0
    %p97 = por %p95, %p96
    %p98 = scmp.ne.s32.totalorder %s87, %s90
    %p99 = scmp.eq.s32.totalorder %s14, 7
    %p100 = por %p98, %p99
    %p101 = scmp.ne.s32.totalorder %s90, %s91
    %p102 = scmp.eq.s32.totalorder %s14, 0
    %p103 = por %p101, %p102
    %p104 = scmp.ne.s32.totalorder %s90, %s91
    %p105 = scmp.eq.s32.totalorder %s15, 7
    %p106 = por %p104, %p105
    %p108 = scmp.ne.s32.totalorder %s91, %s107
    %p109 = scmp.eq.s32.totalorder %s15, 0
    %p110 = por %p108, %p109
    %p111 = scmp.le.s32.totalorder 1, %s9
    %p112 = scmp.lt.s32.totalorder %s9, 9
    %p113 = pnand %p111, %p112
    %p114 = pneg %p113
    // Predicated region
    $region9: #{generator_forward.12} parent=5 // pred_check
      _
    $region10: #{generator_forward.12} parent=5 // pred_check_branch
      %116 = sbr.rel (%p113) target = $region12
    $region11: #{generator_forward.12} parent=5 // pred_region
      %s117 = ssub.s32 %s9, 1
      // Predicated region
      $region13: #{generator_forward.12} parent=11 // pred_check
        %p118 = pneg %p56
      $region14: #{generator_forward.12} parent=11 // pred_check_branch
        %120 = sbr.rel (%p118) target = $region16
      $region15: #{generator_forward.12} parent=11 // pred_region
        _
      $region16: #{generator_forward.12} parent=11 // pred_fallthru
        _
      // Predicated region
      $region17: #{generator_forward.12} parent=11 // pred_check
        %p121 = pneg %p77
      $region18: #{generator_forward.12} parent=11 // pred_check_branch
        %123 = sbr.rel (%p121) target = $region20
      $region19: #{generator_forward.12} parent=11 // pred_region
        _
      $region20: #{generator_forward.12} parent=11 // pred_fallthru
        _
    $region12: #{generator_forward.12} parent=5 // pred_fallthru
      _
    %p124 = scmp.lt.s32.totalorder %s9, 8
    // Predicated region
    $region21: #{generator_forward.12} parent=5 // pred_check
      %p125 = pneg %p124
    $region22: #{generator_forward.12} parent=5 // pred_check_branch
      %127 = sbr.rel (%p125) target = $region24
    $region23: #{generator_forward.12} parent=5 // pred_region
      // Predicated region
      $region25: #{generator_forward.12} parent=23 // pred_check
        %p128 = pneg %p29
      $region26: #{generator_forward.12} parent=23 // pred_check_branch
        %130 = sbr.rel (%p128) target = $region28
      $region27: #{generator_forward.12} parent=23 // pred_region
        %s131 = smul.u32 32, %s9
        %p132 = scmp.lt.s32.totalorder %s131, 255
        %s133 = scalar_select %p132, %s131, 255
        %s134 = smul.addr %s133, 8
        %s135 = scalar_lea.vmem %s0, %s134
        %s136 = smul.u32 32, %s9
      $region28: #{generator_forward.12} parent=23 // pred_fallthru
        _
    $region24: #{generator_forward.12} parent=5 // pred_fallthru
      _
    %p137 = scmp.le.s32.totalorder 1, %s9
    %p138 = scmp.lt.s32.totalorder %s9, 9
    %p139 = pnand %p137, %p138
    %p140 = pneg %p139
    // Predicated region
    $region29: #{generator_forward.12} parent=5 // pred_check
      _
    $region30: #{generator_forward.12} parent=5 // pred_check_branch
      %142 = sbr.rel (%p139) target = $region32
    $region31: #{generator_forward.12} parent=5 // pred_region
      %s143 = ssub.s32 %s9, 1
      %s144 = smul.u32 32, %s14
      %p145 = scmp.lt.s32.totalorder %s144, 255
      %s146 = scalar_select %p145, %s144, 255
      %s147 = smul.addr %s146, 8
      %s148 = scalar_lea.vmem %s0, %s147
      %p149 = pneg %p35
      %p150 = pneg %p32
      %p151 = pneg %p56
      %p152 = pneg %p53
      %p153 = pneg %p77
      %p154 = pneg %p74
      %p155 = pneg %p103
      %p156 = pneg %p100
      %s157 = smul.u32 32, %s14
      %p158 = scmp.lt.s32.totalorder %s157, 255
      %s159 = scalar_select %p158, %s157, 255
      %s160 = smul.addr %s159, 4
      %s161 = smul.addr %s160, 4
      %s162 = scalar_lea.vmem %s3, %s161
      %s163 = smul.u32 32, %s14
      %p164 = scmp.lt.s32.totalorder %s163, 255
      %s165 = scalar_select %p164, %s163, 255
      %s166 = smul.addr %s165, 8
      %s167 = scalar_lea.vmem %s0, %s166
      %s168 = smul.u32 32, %s14
      %s169 = smul.u32 32, %s14
      %p170 = scmp.lt.s32.totalorder %s169, 255
      %s171 = scalar_select %p170, %s169, 255
      %s172 = smul.addr %s171, 4
      %s173 = smul.addr %s172, 4
      %s174 = scalar_lea.vmem %s3, %s173
      %s175 = smul.u32 32, %s14
      %v177 = vld [vmem:[%s167] sm:$0xff]
      %v178 = vld [vmem:[%s167 + $0x8] sm:$0xff]
      %v179 = vld [vmem:[%s167 + $0x10] sm:$0xff]
      %v180 = vld [vmem:[%s167 + $0x18] sm:$0xff]
      %v181 = vld [vmem:[%s167 + $0x20] sm:$0xff]
      %v182 = vld [vmem:[%s167 + $0x28] sm:$0xff]
      %v183 = vld [vmem:[%s167 + $0x30] sm:$0xff]
      %v184 = vld [vmem:[%s167 + $0x38] sm:$0xff]
      %v185 = vld [vmem:[%s167 + $0x40] sm:$0xff]
      %v186 = vld [vmem:[%s167 + $0x48] sm:$0xff]
      %v187 = vld [vmem:[%s167 + $0x50] sm:$0xff]
      %v188 = vld [vmem:[%s167 + $0x58] sm:$0xff]
      %v189 = vld [vmem:[%s167 + $0x60] sm:$0xff]
      %v190 = vld [vmem:[%s167 + $0x68] sm:$0xff]
      %v191 = vld [vmem:[%s167 + $0x70] sm:$0xff]
      %v192 = vld [vmem:[%s167 + $0x78] sm:$0xff]
      %v193 = vld [vmem:[%s167 + $0x80] sm:$0xff]
      %v194 = vld [vmem:[%s167 + $0x88] sm:$0xff]
      %v195 = vld [vmem:[%s167 + $0x90] sm:$0xff]
      %v196 = vld [vmem:[%s167 + $0x98] sm:$0xff]
      %v197 = vld [vmem:[%s167 + $0xa0] sm:$0xff]
      %v198 = vld [vmem:[%s167 + $0xa8] sm:$0xff]
      %v199 = vld [vmem:[%s167 + $0xb0] sm:$0xff]
      %v200 = vld [vmem:[%s167 + $0xb8] sm:$0xff]
      %v201 = vld [vmem:[%s167 + $0xc0] sm:$0xff]
      %v202 = vld [vmem:[%s167 + $0xc8] sm:$0xff]
      %v203 = vld [vmem:[%s167 + $0xd0] sm:$0xff]
      %v204 = vld [vmem:[%s167 + $0xd8] sm:$0xff]
      %v205 = vld [vmem:[%s167 + $0xe0] sm:$0xff]
      %v206 = vld [vmem:[%s167 + $0xe8] sm:$0xff]
      %v207 = vld [vmem:[%s167 + $0xf0] sm:$0xff]
      %v208 = vld [vmem:[%s167 + $0xf8] sm:$0xff]
      %v209 = vld [vmem:[%s1] sm:$0x1]
      %v211 = vlaneseq
      %v212 = vshrl.u32 %v211, 7
      %v213 = vsub.s32 0, %v212
      %v214 = vrot.slane %v209, %v213
      %v216 = vadd.f32 %v177, %v214
      %v217 = vadd.f32 %v178, %v214
      %v218 = vadd.f32 %v179, %v214
      %v219 = vadd.f32 %v180, %v214
      %v220 = vadd.f32 %v181, %v214
      %v221 = vadd.f32 %v182, %v214
      %v222 = vadd.f32 %v183, %v214
      %v223 = vadd.f32 %v184, %v214
      %v224 = vadd.f32 %v185, %v214
      %v225 = vadd.f32 %v186, %v214
      %v226 = vadd.f32 %v187, %v214
      %v227 = vadd.f32 %v188, %v214
      %v228 = vadd.f32 %v189, %v214
      %v229 = vadd.f32 %v190, %v214
      %v230 = vadd.f32 %v191, %v214
      %v231 = vadd.f32 %v192, %v214
      %v232 = vadd.f32 %v193, %v214
      %v233 = vadd.f32 %v194, %v214
      %v234 = vadd.f32 %v195, %v214
      %v235 = vadd.f32 %v196, %v214
      %v236 = vadd.f32 %v197, %v214
      %v237 = vadd.f32 %v198, %v214
      %v238 = vadd.f32 %v199, %v214
      %v239 = vadd.f32 %v200, %v214
      %v240 = vadd.f32 %v201, %v214
      %v241 = vadd.f32 %v202, %v214
      %v242 = vadd.f32 %v203, %v214
      %v243 = vadd.f32 %v204, %v214
      %v244 = vadd.f32 %v205, %v214
      %v245 = vadd.f32 %v206, %v214
      %v246 = vadd.f32 %v207, %v214
      %v247 = vadd.f32 %v208, %v214
      %v248 = vmax.f32 %v216, 0.0
      %v249 = vmax.f32 %v217, 0.0
      %v250 = vmax.f32 %v218, 0.0
      %v251 = vmax.f32 %v219, 0.0
      %v252 = vmax.f32 %v220, 0.0
      %v253 = vmax.f32 %v221, 0.0
      %v254 = vmax.f32 %v222, 0.0
      %v255 = vmax.f32 %v223, 0.0
      %v256 = vmax.f32 %v224, 0.0
      %v257 = vmax.f32 %v225, 0.0
      %v258 = vmax.f32 %v226, 0.0
      %v259 = vmax.f32 %v227, 0.0
      %v260 = vmax.f32 %v228, 0.0
      %v261 = vmax.f32 %v229, 0.0
      %v262 = vmax.f32 %v230, 0.0
      %v263 = vmax.f32 %v231, 0.0
      %v264 = vmax.f32 %v232, 0.0
      %v265 = vmax.f32 %v233, 0.0
      %v266 = vmax.f32 %v234, 0.0
      %v267 = vmax.f32 %v235, 0.0
      %v268 = vmax.f32 %v236, 0.0
      %v269 = vmax.f32 %v237, 0.0
      %v270 = vmax.f32 %v238, 0.0
      %v271 = vmax.f32 %v239, 0.0
      %v272 = vmax.f32 %v240, 0.0
      %v273 = vmax.f32 %v241, 0.0
      %v274 = vmax.f32 %v242, 0.0
      %v275 = vmax.f32 %v243, 0.0
      %v276 = vmax.f32 %v244, 0.0
      %v277 = vmax.f32 %v245, 0.0
      %v278 = vmax.f32 %v246, 0.0
      %v279 = vmax.f32 %v247, 0.0
      %v280 = vpack.c.bf16 %v249, %v248
      %v281 = vpack.c.bf16 %v251, %v250
      %v282 = vpack.c.bf16 %v253, %v252
      %v283 = vpack.c.bf16 %v255, %v254
      %v284 = vpack.c.bf16 %v257, %v256
      %v285 = vpack.c.bf16 %v259, %v258
      %v286 = vpack.c.bf16 %v261, %v260
      %v287 = vpack.c.bf16 %v263, %v262
      %v288 = vpack.c.bf16 %v265, %v264
      %v289 = vpack.c.bf16 %v267, %v266
      %v290 = vpack.c.bf16 %v269, %v268
      %v291 = vpack.c.bf16 %v271, %v270
      %v292 = vpack.c.bf16 %v273, %v272
      %v293 = vpack.c.bf16 %v275, %v274
      %v294 = vpack.c.bf16 %v277, %v276
      %v295 = vpack.c.bf16 %v279, %v278
      %v296 = vld [vmem:[%s2] sm:$0xff]
      %v297 = vld [vmem:[%s2 + $0x8] sm:$0xff]
      %v298 = vld [vmem:[%s2 + $0x10] sm:$0xff]
      %v299 = vld [vmem:[%s2 + $0x18] sm:$0xff]
      %v300 = vld [vmem:[%s2 + $0x20] sm:$0xff]
      %v301 = vld [vmem:[%s2 + $0x28] sm:$0xff]
      %v302 = vld [vmem:[%s2 + $0x30] sm:$0xff]
      %v303 = vld [vmem:[%s2 + $0x38] sm:$0xff]
      %v304 = vld [vmem:[%s2 + $0x40] sm:$0xff]
      %v305 = vld [vmem:[%s2 + $0x48] sm:$0xff]
      %v306 = vld [vmem:[%s2 + $0x50] sm:$0xff]
      %v307 = vld [vmem:[%s2 + $0x58] sm:$0xff]
      %v308 = vld [vmem:[%s2 + $0x60] sm:$0xff]
      %v309 = vld [vmem:[%s2 + $0x68] sm:$0xff]
      %v310 = vld [vmem:[%s2 + $0x70] sm:$0xff]
      %v311 = vld [vmem:[%s2 + $0x78] sm:$0xff]
      %v328 = vunpack.c.l.b16 %v296
      %v329 = vunpack.c.h.b16 %v296
      %v330 = vunpack.c.l.b16 %v297
      %v331 = vunpack.c.h.b16 %v297
      %v332 = vunpack.c.l.b16 %v298
      %v333 = vunpack.c.h.b16 %v298
      %v334 = vunpack.c.l.b16 %v299
      %v335 = vunpack.c.h.b16 %v299
      %v336 = vunpack.c.l.b16 %v300
      %v337 = vunpack.c.h.b16 %v300
      %v338 = vunpack.c.l.b16 %v301
      %v339 = vunpack.c.h.b16 %v301
      %v340 = vunpack.c.l.b16 %v302
      %v341 = vunpack.c.h.b16 %v302
      %v342 = vunpack.c.l.b16 %v303
      %v343 = vunpack.c.h.b16 %v303
      %v344 = vunpack.c.l.b16 %v304
      %v345 = vunpack.c.h.b16 %v304
      %v346 = vunpack.c.l.b16 %v305
      %v347 = vunpack.c.h.b16 %v305
      %v348 = vunpack.c.l.b16 %v306
      %v349 = vunpack.c.h.b16 %v306
      %v350 = vunpack.c.l.b16 %v307
      %v351 = vunpack.c.h.b16 %v307
      %v352 = vunpack.c.l.b16 %v308
      %v353 = vunpack.c.h.b16 %v308
      %v354 = vunpack.c.l.b16 %v309
      %v355 = vunpack.c.h.b16 %v309
      %v356 = vunpack.c.l.b16 %v310
      %v357 = vunpack.c.h.b16 %v310
      %v358 = vunpack.c.l.b16 %v311
      %v359 = vunpack.c.h.b16 %v311
      %v360 = vpack.c.b16 %v332, %v328
      %v361 = vpack.c.b16 %v333, %v329
      %v362 = vpack.c.b16 %v334, %v330
      %v363 = vpack.c.b16 %v335, %v331
      %v364 = vpack.c.b16 %v340, %v336
      %v365 = vpack.c.b16 %v341, %v337
      %v366 = vpack.c.b16 %v342, %v338
      %v367 = vpack.c.b16 %v343, %v339
      %v368 = vpack.c.b16 %v348, %v344
      %v369 = vpack.c.b16 %v349, %v345
      %v370 = vpack.c.b16 %v350, %v346
      %v371 = vpack.c.b16 %v351, %v347
      %v372 = vpack.c.b16 %v356, %v352
      %v373 = vpack.c.b16 %v357, %v353
      %v374 = vpack.c.b16 %v358, %v354
      %v375 = vpack.c.b16 %v359, %v355
      %vm392 = vcmask 523264
      %v394 = vsel %vm392, %v280, 0
      %v397 = vsel %vm392, %v281, 0
      %v400 = vsel %vm392, %v282, 0
      %v403 = vsel %vm392, %v283, 0
      %v406 = vsel %vm392, %v284, 0
      %v409 = vsel %vm392, %v285, 0
      %v412 = vsel %vm392, %v286, 0
      %v415 = vsel %vm392, %v287, 0
      %v418 = vsel %vm392, %v288, 0
      %v421 = vsel %vm392, %v289, 0
      %v424 = vsel %vm392, %v290, 0
      %v427 = vsel %vm392, %v291, 0
      %v430 = vsel %vm392, %v292, 0
      %v433 = vsel %vm392, %v293, 0
      %v436 = vsel %vm392, %v294, 0
      %v439 = vsel %vm392, %v295, 0
      %441 = vmatprep.subr.bf16.mxu0 %v361
      %442 = vmatpush1.bf16.msra.mxu0 %v360
      %443 = vmatprep.subr.bf16.mxu0 %v365
      %444 = vmatpush1.bf16.msra.mxu0 %v364
      %445 = vmatprep.subr.bf16.mxu0 %v369
      %446 = vmatpush1.bf16.msra.mxu0 %v368
      %447 = vmatprep.subr.bf16.mxu0 %v373
      %448 = vmatpush1.bf16.msra.mxu0 %v372
      %449 = vmatprep.subr.bf16.mxu0 0
      %450 = vmatpush1.bf16.msra.mxu0 0
      %451 = vmatprep.subr.bf16.mxu0 0
      %452 = vmatpush1.bf16.msra.mxu0 0
      %453 = vmatprep.subr.bf16.mxu0 0
      %454 = vmatpush1.bf16.msra.mxu0 0
      %455 = vmatprep.subr.bf16.mxu0 0
      %456 = vmatpush1.bf16.msra.mxu0 0
      %457 = vmatprep.subr.bf16.mxu0 0
      %458 = vmatpush1.bf16.msra.mxu0 0
      %459 = vmatprep.subr.bf16.mxu0 0
      %460 = vmatpush1.bf16.msra.mxu0 0
      %461 = vmatprep.subr.bf16.mxu0 0
      %462 = vmatpush1.bf16.msra.mxu0 0
      %463 = vmatprep.subr.bf16.mxu0 0
      %464 = vmatpush1.bf16.msra.mxu0 0
      %465 = vmatprep.subr.bf16.mxu0 0
      %466 = vmatpush1.bf16.msra.mxu0 0
      %467 = vmatprep.subr.bf16.mxu0 0
      %468 = vmatpush1.bf16.msra.mxu0 0
      %469 = vmatprep.subr.bf16.mxu0 0
      %470 = vmatpush1.bf16.msra.mxu0 0
      %471 = vmatprep.subr.bf16.mxu0 0
      %472 = vmatpush1.bf16.msra.mxu0 0
      %473 = vmatprep.mubr.bf16.mxu0 0
      %474 = vmatmul.mubr.bf16.gmra.mrb[0].mxu0 %v394
      %v475 = vpop.f32.mrb[0].mxu0
      %v476 = vadd.f32 0.0, %v475
      %v477 = vpop.f32.mrb[0].mxu0
      %v478 = vadd.f32 0.0, %v477
      %v479 = vpop.f32.mrb[0].mxu0
      %v480 = vadd.f32 0.0, %v479
      %v481 = vpop.f32.mrb[0].mxu0
      %v482 = vadd.f32 0.0, %v481
      %483 = vmatprep.mubr.bf16.mxu0 0
      %484 = vmatmul.mubr.bf16.gmra.mrb[0].mxu0 %v397
      %v485 = vpop.f32.mrb[0].mxu0
      %v486 = vadd.f32 0.0, %v485
      %v487 = vpop.f32.mrb[0].mxu0
      %v488 = vadd.f32 0.0, %v487
      %v489 = vpop.f32.mrb[0].mxu0
      %v490 = vadd.f32 0.0, %v489
      %v491 = vpop.f32.mrb[0].mxu0
      %v492 = vadd.f32 0.0, %v491
      %493 = vmatprep.mubr.bf16.mxu0 0
      %494 = vmatmul.mubr.bf16.gmra.mrb[0].mxu0 %v400
      %v495 = vpop.f32.mrb[0].mxu0
      %v496 = vadd.f32 0.0, %v495
      %v497 = vpop.f32.mrb[0].mxu0
      %v498 = vadd.f32 0.0, %v497
      %v499 = vpop.f32.mrb[0].mxu0
      %v500 = vadd.f32 0.0, %v499
      %v501 = vpop.f32.mrb[0].mxu0
      %v502 = vadd.f32 0.0, %v501
      %503 = vmatprep.mubr.bf16.mxu0 0
      %504 = vmatmul.mubr.bf16.gmra.mrb[0].mxu0 %v403
      %v505 = vpop.f32.mrb[0].mxu0
      %v506 = vadd.f32 0.0, %v505
      %v507 = vpop.f32.mrb[0].mxu0
      %v508 = vadd.f32 0.0, %v507
      %v509 = vpop.f32.mrb[0].mxu0
      %v510 = vadd.f32 0.0, %v509
      %v511 = vpop.f32.mrb[0].mxu0
      %v512 = vadd.f32 0.0, %v511
      %513 = vmatprep.mubr.bf16.mxu0 0
      %514 = vmatmul.mubr.bf16.gmra.mrb[0].mxu0 %v406
      %v515 = vpop.f32.mrb[0].mxu0
      %v516 = vadd.f32 0.0, %v515
      %v517 = vpop.f32.mrb[0].mxu0
      %v518 = vadd.f32 0.0, %v517
      %v519 = vpop.f32.mrb[0].mxu0
      %v520 = vadd.f32 0.0, %v519
      %v521 = vpop.f32.mrb[0].mxu0
      %v522 = vadd.f32 0.0, %v521
      %523 = vmatprep.mubr.bf16.mxu0 0
      %524 = vmatmul.mubr.bf16.gmra.mrb[0].mxu0 %v409
      %v525 = vpop.f32.mrb[0].mxu0
      %v526 = vadd.f32 0.0, %v525
      %v527 = vpop.f32.mrb[0].mxu0
      %v528 = vadd.f32 0.0, %v527
      %v529 = vpop.f32.mrb[0].mxu0
      %v530 = vadd.f32 0.0, %v529
      %v531 = vpop.f32.mrb[0].mxu0
      %v532 = vadd.f32 0.0, %v531
      %533 = vmatprep.mubr.bf16.mxu0 0
      %534 = vmatmul.mubr.bf16.gmra.mrb[0].mxu0 %v412
      %v535 = vpop.f32.mrb[0].mxu0
      %v536 = vadd.f32 0.0, %v535
      %v537 = vpop.f32.mrb[0].mxu0
      %v538 = vadd.f32 0.0, %v537
      %v539 = vpop.f32.mrb[0].mxu0
      %v540 = vadd.f32 0.0, %v539
      %v541 = vpop.f32.mrb[0].mxu0
      %v542 = vadd.f32 0.0, %v541
      %543 = vmatprep.mubr.bf16.mxu0 0
      %544 = vmatmul.mubr.bf16.gmra.mrb[0].mxu0 %v415
      %v545 = vpop.f32.mrb[0].mxu0
      %v546 = vadd.f32 0.0, %v545
      %v547 = vpop.f32.mrb[0].mxu0
      %v548 = vadd.f32 0.0, %v547
      %v549 = vpop.f32.mrb[0].mxu0
      %v550 = vadd.f32 0.0, %v549
      %v551 = vpop.f32.mrb[0].mxu0
      %v552 = vadd.f32 0.0, %v551
      %553 = vmatprep.mubr.bf16.mxu0 0
      %554 = vmatmul.mubr.bf16.gmra.mrb[0].mxu0 %v418
      %v555 = vpop.f32.mrb[0].mxu0
      %v556 = vadd.f32 0.0, %v555
      %v557 = vpop.f32.mrb[0].mxu0
      %v558 = vadd.f32 0.0, %v557
      %v559 = vpop.f32.mrb[0].mxu0
      %v560 = vadd.f32 0.0, %v559
      %v561 = vpop.f32.mrb[0].mxu0
      %v562 = vadd.f32 0.0, %v561
      %563 = vmatprep.mubr.bf16.mxu0 0
      %564 = vmatmul.mubr.bf16.gmra.mrb[0].mxu0 %v421
      %v565 = vpop.f32.mrb[0].mxu0
      %v566 = vadd.f32 0.0, %v565
      %v567 = vpop.f32.mrb[0].mxu0
      %v568 = vadd.f32 0.0, %v567
      %v569 = vpop.f32.mrb[0].mxu0
      %v570 = vadd.f32 0.0, %v569
      %v571 = vpop.f32.mrb[0].mxu0
      %v572 = vadd.f32 0.0, %v571
      %573 = vmatprep.mubr.bf16.mxu0 0
      %574 = vmatmul.mubr.bf16.gmra.mrb[0].mxu0 %v424
      %v575 = vpop.f32.mrb[0].mxu0
      %v576 = vadd.f32 0.0, %v575
      %v577 = vpop.f32.mrb[0].mxu0
      %v578 = vadd.f32 0.0, %v577
      %v579 = vpop.f32.mrb[0].mxu0
      %v580 = vadd.f32 0.0, %v579
      %v581 = vpop.f32.mrb[0].mxu0
      %v582 = vadd.f32 0.0, %v581
      %583 = vmatprep.mubr.bf16.mxu0 0
      %584 = vmatmul.mubr.bf16.gmra.mrb[0].mxu0 %v427
      %v585 = vpop.f32.mrb[0].mxu0
      %v586 = vadd.f32 0.0, %v585
      %v587 = vpop.f32.mrb[0].mxu0
      %v588 = vadd.f32 0.0, %v587
      %v589 = vpop.f32.mrb[0].mxu0
      %v590 = vadd.f32 0.0, %v589
      %v591 = vpop.f32.mrb[0].mxu0
      %v592 = vadd.f32 0.0, %v591
      %593 = vmatprep.mubr.bf16.mxu0 0
      %594 = vmatmul.mubr.bf16.gmra.mrb[0].mxu0 %v430
      %v595 = vpop.f32.mrb[0].mxu0
      %v596 = vadd.f32 0.0, %v595
      %v597 = vpop.f32.mrb[0].mxu0
      %v598 = vadd.f32 0.0, %v597
      %v599 = vpop.f32.mrb[0].mxu0
      %v600 = vadd.f32 0.0, %v599
      %v601 = vpop.f32.mrb[0].mxu0
      %v602 = vadd.f32 0.0, %v601
      %603 = vmatprep.mubr.bf16.mxu0 0
      %604 = vmatmul.mubr.bf16.gmra.mrb[0].mxu0 %v433
      %v605 = vpop.f32.mrb[0].mxu0
      %v606 = vadd.f32 0.0, %v605
      %v607 = vpop.f32.mrb[0].mxu0
      %v608 = vadd.f32 0.0, %v607
      %v609 = vpop.f32.mrb[0].mxu0
      %v610 = vadd.f32 0.0, %v609
      %v611 = vpop.f32.mrb[0].mxu0
      %v612 = vadd.f32 0.0, %v611
      %613 = vmatprep.mubr.bf16.mxu0 0
      %614 = vmatmul.mubr.bf16.gmra.mrb[0].mxu0 %v436
      %v615 = vpop.f32.mrb[0].mxu0
      %v616 = vadd.f32 0.0, %v615
      %v617 = vpop.f32.mrb[0].mxu0
      %v618 = vadd.f32 0.0, %v617
      %v619 = vpop.f32.mrb[0].mxu0
      %v620 = vadd.f32 0.0, %v619
      %v621 = vpop.f32.mrb[0].mxu0
      %v622 = vadd.f32 0.0, %v621
      %623 = vmatprep.mubr.bf16.mxu0 0
      %624 = vmatmul.mubr.bf16.gmra.mrb[0].mxu0 %v439
      %v625 = vpop.f32.mrb[0].mxu0
      %v626 = vadd.f32 0.0, %v625
      %v627 = vpop.f32.mrb[0].mxu0
      %v628 = vadd.f32 0.0, %v627
      %v629 = vpop.f32.mrb[0].mxu0
      %v630 = vadd.f32 0.0, %v629
      %v631 = vpop.f32.mrb[0].mxu0
      %v632 = vadd.f32 0.0, %v631
      %633 = vdwg.mxu0
      %634 = vmatprep.subr.bf16.mxu0 %v363
      %635 = vmatpush1.bf16.msra.mxu0 %v362
      %636 = vmatprep.subr.bf16.mxu0 %v367
      %637 = vmatpush1.bf16.msra.mxu0 %v366
      %638 = vmatprep.subr.bf16.mxu0 %v371
      %639 = vmatpush1.bf16.msra.mxu0 %v370
      %640 = vmatprep.subr.bf16.mxu0 %v375
      %641 = vmatpush1.bf16.msra.mxu0 %v374
      %642 = vmatprep.subr.bf16.mxu0 0
      %643 = vmatpush1.bf16.msra.mxu0 0
      %644 = vmatprep.subr.bf16.mxu0 0
      %645 = vmatpush1.bf16.msra.mxu0 0
      %646 = vmatprep.subr.bf16.mxu0 0
      %647 = vmatpush1.bf16.msra.mxu0 0
      %648 = vmatprep.subr.bf16.mxu0 0
      %649 = vmatpush1.bf16.msra.mxu0 0
      %650 = vmatprep.subr.bf16.mxu0 0
      %651 = vmatpush1.bf16.msra.mxu0 0
      %652 = vmatprep.subr.bf16.mxu0 0
      %653 = vmatpush1.bf16.msra.mxu0 0
      %654 = vmatprep.subr.bf16.mxu0 0
      %655 = vmatpush1.bf16.msra.mxu0 0
      %656 = vmatprep.subr.bf16.mxu0 0
      %657 = vmatpush1.bf16.msra.mxu0 0
      %658 = vmatprep.subr.bf16.mxu0 0
      %659 = vmatpush1.bf16.msra.mxu0 0
      %660 = vmatprep.subr.bf16.mxu0 0
      %661 = vmatpush1.bf16.msra.mxu0 0
      %662 = vmatprep.subr.bf16.mxu0 0
      %663 = vmatpush1.bf16.msra.mxu0 0
      %664 = vmatprep.subr.bf16.mxu0 0
      %665 = vmatpush1.bf16.msra.mxu0 0
      %666 = vmatprep.mubr.bf16.mxu0 0
      %667 = vmatmul.mubr.bf16.gmra.mrb[0].mxu0 %v394
      %v668 = vpop.f32.mrb[0].mxu0
      %v669 = vadd.f32 0.0, %v668
      %v670 = vpop.f32.mrb[0].mxu0
      %v671 = vadd.f32 0.0, %v670
      %v672 = vpop.f32.mrb[0].mxu0
      %v673 = vadd.f32 0.0, %v672
      %v674 = vpop.f32.mrb[0].mxu0
      %v675 = vadd.f32 0.0, %v674
      %676 = vmatprep.mubr.bf16.mxu0 0
      %677 = vmatmul.mubr.bf16.gmra.mrb[0].mxu0 %v397
      %v678 = vpop.f32.mrb[0].mxu0
      %v679 = vadd.f32 0.0, %v678
      %v680 = vpop.f32.mrb[0].mxu0
      %v681 = vadd.f32 0.0, %v680
      %v682 = vpop.f32.mrb[0].mxu0
      %v683 = vadd.f32 0.0, %v682
      %v684 = vpop.f32.mrb[0].mxu0
      %v685 = vadd.f32 0.0, %v684
      %686 = vmatprep.mubr.bf16.mxu0 0
      %687 = vmatmul.mubr.bf16.gmra.mrb[0].mxu0 %v400
      %v688 = vpop.f32.mrb[0].mxu0
      %v689 = vadd.f32 0.0, %v688
      %v690 = vpop.f32.mrb[0].mxu0
      %v691 = vadd.f32 0.0, %v690
      %v692 = vpop.f32.mrb[0].mxu0
      %v693 = vadd.f32 0.0, %v692
      %v694 = vpop.f32.mrb[0].mxu0
      %v695 = vadd.f32 0.0, %v694
      %696 = vmatprep.mubr.bf16.mxu0 0
      %697 = vmatmul.mubr.bf16.gmra.mrb[0].mxu0 %v403
      %v698 = vpop.f32.mrb[0].mxu0
      %v699 = vadd.f32 0.0, %v698
      %v700 = vpop.f32.mrb[0].mxu0
      %v701 = vadd.f32 0.0, %v700
      %v702 = vpop.f32.mrb[0].mxu0
      %v703 = vadd.f32 0.0, %v702
      %v704 = vpop.f32.mrb[0].mxu0
      %v705 = vadd.f32 0.0, %v704
      %706 = vmatprep.mubr.bf16.mxu0 0
      %707 = vmatmul.mubr.bf16.gmra.mrb[0].mxu0 %v406
      %v708 = vpop.f32.mrb[0].mxu0
      %v709 = vadd.f32 0.0, %v708
      %v710 = vpop.f32.mrb[0].mxu0
      %v711 = vadd.f32 0.0, %v710
      %v712 = vpop.f32.mrb[0].mxu0
      %v713 = vadd.f32 0.0, %v712
      %v714 = vpop.f32.mrb[0].mxu0
      %v715 = vadd.f32 0.0, %v714
      %716 = vmatprep.mubr.bf16.mxu0 0
      %717 = vmatmul.mubr.bf16.gmra.mrb[0].mxu0 %v409
      %v718 = vpop.f32.mrb[0].mxu0
      %v719 = vadd.f32 0.0, %v718
      %v720 = vpop.f32.mrb[0].mxu0
      %v721 = vadd.f32 0.0, %v720
      %v722 = vpop.f32.mrb[0].mxu0
      %v723 = vadd.f32 0.0, %v722
      %v724 = vpop.f32.mrb[0].mxu0
      %v725 = vadd.f32 0.0, %v724
      %726 = vmatprep.mubr.bf16.mxu0 0
      %727 = vmatmul.mubr.bf16.gmra.mrb[0].mxu0 %v412
      %v728 = vpop.f32.mrb[0].mxu0
      %v729 = vadd.f32 0.0, %v728
      %v730 = vpop.f32.mrb[0].mxu0
      %v731 = vadd.f32 0.0, %v730
      %v732 = vpop.f32.mrb[0].mxu0
      %v733 = vadd.f32 0.0, %v732
      %v734 = vpop.f32.mrb[0].mxu0
      %v735 = vadd.f32 0.0, %v734
      %736 = vmatprep.mubr.bf16.mxu0 0
      %737 = vmatmul.mubr.bf16.gmra.mrb[0].mxu0 %v415
      %v738 = vpop.f32.mrb[0].mxu0
      %v739 = vadd.f32 0.0, %v738
      %v740 = vpop.f32.mrb[0].mxu0
      %v741 = vadd.f32 0.0, %v740
      %v742 = vpop.f32.mrb[0].mxu0
      %v743 = vadd.f32 0.0, %v742
      %v744 = vpop.f32.mrb[0].mxu0
      %v745 = vadd.f32 0.0, %v744
      %746 = vmatprep.mubr.bf16.mxu0 0
      %747 = vmatmul.mubr.bf16.gmra.mrb[0].mxu0 %v418
      %v748 = vpop.f32.mrb[0].mxu0
      %v749 = vadd.f32 0.0, %v748
      %v750 = vpop.f32.mrb[0].mxu0
      %v751 = vadd.f32 0.0, %v750
      %v752 = vpop.f32.mrb[0].mxu0
      %v753 = vadd.f32 0.0, %v752
      %v754 = vpop.f32.mrb[0].mxu0
      %v755 = vadd.f32 0.0, %v754
      %756 = vmatprep.mubr.bf16.mxu0 0
      %757 = vmatmul.mubr.bf16.gmra.mrb[0].mxu0 %v421
      %v758 = vpop.f32.mrb[0].mxu0
      %v759 = vadd.f32 0.0, %v758
      %v760 = vpop.f32.mrb[0].mxu0
      %v761 = vadd.f32 0.0, %v760
      %v762 = vpop.f32.mrb[0].mxu0
      %v763 = vadd.f32 0.0, %v762
      %v764 = vpop.f32.mrb[0].mxu0
      %v765 = vadd.f32 0.0, %v764
      %766 = vmatprep.mubr.bf16.mxu0 0
      %767 = vmatmul.mubr.bf16.gmra.mrb[0].mxu0 %v424
      %v768 = vpop.f32.mrb[0].mxu0
      %v769 = vadd.f32 0.0, %v768
      %v770 = vpop.f32.mrb[0].mxu0
      %v771 = vadd.f32 0.0, %v770
      %v772 = vpop.f32.mrb[0].mxu0
      %v773 = vadd.f32 0.0, %v772
      %v774 = vpop.f32.mrb[0].mxu0
      %v775 = vadd.f32 0.0, %v774
      %776 = vmatprep.mubr.bf16.mxu0 0
      %777 = vmatmul.mubr.bf16.gmra.mrb[0].mxu0 %v427
      %v778 = vpop.f32.mrb[0].mxu0
      %v779 = vadd.f32 0.0, %v778
      %v780 = vpop.f32.mrb[0].mxu0
      %v781 = vadd.f32 0.0, %v780
      %v782 = vpop.f32.mrb[0].mxu0
      %v783 = vadd.f32 0.0, %v782
      %v784 = vpop.f32.mrb[0].mxu0
      %v785 = vadd.f32 0.0, %v784
      %786 = vmatprep.mubr.bf16.mxu0 0
      %787 = vmatmul.mubr.bf16.gmra.mrb[0].mxu0 %v430
      %v788 = vpop.f32.mrb[0].mxu0
      %v789 = vadd.f32 0.0, %v788
      %v790 = vpop.f32.mrb[0].mxu0
      %v791 = vadd.f32 0.0, %v790
      %v792 = vpop.f32.mrb[0].mxu0
      %v793 = vadd.f32 0.0, %v792
      %v794 = vpop.f32.mrb[0].mxu0
      %v795 = vadd.f32 0.0, %v794
      %796 = vmatprep.mubr.bf16.mxu0 0
      %797 = vmatmul.mubr.bf16.gmra.mrb[0].mxu0 %v433
      %v798 = vpop.f32.mrb[0].mxu0
      %v799 = vadd.f32 0.0, %v798
      %v800 = vpop.f32.mrb[0].mxu0
      %v801 = vadd.f32 0.0, %v800
      %v802 = vpop.f32.mrb[0].mxu0
      %v803 = vadd.f32 0.0, %v802
      %v804 = vpop.f32.mrb[0].mxu0
      %v805 = vadd.f32 0.0, %v804
      %806 = vmatprep.mubr.bf16.mxu0 0
      %807 = vmatmul.mubr.bf16.gmra.mrb[0].mxu0 %v436
      %v808 = vpop.f32.mrb[0].mxu0
      %v809 = vadd.f32 0.0, %v808
      %v810 = vpop.f32.mrb[0].mxu0
      %v811 = vadd.f32 0.0, %v810
      %v812 = vpop.f32.mrb[0].mxu0
      %v813 = vadd.f32 0.0, %v812
      %v814 = vpop.f32.mrb[0].mxu0
      %v815 = vadd.f32 0.0, %v814
      %816 = vmatprep.mubr.bf16.mxu0 0
      %817 = vmatmul.mubr.bf16.gmra.mrb[0].mxu0 %v439
      %v818 = vpop.f32.mrb[0].mxu0
      %v819 = vadd.f32 0.0, %v818
      %v820 = vpop.f32.mrb[0].mxu0
      %v821 = vadd.f32 0.0, %v820
      %v822 = vpop.f32.mrb[0].mxu0
      %v823 = vadd.f32 0.0, %v822
      %v824 = vpop.f32.mrb[0].mxu0
      %v825 = vadd.f32 0.0, %v824
      %826 = vdwg.mxu0
      %v827 = vpack.c.bf16 %v480, %v476
      %v828 = vpack.c.bf16 %v482, %v478
      %v829 = vpack.c.bf16 %v673, %v669
      %v830 = vpack.c.bf16 %v675, %v671
      %v831 = vpack.c.bf16 %v490, %v486
      %v832 = vpack.c.bf16 %v492, %v488
      %v833 = vpack.c.bf16 %v683, %v679
      %v834 = vpack.c.bf16 %v685, %v681
      %v835 = vpack.c.bf16 %v500, %v496
      %v836 = vpack.c.bf16 %v502, %v498
      %v837 = vpack.c.bf16 %v693, %v689
      %v838 = vpack.c.bf16 %v695, %v691
      %v839 = vpack.c.bf16 %v510, %v506
      %v840 = vpack.c.bf16 %v512, %v508
      %v841 = vpack.c.bf16 %v703, %v699
      %v842 = vpack.c.bf16 %v705, %v701
      %v843 = vpack.c.bf16 %v520, %v516
      %v844 = vpack.c.bf16 %v522, %v518
      %v845 = vpack.c.bf16 %v713, %v709
      %v846 = vpack.c.bf16 %v715, %v711
      %v847 = vpack.c.bf16 %v530, %v526
      %v848 = vpack.c.bf16 %v532, %v528
      %v849 = vpack.c.bf16 %v723, %v719
      %v850 = vpack.c.bf16 %v725, %v721
      %v851 = vpack.c.bf16 %v540, %v536
      %v852 = vpack.c.bf16 %v542, %v538
      %v853 = vpack.c.bf16 %v733, %v729
      %v854 = vpack.c.bf16 %v735, %v731
      %v855 = vpack.c.bf16 %v550, %v546
      %v856 = vpack.c.bf16 %v552, %v548
      %v857 = vpack.c.bf16 %v743, %v739
      %v858 = vpack.c.bf16 %v745, %v741
      %v859 = vpack.c.bf16 %v560, %v556
      %v860 = vpack.c.bf16 %v562, %v558
      %v861 = vpack.c.bf16 %v753, %v749
      %v862 = vpack.c.bf16 %v755, %v751
      %v863 = vpack.c.bf16 %v570, %v566
      %v864 = vpack.c.bf16 %v572, %v568
      %v865 = vpack.c.bf16 %v763, %v759
      %v866 = vpack.c.bf16 %v765, %v761
      %v867 = vpack.c.bf16 %v580, %v576
      %v868 = vpack.c.bf16 %v582, %v578
      %v869 = vpack.c.bf16 %v773, %v769
      %v870 = vpack.c.bf16 %v775, %v771
      %v871 = vpack.c.bf16 %v590, %v586
      %v872 = vpack.c.bf16 %v592, %v588
      %v873 = vpack.c.bf16 %v783, %v779
      %v874 = vpack.c.bf16 %v785, %v781
      %v875 = vpack.c.bf16 %v600, %v596
      %v876 = vpack.c.bf16 %v602, %v598
      %v877 = vpack.c.bf16 %v793, %v789
      %v878 = vpack.c.bf16 %v795, %v791
      %v879 = vpack.c.bf16 %v610, %v606
      %v880 = vpack.c.bf16 %v612, %v608
      %v881 = vpack.c.bf16 %v803, %v799
      %v882 = vpack.c.bf16 %v805, %v801
      %v883 = vpack.c.bf16 %v620, %v616
      %v884 = vpack.c.bf16 %v622, %v618
      %v885 = vpack.c.bf16 %v813, %v809
      %v886 = vpack.c.bf16 %v815, %v811
      %v887 = vpack.c.bf16 %v630, %v626
      %v888 = vpack.c.bf16 %v632, %v628
      %v889 = vpack.c.bf16 %v823, %v819
      %v890 = vpack.c.bf16 %v825, %v821
      %v955 = vunpack.c.l.b16 %v827
      %v956 = vunpack.c.l.b16 %v828
      %v957 = vunpack.c.l.b16 %v829
      %v958 = vunpack.c.l.b16 %v830
      %v959 = vunpack.c.h.b16 %v827
      %v960 = vunpack.c.h.b16 %v828
      %v961 = vunpack.c.h.b16 %v829
      %v962 = vunpack.c.h.b16 %v830
      %v963 = vunpack.c.l.b16 %v831
      %v964 = vunpack.c.l.b16 %v832
      %v965 = vunpack.c.l.b16 %v833
      %v966 = vunpack.c.l.b16 %v834
      %v967 = vunpack.c.h.b16 %v831
      %v968 = vunpack.c.h.b16 %v832
      %v969 = vunpack.c.h.b16 %v833
      %v970 = vunpack.c.h.b16 %v834
      %v971 = vunpack.c.l.b16 %v835
      %v972 = vunpack.c.l.b16 %v836
      %v973 = vunpack.c.l.b16 %v837
      %v974 = vunpack.c.l.b16 %v838
      %v975 = vunpack.c.h.b16 %v835
      %v976 = vunpack.c.h.b16 %v836
      %v977 = vunpack.c.h.b16 %v837
      %v978 = vunpack.c.h.b16 %v838
      %v979 = vunpack.c.l.b16 %v839
      %v980 = vunpack.c.l.b16 %v840
      %v981 = vunpack.c.l.b16 %v841
      %v982 = vunpack.c.l.b16 %v842
      %v983 = vunpack.c.h.b16 %v839
      %v984 = vunpack.c.h.b16 %v840
      %v985 = vunpack.c.h.b16 %v841
      %v986 = vunpack.c.h.b16 %v842
      %v987 = vunpack.c.l.b16 %v843
      %v988 = vunpack.c.l.b16 %v844
      %v989 = vunpack.c.l.b16 %v845
      %v990 = vunpack.c.l.b16 %v846
      %v991 = vunpack.c.h.b16 %v843
      %v992 = vunpack.c.h.b16 %v844
      %v993 = vunpack.c.h.b16 %v845
      %v994 = vunpack.c.h.b16 %v846
      %v995 = vunpack.c.l.b16 %v847
      %v996 = vunpack.c.l.b16 %v848
      %v997 = vunpack.c.l.b16 %v849
      %v998 = vunpack.c.l.b16 %v850
      %v999 = vunpack.c.h.b16 %v847
      %v1000 = vunpack.c.h.b16 %v848
      %v1001 = vunpack.c.h.b16 %v849
      %v1002 = vunpack.c.h.b16 %v850
      %v1003 = vunpack.c.l.b16 %v851
      %v1004 = vunpack.c.l.b16 %v852
      %v1005 = vunpack.c.l.b16 %v853
      %v1006 = vunpack.c.l.b16 %v854
      %v1007 = vunpack.c.h.b16 %v851
      %v1008 = vunpack.c.h.b16 %v852
      %v1009 = vunpack.c.h.b16 %v853
      %v1010 = vunpack.c.h.b16 %v854
      %v1011 = vunpack.c.l.b16 %v855
      %v1012 = vunpack.c.l.b16 %v856
      %v1013 = vunpack.c.l.b16 %v857
      %v1014 = vunpack.c.l.b16 %v858
      %v1015 = vunpack.c.h.b16 %v855
      %v1016 = vunpack.c.h.b16 %v856
      %v1017 = vunpack.c.h.b16 %v857
      %v1018 = vunpack.c.h.b16 %v858
      %v1019 = vunpack.c.l.b16 %v859
      %v1020 = vunpack.c.l.b16 %v860
      %v1021 = vunpack.c.l.b16 %v861
      %v1022 = vunpack.c.l.b16 %v862
      %v1023 = vunpack.c.h.b16 %v859
      %v1024 = vunpack.c.h.b16 %v860
      %v1025 = vunpack.c.h.b16 %v861
      %v1026 = vunpack.c.h.b16 %v862
      %v1027 = vunpack.c.l.b16 %v863
      %v1028 = vunpack.c.l.b16 %v864
      %v1029 = vunpack.c.l.b16 %v865
      %v1030 = vunpack.c.l.b16 %v866
      %v1031 = vunpack.c.h.b16 %v863
      %v1032 = vunpack.c.h.b16 %v864
      %v1033 = vunpack.c.h.b16 %v865
      %v1034 = vunpack.c.h.b16 %v866
      %v1035 = vunpack.c.l.b16 %v867
      %v1036 = vunpack.c.l.b16 %v868
      %v1037 = vunpack.c.l.b16 %v869
      %v1038 = vunpack.c.l.b16 %v870
      %v1039 = vunpack.c.h.b16 %v867
      %v1040 = vunpack.c.h.b16 %v868
      %v1041 = vunpack.c.h.b16 %v869
      %v1042 = vunpack.c.h.b16 %v870
      %v1043 = vunpack.c.l.b16 %v871
      %v1044 = vunpack.c.l.b16 %v872
      %v1045 = vunpack.c.l.b16 %v873
      %v1046 = vunpack.c.l.b16 %v874
      %v1047 = vunpack.c.h.b16 %v871
      %v1048 = vunpack.c.h.b16 %v872
      %v1049 = vunpack.c.h.b16 %v873
      %v1050 = vunpack.c.h.b16 %v874
      %v1051 = vunpack.c.l.b16 %v875
      %v1052 = vunpack.c.l.b16 %v876
      %v1053 = vunpack.c.l.b16 %v877
      %v1054 = vunpack.c.l.b16 %v878
      %v1055 = vunpack.c.h.b16 %v875
      %v1056 = vunpack.c.h.b16 %v876
      %v1057 = vunpack.c.h.b16 %v877
      %v1058 = vunpack.c.h.b16 %v878
      %v1059 = vunpack.c.l.b16 %v879
      %v1060 = vunpack.c.l.b16 %v880
      %v1061 = vunpack.c.l.b16 %v881
      %v1062 = vunpack.c.l.b16 %v882
      %v1063 = vunpack.c.h.b16 %v879
      %v1064 = vunpack.c.h.b16 %v880
      %v1065 = vunpack.c.h.b16 %v881
      %v1066 = vunpack.c.h.b16 %v882
      %v1067 = vunpack.c.l.b16 %v883
      %v1068 = vunpack.c.l.b16 %v884
      %v1069 = vunpack.c.l.b16 %v885
      %v1070 = vunpack.c.l.b16 %v886
      %v1071 = vunpack.c.h.b16 %v883
      %v1072 = vunpack.c.h.b16 %v884
      %v1073 = vunpack.c.h.b16 %v885
      %v1074 = vunpack.c.h.b16 %v886
      %v1075 = vunpack.c.l.b16 %v887
      %v1076 = vunpack.c.l.b16 %v888
      %v1077 = vunpack.c.l.b16 %v889
      %v1078 = vunpack.c.l.b16 %v890
      %v1079 = vunpack.c.h.b16 %v887
      %v1080 = vunpack.c.h.b16 %v888
      %v1081 = vunpack.c.h.b16 %v889
      %v1082 = vunpack.c.h.b16 %v890
      %v1083 = vpack.c.b16 %v956, %v955
      %v1084 = vpack.c.b16 %v958, %v957
      %v1085 = vpack.c.b16 %v960, %v959
      %v1086 = vpack.c.b16 %v962, %v961
      %v1087 = vpack.c.b16 %v964, %v963
      %v1088 = vpack.c.b16 %v966, %v965
      %v1089 = vpack.c.b16 %v968, %v967
      %v1090 = vpack.c.b16 %v970, %v969
      %v1091 = vpack.c.b16 %v972, %v971
      %v1092 = vpack.c.b16 %v974, %v973
      %v1093 = vpack.c.b16 %v976, %v975
      %v1094 = vpack.c.b16 %v978, %v977
      %v1095 = vpack.c.b16 %v980, %v979
      %v1096 = vpack.c.b16 %v982, %v981
      %v1097 = vpack.c.b16 %v984, %v983
      %v1098 = vpack.c.b16 %v986, %v985
      %v1099 = vpack.c.b16 %v988, %v987
      %v1100 = vpack.c.b16 %v990, %v989
      %v1101 = vpack.c.b16 %v992, %v991
      %v1102 = vpack.c.b16 %v994, %v993
      %v1103 = vpack.c.b16 %v996, %v995
      %v1104 = vpack.c.b16 %v998, %v997
      %v1105 = vpack.c.b16 %v1000, %v999
      %v1106 = vpack.c.b16 %v1002, %v1001
      %v1107 = vpack.c.b16 %v1004, %v1003
      %v1108 = vpack.c.b16 %v1006, %v1005
      %v1109 = vpack.c.b16 %v1008, %v1007
      %v1110 = vpack.c.b16 %v1010, %v1009
      %v1111 = vpack.c.b16 %v1012, %v1011
      %v1112 = vpack.c.b16 %v1014, %v1013
      %v1113 = vpack.c.b16 %v1016, %v1015
      %v1114 = vpack.c.b16 %v1018, %v1017
      %v1115 = vpack.c.b16 %v1020, %v1019
      %v1116 = vpack.c.b16 %v1022, %v1021
      %v1117 = vpack.c.b16 %v1024, %v1023
      %v1118 = vpack.c.b16 %v1026, %v1025
      %v1119 = vpack.c.b16 %v1028, %v1027
      %v1120 = vpack.c.b16 %v1030, %v1029
      %v1121 = vpack.c.b16 %v1032, %v1031
      %v1122 = vpack.c.b16 %v1034, %v1033
      %v1123 = vpack.c.b16 %v1036, %v1035
      %v1124 = vpack.c.b16 %v1038, %v1037
      %v1125 = vpack.c.b16 %v1040, %v1039
      %v1126 = vpack.c.b16 %v1042, %v1041
      %v1127 = vpack.c.b16 %v1044, %v1043
      %v1128 = vpack.c.b16 %v1046, %v1045
      %v1129 = vpack.c.b16 %v1048, %v1047
      %v1130 = vpack.c.b16 %v1050, %v1049
      %v1131 = vpack.c.b16 %v1052, %v1051
      %v1132 = vpack.c.b16 %v1054, %v1053
      %v1133 = vpack.c.b16 %v1056, %v1055
      %v1134 = vpack.c.b16 %v1058, %v1057
      %v1135 = vpack.c.b16 %v1060, %v1059
      %v1136 = vpack.c.b16 %v1062, %v1061
      %v1137 = vpack.c.b16 %v1064, %v1063
      %v1138 = vpack.c.b16 %v1066, %v1065
      %v1139 = vpack.c.b16 %v1068, %v1067
      %v1140 = vpack.c.b16 %v1070, %v1069
      %v1141 = vpack.c.b16 %v1072, %v1071
      %v1142 = vpack.c.b16 %v1074, %v1073
      %v1143 = vpack.c.b16 %v1076, %v1075
      %v1144 = vpack.c.b16 %v1078, %v1077
      %v1145 = vpack.c.b16 %v1080, %v1079
      %v1146 = vpack.c.b16 %v1082, %v1081
      %1211 = vst [vmem:[%s174] sm:$0xff] %v1083
      %1212 = vst [vmem:[%s174 + $0x8] sm:$0xff] %v1084
      %1213 = vst [vmem:[%s174 + $0x10] sm:$0xff] %v1085
      %1214 = vst [vmem:[%s174 + $0x18] sm:$0xff] %v1086
      %1215 = vst [vmem:[%s174 + $0x20] sm:$0xff] %v1087
      %1216 = vst [vmem:[%s174 + $0x28] sm:$0xff] %v1088
      %1217 = vst [vmem:[%s174 + $0x30] sm:$0xff] %v1089
      %1218 = vst [vmem:[%s174 + $0x38] sm:$0xff] %v1090
      %1219 = vst [vmem:[%s174 + $0x40] sm:$0xff] %v1091
      %1220 = vst [vmem:[%s174 + $0x48] sm:$0xff] %v1092
      %1221 = vst [vmem:[%s174 + $0x50] sm:$0xff] %v1093
      %1222 = vst [vmem:[%s174 + $0x58] sm:$0xff] %v1094
      %1223 = vst [vmem:[%s174 + $0x60] sm:$0xff] %v1095
      %1224 = vst [vmem:[%s174 + $0x68] sm:$0xff] %v1096
      %1225 = vst [vmem:[%s174 + $0x70] sm:$0xff] %v1097
      %1226 = vst [vmem:[%s174 + $0x78] sm:$0xff] %v1098
      %1227 = vst [vmem:[%s174 + $0x80] sm:$0xff] %v1099
      %1228 = vst [vmem:[%s174 + $0x88] sm:$0xff] %v1100
      %1229 = vst [vmem:[%s174 + $0x90] sm:$0xff] %v1101
      %1230 = vst [vmem:[%s174 + $0x98] sm:$0xff] %v1102
      %1231 = vst [vmem:[%s174 + $0xa0] sm:$0xff] %v1103
      %1232 = vst [vmem:[%s174 + $0xa8] sm:$0xff] %v1104
      %1233 = vst [vmem:[%s174 + $0xb0] sm:$0xff] %v1105
      %1234 = vst [vmem:[%s174 + $0xb8] sm:$0xff] %v1106
      %1235 = vst [vmem:[%s174 + $0xc0] sm:$0xff] %v1107
      %1236 = vst [vmem:[%s174 + $0xc8] sm:$0xff] %v1108
      %1237 = vst [vmem:[%s174 + $0xd0] sm:$0xff] %v1109
      %1238 = vst [vmem:[%s174 + $0xd8] sm:$0xff] %v1110
      %1239 = vst [vmem:[%s174 + $0xe0] sm:$0xff] %v1111
      %1240 = vst [vmem:[%s174 + $0xe8] sm:$0xff] %v1112
      %1241 = vst [vmem:[%s174 + $0xf0] sm:$0xff] %v1113
      %1242 = vst [vmem:[%s174 + $0xf8] sm:$0xff] %v1114
      %1243 = vst [vmem:[%s174 + $0x100] sm:$0xff] %v1115
      %1244 = vst [vmem:[%s174 + $0x108] sm:$0xff] %v1116
      %1245 = vst [vmem:[%s174 + $0x110] sm:$0xff] %v1117
      %1246 = vst [vmem:[%s174 + $0x118] sm:$0xff] %v1118
      %1247 = vst [vmem:[%s174 + $0x120] sm:$0xff] %v1119
      %1248 = vst [vmem:[%s174 + $0x128] sm:$0xff] %v1120
      %1249 = vst [vmem:[%s174 + $0x130] sm:$0xff] %v1121
      %1250 = vst [vmem:[%s174 + $0x138] sm:$0xff] %v1122
      %1251 = vst [vmem:[%s174 + $0x140] sm:$0xff] %v1123
      %1252 = vst [vmem:[%s174 + $0x148] sm:$0xff] %v1124
      %1253 = vst [vmem:[%s174 + $0x150] sm:$0xff] %v1125
      %1254 = vst [vmem:[%s174 + $0x158] sm:$0xff] %v1126
      %1255 = vst [vmem:[%s174 + $0x160] sm:$0xff] %v1127
      %1256 = vst [vmem:[%s174 + $0x168] sm:$0xff] %v1128
      %1257 = vst [vmem:[%s174 + $0x170] sm:$0xff] %v1129
      %1258 = vst [vmem:[%s174 + $0x178] sm:$0xff] %v1130
      %1259 = vst [vmem:[%s174 + $0x180] sm:$0xff] %v1131
      %1260 = vst [vmem:[%s174 + $0x188] sm:$0xff] %v1132
      %1261 = vst [vmem:[%s174 + $0x190] sm:$0xff] %v1133
      %1262 = vst [vmem:[%s174 + $0x198] sm:$0xff] %v1134
      %1263 = vst [vmem:[%s174 + $0x1a0] sm:$0xff] %v1135
      %1264 = vst [vmem:[%s174 + $0x1a8] sm:$0xff] %v1136
      %1265 = vst [vmem:[%s174 + $0x1b0] sm:$0xff] %v1137
      %1266 = vst [vmem:[%s174 + $0x1b8] sm:$0xff] %v1138
      %1267 = vst [vmem:[%s174 + $0x1c0] sm:$0xff] %v1139
      %1268 = vst [vmem:[%s174 + $0x1c8] sm:$0xff] %v1140
      %1269 = vst [vmem:[%s174 + $0x1d0] sm:$0xff] %v1141
      %1270 = vst [vmem:[%s174 + $0x1d8] sm:$0xff] %v1142
      %1271 = vst [vmem:[%s174 + $0x1e0] sm:$0xff] %v1143
      %1272 = vst [vmem:[%s174 + $0x1e8] sm:$0xff] %v1144
      %1273 = vst [vmem:[%s174 + $0x1f0] sm:$0xff] %v1145
      %1274 = vst [vmem:[%s174 + $0x1f8] sm:$0xff] %v1146
      %s1275 = smul.u32 32, %s14
      %p1276 = scmp.lt.s32.totalorder %s1275, 255
      %s1277 = scalar_select %p1276, %s1275, 255
      %s1278 = smul.addr %s1277, 4
      %s1279 = smul.addr %s1278, 4
      %s1280 = scalar_lea.vmem %s3, %s1279
      // Predicated region
      $region33: #{generator_forward.12} parent=31 // pred_check
        %p1281 = pneg %p100
      $region34: #{generator_forward.12} parent=31 // pred_check_branch
        %1283 = sbr.rel (%p1281) target = $region36
      $region35: #{generator_forward.12} parent=31 // pred_region
        %s1284 = smul.u32 32, %s14
      $region36: #{generator_forward.12} parent=31 // pred_fallthru
        _
    $region32: #{generator_forward.12} parent=5 // pred_fallthru
      _
    %p1285 = scmp.le.s32.totalorder 2, %s9
    // Predicated region
    $region37: #{generator_forward.12} parent=5 // pred_check
      %p1286 = pneg %p1285
    $region38: #{generator_forward.12} parent=5 // pred_check_branch
      %1288 = sbr.rel (%p1286) target = $region40
    $region39: #{generator_forward.12} parent=5 // pred_region
      %s1289 = ssub.s32 %s9, 2
      // Predicated region
      $region41: #{generator_forward.12} parent=39 // pred_check
        %p1290 = pneg %p106
      $region42: #{generator_forward.12} parent=39 // pred_check_branch
        %1292 = sbr.rel (%p1290) target = $region44
      $region43: #{generator_forward.12} parent=39 // pred_region
        %s1293 = smul.u32 32, %s15
        %p1294 = scmp.lt.s32.totalorder %s1293, 255
        %s1295 = scalar_select %p1294, %s1293, 255
        %s1296 = smul.addr %s1295, 4
        %s1297 = smul.addr %s1296, 4
        %s1298 = scalar_lea.vmem %s3, %s1297
      $region44: #{generator_forward.12} parent=39 // pred_fallthru
        _
    $region40: #{generator_forward.12} parent=5 // pred_fallthru
      _
  $region6: #{generator_forward.12} parent=0 // loop_footer
    %s13 = sadd.s32 1, %s9
  $region7: #{generator_forward.12} parent=0 // loop_footer_branch
    %8 = sbr.rel target = $region3
  $region8: #{generator_forward.12} parent=0 // loop_exit
    _

// kernel: generator_forward.13
$region0: #{generator_forward.13}
  #allocation0 [shape = 'u32[]', space=smem, size = 0x4, offset = 0x4, fixed_abs, tag = 'smem constant byte address 0x4 - core index']
  #allocation1 [shape = 'u32[144,128]{1,0:T(1,128)}', space=vmem, size = 0x12000, scoped, tag = 'internal scratch']
  %s0 = inlined_call_operand.vmem [shape: f32[8192,32], index: 0, kind: input, shape index: {}]
  %s1 = inlined_call_operand.vmem [shape: f32[1,32], index: 1, kind: input, shape index: {}]
  %s2 = inlined_call_operand.vmem [shape: bf16[32,128], index: 2, kind: input, shape index: {}]
  %s3 = inlined_call_operand.vmem [shape: bf16[8192,128], index: 3, kind: output, shape index: {}]
  %s4 = sld [smem:[#allocation0]]
  $region45: #{generator_forward.13} parent=0
    _
  %s6 = ssub.s32 1, %s4
  %s7 = scalar_select 0, %s6, %s4
  loop: start=0, step=1, limit=10
  $region2: #{generator_forward.13} parent=0 // loop_pre_header
    _
  $region3: #{generator_forward.13} parent=0 // loop_header
    %s9 = sphi 0, %s13
    %p10 = scmp.ge.s32.totalorder %s9, 10
    %s19 = sphi 0, %s21
    %s22 = sphi 0, %s19
    %s23 = sphi 0, %s22
    %s39 = sphi 0, %s23
    %s43 = sphi 0, %s43
    %s45 = sphi 0, %s43
    %s46 = sphi 0, %s45
    %s60 = sphi 0, %s46
    %s64 = sphi 0, %s64
    %s66 = sphi 0, %s64
    %s67 = sphi 0, %s66
    %s81 = sphi 0, %s67
    %s87 = sphi 0, %s89
    %s90 = sphi 0, %s87
    %s91 = sphi 0, %s90
    %s107 = sphi 0, %s91
  $region4: #{generator_forward.13} parent=0 // loop_header_branch
    %12 = sbr.rel (%p10) target = $region8
  $region5: #{generator_forward.13} parent=0 // loop_body
    %s14 = ssub.s32 %s9, 1
    %s15 = ssub.s32 %s9, 2
    %s16 = sadd.s32 %s9, 1
    %s17 = ssub.s32 %s9, %s16
    %p18 = scmp.eq.s32.totalorder %s17, 0
    %s20 = sadd.s32 %s19, 1
    %s21 = scalar_select %p18, %s19, %s20
    %p24 = pneg %p18
    %p25 = scmp.eq.s32.totalorder %s9, 7
    %p26 = por %p24, %p25
    %p27 = scmp.ne.s32.totalorder %s19, %s22
    %p28 = scmp.eq.s32.totalorder %s9, 0
    %p29 = por %p27, %p28
    %p30 = scmp.ne.s32.totalorder %s19, %s22
    %p31 = scmp.eq.s32.totalorder %s14, 7
    %p32 = por %p30, %p31
    %p33 = scmp.ne.s32.totalorder %s22, %s23
    %p34 = scmp.eq.s32.totalorder %s14, 0
    %p35 = por %p33, %p34
    %p36 = scmp.ne.s32.totalorder %s22, %s23
    %p37 = scmp.eq.s32.totalorder %s15, 7
    %p38 = por %p36, %p37
    %p40 = scmp.ne.s32.totalorder %s23, %s39
    %p41 = scmp.eq.s32.totalorder %s15, 0
    %p42 = por %p40, %p41
    %s44 = sadd.s32 %s43, 1
    %p47 = scmp.eq.s32.totalorder %s9, 7
    %p48 = scmp.ne.s32.totalorder %s43, %s45
    %p49 = scmp.eq.s32.totalorder %s9, 0
    %p50 = por %p48, %p49
    %p51 = scmp.ne.s32.totalorder %s43, %s45
    %p52 = scmp.eq.s32.totalorder %s14, 7
    %p53 = por %p51, %p52
    %p54 = scmp.ne.s32.totalorder %s45, %s46
    %p55 = scmp.eq.s32.totalorder %s14, 0
    %p56 = por %p54, %p55
    %p57 = scmp.ne.s32.totalorder %s45, %s46
    %p58 = scmp.eq.s32.totalorder %s15, 7
    %p59 = por %p57, %p58
    %p61 = scmp.ne.s32.totalorder %s46, %s60
    %p62 = scmp.eq.s32.totalorder %s15, 0
    %p63 = por %p61, %p62
    %s65 = sadd.s32 %s64, 1
    %p68 = scmp.eq.s32.totalorder %s9, 7
    %p69 = scmp.ne.s32.totalorder %s64, %s66
    %p70 = scmp.eq.s32.totalorder %s9, 0
    %p71 = por %p69, %p70
    %p72 = scmp.ne.s32.totalorder %s64, %s66
    %p73 = scmp.eq.s32.totalorder %s14, 7
    %p74 = por %p72, %p73
    %p75 = scmp.ne.s32.totalorder %s66, %s67
    %p76 = scmp.eq.s32.totalorder %s14, 0
    %p77 = por %p75, %p76
    %p78 = scmp.ne.s32.totalorder %s66, %s67
    %p79 = scmp.eq.s32.totalorder %s15, 7
    %p80 = por %p78, %p79
    %p82 = scmp.ne.s32.totalorder %s67, %s81
    %p83 = scmp.eq.s32.totalorder %s15, 0
    %p84 = por %p82, %p83
    %s85 = ssub.s32 %s9, %s16
    %p86 = scmp.eq.s32.totalorder %s85, 0
    %s88 = sadd.s32 %s87, 1
    %s89 = scalar_select %p86, %s87, %s88
    %p92 = pneg %p86
    %p93 = scmp.eq.s32.totalorder %s9, 7
    %p94 = por %p92, %p93
    %p95 = scmp.ne.s32.totalorder %s87, %s90
    %p96 = scmp.eq.s32.totalorder %s9, 0
    %p97 = por %p95, %p96
    %p98 = scmp.ne.s32.totalorder %s87, %s90
    %p99 = scmp.eq.s32.totalorder %s14, 7
    %p100 = por %p98, %p99
    %p101 = scmp.ne.s32.totalorder %s90, %s91
    %p102 = scmp.eq.s32.totalorder %s14, 0
    %p103 = por %p101, %p102
    %p104 = scmp.ne.s32.totalorder %s90, %s91
    %p105 = scmp.eq.s32.totalorder %s15, 7
    %p106 = por %p104, %p105
    %p108 = scmp.ne.s32.totalorder %s91, %s107
    %p109 = scmp.eq.s32.totalorder %s15, 0
    %p110 = por %p108, %p109
    %p111 = scmp.le.s32.totalorder 1, %s9
    %p112 = scmp.lt.s32.totalorder %s9, 9
    %p113 = pnand %p111, %p112
    %p114 = pneg %p113
    // Predicated region
    $region9: #{generator_forward.13} parent=5 // pred_check
      _
    $region10: #{generator_forward.13} parent=5 // pred_check_branch
      %116 = sbr.rel (%p113) target = $region12
    $region11: #{generator_forward.13} parent=5 // pred_region
      %s117 = ssub.s32 %s9, 1
      // Predicated region
      $region13: #{generator_forward.13} parent=11 // pred_check
        %p118 = pneg %p56
      $region14: #{generator_forward.13} parent=11 // pred_check_branch
        %120 = sbr.rel (%p118) target = $region16
      $region15: #{generator_forward.13} parent=11 // pred_region
        _
      $region16: #{generator_forward.13} parent=11 // pred_fallthru
        _
      // Predicated region
      $region17: #{generator_forward.13} parent=11 // pred_check
        %p121 = pneg %p77
      $region18: #{generator_forward.13} parent=11 // pred_check_branch
        %123 = sbr.rel (%p121) target = $region20
      $region19: #{generator_forward.13} parent=11 // pred_region
        _
      $region20: #{generator_forward.13} parent=11 // pred_fallthru
        _
    $region12: #{generator_forward.13} parent=5 // pred_fallthru
      _
    %p124 = scmp.lt.s32.totalorder %s9, 8
    // Predicated region
    $region21: #{generator_forward.13} parent=5 // pred_check
      %p125 = pneg %p124
    $region22: #{generator_forward.13} parent=5 // pred_check_branch
      %127 = sbr.rel (%p125) target = $region24
    $region23: #{generator_forward.13} parent=5 // pred_region
      // Predicated region
      $region25: #{generator_forward.13} parent=23 // pred_check
        %p128 = pneg %p29
      $region26: #{generator_forward.13} parent=23 // pred_check_branch
        %130 = sbr.rel (%p128) target = $region28
      $region27: #{generator_forward.13} parent=23 // pred_region
        %s131 = smul.u32 128, %s9
        %p132 = scmp.lt.s32.totalorder %s131, 1023
        %s133 = scalar_select %p132, %s131, 1023
        %s134 = smul.addr %s133, 8
        %s135 = scalar_lea.vmem %s0, %s134
        %s136 = smul.u32 128, %s9
      $region28: #{generator_forward.13} parent=23 // pred_fallthru
        _
    $region24: #{generator_forward.13} parent=5 // pred_fallthru
      _
    %p137 = scmp.le.s32.totalorder 1, %s9
    %p138 = scmp.lt.s32.totalorder %s9, 9
    %p139 = pnand %p137, %p138
    %p140 = pneg %p139
    // Predicated region
    $region29: #{generator_forward.13} parent=5 // pred_check
      _
    $region30: #{generator_forward.13} parent=5 // pred_check_branch
      %142 = sbr.rel (%p139) target = $region32
    $region31: #{generator_forward.13} parent=5 // pred_region
      %s143 = ssub.s32 %s9, 1
      %s144 = smul.u32 128, %s14
      %p145 = scmp.lt.s32.totalorder %s144, 1023
      %s146 = scalar_select %p145, %s144, 1023
      %s147 = smul.addr %s146, 8
      %s148 = scalar_lea.vmem %s0, %s147
      %p149 = pneg %p35
      %p150 = pneg %p32
      %p151 = pneg %p56
      %p152 = pneg %p53
      %p153 = pneg %p77
      %p154 = pneg %p74
      %p155 = pneg %p103
      %p156 = pneg %p100
      %s157 = smul.u32 128, %s14
      %p158 = scmp.lt.s32.totalorder %s157, 1023
      %s159 = scalar_select %p158, %s157, 1023
      %s160 = smul.addr %s159, 4
      %s161 = scalar_lea.vmem %s3, %s160
      %s162 = smul.u32 128, %s14
      %p163 = scmp.lt.s32.totalorder %s162, 1023
      %s164 = scalar_select %p163, %s162, 1023
      %s165 = smul.addr %s164, 8
      %s166 = scalar_lea.vmem %s0, %s165
      %s167 = smul.u32 128, %s14
      %s168 = smul.u32 128, %s14
      %p169 = scmp.lt.s32.totalorder %s168, 1023
      %s170 = scalar_select %p169, %s168, 1023
      %s171 = smul.addr %s170, 4
      %s172 = scalar_lea.vmem %s3, %s171
      %s173 = smul.u32 128, %s14
      %v175 = vld [vmem:[%s166] sm:$0xff]
      %v176 = vld [vmem:[%s166 + $0x8] sm:$0xff]
      %v177 = vld [vmem:[%s166 + $0x10] sm:$0xff]
      %v178 = vld [vmem:[%s166 + $0x18] sm:$0xff]
      %v179 = vld [vmem:[%s166 + $0x20] sm:$0xff]
      %v180 = vld [vmem:[%s166 + $0x28] sm:$0xff]
      %v181 = vld [vmem:[%s166 + $0x30] sm:$0xff]
      %v182 = vld [vmem:[%s166 + $0x38] sm:$0xff]
      %v183 = vld [vmem:[%s166 + $0x40] sm:$0xff]
      %v184 = vld [vmem:[%s166 + $0x48] sm:$0xff]
      %v185 = vld [vmem:[%s166 + $0x50] sm:$0xff]
      %v186 = vld [vmem:[%s166 + $0x58] sm:$0xff]
      %v187 = vld [vmem:[%s166 + $0x60] sm:$0xff]
      %v188 = vld [vmem:[%s166 + $0x68] sm:$0xff]
      %v189 = vld [vmem:[%s166 + $0x70] sm:$0xff]
      %v190 = vld [vmem:[%s166 + $0x78] sm:$0xff]
      %v191 = vld [vmem:[%s166 + $0x80] sm:$0xff]
      %v192 = vld [vmem:[%s166 + $0x88] sm:$0xff]
      %v193 = vld [vmem:[%s166 + $0x90] sm:$0xff]
      %v194 = vld [vmem:[%s166 + $0x98] sm:$0xff]
      %v195 = vld [vmem:[%s166 + $0xa0] sm:$0xff]
      %v196 = vld [vmem:[%s166 + $0xa8] sm:$0xff]
      %v197 = vld [vmem:[%s166 + $0xb0] sm:$0xff]
      %v198 = vld [vmem:[%s166 + $0xb8] sm:$0xff]
      %v199 = vld [vmem:[%s166 + $0xc0] sm:$0xff]
      %v200 = vld [vmem:[%s166 + $0xc8] sm:$0xff]
      %v201 = vld [vmem:[%s166 + $0xd0] sm:$0xff]
      %v202 = vld [vmem:[%s166 + $0xd8] sm:$0xff]
      %v203 = vld [vmem:[%s166 + $0xe0] sm:$0xff]
      %v204 = vld [vmem:[%s166 + $0xe8] sm:$0xff]
      %v205 = vld [vmem:[%s166 + $0xf0] sm:$0xff]
      %v206 = vld [vmem:[%s166 + $0xf8] sm:$0xff]
      %v207 = vld [vmem:[%s166 + $0x100] sm:$0xff]
      %v208 = vld [vmem:[%s166 + $0x108] sm:$0xff]
      %v209 = vld [vmem:[%s166 + $0x110] sm:$0xff]
      %v210 = vld [vmem:[%s166 + $0x118] sm:$0xff]
      %v211 = vld [vmem:[%s166 + $0x120] sm:$0xff]
      %v212 = vld [vmem:[%s166 + $0x128] sm:$0xff]
      %v213 = vld [vmem:[%s166 + $0x130] sm:$0xff]
      %v214 = vld [vmem:[%s166 + $0x138] sm:$0xff]
      %v215 = vld [vmem:[%s166 + $0x140] sm:$0xff]
      %v216 = vld [vmem:[%s166 + $0x148] sm:$0xff]
      %v217 = vld [vmem:[%s166 + $0x150] sm:$0xff]
      %v218 = vld [vmem:[%s166 + $0x158] sm:$0xff]
      %v219 = vld [vmem:[%s166 + $0x160] sm:$0xff]
      %v220 = vld [vmem:[%s166 + $0x168] sm:$0xff]
      %v221 = vld [vmem:[%s166 + $0x170] sm:$0xff]
      %v222 = vld [vmem:[%s166 + $0x178] sm:$0xff]
      %v223 = vld [vmem:[%s166 + $0x180] sm:$0xff]
      %v224 = vld [vmem:[%s166 + $0x188] sm:$0xff]
      %v225 = vld [vmem:[%s166 + $0x190] sm:$0xff]
      %v226 = vld [vmem:[%s166 + $0x198] sm:$0xff]
      %v227 = vld [vmem:[%s166 + $0x1a0] sm:$0xff]
      %v228 = vld [vmem:[%s166 + $0x1a8] sm:$0xff]
      %v229 = vld [vmem:[%s166 + $0x1b0] sm:$0xff]
      %v230 = vld [vmem:[%s166 + $0x1b8] sm:$0xff]
      %v231 = vld [vmem:[%s166 + $0x1c0] sm:$0xff]
      %v232 = vld [vmem:[%s166 + $0x1c8] sm:$0xff]
      %v233 = vld [vmem:[%s166 + $0x1d0] sm:$0xff]
      %v234 = vld [vmem:[%s166 + $0x1d8] sm:$0xff]
      %v235 = vld [vmem:[%s166 + $0x1e0] sm:$0xff]
      %v236 = vld [vmem:[%s166 + $0x1e8] sm:$0xff]
      %v237 = vld [vmem:[%s166 + $0x1f0] sm:$0xff]
      %v238 = vld [vmem:[%s166 + $0x1f8] sm:$0xff]
      %v239 = vld [vmem:[%s166 + $0x200] sm:$0xff]
      %v240 = vld [vmem:[%s166 + $0x208] sm:$0xff]
      %v241 = vld [vmem:[%s166 + $0x210] sm:$0xff]
      %v242 = vld [vmem:[%s166 + $0x218] sm:$0xff]
      %v243 = vld [vmem:[%s166 + $0x220] sm:$0xff]
      %v244 = vld [vmem:[%s166 + $0x228] sm:$0xff]
      %v245 = vld [vmem:[%s166 + $0x230] sm:$0xff]
      %v246 = vld [vmem:[%s166 + $0x238] sm:$0xff]
      %v247 = vld [vmem:[%s166 + $0x240] sm:$0xff]
      %v248 = vld [vmem:[%s166 + $0x248] sm:$0xff]
      %v249 = vld [vmem:[%s166 + $0x250] sm:$0xff]
      %v250 = vld [vmem:[%s166 + $0x258] sm:$0xff]
      %v251 = vld [vmem:[%s166 + $0x260] sm:$0xff]
      %v252 = vld [vmem:[%s166 + $0x268] sm:$0xff]
      %v253 = vld [vmem:[%s166 + $0x270] sm:$0xff]
      %v254 = vld [vmem:[%s166 + $0x278] sm:$0xff]
      %v255 = vld [vmem:[%s166 + $0x280] sm:$0xff]
      %v256 = vld [vmem:[%s166 + $0x288] sm:$0xff]
      %v257 = vld [vmem:[%s166 + $0x290] sm:$0xff]
      %v258 = vld [vmem:[%s166 + $0x298] sm:$0xff]
      %v259 = vld [vmem:[%s166 + $0x2a0] sm:$0xff]
      %v260 = vld [vmem:[%s166 + $0x2a8] sm:$0xff]
      %v261 = vld [vmem:[%s166 + $0x2b0] sm:$0xff]
      %v262 = vld [vmem:[%s166 + $0x2b8] sm:$0xff]
      %v263 = vld [vmem:[%s166 + $0x2c0] sm:$0xff]
      %v264 = vld [vmem:[%s166 + $0x2c8] sm:$0xff]
      %v265 = vld [vmem:[%s166 + $0x2d0] sm:$0xff]
      %v266 = vld [vmem:[%s166 + $0x2d8] sm:$0xff]
      %v267 = vld [vmem:[%s166 + $0x2e0] sm:$0xff]
      %v268 = vld [vmem:[%s166 + $0x2e8] sm:$0xff]
      %v269 = vld [vmem:[%s166 + $0x2f0] sm:$0xff]
      %v270 = vld [vmem:[%s166 + $0x2f8] sm:$0xff]
      %v271 = vld [vmem:[%s166 + $0x300] sm:$0xff]
      %v272 = vld [vmem:[%s166 + $0x308] sm:$0xff]
      %v273 = vld [vmem:[%s166 + $0x310] sm:$0xff]
      %v274 = vld [vmem:[%s166 + $0x318] sm:$0xff]
      %v275 = vld [vmem:[%s166 + $0x320] sm:$0xff]
      %v276 = vld [vmem:[%s166 + $0x328] sm:$0xff]
      %v277 = vld [vmem:[%s166 + $0x330] sm:$0xff]
      %v278 = vld [vmem:[%s166 + $0x338] sm:$0xff]
      %v279 = vld [vmem:[%s166 + $0x340] sm:$0xff]
      %v280 = vld [vmem:[%s166 + $0x348] sm:$0xff]
      %v281 = vld [vmem:[%s166 + $0x350] sm:$0xff]
      %v282 = vld [vmem:[%s166 + $0x358] sm:$0xff]
      %v283 = vld [vmem:[%s166 + $0x360] sm:$0xff]
      %v284 = vld [vmem:[%s166 + $0x368] sm:$0xff]
      %v285 = vld [vmem:[%s166 + $0x370] sm:$0xff]
      %v286 = vld [vmem:[%s166 + $0x378] sm:$0xff]
      %v287 = vld [vmem:[%s166 + $0x380] sm:$0xff]
      %v288 = vld [vmem:[%s166 + $0x388] sm:$0xff]
      %v289 = vld [vmem:[%s166 + $0x390] sm:$0xff]
      %v290 = vld [vmem:[%s166 + $0x398] sm:$0xff]
      %v291 = vld [vmem:[%s166 + $0x3a0] sm:$0xff]
      %v292 = vld [vmem:[%s166 + $0x3a8] sm:$0xff]
      %v293 = vld [vmem:[%s166 + $0x3b0] sm:$0xff]
      %v294 = vld [vmem:[%s166 + $0x3b8] sm:$0xff]
      %v295 = vld [vmem:[%s166 + $0x3c0] sm:$0xff]
      %v296 = vld [vmem:[%s166 + $0x3c8] sm:$0xff]
      %v297 = vld [vmem:[%s166 + $0x3d0] sm:$0xff]
      %v298 = vld [vmem:[%s166 + $0x3d8] sm:$0xff]
      %v299 = vld [vmem:[%s166 + $0x3e0] sm:$0xff]
      %v300 = vld [vmem:[%s166 + $0x3e8] sm:$0xff]
      %v301 = vld [vmem:[%s166 + $0x3f0] sm:$0xff]
      %v302 = vld [vmem:[%s166 + $0x3f8] sm:$0xff]
      %v303 = vld [vmem:[%s1] sm:$0x1]
      %v305 = vlaneseq
      %v306 = vshrl.u32 %v305, 7
      %v307 = vsub.s32 0, %v306
      %v308 = vrot.slane %v303, %v307
      %v310 = vadd.f32 %v175, %v308
      %v311 = vadd.f32 %v176, %v308
      %v312 = vadd.f32 %v177, %v308
      %v313 = vadd.f32 %v178, %v308
      %v314 = vadd.f32 %v179, %v308
      %v315 = vadd.f32 %v180, %v308
      %v316 = vadd.f32 %v181, %v308
      %v317 = vadd.f32 %v182, %v308
      %v318 = vadd.f32 %v183, %v308
      %v319 = vadd.f32 %v184, %v308
      %v320 = vadd.f32 %v185, %v308
      %v321 = vadd.f32 %v186, %v308
      %v322 = vadd.f32 %v187, %v308
      %v323 = vadd.f32 %v188, %v308
      %v324 = vadd.f32 %v189, %v308
      %v325 = vadd.f32 %v190, %v308
      %v326 = vadd.f32 %v191, %v308
      %v327 = vadd.f32 %v192, %v308
      %v328 = vadd.f32 %v193, %v308
      %v329 = vadd.f32 %v194, %v308
      %v330 = vadd.f32 %v195, %v308
      %v331 = vadd.f32 %v196, %v308
      %v332 = vadd.f32 %v197, %v308
      %v333 = vadd.f32 %v198, %v308
      %v334 = vadd.f32 %v199, %v308
      %v335 = vadd.f32 %v200, %v308
      %v336 = vadd.f32 %v201, %v308
      %v337 = vadd.f32 %v202, %v308
      %v338 = vadd.f32 %v203, %v308
      %v339 = vadd.f32 %v204, %v308
      %v340 = vadd.f32 %v205, %v308
      %v341 = vadd.f32 %v206, %v308
      %v342 = vadd.f32 %v207, %v308
      %v343 = vadd.f32 %v208, %v308
      %v344 = vadd.f32 %v209, %v308
      %v345 = vadd.f32 %v210, %v308
      %v346 = vadd.f32 %v211, %v308
      %v347 = vadd.f32 %v212, %v308
      %v348 = vadd.f32 %v213, %v308
      %v349 = vadd.f32 %v214, %v308
      %v350 = vadd.f32 %v215, %v308
      %v351 = vadd.f32 %v216, %v308
      %v352 = vadd.f32 %v217, %v308
      %v353 = vadd.f32 %v218, %v308
      %v354 = vadd.f32 %v219, %v308
      %v355 = vadd.f32 %v220, %v308
      %v356 = vadd.f32 %v221, %v308
      %v357 = vadd.f32 %v222, %v308
      %v358 = vadd.f32 %v223, %v308
      %v359 = vadd.f32 %v224, %v308
      %v360 = vadd.f32 %v225, %v308
      %v361 = vadd.f32 %v226, %v308
      %v362 = vadd.f32 %v227, %v308
      %v363 = vadd.f32 %v228, %v308
      %v364 = vadd.f32 %v229, %v308
      %v365 = vadd.f32 %v230, %v308
      %v366 = vadd.f32 %v231, %v308
      %v367 = vadd.f32 %v232, %v308
      %v368 = vadd.f32 %v233, %v308
      %v369 = vadd.f32 %v234, %v308
      %v370 = vadd.f32 %v235, %v308
      %v371 = vadd.f32 %v236, %v308
      %v372 = vadd.f32 %v237, %v308
      %v373 = vadd.f32 %v238, %v308
      %v374 = vadd.f32 %v239, %v308
      %v375 = vadd.f32 %v240, %v308
      %v376 = vadd.f32 %v241, %v308
      %v377 = vadd.f32 %v242, %v308
      %v378 = vadd.f32 %v243, %v308
      %v379 = vadd.f32 %v244, %v308
      %v380 = vadd.f32 %v245, %v308
      %v381 = vadd.f32 %v246, %v308
      %v382 = vadd.f32 %v247, %v308
      %v383 = vadd.f32 %v248, %v308
      %v384 = vadd.f32 %v249, %v308
      %v385 = vadd.f32 %v250, %v308
      %v386 = vadd.f32 %v251, %v308
      %v387 = vadd.f32 %v252, %v308
      %v388 = vadd.f32 %v253, %v308
      %v389 = vadd.f32 %v254, %v308
      %v390 = vadd.f32 %v255, %v308
      %v391 = vadd.f32 %v256, %v308
      %v392 = vadd.f32 %v257, %v308
      %v393 = vadd.f32 %v258, %v308
      %v394 = vadd.f32 %v259, %v308
      %v395 = vadd.f32 %v260, %v308
      %v396 = vadd.f32 %v261, %v308
      %v397 = vadd.f32 %v262, %v308
      %v398 = vadd.f32 %v263, %v308
      %v399 = vadd.f32 %v264, %v308
      %v400 = vadd.f32 %v265, %v308
      %v401 = vadd.f32 %v266, %v308
      %v402 = vadd.f32 %v267, %v308
      %v403 = vadd.f32 %v268, %v308
      %v404 = vadd.f32 %v269, %v308
      %v405 = vadd.f32 %v270, %v308
      %v406 = vadd.f32 %v271, %v308
      %v407 = vadd.f32 %v272, %v308
      %v408 = vadd.f32 %v273, %v308
      %v409 = vadd.f32 %v274, %v308
      %v410 = vadd.f32 %v275, %v308
      %v411 = vadd.f32 %v276, %v308
      %v412 = vadd.f32 %v277, %v308
      %v413 = vadd.f32 %v278, %v308
      %v414 = vadd.f32 %v279, %v308
      %v415 = vadd.f32 %v280, %v308
      %v416 = vadd.f32 %v281, %v308
      %v417 = vadd.f32 %v282, %v308
      %v418 = vadd.f32 %v283, %v308
      %v419 = vadd.f32 %v284, %v308
      %v420 = vadd.f32 %v285, %v308
      %v421 = vadd.f32 %v286, %v308
      %v422 = vadd.f32 %v287, %v308
      %v423 = vadd.f32 %v288, %v308
      %v424 = vadd.f32 %v289, %v308
      %v425 = vadd.f32 %v290, %v308
      %v426 = vadd.f32 %v291, %v308
      %v427 = vadd.f32 %v292, %v308
      %v428 = vadd.f32 %v293, %v308
      %v429 = vadd.f32 %v294, %v308
      %v430 = vadd.f32 %v295, %v308
      %v431 = vadd.f32 %v296, %v308
      %v432 = vadd.f32 %v297, %v308
      %v433 = vadd.f32 %v298, %v308
      %v434 = vadd.f32 %v299, %v308
      %v435 = vadd.f32 %v300, %v308
      %v436 = vadd.f32 %v301, %v308
      %v437 = vadd.f32 %v302, %v308
      %v438 = vmax.f32 %v310, 0.0
      %v439 = vmax.f32 %v311, 0.0
      %v440 = vmax.f32 %v312, 0.0
      %v441 = vmax.f32 %v313, 0.0
      %v442 = vmax.f32 %v314, 0.0
      %v443 = vmax.f32 %v315, 0.0
      %v444 = vmax.f32 %v316, 0.0
      %v445 = vmax.f32 %v317, 0.0
      %v446 = vmax.f32 %v318, 0.0
      %v447 = vmax.f32 %v319, 0.0
      %v448 = vmax.f32 %v320, 0.0
      %v449 = vmax.f32 %v321, 0.0
      %v450 = vmax.f32 %v322, 0.0
      %v451 = vmax.f32 %v323, 0.0
      %v452 = vmax.f32 %v324, 0.0
      %v453 = vmax.f32 %v325, 0.0
      %v454 = vmax.f32 %v326, 0.0
      %v455 = vmax.f32 %v327, 0.0
      %v456 = vmax.f32 %v328, 0.0
      %v457 = vmax.f32 %v329, 0.0
      %v458 = vmax.f32 %v330, 0.0
      %v459 = vmax.f32 %v331, 0.0
      %v460 = vmax.f32 %v332, 0.0
      %v461 = vmax.f32 %v333, 0.0
      %v462 = vmax.f32 %v334, 0.0
      %v463 = vmax.f32 %v335, 0.0
      %v464 = vmax.f32 %v336, 0.0
      %v465 = vmax.f32 %v337, 0.0
      %v466 = vmax.f32 %v338, 0.0
      %v467 = vmax.f32 %v339, 0.0
      %v468 = vmax.f32 %v340, 0.0
      %v469 = vmax.f32 %v341, 0.0
      %v470 = vmax.f32 %v342, 0.0
      %v471 = vmax.f32 %v343, 0.0
      %v472 = vmax.f32 %v344, 0.0
      %v473 = vmax.f32 %v345, 0.0
      %v474 = vmax.f32 %v346, 0.0
      %v475 = vmax.f32 %v347, 0.0
      %v476 = vmax.f32 %v348, 0.0
      %v477 = vmax.f32 %v349, 0.0
      %v478 = vmax.f32 %v350, 0.0
      %v479 = vmax.f32 %v351, 0.0
      %v480 = vmax.f32 %v352, 0.0
      %v481 = vmax.f32 %v353, 0.0
      %v482 = vmax.f32 %v354, 0.0
      %v483 = vmax.f32 %v355, 0.0
      %v484 = vmax.f32 %v356, 0.0
      %v485 = vmax.f32 %v357, 0.0
      %v486 = vmax.f32 %v358, 0.0
      %v487 = vmax.f32 %v359, 0.0
      %v488 = vmax.f32 %v360, 0.0
      %v489 = vmax.f32 %v361, 0.0
      %v490 = vmax.f32 %v362, 0.0
      %v491 = vmax.f32 %v363, 0.0
      %v492 = vmax.f32 %v364, 0.0
      %v493 = vmax.f32 %v365, 0.0
      %v494 = vmax.f32 %v366, 0.0
      %v495 = vmax.f32 %v367, 0.0
      %v496 = vmax.f32 %v368, 0.0
      %v497 = vmax.f32 %v369, 0.0
      %v498 = vmax.f32 %v370, 0.0
      %v499 = vmax.f32 %v371, 0.0
      %v500 = vmax.f32 %v372, 0.0
      %v501 = vmax.f32 %v373, 0.0
      %v502 = vmax.f32 %v374, 0.0
      %v503 = vmax.f32 %v375, 0.0
      %v504 = vmax.f32 %v376, 0.0
      %v505 = vmax.f32 %v377, 0.0
      %v506 = vmax.f32 %v378, 0.0
      %v507 = vmax.f32 %v379, 0.0
      %v508 = vmax.f32 %v380, 0.0
      %v509 = vmax.f32 %v381, 0.0
      %v510 = vmax.f32 %v382, 0.0
      %v511 = vmax.f32 %v383, 0.0
      %v512 = vmax.f32 %v384, 0.0
      %v513 = vmax.f32 %v385, 0.0
      %v514 = vmax.f32 %v386, 0.0
      %v515 = vmax.f32 %v387, 0.0
      %v516 = vmax.f32 %v388, 0.0
      %v517 = vmax.f32 %v389, 0.0
      %v518 = vmax.f32 %v390, 0.0
      %v519 = vmax.f32 %v391, 0.0
      %v520 = vmax.f32 %v392, 0.0
      %v521 = vmax.f32 %v393, 0.0
      %v522 = vmax.f32 %v394, 0.0
      %v523 = vmax.f32 %v395, 0.0
      %v524 = vmax.f32 %v396, 0.0
      %v525 = vmax.f32 %v397, 0.0
      %v526 = vmax.f32 %v398, 0.0
      %v527 = vmax.f32 %v399, 0.0
      %v528 = vmax.f32 %v400, 0.0
      %v529 = vmax.f32 %v401, 0.0
      %v530 = vmax.f32 %v402, 0.0
      %v531 = vmax.f32 %v403, 0.0
      %v532 = vmax.f32 %v404, 0.0
      %v533 = vmax.f32 %v405, 0.0
      %v534 = vmax.f32 %v406, 0.0
      %v535 = vmax.f32 %v407, 0.0
      %v536 = vmax.f32 %v408, 0.0
      %v537 = vmax.f32 %v409, 0.0
      %v538 = vmax.f32 %v410, 0.0
      %v539 = vmax.f32 %v411, 0.0
      %v540 = vmax.f32 %v412, 0.0
      %v541 = vmax.f32 %v413, 0.0
      %v542 = vmax.f32 %v414, 0.0
      %v543 = vmax.f32 %v415, 0.0
      %v544 = vmax.f32 %v416, 0.0
      %v545 = vmax.f32 %v417, 0.0
      %v546 = vmax.f32 %v418, 0.0
      %v547 = vmax.f32 %v419, 0.0
      %v548 = vmax.f32 %v420, 0.0
      %v549 = vmax.f32 %v421, 0.0
      %v550 = vmax.f32 %v422, 0.0
      %v551 = vmax.f32 %v423, 0.0
      %v552 = vmax.f32 %v424, 0.0
      %v553 = vmax.f32 %v425, 0.0
      %v554 = vmax.f32 %v426, 0.0
      %v555 = vmax.f32 %v427, 0.0
      %v556 = vmax.f32 %v428, 0.0
      %v557 = vmax.f32 %v429, 0.0
      %v558 = vmax.f32 %v430, 0.0
      %v559 = vmax.f32 %v431, 0.0
      %v560 = vmax.f32 %v432, 0.0
      %v561 = vmax.f32 %v433, 0.0
      %v562 = vmax.f32 %v434, 0.0
      %v563 = vmax.f32 %v435, 0.0
      %v564 = vmax.f32 %v436, 0.0
      %v565 = vmax.f32 %v437, 0.0
      %v566 = vpack.c.bf16 %v439, %v438
      %v567 = vpack.c.bf16 %v441, %v440
      %v568 = vpack.c.bf16 %v443, %v442
      %v569 = vpack.c.bf16 %v445, %v444
      %v570 = vpack.c.bf16 %v447, %v446
      %v571 = vpack.c.bf16 %v449, %v448
      %v572 = vpack.c.bf16 %v451, %v450
      %v573 = vpack.c.bf16 %v453, %v452
      %v574 = vpack.c.bf16 %v455, %v454
      %v575 = vpack.c.bf16 %v457, %v456
      %v576 = vpack.c.bf16 %v459, %v458
      %v577 = vpack.c.bf16 %v461, %v460
      %v578 = vpack.c.bf16 %v463, %v462
      %v579 = vpack.c.bf16 %v465, %v464
      %v580 = vpack.c.bf16 %v467, %v466
      %v581 = vpack.c.bf16 %v469, %v468
      %v582 = vpack.c.bf16 %v471, %v470
      %v583 = vpack.c.bf16 %v473, %v472
      %v584 = vpack.c.bf16 %v475, %v474
      %v585 = vpack.c.bf16 %v477, %v476
      %v586 = vpack.c.bf16 %v479, %v478
      %v587 = vpack.c.bf16 %v481, %v480
      %v588 = vpack.c.bf16 %v483, %v482
      %v589 = vpack.c.bf16 %v485, %v484
      %v590 = vpack.c.bf16 %v487, %v486
      %v591 = vpack.c.bf16 %v489, %v488
      %v592 = vpack.c.bf16 %v491, %v490
      %v593 = vpack.c.bf16 %v493, %v492
      %v594 = vpack.c.bf16 %v495, %v494
      %v595 = vpack.c.bf16 %v497, %v496
      %v596 = vpack.c.bf16 %v499, %v498
      %v597 = vpack.c.bf16 %v501, %v500
      %v598 = vpack.c.bf16 %v503, %v502
      %v599 = vpack.c.bf16 %v505, %v504
      %v600 = vpack.c.bf16 %v507, %v506
      %v601 = vpack.c.bf16 %v509, %v508
      %v602 = vpack.c.bf16 %v511, %v510
      %v603 = vpack.c.bf16 %v513, %v512
      %v604 = vpack.c.bf16 %v515, %v514
      %v605 = vpack.c.bf16 %v517, %v516
      %v606 = vpack.c.bf16 %v519, %v518
      %v607 = vpack.c.bf16 %v521, %v520
      %v608 = vpack.c.bf16 %v523, %v522
      %v609 = vpack.c.bf16 %v525, %v524
      %v610 = vpack.c.bf16 %v527, %v526
      %v611 = vpack.c.bf16 %v529, %v528
      %v612 = vpack.c.bf16 %v531, %v530
      %v613 = vpack.c.bf16 %v533, %v532
      %v614 = vpack.c.bf16 %v535, %v534
      %v615 = vpack.c.bf16 %v537, %v536
      %v616 = vpack.c.bf16 %v539, %v538
      %v617 = vpack.c.bf16 %v541, %v540
      %v618 = vpack.c.bf16 %v543, %v542
      %v619 = vpack.c.bf16 %v545, %v544
      %v620 = vpack.c.bf16 %v547, %v546
      %v621 = vpack.c.bf16 %v549, %v548
      %v622 = vpack.c.bf16 %v551, %v550
      %v623 = vpack.c.bf16 %v553, %v552
      %v624 = vpack.c.bf16 %v555, %v554
      %v625 = vpack.c.bf16 %v557, %v556
      %v626 = vpack.c.bf16 %v559, %v558
      %v627 = vpack.c.bf16 %v561, %v560
      %v628 = vpack.c.bf16 %v563, %v562
      %v629 = vpack.c.bf16 %v565, %v564
      %v630 = vld [vmem:[%s2] sm:$0xf]
      %v631 = vld [vmem:[%s2 + $0x4] sm:$0xf]
      %v632 = vld [vmem:[%s2 + $0x8] sm:$0xf]
      %v633 = vld [vmem:[%s2 + $0xc] sm:$0xf]
      %v638 = vunpack.c.l.b16 %v630
      %v639 = vunpack.c.l.b16 %v631
      %v640 = vunpack.c.l.b16 %v632
      %v641 = vunpack.c.l.b16 %v633
      %v642 = vpack.c.b16 %v639, %v638
      %v643 = vpack.c.b16 %v641, %v640
      %vm646 = vcmask 261120
      %v648 = vsel %vm646, %v566, 0
      %v651 = vsel %vm646, %v567, 0
      %v654 = vsel %vm646, %v568, 0
      %v657 = vsel %vm646, %v569, 0
      %v660 = vsel %vm646, %v570, 0
      %v663 = vsel %vm646, %v571, 0
      %v666 = vsel %vm646, %v572, 0
      %v669 = vsel %vm646, %v573, 0
      %v672 = vsel %vm646, %v574, 0
      %v675 = vsel %vm646, %v575, 0
      %v678 = vsel %vm646, %v576, 0
      %v681 = vsel %vm646, %v577, 0
      %v684 = vsel %vm646, %v578, 0
      %v687 = vsel %vm646, %v579, 0
      %v690 = vsel %vm646, %v580, 0
      %v693 = vsel %vm646, %v581, 0
      %v696 = vsel %vm646, %v582, 0
      %v699 = vsel %vm646, %v583, 0
      %v702 = vsel %vm646, %v584, 0
      %v705 = vsel %vm646, %v585, 0
      %v708 = vsel %vm646, %v586, 0
      %v711 = vsel %vm646, %v587, 0
      %v714 = vsel %vm646, %v588, 0
      %v717 = vsel %vm646, %v589, 0
      %v720 = vsel %vm646, %v590, 0
      %v723 = vsel %vm646, %v591, 0
      %v726 = vsel %vm646, %v592, 0
      %v729 = vsel %vm646, %v593, 0
      %v732 = vsel %vm646, %v594, 0
      %v735 = vsel %vm646, %v595, 0
      %v738 = vsel %vm646, %v596, 0
      %v741 = vsel %vm646, %v597, 0
      %v744 = vsel %vm646, %v598, 0
      %v747 = vsel %vm646, %v599, 0
      %v750 = vsel %vm646, %v600, 0
      %v753 = vsel %vm646, %v601, 0
      %v756 = vsel %vm646, %v602, 0
      %v759 = vsel %vm646, %v603, 0
      %v762 = vsel %vm646, %v604, 0
      %v765 = vsel %vm646, %v605, 0
      %v768 = vsel %vm646, %v606, 0
      %v771 = vsel %vm646, %v607, 0
      %v774 = vsel %vm646, %v608, 0
      %v777 = vsel %vm646, %v609, 0
      %v780 = vsel %vm646, %v610, 0
      %v783 = vsel %vm646, %v611, 0
      %v786 = vsel %vm646, %v612, 0
      %v789 = vsel %vm646, %v613, 0
      %v792 = vsel %vm646, %v614, 0
      %v795 = vsel %vm646, %v615, 0
      %v798 = vsel %vm646, %v616, 0
      %v801 = vsel %vm646, %v617, 0
      %v804 = vsel %vm646, %v618, 0
      %v807 = vsel %vm646, %v619, 0
      %v810 = vsel %vm646, %v620, 0
      %v813 = vsel %vm646, %v621, 0
      %v816 = vsel %vm646, %v622, 0
      %v819 = vsel %vm646, %v623, 0
      %v822 = vsel %vm646, %v624, 0
      %v825 = vsel %vm646, %v625, 0
      %v828 = vsel %vm646, %v626, 0
      %v831 = vsel %vm646, %v627, 0
      %v834 = vsel %vm646, %v628, 0
      %v837 = vsel %vm646, %v629, 0
      %839 = vmatprep.subr.bf16.mxu0 0
      %840 = vmatpush1.bf16.msra.mxu0 %v642
      %841 = vmatprep.subr.bf16.mxu0 0
      %842 = vmatpush1.bf16.msra.mxu0 %v643
      %843 = vmatprep.subr.bf16.mxu0 0
      %844 = vmatpush1.bf16.msra.mxu0 0
      %845 = vmatprep.subr.bf16.mxu0 0
      %846 = vmatpush1.bf16.msra.mxu0 0
      %847 = vmatprep.subr.bf16.mxu0 0
      %848 = vmatpush1.bf16.msra.mxu0 0
      %849 = vmatprep.subr.bf16.mxu0 0
      %850 = vmatpush1.bf16.msra.mxu0 0
      %851 = vmatprep.subr.bf16.mxu0 0
      %852 = vmatpush1.bf16.msra.mxu0 0
      %853 = vmatprep.subr.bf16.mxu0 0
      %854 = vmatpush1.bf16.msra.mxu0 0
      %855 = vmatprep.subr.bf16.mxu0 0
      %856 = vmatpush1.bf16.msra.mxu0 0
      %857 = vmatprep.subr.bf16.mxu0 0
      %858 = vmatpush1.bf16.msra.mxu0 0
      %859 = vmatprep.subr.bf16.mxu0 0
      %860 = vmatpush1.bf16.msra.mxu0 0
      %861 = vmatprep.subr.bf16.mxu0 0
      %862 = vmatpush1.bf16.msra.mxu0 0
      %863 = vmatprep.subr.bf16.mxu0 0
      %864 = vmatpush1.bf16.msra.mxu0 0
      %865 = vmatprep.subr.bf16.mxu0 0
      %866 = vmatpush1.bf16.msra.mxu0 0
      %867 = vmatprep.subr.bf16.mxu0 0
      %868 = vmatpush1.bf16.msra.mxu0 0
      %869 = vmatprep.subr.bf16.mxu0 0
      %870 = vmatpush1.bf16.msra.mxu0 0
      %871 = vmatprep.mubr.bf16.mxu0 0
      %872 = vmatmul.mubr.bf16.gmra.mrb[0].mxu0 %v648
      %v873 = vpop.f32.mrb[0].mxu0
      %v874 = vadd.f32 0.0, %v873
      %v875 = vpop.f32.mrb[0].mxu0
      %v876 = vpop.f32.mrb[0].mxu0
      %v877 = vadd.f32 0.0, %v876
      %v878 = vpop.f32.mrb[0].mxu0
      %879 = vmatprep.mubr.bf16.mxu0 0
      %880 = vmatmul.mubr.bf16.gmra.mrb[0].mxu0 %v651
      %v881 = vpop.f32.mrb[0].mxu0
      %v882 = vadd.f32 0.0, %v881
      %v883 = vpop.f32.mrb[0].mxu0
      %v884 = vpop.f32.mrb[0].mxu0
      %v885 = vadd.f32 0.0, %v884
      %v886 = vpop.f32.mrb[0].mxu0
      %887 = vmatprep.mubr.bf16.mxu0 0
      %888 = vmatmul.mubr.bf16.gmra.mrb[0].mxu0 %v654
      %v889 = vpop.f32.mrb[0].mxu0
      %v890 = vadd.f32 0.0, %v889
      %v891 = vpop.f32.mrb[0].mxu0
      %v892 = vpop.f32.mrb[0].mxu0
      %v893 = vadd.f32 0.0, %v892
      %v894 = vpop.f32.mrb[0].mxu0
      %895 = vmatprep.mubr.bf16.mxu0 0
      %896 = vmatmul.mubr.bf16.gmra.mrb[0].mxu0 %v657
      %v897 = vpop.f32.mrb[0].mxu0
      %v898 = vadd.f32 0.0, %v897
      %v899 = vpop.f32.mrb[0].mxu0
      %v900 = vpop.f32.mrb[0].mxu0
      %v901 = vadd.f32 0.0, %v900
      %v902 = vpop.f32.mrb[0].mxu0
      %903 = vmatprep.mubr.bf16.mxu0 0
      %904 = vmatmul.mubr.bf16.gmra.mrb[0].mxu0 %v660
      %v905 = vpop.f32.mrb[0].mxu0
      %v906 = vadd.f32 0.0, %v905
      %v907 = vpop.f32.mrb[0].mxu0
      %v908 = vpop.f32.mrb[0].mxu0
      %v909 = vadd.f32 0.0, %v908
      %v910 = vpop.f32.mrb[0].mxu0
      %911 = vmatprep.mubr.bf16.mxu0 0
      %912 = vmatmul.mubr.bf16.gmra.mrb[0].mxu0 %v663
      %v913 = vpop.f32.mrb[0].mxu0
      %v914 = vadd.f32 0.0, %v913
      %v915 = vpop.f32.mrb[0].mxu0
      %v916 = vpop.f32.mrb[0].mxu0
      %v917 = vadd.f32 0.0, %v916
      %v918 = vpop.f32.mrb[0].mxu0
      %919 = vmatprep.mubr.bf16.mxu0 0
      %920 = vmatmul.mubr.bf16.gmra.mrb[0].mxu0 %v666
      %v921 = vpop.f32.mrb[0].mxu0
      %v922 = vadd.f32 0.0, %v921
      %v923 = vpop.f32.mrb[0].mxu0
      %v924 = vpop.f32.mrb[0].mxu0
      %v925 = vadd.f32 0.0, %v924
      %v926 = vpop.f32.mrb[0].mxu0
      %927 = vmatprep.mubr.bf16.mxu0 0
      %928 = vmatmul.mubr.bf16.gmra.mrb[0].mxu0 %v669
      %v929 = vpop.f32.mrb[0].mxu0
      %v930 = vadd.f32 0.0, %v929
      %v931 = vpop.f32.mrb[0].mxu0
      %v932 = vpop.f32.mrb[0].mxu0
      %v933 = vadd.f32 0.0, %v932
      %v934 = vpop.f32.mrb[0].mxu0
      %935 = vmatprep.mubr.bf16.mxu0 0
      %936 = vmatmul.mubr.bf16.gmra.mrb[0].mxu0 %v672
      %v937 = vpop.f32.mrb[0].mxu0
      %v938 = vadd.f32 0.0, %v937
      %v939 = vpop.f32.mrb[0].mxu0
      %v940 = vpop.f32.mrb[0].mxu0
      %v941 = vadd.f32 0.0, %v940
      %v942 = vpop.f32.mrb[0].mxu0
      %943 = vmatprep.mubr.bf16.mxu0 0
      %944 = vmatmul.mubr.bf16.gmra.mrb[0].mxu0 %v675
      %v945 = vpop.f32.mrb[0].mxu0
      %v946 = vadd.f32 0.0, %v945
      %v947 = vpop.f32.mrb[0].mxu0
      %v948 = vpop.f32.mrb[0].mxu0
      %v949 = vadd.f32 0.0, %v948
      %v950 = vpop.f32.mrb[0].mxu0
      %951 = vmatprep.mubr.bf16.mxu0 0
      %952 = vmatmul.mubr.bf16.gmra.mrb[0].mxu0 %v678
      %v953 = vpop.f32.mrb[0].mxu0
      %v954 = vadd.f32 0.0, %v953
      %v955 = vpop.f32.mrb[0].mxu0
      %v956 = vpop.f32.mrb[0].mxu0
      %v957 = vadd.f32 0.0, %v956
      %v958 = vpop.f32.mrb[0].mxu0
      %959 = vmatprep.mubr.bf16.mxu0 0
      %960 = vmatmul.mubr.bf16.gmra.mrb[0].mxu0 %v681
      %v961 = vpop.f32.mrb[0].mxu0
      %v962 = vadd.f32 0.0, %v961
      %v963 = vpop.f32.mrb[0].mxu0
      %v964 = vpop.f32.mrb[0].mxu0
      %v965 = vadd.f32 0.0, %v964
      %v966 = vpop.f32.mrb[0].mxu0
      %967 = vmatprep.mubr.bf16.mxu0 0
      %968 = vmatmul.mubr.bf16.gmra.mrb[0].mxu0 %v684
      %v969 = vpop.f32.mrb[0].mxu0
      %v970 = vadd.f32 0.0, %v969
      %v971 = vpop.f32.mrb[0].mxu0
      %v972 = vpop.f32.mrb[0].mxu0
      %v973 = vadd.f32 0.0, %v972
      %v974 = vpop.f32.mrb[0].mxu0
      %975 = vmatprep.mubr.bf16.mxu0 0
      %976 = vmatmul.mubr.bf16.gmra.mrb[0].mxu0 %v687
      %v977 = vpop.f32.mrb[0].mxu0
      %v978 = vadd.f32 0.0, %v977
      %v979 = vpop.f32.mrb[0].mxu0
      %v980 = vpop.f32.mrb[0].mxu0
      %v981 = vadd.f32 0.0, %v980
      %v982 = vpop.f32.mrb[0].mxu0
      %983 = vmatprep.mubr.bf16.mxu0 0
      %984 = vmatmul.mubr.bf16.gmra.mrb[0].mxu0 %v690
      %v985 = vpop.f32.mrb[0].mxu0
      %v986 = vadd.f32 0.0, %v985
      %v987 = vpop.f32.mrb[0].mxu0
      %v988 = vpop.f32.mrb[0].mxu0
      %v989 = vadd.f32 0.0, %v988
      %v990 = vpop.f32.mrb[0].mxu0
      %991 = vmatprep.mubr.bf16.mxu0 0
      %992 = vmatmul.mubr.bf16.gmra.mrb[0].mxu0 %v693
      %v993 = vpop.f32.mrb[0].mxu0
      %v994 = vadd.f32 0.0, %v993
      %v995 = vpop.f32.mrb[0].mxu0
      %v996 = vpop.f32.mrb[0].mxu0
      %v997 = vadd.f32 0.0, %v996
      %v998 = vpop.f32.mrb[0].mxu0
      %999 = vmatprep.mubr.bf16.mxu0 0
      %1000 = vmatmul.mubr.bf16.gmra.mrb[0].mxu0 %v696
      %v1001 = vpop.f32.mrb[0].mxu0
      %v1002 = vadd.f32 0.0, %v1001
      %v1003 = vpop.f32.mrb[0].mxu0
      %v1004 = vpop.f32.mrb[0].mxu0
      %v1005 = vadd.f32 0.0, %v1004
      %v1006 = vpop.f32.mrb[0].mxu0
      %1007 = vmatprep.mubr.bf16.mxu0 0
      %1008 = vmatmul.mubr.bf16.gmra.mrb[0].mxu0 %v699
      %v1009 = vpop.f32.mrb[0].mxu0
      %v1010 = vadd.f32 0.0, %v1009
      %v1011 = vpop.f32.mrb[0].mxu0
      %v1012 = vpop.f32.mrb[0].mxu0
      %v1013 = vadd.f32 0.0, %v1012
      %v1014 = vpop.f32.mrb[0].mxu0
      %1015 = vmatprep.mubr.bf16.mxu0 0
      %1016 = vmatmul.mubr.bf16.gmra.mrb[0].mxu0 %v702
      %v1017 = vpop.f32.mrb[0].mxu0
      %v1018 = vadd.f32 0.0, %v1017
      %v1019 = vpop.f32.mrb[0].mxu0
      %v1020 = vpop.f32.mrb[0].mxu0
      %v1021 = vadd.f32 0.0, %v1020
      %v1022 = vpop.f32.mrb[0].mxu0
      %1023 = vmatprep.mubr.bf16.mxu0 0
      %1024 = vmatmul.mubr.bf16.gmra.mrb[0].mxu0 %v705
      %v1025 = vpop.f32.mrb[0].mxu0
      %v1026 = vadd.f32 0.0, %v1025
      %v1027 = vpop.f32.mrb[0].mxu0
      %v1028 = vpop.f32.mrb[0].mxu0
      %v1029 = vadd.f32 0.0, %v1028
      %v1030 = vpop.f32.mrb[0].mxu0
      %1031 = vmatprep.mubr.bf16.mxu0 0
      %1032 = vmatmul.mubr.bf16.gmra.mrb[0].mxu0 %v708
      %v1033 = vpop.f32.mrb[0].mxu0
      %v1034 = vadd.f32 0.0, %v1033
      %v1035 = vpop.f32.mrb[0].mxu0
      %v1036 = vpop.f32.mrb[0].mxu0
      %v1037 = vadd.f32 0.0, %v1036
      %v1038 = vpop.f32.mrb[0].mxu0
      %1039 = vmatprep.mubr.bf16.mxu0 0
      %1040 = vmatmul.mubr.bf16.gmra.mrb[0].mxu0 %v711
      %v1041 = vpop.f32.mrb[0].mxu0
      %v1042 = vadd.f32 0.0, %v1041
      %v1043 = vpop.f32.mrb[0].mxu0
      %v1044 = vpop.f32.mrb[0].mxu0
      %v1045 = vadd.f32 0.0, %v1044
      %v1046 = vpop.f32.mrb[0].mxu0
      %1047 = vmatprep.mubr.bf16.mxu0 0
      %1048 = vmatmul.mubr.bf16.gmra.mrb[0].mxu0 %v714
      %v1049 = vpop.f32.mrb[0].mxu0
      %v1050 = vadd.f32 0.0, %v1049
      %v1051 = vpop.f32.mrb[0].mxu0
      %v1052 = vpop.f32.mrb[0].mxu0
      %v1053 = vadd.f32 0.0, %v1052
      %v1054 = vpop.f32.mrb[0].mxu0
      %1055 = vmatprep.mubr.bf16.mxu0 0
      %1056 = vmatmul.mubr.bf16.gmra.mrb[0].mxu0 %v717
      %v1057 = vpop.f32.mrb[0].mxu0
      %v1058 = vadd.f32 0.0, %v1057
      %v1059 = vpop.f32.mrb[0].mxu0
      %v1060 = vpop.f32.mrb[0].mxu0
      %v1061 = vadd.f32 0.0, %v1060
      %v1062 = vpop.f32.mrb[0].mxu0
      %1063 = vmatprep.mubr.bf16.mxu0 0
      %1064 = vmatmul.mubr.bf16.gmra.mrb[0].mxu0 %v720
      %v1065 = vpop.f32.mrb[0].mxu0
      %v1066 = vadd.f32 0.0, %v1065
      %v1067 = vpop.f32.mrb[0].mxu0
      %v1068 = vpop.f32.mrb[0].mxu0
      %v1069 = vadd.f32 0.0, %v1068
      %v1070 = vpop.f32.mrb[0].mxu0
      %1071 = vmatprep.mubr.bf16.mxu0 0
      %1072 = vmatmul.mubr.bf16.gmra.mrb[0].mxu0 %v723
      %v1073 = vpop.f32.mrb[0].mxu0
      %v1074 = vadd.f32 0.0, %v1073
      %v1075 = vpop.f32.mrb[0].mxu0
      %v1076 = vpop.f32.mrb[0].mxu0
      %v1077 = vadd.f32 0.0, %v1076
      %v1078 = vpop.f32.mrb[0].mxu0
      %1079 = vmatprep.mubr.bf16.mxu0 0
      %1080 = vmatmul.mubr.bf16.gmra.mrb[0].mxu0 %v726
      %v1081 = vpop.f32.mrb[0].mxu0
      %v1082 = vadd.f32 0.0, %v1081
      %v1083 = vpop.f32.mrb[0].mxu0
      %v1084 = vpop.f32.mrb[0].mxu0
      %v1085 = vadd.f32 0.0, %v1084
      %v1086 = vpop.f32.mrb[0].mxu0
      %1087 = vmatprep.mubr.bf16.mxu0 0
      %1088 = vmatmul.mubr.bf16.gmra.mrb[0].mxu0 %v729
      %v1089 = vpop.f32.mrb[0].mxu0
      %v1090 = vadd.f32 0.0, %v1089
      %v1091 = vpop.f32.mrb[0].mxu0
      %v1092 = vpop.f32.mrb[0].mxu0
      %v1093 = vadd.f32 0.0, %v1092
      %v1094 = vpop.f32.mrb[0].mxu0
      %1095 = vmatprep.mubr.bf16.mxu0 0
      %1096 = vmatmul.mubr.bf16.gmra.mrb[0].mxu0 %v732
      %v1097 = vpop.f32.mrb[0].mxu0
      %v1098 = vadd.f32 0.0, %v1097
      %v1099 = vpop.f32.mrb[0].mxu0
      %v1100 = vpop.f32.mrb[0].mxu0
      %v1101 = vadd.f32 0.0, %v1100
      %v1102 = vpop.f32.mrb[0].mxu0
      %1103 = vmatprep.mubr.bf16.mxu0 0
      %1104 = vmatmul.mubr.bf16.gmra.mrb[0].mxu0 %v735
      %v1105 = vpop.f32.mrb[0].mxu0
      %v1106 = vadd.f32 0.0, %v1105
      %v1107 = vpop.f32.mrb[0].mxu0
      %v1108 = vpop.f32.mrb[0].mxu0
      %v1109 = vadd.f32 0.0, %v1108
      %v1110 = vpop.f32.mrb[0].mxu0
      %1111 = vmatprep.mubr.bf16.mxu0 0
      %1112 = vmatmul.mubr.bf16.gmra.mrb[0].mxu0 %v738
      %v1113 = vpop.f32.mrb[0].mxu0
      %v1114 = vadd.f32 0.0, %v1113
      %v1115 = vpop.f32.mrb[0].mxu0
      %v1116 = vpop.f32.mrb[0].mxu0
      %v1117 = vadd.f32 0.0, %v1116
      %v1118 = vpop.f32.mrb[0].mxu0
      %1119 = vmatprep.mubr.bf16.mxu0 0
      %1120 = vmatmul.mubr.bf16.gmra.mrb[0].mxu0 %v741
      %v1121 = vpop.f32.mrb[0].mxu0
      %v1122 = vadd.f32 0.0, %v1121
      %v1123 = vpop.f32.mrb[0].mxu0
      %v1124 = vpop.f32.mrb[0].mxu0
      %v1125 = vadd.f32 0.0, %v1124
      %v1126 = vpop.f32.mrb[0].mxu0
      %1127 = vmatprep.mubr.bf16.mxu0 0
      %1128 = vmatmul.mubr.bf16.gmra.mrb[0].mxu0 %v744
      %v1129 = vpop.f32.mrb[0].mxu0
      %v1130 = vadd.f32 0.0, %v1129
      %v1131 = vpop.f32.mrb[0].mxu0
      %v1132 = vpop.f32.mrb[0].mxu0
      %v1133 = vadd.f32 0.0, %v1132
      %v1134 = vpop.f32.mrb[0].mxu0
      %1135 = vmatprep.mubr.bf16.mxu0 0
      %1136 = vmatmul.mubr.bf16.gmra.mrb[0].mxu0 %v747
      %v1137 = vpop.f32.mrb[0].mxu0
      %v1138 = vadd.f32 0.0, %v1137
      %v1139 = vpop.f32.mrb[0].mxu0
      %v1140 = vpop.f32.mrb[0].mxu0
      %v1141 = vadd.f32 0.0, %v1140
      %v1142 = vpop.f32.mrb[0].mxu0
      %1143 = vmatprep.mubr.bf16.mxu0 0
      %1144 = vmatmul.mubr.bf16.gmra.mrb[0].mxu0 %v750
      %v1145 = vpop.f32.mrb[0].mxu0
      %v1146 = vadd.f32 0.0, %v1145
      %v1147 = vpop.f32.mrb[0].mxu0
      %v1148 = vpop.f32.mrb[0].mxu0
      %v1149 = vadd.f32 0.0, %v1148
      %v1150 = vpop.f32.mrb[0].mxu0
      %1151 = vmatprep.mubr.bf16.mxu0 0
      %1152 = vmatmul.mubr.bf16.gmra.mrb[0].mxu0 %v753
      %v1153 = vpop.f32.mrb[0].mxu0
      %v1154 = vadd.f32 0.0, %v1153
      %v1155 = vpop.f32.mrb[0].mxu0
      %v1156 = vpop.f32.mrb[0].mxu0
      %v1157 = vadd.f32 0.0, %v1156
      %v1158 = vpop.f32.mrb[0].mxu0
      %1159 = vmatprep.mubr.bf16.mxu0 0
      %1160 = vmatmul.mubr.bf16.gmra.mrb[0].mxu0 %v756
      %v1161 = vpop.f32.mrb[0].mxu0
      %v1162 = vadd.f32 0.0, %v1161
      %v1163 = vpop.f32.mrb[0].mxu0
      %v1164 = vpop.f32.mrb[0].mxu0
      %v1165 = vadd.f32 0.0, %v1164
      %v1166 = vpop.f32.mrb[0].mxu0
      %1167 = vmatprep.mubr.bf16.mxu0 0
      %1168 = vmatmul.mubr.bf16.gmra.mrb[0].mxu0 %v759
      %v1169 = vpop.f32.mrb[0].mxu0
      %v1170 = vadd.f32 0.0, %v1169
      %v1171 = vpop.f32.mrb[0].mxu0
      %v1172 = vpop.f32.mrb[0].mxu0
      %v1173 = vadd.f32 0.0, %v1172
      %v1174 = vpop.f32.mrb[0].mxu0
      %1175 = vmatprep.mubr.bf16.mxu0 0
      %1176 = vmatmul.mubr.bf16.gmra.mrb[0].mxu0 %v762
      %v1177 = vpop.f32.mrb[0].mxu0
      %v1178 = vadd.f32 0.0, %v1177
      %v1179 = vpop.f32.mrb[0].mxu0
      %v1180 = vpop.f32.mrb[0].mxu0
      %v1181 = vadd.f32 0.0, %v1180
      %v1182 = vpop.f32.mrb[0].mxu0
      %1183 = vmatprep.mubr.bf16.mxu0 0
      %1184 = vmatmul.mubr.bf16.gmra.mrb[0].mxu0 %v765
      %v1185 = vpop.f32.mrb[0].mxu0
      %v1186 = vadd.f32 0.0, %v1185
      %v1187 = vpop.f32.mrb[0].mxu0
      %v1188 = vpop.f32.mrb[0].mxu0
      %v1189 = vadd.f32 0.0, %v1188
      %v1190 = vpop.f32.mrb[0].mxu0
      %1191 = vmatprep.mubr.bf16.mxu0 0
      %1192 = vmatmul.mubr.bf16.gmra.mrb[0].mxu0 %v768
      %v1193 = vpop.f32.mrb[0].mxu0
      %v1194 = vadd.f32 0.0, %v1193
      %v1195 = vpop.f32.mrb[0].mxu0
      %v1196 = vpop.f32.mrb[0].mxu0
      %v1197 = vadd.f32 0.0, %v1196
      %v1198 = vpop.f32.mrb[0].mxu0
      %1199 = vmatprep.mubr.bf16.mxu0 0
      %1200 = vmatmul.mubr.bf16.gmra.mrb[0].mxu0 %v771
      %v1201 = vpop.f32.mrb[0].mxu0
      %v1202 = vadd.f32 0.0, %v1201
      %v1203 = vpop.f32.mrb[0].mxu0
      %v1204 = vpop.f32.mrb[0].mxu0
      %v1205 = vadd.f32 0.0, %v1204
      %v1206 = vpop.f32.mrb[0].mxu0
      %1207 = vmatprep.mubr.bf16.mxu0 0
      %1208 = vmatmul.mubr.bf16.gmra.mrb[0].mxu0 %v774
      %v1209 = vpop.f32.mrb[0].mxu0
      %v1210 = vadd.f32 0.0, %v1209
      %v1211 = vpop.f32.mrb[0].mxu0
      %v1212 = vpop.f32.mrb[0].mxu0
      %v1213 = vadd.f32 0.0, %v1212
      %v1214 = vpop.f32.mrb[0].mxu0
      %1215 = vmatprep.mubr.bf16.mxu0 0
      %1216 = vmatmul.mubr.bf16.gmra.mrb[0].mxu0 %v777
      %v1217 = vpop.f32.mrb[0].mxu0
      %v1218 = vadd.f32 0.0, %v1217
      %v1219 = vpop.f32.mrb[0].mxu0
      %v1220 = vpop.f32.mrb[0].mxu0
      %v1221 = vadd.f32 0.0, %v1220
      %v1222 = vpop.f32.mrb[0].mxu0
      %1223 = vmatprep.mubr.bf16.mxu0 0
      %1224 = vmatmul.mubr.bf16.gmra.mrb[0].mxu0 %v780
      %v1225 = vpop.f32.mrb[0].mxu0
      %v1226 = vadd.f32 0.0, %v1225
      %v1227 = vpop.f32.mrb[0].mxu0
      %v1228 = vpop.f32.mrb[0].mxu0
      %v1229 = vadd.f32 0.0, %v1228
      %v1230 = vpop.f32.mrb[0].mxu0
      %1231 = vmatprep.mubr.bf16.mxu0 0
      %1232 = vmatmul.mubr.bf16.gmra.mrb[0].mxu0 %v783
      %v1233 = vpop.f32.mrb[0].mxu0
      %v1234 = vadd.f32 0.0, %v1233
      %v1235 = vpop.f32.mrb[0].mxu0
      %v1236 = vpop.f32.mrb[0].mxu0
      %v1237 = vadd.f32 0.0, %v1236
      %v1238 = vpop.f32.mrb[0].mxu0
      %1239 = vmatprep.mubr.bf16.mxu0 0
      %1240 = vmatmul.mubr.bf16.gmra.mrb[0].mxu0 %v786
      %v1241 = vpop.f32.mrb[0].mxu0
      %v1242 = vadd.f32 0.0, %v1241
      %v1243 = vpop.f32.mrb[0].mxu0
      %v1244 = vpop.f32.mrb[0].mxu0
      %v1245 = vadd.f32 0.0, %v1244
      %v1246 = vpop.f32.mrb[0].mxu0
      %1247 = vmatprep.mubr.bf16.mxu0 0
      %1248 = vmatmul.mubr.bf16.gmra.mrb[0].mxu0 %v789
      %v1249 = vpop.f32.mrb[0].mxu0
      %v1250 = vadd.f32 0.0, %v1249
      %v1251 = vpop.f32.mrb[0].mxu0
      %v1252 = vpop.f32.mrb[0].mxu0
      %v1253 = vadd.f32 0.0, %v1252
      %v1254 = vpop.f32.mrb[0].mxu0
      %1255 = vmatprep.mubr.bf16.mxu0 0
      %1256 = vmatmul.mubr.bf16.gmra.mrb[0].mxu0 %v792
      %v1257 = vpop.f32.mrb[0].mxu0
      %v1258 = vadd.f32 0.0, %v1257
      %v1259 = vpop.f32.mrb[0].mxu0
      %v1260 = vpop.f32.mrb[0].mxu0
      %v1261 = vadd.f32 0.0, %v1260
      %v1262 = vpop.f32.mrb[0].mxu0
      %1263 = vmatprep.mubr.bf16.mxu0 0
      %1264 = vmatmul.mubr.bf16.gmra.mrb[0].mxu0 %v795
      %v1265 = vpop.f32.mrb[0].mxu0
      %v1266 = vadd.f32 0.0, %v1265
      %v1267 = vpop.f32.mrb[0].mxu0
      %v1268 = vpop.f32.mrb[0].mxu0
      %v1269 = vadd.f32 0.0, %v1268
      %v1270 = vpop.f32.mrb[0].mxu0
      %1271 = vmatprep.mubr.bf16.mxu0 0
      %1272 = vmatmul.mubr.bf16.gmra.mrb[0].mxu0 %v798
      %v1273 = vpop.f32.mrb[0].mxu0
      %v1274 = vadd.f32 0.0, %v1273
      %v1275 = vpop.f32.mrb[0].mxu0
      %v1276 = vpop.f32.mrb[0].mxu0
      %v1277 = vadd.f32 0.0, %v1276
      %v1278 = vpop.f32.mrb[0].mxu0
      %1279 = vmatprep.mubr.bf16.mxu0 0
      %1280 = vmatmul.mubr.bf16.gmra.mrb[0].mxu0 %v801
      %v1281 = vpop.f32.mrb[0].mxu0
      %v1282 = vadd.f32 0.0, %v1281
      %v1283 = vpop.f32.mrb[0].mxu0
      %v1284 = vpop.f32.mrb[0].mxu0
      %v1285 = vadd.f32 0.0, %v1284
      %v1286 = vpop.f32.mrb[0].mxu0
      %1287 = vmatprep.mubr.bf16.mxu0 0
      %1288 = vmatmul.mubr.bf16.gmra.mrb[0].mxu0 %v804
      %v1289 = vpop.f32.mrb[0].mxu0
      %v1290 = vadd.f32 0.0, %v1289
      %v1291 = vpop.f32.mrb[0].mxu0
      %v1292 = vpop.f32.mrb[0].mxu0
      %v1293 = vadd.f32 0.0, %v1292
      %v1294 = vpop.f32.mrb[0].mxu0
      %1295 = vmatprep.mubr.bf16.mxu0 0
      %1296 = vmatmul.mubr.bf16.gmra.mrb[0].mxu0 %v807
      %v1297 = vpop.f32.mrb[0].mxu0
      %v1298 = vadd.f32 0.0, %v1297
      %v1299 = vpop.f32.mrb[0].mxu0
      %v1300 = vpop.f32.mrb[0].mxu0
      %v1301 = vadd.f32 0.0, %v1300
      %v1302 = vpop.f32.mrb[0].mxu0
      %1303 = vmatprep.mubr.bf16.mxu0 0
      %1304 = vmatmul.mubr.bf16.gmra.mrb[0].mxu0 %v810
      %v1305 = vpop.f32.mrb[0].mxu0
      %v1306 = vadd.f32 0.0, %v1305
      %v1307 = vpop.f32.mrb[0].mxu0
      %v1308 = vpop.f32.mrb[0].mxu0
      %v1309 = vadd.f32 0.0, %v1308
      %v1310 = vpop.f32.mrb[0].mxu0
      %1311 = vmatprep.mubr.bf16.mxu0 0
      %1312 = vmatmul.mubr.bf16.gmra.mrb[0].mxu0 %v813
      %v1313 = vpop.f32.mrb[0].mxu0
      %v1314 = vadd.f32 0.0, %v1313
      %v1315 = vpop.f32.mrb[0].mxu0
      %v1316 = vpop.f32.mrb[0].mxu0
      %v1317 = vadd.f32 0.0, %v1316
      %v1318 = vpop.f32.mrb[0].mxu0
      %1319 = vmatprep.mubr.bf16.mxu0 0
      %1320 = vmatmul.mubr.bf16.gmra.mrb[0].mxu0 %v816
      %v1321 = vpop.f32.mrb[0].mxu0
      %v1322 = vadd.f32 0.0, %v1321
      %v1323 = vpop.f32.mrb[0].mxu0
      %v1324 = vpop.f32.mrb[0].mxu0
      %v1325 = vadd.f32 0.0, %v1324
      %v1326 = vpop.f32.mrb[0].mxu0
      %1327 = vmatprep.mubr.bf16.mxu0 0
      %1328 = vmatmul.mubr.bf16.gmra.mrb[0].mxu0 %v819
      %v1329 = vpop.f32.mrb[0].mxu0
      %v1330 = vadd.f32 0.0, %v1329
      %v1331 = vpop.f32.mrb[0].mxu0
      %v1332 = vpop.f32.mrb[0].mxu0
      %v1333 = vadd.f32 0.0, %v1332
      %v1334 = vpop.f32.mrb[0].mxu0
      %1335 = vmatprep.mubr.bf16.mxu0 0
      %1336 = vmatmul.mubr.bf16.gmra.mrb[0].mxu0 %v822
      %v1337 = vpop.f32.mrb[0].mxu0
      %v1338 = vadd.f32 0.0, %v1337
      %v1339 = vpop.f32.mrb[0].mxu0
      %v1340 = vpop.f32.mrb[0].mxu0
      %v1341 = vadd.f32 0.0, %v1340
      %v1342 = vpop.f32.mrb[0].mxu0
      %1343 = vmatprep.mubr.bf16.mxu0 0
      %1344 = vmatmul.mubr.bf16.gmra.mrb[0].mxu0 %v825
      %v1345 = vpop.f32.mrb[0].mxu0
      %v1346 = vadd.f32 0.0, %v1345
      %v1347 = vpop.f32.mrb[0].mxu0
      %v1348 = vpop.f32.mrb[0].mxu0
      %v1349 = vadd.f32 0.0, %v1348
      %v1350 = vpop.f32.mrb[0].mxu0
      %1351 = vmatprep.mubr.bf16.mxu0 0
      %1352 = vmatmul.mubr.bf16.gmra.mrb[0].mxu0 %v828
      %v1353 = vpop.f32.mrb[0].mxu0
      %v1354 = vadd.f32 0.0, %v1353
      %v1355 = vpop.f32.mrb[0].mxu0
      %v1356 = vpop.f32.mrb[0].mxu0
      %v1357 = vadd.f32 0.0, %v1356
      %v1358 = vpop.f32.mrb[0].mxu0
      %1359 = vmatprep.mubr.bf16.mxu0 0
      %1360 = vmatmul.mubr.bf16.gmra.mrb[0].mxu0 %v831
      %v1361 = vpop.f32.mrb[0].mxu0
      %v1362 = vadd.f32 0.0, %v1361
      %v1363 = vpop.f32.mrb[0].mxu0
      %v1364 = vpop.f32.mrb[0].mxu0
      %v1365 = vadd.f32 0.0, %v1364
      %v1366 = vpop.f32.mrb[0].mxu0
      %1367 = vmatprep.mubr.bf16.mxu0 0
      %1368 = vmatmul.mubr.bf16.gmra.mrb[0].mxu0 %v834
      %v1369 = vpop.f32.mrb[0].mxu0
      %v1370 = vadd.f32 0.0, %v1369
      %v1371 = vpop.f32.mrb[0].mxu0
      %v1372 = vpop.f32.mrb[0].mxu0
      %v1373 = vadd.f32 0.0, %v1372
      %v1374 = vpop.f32.mrb[0].mxu0
      %1375 = vmatprep.mubr.bf16.mxu0 0
      %1376 = vmatmul.mubr.bf16.gmra.mrb[0].mxu0 %v837
      %v1377 = vpop.f32.mrb[0].mxu0
      %v1378 = vadd.f32 0.0, %v1377
      %v1379 = vpop.f32.mrb[0].mxu0
      %v1380 = vpop.f32.mrb[0].mxu0
      %v1381 = vadd.f32 0.0, %v1380
      %v1382 = vpop.f32.mrb[0].mxu0
      %1383 = vdwg.mxu0
      %v1384 = vpack.c.bf16 %v877, %v874
      %v1385 = vpack.c.bf16 %v885, %v882
      %v1386 = vpack.c.bf16 %v893, %v890
      %v1387 = vpack.c.bf16 %v901, %v898
      %v1388 = vpack.c.bf16 %v909, %v906
      %v1389 = vpack.c.bf16 %v917, %v914
      %v1390 = vpack.c.bf16 %v925, %v922
      %v1391 = vpack.c.bf16 %v933, %v930
      %v1392 = vpack.c.bf16 %v941, %v938
      %v1393 = vpack.c.bf16 %v949, %v946
      %v1394 = vpack.c.bf16 %v957, %v954
      %v1395 = vpack.c.bf16 %v965, %v962
      %v1396 = vpack.c.bf16 %v973, %v970
      %v1397 = vpack.c.bf16 %v981, %v978
      %v1398 = vpack.c.bf16 %v989, %v986
      %v1399 = vpack.c.bf16 %v997, %v994
      %v1400 = vpack.c.bf16 %v1005, %v1002
      %v1401 = vpack.c.bf16 %v1013, %v1010
      %v1402 = vpack.c.bf16 %v1021, %v1018
      %v1403 = vpack.c.bf16 %v1029, %v1026
      %v1404 = vpack.c.bf16 %v1037, %v1034
      %v1405 = vpack.c.bf16 %v1045, %v1042
      %v1406 = vpack.c.bf16 %v1053, %v1050
      %v1407 = vpack.c.bf16 %v1061, %v1058
      %v1408 = vpack.c.bf16 %v1069, %v1066
      %v1409 = vpack.c.bf16 %v1077, %v1074
      %v1410 = vpack.c.bf16 %v1085, %v1082
      %v1411 = vpack.c.bf16 %v1093, %v1090
      %v1412 = vpack.c.bf16 %v1101, %v1098
      %v1413 = vpack.c.bf16 %v1109, %v1106
      %v1414 = vpack.c.bf16 %v1117, %v1114
      %v1415 = vpack.c.bf16 %v1125, %v1122
      %v1416 = vpack.c.bf16 %v1133, %v1130
      %v1417 = vpack.c.bf16 %v1141, %v1138
      %v1418 = vpack.c.bf16 %v1149, %v1146
      %v1419 = vpack.c.bf16 %v1157, %v1154
      %v1420 = vpack.c.bf16 %v1165, %v1162
      %v1421 = vpack.c.bf16 %v1173, %v1170
      %v1422 = vpack.c.bf16 %v1181, %v1178
      %v1423 = vpack.c.bf16 %v1189, %v1186
      %v1424 = vpack.c.bf16 %v1197, %v1194
      %v1425 = vpack.c.bf16 %v1205, %v1202
      %v1426 = vpack.c.bf16 %v1213, %v1210
      %v1427 = vpack.c.bf16 %v1221, %v1218
      %v1428 = vpack.c.bf16 %v1229, %v1226
      %v1429 = vpack.c.bf16 %v1237, %v1234
      %v1430 = vpack.c.bf16 %v1245, %v1242
      %v1431 = vpack.c.bf16 %v1253, %v1250
      %v1432 = vpack.c.bf16 %v1261, %v1258
      %v1433 = vpack.c.bf16 %v1269, %v1266
      %v1434 = vpack.c.bf16 %v1277, %v1274
      %v1435 = vpack.c.bf16 %v1285, %v1282
      %v1436 = vpack.c.bf16 %v1293, %v1290
      %v1437 = vpack.c.bf16 %v1301, %v1298
      %v1438 = vpack.c.bf16 %v1309, %v1306
      %v1439 = vpack.c.bf16 %v1317, %v1314
      %v1440 = vpack.c.bf16 %v1325, %v1322
      %v1441 = vpack.c.bf16 %v1333, %v1330
      %v1442 = vpack.c.bf16 %v1341, %v1338
      %v1443 = vpack.c.bf16 %v1349, %v1346
      %v1444 = vpack.c.bf16 %v1357, %v1354
      %v1445 = vpack.c.bf16 %v1365, %v1362
      %v1446 = vpack.c.bf16 %v1373, %v1370
      %v1447 = vpack.c.bf16 %v1381, %v1378
      %v1512 = vunpack.c.l.b16 %v1384
      %v1513 = vunpack.c.h.b16 %v1384
      %v1514 = vunpack.c.l.b16 %v1385
      %v1515 = vunpack.c.h.b16 %v1385
      %v1516 = vunpack.c.l.b16 %v1386
      %v1517 = vunpack.c.h.b16 %v1386
      %v1518 = vunpack.c.l.b16 %v1387
      %v1519 = vunpack.c.h.b16 %v1387
      %v1520 = vunpack.c.l.b16 %v1388
      %v1521 = vunpack.c.h.b16 %v1388
      %v1522 = vunpack.c.l.b16 %v1389
      %v1523 = vunpack.c.h.b16 %v1389
      %v1524 = vunpack.c.l.b16 %v1390
      %v1525 = vunpack.c.h.b16 %v1390
      %v1526 = vunpack.c.l.b16 %v1391
      %v1527 = vunpack.c.h.b16 %v1391
      %v1528 = vunpack.c.l.b16 %v1392
      %v1529 = vunpack.c.h.b16 %v1392
      %v1530 = vunpack.c.l.b16 %v1393
      %v1531 = vunpack.c.h.b16 %v1393
      %v1532 = vunpack.c.l.b16 %v1394
      %v1533 = vunpack.c.h.b16 %v1394
      %v1534 = vunpack.c.l.b16 %v1395
      %v1535 = vunpack.c.h.b16 %v1395
      %v1536 = vunpack.c.l.b16 %v1396
      %v1537 = vunpack.c.h.b16 %v1396
      %v1538 = vunpack.c.l.b16 %v1397
      %v1539 = vunpack.c.h.b16 %v1397
      %v1540 = vunpack.c.l.b16 %v1398
      %v1541 = vunpack.c.h.b16 %v1398
      %v1542 = vunpack.c.l.b16 %v1399
      %v1543 = vunpack.c.h.b16 %v1399
      %v1544 = vunpack.c.l.b16 %v1400
      %v1545 = vunpack.c.h.b16 %v1400
      %v1546 = vunpack.c.l.b16 %v1401
      %v1547 = vunpack.c.h.b16 %v1401
      %v1548 = vunpack.c.l.b16 %v1402
      %v1549 = vunpack.c.h.b16 %v1402
      %v1550 = vunpack.c.l.b16 %v1403
      %v1551 = vunpack.c.h.b16 %v1403
      %v1552 = vunpack.c.l.b16 %v1404
      %v1553 = vunpack.c.h.b16 %v1404
      %v1554 = vunpack.c.l.b16 %v1405
      %v1555 = vunpack.c.h.b16 %v1405
      %v1556 = vunpack.c.l.b16 %v1406
      %v1557 = vunpack.c.h.b16 %v1406
      %v1558 = vunpack.c.l.b16 %v1407
      %v1559 = vunpack.c.h.b16 %v1407
      %v1560 = vunpack.c.l.b16 %v1408
      %v1561 = vunpack.c.h.b16 %v1408
      %v1562 = vunpack.c.l.b16 %v1409
      %v1563 = vunpack.c.h.b16 %v1409
      %v1564 = vunpack.c.l.b16 %v1410
      %v1565 = vunpack.c.h.b16 %v1410
      %v1566 = vunpack.c.l.b16 %v1411
      %v1567 = vunpack.c.h.b16 %v1411
      %v1568 = vunpack.c.l.b16 %v1412
      %v1569 = vunpack.c.h.b16 %v1412
      %v1570 = vunpack.c.l.b16 %v1413
      %v1571 = vunpack.c.h.b16 %v1413
      %v1572 = vunpack.c.l.b16 %v1414
      %v1573 = vunpack.c.h.b16 %v1414
      %v1574 = vunpack.c.l.b16 %v1415
      %v1575 = vunpack.c.h.b16 %v1415
      %v1576 = vunpack.c.l.b16 %v1416
      %v1577 = vunpack.c.h.b16 %v1416
      %v1578 = vunpack.c.l.b16 %v1417
      %v1579 = vunpack.c.h.b16 %v1417
      %v1580 = vunpack.c.l.b16 %v1418
      %v1581 = vunpack.c.h.b16 %v1418
      %v1582 = vunpack.c.l.b16 %v1419
      %v1583 = vunpack.c.h.b16 %v1419
      %v1584 = vunpack.c.l.b16 %v1420
      %v1585 = vunpack.c.h.b16 %v1420
      %v1586 = vunpack.c.l.b16 %v1421
      %v1587 = vunpack.c.h.b16 %v1421
      %v1588 = vunpack.c.l.b16 %v1422
      %v1589 = vunpack.c.h.b16 %v1422
      %v1590 = vunpack.c.l.b16 %v1423
      %v1591 = vunpack.c.h.b16 %v1423
      %v1592 = vunpack.c.l.b16 %v1424
      %v1593 = vunpack.c.h.b16 %v1424
      %v1594 = vunpack.c.l.b16 %v1425
      %v1595 = vunpack.c.h.b16 %v1425
      %v1596 = vunpack.c.l.b16 %v1426
      %v1597 = vunpack.c.h.b16 %v1426
      %v1598 = vunpack.c.l.b16 %v1427
      %v1599 = vunpack.c.h.b16 %v1427
      %v1600 = vunpack.c.l.b16 %v1428
      %v1601 = vunpack.c.h.b16 %v1428
      %v1602 = vunpack.c.l.b16 %v1429
      %v1603 = vunpack.c.h.b16 %v1429
      %v1604 = vunpack.c.l.b16 %v1430
      %v1605 = vunpack.c.h.b16 %v1430
      %v1606 = vunpack.c.l.b16 %v1431
      %v1607 = vunpack.c.h.b16 %v1431
      %v1608 = vunpack.c.l.b16 %v1432
      %v1609 = vunpack.c.h.b16 %v1432
      %v1610 = vunpack.c.l.b16 %v1433
      %v1611 = vunpack.c.h.b16 %v1433
      %v1612 = vunpack.c.l.b16 %v1434
      %v1613 = vunpack.c.h.b16 %v1434
      %v1614 = vunpack.c.l.b16 %v1435
      %v1615 = vunpack.c.h.b16 %v1435
      %v1616 = vunpack.c.l.b16 %v1436
      %v1617 = vunpack.c.h.b16 %v1436
      %v1618 = vunpack.c.l.b16 %v1437
      %v1619 = vunpack.c.h.b16 %v1437
      %v1620 = vunpack.c.l.b16 %v1438
      %v1621 = vunpack.c.h.b16 %v1438
      %v1622 = vunpack.c.l.b16 %v1439
      %v1623 = vunpack.c.h.b16 %v1439
      %v1624 = vunpack.c.l.b16 %v1440
      %v1625 = vunpack.c.h.b16 %v1440
      %v1626 = vunpack.c.l.b16 %v1441
      %v1627 = vunpack.c.h.b16 %v1441
      %v1628 = vunpack.c.l.b16 %v1442
      %v1629 = vunpack.c.h.b16 %v1442
      %v1630 = vunpack.c.l.b16 %v1443
      %v1631 = vunpack.c.h.b16 %v1443
      %v1632 = vunpack.c.l.b16 %v1444
      %v1633 = vunpack.c.h.b16 %v1444
      %v1634 = vunpack.c.l.b16 %v1445
      %v1635 = vunpack.c.h.b16 %v1445
      %v1636 = vunpack.c.l.b16 %v1446
      %v1637 = vunpack.c.h.b16 %v1446
      %v1638 = vunpack.c.l.b16 %v1447
      %v1639 = vunpack.c.h.b16 %v1447
      %v1640 = vpack.c.b16 %v1512, %v1512
      %v1641 = vpack.c.b16 %v1513, %v1513
      %v1642 = vpack.c.b16 %v1514, %v1514
      %v1643 = vpack.c.b16 %v1515, %v1515
      %v1644 = vpack.c.b16 %v1516, %v1516
      %v1645 = vpack.c.b16 %v1517, %v1517
      %v1646 = vpack.c.b16 %v1518, %v1518
      %v1647 = vpack.c.b16 %v1519, %v1519
      %v1648 = vpack.c.b16 %v1520, %v1520
      %v1649 = vpack.c.b16 %v1521, %v1521
      %v1650 = vpack.c.b16 %v1522, %v1522
      %v1651 = vpack.c.b16 %v1523, %v1523
      %v1652 = vpack.c.b16 %v1524, %v1524
      %v1653 = vpack.c.b16 %v1525, %v1525
      %v1654 = vpack.c.b16 %v1526, %v1526
      %v1655 = vpack.c.b16 %v1527, %v1527
      %v1656 = vpack.c.b16 %v1528, %v1528
      %v1657 = vpack.c.b16 %v1529, %v1529
      %v1658 = vpack.c.b16 %v1530, %v1530
      %v1659 = vpack.c.b16 %v1531, %v1531
      %v1660 = vpack.c.b16 %v1532, %v1532
      %v1661 = vpack.c.b16 %v1533, %v1533
      %v1662 = vpack.c.b16 %v1534, %v1534
      %v1663 = vpack.c.b16 %v1535, %v1535
      %v1664 = vpack.c.b16 %v1536, %v1536
      %v1665 = vpack.c.b16 %v1537, %v1537
      %v1666 = vpack.c.b16 %v1538, %v1538
      %v1667 = vpack.c.b16 %v1539, %v1539
      %v1668 = vpack.c.b16 %v1540, %v1540
      %v1669 = vpack.c.b16 %v1541, %v1541
      %v1670 = vpack.c.b16 %v1542, %v1542
      %v1671 = vpack.c.b16 %v1543, %v1543
      %v1672 = vpack.c.b16 %v1544, %v1544
      %v1673 = vpack.c.b16 %v1545, %v1545
      %v1674 = vpack.c.b16 %v1546, %v1546
      %v1675 = vpack.c.b16 %v1547, %v1547
      %v1676 = vpack.c.b16 %v1548, %v1548
      %v1677 = vpack.c.b16 %v1549, %v1549
      %v1678 = vpack.c.b16 %v1550, %v1550
      %v1679 = vpack.c.b16 %v1551, %v1551
      %v1680 = vpack.c.b16 %v1552, %v1552
      %v1681 = vpack.c.b16 %v1553, %v1553
      %v1682 = vpack.c.b16 %v1554, %v1554
      %v1683 = vpack.c.b16 %v1555, %v1555
      %v1684 = vpack.c.b16 %v1556, %v1556
      %v1685 = vpack.c.b16 %v1557, %v1557
      %v1686 = vpack.c.b16 %v1558, %v1558
      %v1687 = vpack.c.b16 %v1559, %v1559
      %v1688 = vpack.c.b16 %v1560, %v1560
      %v1689 = vpack.c.b16 %v1561, %v1561
      %v1690 = vpack.c.b16 %v1562, %v1562
      %v1691 = vpack.c.b16 %v1563, %v1563
      %v1692 = vpack.c.b16 %v1564, %v1564
      %v1693 = vpack.c.b16 %v1565, %v1565
      %v1694 = vpack.c.b16 %v1566, %v1566
      %v1695 = vpack.c.b16 %v1567, %v1567
      %v1696 = vpack.c.b16 %v1568, %v1568
      %v1697 = vpack.c.b16 %v1569, %v1569
      %v1698 = vpack.c.b16 %v1570, %v1570
      %v1699 = vpack.c.b16 %v1571, %v1571
      %v1700 = vpack.c.b16 %v1572, %v1572
      %v1701 = vpack.c.b16 %v1573, %v1573
      %v1702 = vpack.c.b16 %v1574, %v1574
      %v1703 = vpack.c.b16 %v1575, %v1575
      %v1704 = vpack.c.b16 %v1576, %v1576
      %v1705 = vpack.c.b16 %v1577, %v1577
      %v1706 = vpack.c.b16 %v1578, %v1578
      %v1707 = vpack.c.b16 %v1579, %v1579
      %v1708 = vpack.c.b16 %v1580, %v1580
      %v1709 = vpack.c.b16 %v1581, %v1581
      %v1710 = vpack.c.b16 %v1582, %v1582
      %v1711 = vpack.c.b16 %v1583, %v1583
      %v1712 = vpack.c.b16 %v1584, %v1584
      %v1713 = vpack.c.b16 %v1585, %v1585
      %v1714 = vpack.c.b16 %v1586, %v1586
      %v1715 = vpack.c.b16 %v1587, %v1587
      %v1716 = vpack.c.b16 %v1588, %v1588
      %v1717 = vpack.c.b16 %v1589, %v1589
      %v1718 = vpack.c.b16 %v1590, %v1590
      %v1719 = vpack.c.b16 %v1591, %v1591
      %v1720 = vpack.c.b16 %v1592, %v1592
      %v1721 = vpack.c.b16 %v1593, %v1593
      %v1722 = vpack.c.b16 %v1594, %v1594
      %v1723 = vpack.c.b16 %v1595, %v1595
      %v1724 = vpack.c.b16 %v1596, %v1596
      %v1725 = vpack.c.b16 %v1597, %v1597
      %v1726 = vpack.c.b16 %v1598, %v1598
      %v1727 = vpack.c.b16 %v1599, %v1599
      %v1728 = vpack.c.b16 %v1600, %v1600
      %v1729 = vpack.c.b16 %v1601, %v1601
      %v1730 = vpack.c.b16 %v1602, %v1602
      %v1731 = vpack.c.b16 %v1603, %v1603
      %v1732 = vpack.c.b16 %v1604, %v1604
      %v1733 = vpack.c.b16 %v1605, %v1605
      %v1734 = vpack.c.b16 %v1606, %v1606
      %v1735 = vpack.c.b16 %v1607, %v1607
      %v1736 = vpack.c.b16 %v1608, %v1608
      %v1737 = vpack.c.b16 %v1609, %v1609
      %v1738 = vpack.c.b16 %v1610, %v1610
      %v1739 = vpack.c.b16 %v1611, %v1611
      %v1740 = vpack.c.b16 %v1612, %v1612
      %v1741 = vpack.c.b16 %v1613, %v1613
      %v1742 = vpack.c.b16 %v1614, %v1614
      %v1743 = vpack.c.b16 %v1615, %v1615
      %v1744 = vpack.c.b16 %v1616, %v1616
      %v1745 = vpack.c.b16 %v1617, %v1617
      %v1746 = vpack.c.b16 %v1618, %v1618
      %v1747 = vpack.c.b16 %v1619, %v1619
      %v1748 = vpack.c.b16 %v1620, %v1620
      %v1749 = vpack.c.b16 %v1621, %v1621
      %v1750 = vpack.c.b16 %v1622, %v1622
      %v1751 = vpack.c.b16 %v1623, %v1623
      %v1752 = vpack.c.b16 %v1624, %v1624
      %v1753 = vpack.c.b16 %v1625, %v1625
      %v1754 = vpack.c.b16 %v1626, %v1626
      %v1755 = vpack.c.b16 %v1627, %v1627
      %v1756 = vpack.c.b16 %v1628, %v1628
      %v1757 = vpack.c.b16 %v1629, %v1629
      %v1758 = vpack.c.b16 %v1630, %v1630
      %v1759 = vpack.c.b16 %v1631, %v1631
      %v1760 = vpack.c.b16 %v1632, %v1632
      %v1761 = vpack.c.b16 %v1633, %v1633
      %v1762 = vpack.c.b16 %v1634, %v1634
      %v1763 = vpack.c.b16 %v1635, %v1635
      %v1764 = vpack.c.b16 %v1636, %v1636
      %v1765 = vpack.c.b16 %v1637, %v1637
      %v1766 = vpack.c.b16 %v1638, %v1638
      %v1767 = vpack.c.b16 %v1639, %v1639
      %1896 = vst [vmem:[%s172] sm:$0xf] %v1640
      %1897 = vst [vmem:[%s172 + $0x4] sm:$0xf] %v1641
      %1898 = vst [vmem:[%s172 + $0x8] sm:$0xf] %v1642
      %1899 = vst [vmem:[%s172 + $0xc] sm:$0xf] %v1643
      %1900 = vst [vmem:[%s172 + $0x10] sm:$0xf] %v1644
      %1901 = vst [vmem:[%s172 + $0x14] sm:$0xf] %v1645
      %1902 = vst [vmem:[%s172 + $0x18] sm:$0xf] %v1646
      %1903 = vst [vmem:[%s172 + $0x1c] sm:$0xf] %v1647
      %1904 = vst [vmem:[%s172 + $0x20] sm:$0xf] %v1648
      %1905 = vst [vmem:[%s172 + $0x24] sm:$0xf] %v1649
      %1906 = vst [vmem:[%s172 + $0x28] sm:$0xf] %v1650
      %1907 = vst [vmem:[%s172 + $0x2c] sm:$0xf] %v1651
      %1908 = vst [vmem:[%s172 + $0x30] sm:$0xf] %v1652
      %1909 = vst [vmem:[%s172 + $0x34] sm:$0xf] %v1653
      %1910 = vst [vmem:[%s172 + $0x38] sm:$0xf] %v1654
      %1911 = vst [vmem:[%s172 + $0x3c] sm:$0xf] %v1655
      %1912 = vst [vmem:[%s172 + $0x40] sm:$0xf] %v1656
      %1913 = vst [vmem:[%s172 + $0x44] sm:$0xf] %v1657
      %1914 = vst [vmem:[%s172 + $0x48] sm:$0xf] %v1658
      %1915 = vst [vmem:[%s172 + $0x4c] sm:$0xf] %v1659
      %1916 = vst [vmem:[%s172 + $0x50] sm:$0xf] %v1660
      %1917 = vst [vmem:[%s172 + $0x54] sm:$0xf] %v1661
      %1918 = vst [vmem:[%s172 + $0x58] sm:$0xf] %v1662
      %1919 = vst [vmem:[%s172 + $0x5c] sm:$0xf] %v1663
      %1920 = vst [vmem:[%s172 + $0x60] sm:$0xf] %v1664
      %1921 = vst [vmem:[%s172 + $0x64] sm:$0xf] %v1665
      %1922 = vst [vmem:[%s172 + $0x68] sm:$0xf] %v1666
      %1923 = vst [vmem:[%s172 + $0x6c] sm:$0xf] %v1667
      %1924 = vst [vmem:[%s172 + $0x70] sm:$0xf] %v1668
      %1925 = vst [vmem:[%s172 + $0x74] sm:$0xf] %v1669
      %1926 = vst [vmem:[%s172 + $0x78] sm:$0xf] %v1670
      %1927 = vst [vmem:[%s172 + $0x7c] sm:$0xf] %v1671
      %1928 = vst [vmem:[%s172 + $0x80] sm:$0xf] %v1672
      %1929 = vst [vmem:[%s172 + $0x84] sm:$0xf] %v1673
      %1930 = vst [vmem:[%s172 + $0x88] sm:$0xf] %v1674
      %1931 = vst [vmem:[%s172 + $0x8c] sm:$0xf] %v1675
      %1932 = vst [vmem:[%s172 + $0x90] sm:$0xf] %v1676
      %1933 = vst [vmem:[%s172 + $0x94] sm:$0xf] %v1677
      %1934 = vst [vmem:[%s172 + $0x98] sm:$0xf] %v1678
      %1935 = vst [vmem:[%s172 + $0x9c] sm:$0xf] %v1679
      %1936 = vst [vmem:[%s172 + $0xa0] sm:$0xf] %v1680
      %1937 = vst [vmem:[%s172 + $0xa4] sm:$0xf] %v1681
      %1938 = vst [vmem:[%s172 + $0xa8] sm:$0xf] %v1682
      %1939 = vst [vmem:[%s172 + $0xac] sm:$0xf] %v1683
      %1940 = vst [vmem:[%s172 + $0xb0] sm:$0xf] %v1684
      %1941 = vst [vmem:[%s172 + $0xb4] sm:$0xf] %v1685
      %1942 = vst [vmem:[%s172 + $0xb8] sm:$0xf] %v1686
      %1943 = vst [vmem:[%s172 + $0xbc] sm:$0xf] %v1687
      %1944 = vst [vmem:[%s172 + $0xc0] sm:$0xf] %v1688
      %1945 = vst [vmem:[%s172 + $0xc4] sm:$0xf] %v1689
      %1946 = vst [vmem:[%s172 + $0xc8] sm:$0xf] %v1690
      %1947 = vst [vmem:[%s172 + $0xcc] sm:$0xf] %v1691
      %1948 = vst [vmem:[%s172 + $0xd0] sm:$0xf] %v1692
      %1949 = vst [vmem:[%s172 + $0xd4] sm:$0xf] %v1693
      %1950 = vst [vmem:[%s172 + $0xd8] sm:$0xf] %v1694
      %1951 = vst [vmem:[%s172 + $0xdc] sm:$0xf] %v1695
      %1952 = vst [vmem:[%s172 + $0xe0] sm:$0xf] %v1696
      %1953 = vst [vmem:[%s172 + $0xe4] sm:$0xf] %v1697
      %1954 = vst [vmem:[%s172 + $0xe8] sm:$0xf] %v1698
      %1955 = vst [vmem:[%s172 + $0xec] sm:$0xf] %v1699
      %1956 = vst [vmem:[%s172 + $0xf0] sm:$0xf] %v1700
      %1957 = vst [vmem:[%s172 + $0xf4] sm:$0xf] %v1701
      %1958 = vst [vmem:[%s172 + $0xf8] sm:$0xf] %v1702
      %1959 = vst [vmem:[%s172 + $0xfc] sm:$0xf] %v1703
      %1960 = vst [vmem:[%s172 + $0x100] sm:$0xf] %v1704
      %1961 = vst [vmem:[%s172 + $0x104] sm:$0xf] %v1705
      %1962 = vst [vmem:[%s172 + $0x108] sm:$0xf] %v1706
      %1963 = vst [vmem:[%s172 + $0x10c] sm:$0xf] %v1707
      %1964 = vst [vmem:[%s172 + $0x110] sm:$0xf] %v1708
      %1965 = vst [vmem:[%s172 + $0x114] sm:$0xf] %v1709
      %1966 = vst [vmem:[%s172 + $0x118] sm:$0xf] %v1710
      %1967 = vst [vmem:[%s172 + $0x11c] sm:$0xf] %v1711
      %1968 = vst [vmem:[%s172 + $0x120] sm:$0xf] %v1712
      %1969 = vst [vmem:[%s172 + $0x124] sm:$0xf] %v1713
      %1970 = vst [vmem:[%s172 + $0x128] sm:$0xf] %v1714
      %1971 = vst [vmem:[%s172 + $0x12c] sm:$0xf] %v1715
      %1972 = vst [vmem:[%s172 + $0x130] sm:$0xf] %v1716
      %1973 = vst [vmem:[%s172 + $0x134] sm:$0xf] %v1717
      %1974 = vst [vmem:[%s172 + $0x138] sm:$0xf] %v1718
      %1975 = vst [vmem:[%s172 + $0x13c] sm:$0xf] %v1719
      %1976 = vst [vmem:[%s172 + $0x140] sm:$0xf] %v1720
      %1977 = vst [vmem:[%s172 + $0x144] sm:$0xf] %v1721
      %1978 = vst [vmem:[%s172 + $0x148] sm:$0xf] %v1722
      %1979 = vst [vmem:[%s172 + $0x14c] sm:$0xf] %v1723
      %1980 = vst [vmem:[%s172 + $0x150] sm:$0xf] %v1724
      %1981 = vst [vmem:[%s172 + $0x154] sm:$0xf] %v1725
      %1982 = vst [vmem:[%s172 + $0x158] sm:$0xf] %v1726
      %1983 = vst [vmem:[%s172 + $0x15c] sm:$0xf] %v1727
      %1984 = vst [vmem:[%s172 + $0x160] sm:$0xf] %v1728
      %1985 = vst [vmem:[%s172 + $0x164] sm:$0xf] %v1729
      %1986 = vst [vmem:[%s172 + $0x168] sm:$0xf] %v1730
      %1987 = vst [vmem:[%s172 + $0x16c] sm:$0xf] %v1731
      %1988 = vst [vmem:[%s172 + $0x170] sm:$0xf] %v1732
      %1989 = vst [vmem:[%s172 + $0x174] sm:$0xf] %v1733
      %1990 = vst [vmem:[%s172 + $0x178] sm:$0xf] %v1734
      %1991 = vst [vmem:[%s172 + $0x17c] sm:$0xf] %v1735
      %1992 = vst [vmem:[%s172 + $0x180] sm:$0xf] %v1736
      %1993 = vst [vmem:[%s172 + $0x184] sm:$0xf] %v1737
      %1994 = vst [vmem:[%s172 + $0x188] sm:$0xf] %v1738
      %1995 = vst [vmem:[%s172 + $0x18c] sm:$0xf] %v1739
      %1996 = vst [vmem:[%s172 + $0x190] sm:$0xf] %v1740
      %1997 = vst [vmem:[%s172 + $0x194] sm:$0xf] %v1741
      %1998 = vst [vmem:[%s172 + $0x198] sm:$0xf] %v1742
      %1999 = vst [vmem:[%s172 + $0x19c] sm:$0xf] %v1743
      %2000 = vst [vmem:[%s172 + $0x1a0] sm:$0xf] %v1744
      %2001 = vst [vmem:[%s172 + $0x1a4] sm:$0xf] %v1745
      %2002 = vst [vmem:[%s172 + $0x1a8] sm:$0xf] %v1746
      %2003 = vst [vmem:[%s172 + $0x1ac] sm:$0xf] %v1747
      %2004 = vst [vmem:[%s172 + $0x1b0] sm:$0xf] %v1748
      %2005 = vst [vmem:[%s172 + $0x1b4] sm:$0xf] %v1749
      %2006 = vst [vmem:[%s172 + $0x1b8] sm:$0xf] %v1750
      %2007 = vst [vmem:[%s172 + $0x1bc] sm:$0xf] %v1751
      %2008 = vst [vmem:[%s172 + $0x1c0] sm:$0xf] %v1752
      %2009 = vst [vmem:[%s172 + $0x1c4] sm:$0xf] %v1753
      %2010 = vst [vmem:[%s172 + $0x1c8] sm:$0xf] %v1754
      %2011 = vst [vmem:[%s172 + $0x1cc] sm:$0xf] %v1755
      %2012 = vst [vmem:[%s172 + $0x1d0] sm:$0xf] %v1756
      %2013 = vst [vmem:[%s172 + $0x1d4] sm:$0xf] %v1757
      %2014 = vst [vmem:[%s172 + $0x1d8] sm:$0xf] %v1758
      %2015 = vst [vmem:[%s172 + $0x1dc] sm:$0xf] %v1759
      %2016 = vst [vmem:[%s172 + $0x1e0] sm:$0xf] %v1760
      %2017 = vst [vmem:[%s172 + $0x1e4] sm:$0xf] %v1761
      %2018 = vst [vmem:[%s172 + $0x1e8] sm:$0xf] %v1762
      %2019 = vst [vmem:[%s172 + $0x1ec] sm:$0xf] %v1763
      %2020 = vst [vmem:[%s172 + $0x1f0] sm:$0xf] %v1764
      %2021 = vst [vmem:[%s172 + $0x1f4] sm:$0xf] %v1765
      %2022 = vst [vmem:[%s172 + $0x1f8] sm:$0xf] %v1766
      %2023 = vst [vmem:[%s172 + $0x1fc] sm:$0xf] %v1767
      %s2024 = smul.u32 128, %s14
      %p2025 = scmp.lt.s32.totalorder %s2024, 1023
      %s2026 = scalar_select %p2025, %s2024, 1023
      %s2027 = smul.addr %s2026, 4
      %s2028 = scalar_lea.vmem %s3, %s2027
      // Predicated region
      $region33: #{generator_forward.13} parent=31 // pred_check
        %p2029 = pneg %p100
      $region34: #{generator_forward.13} parent=31 // pred_check_branch
        %2031 = sbr.rel (%p2029) target = $region36
      $region35: #{generator_forward.13} parent=31 // pred_region
        %s2032 = smul.u32 128, %s14
      $region36: #{generator_forward.13} parent=31 // pred_fallthru
        _
    $region32: #{generator_forward.13} parent=5 // pred_fallthru
      _
    %p2033 = scmp.le.s32.totalorder 2, %s9
    // Predicated region
    $region37: #{generator_forward.13} parent=5 // pred_check
      %p2034 = pneg %p2033
    $region38: #{generator_forward.13} parent=5 // pred_check_branch
      %2036 = sbr.rel (%p2034) target = $region40
    $region39: #{generator_forward.13} parent=5 // pred_region
      %s2037 = ssub.s32 %s9, 2
      // Predicated region
      $region41: #{generator_forward.13} parent=39 // pred_check
        %p2038 = pneg %p106
      $region42: #{generator_forward.13} parent=39 // pred_check_branch
        %2040 = sbr.rel (%p2038) target = $region44
      $region43: #{generator_forward.13} parent=39 // pred_region
        %s2041 = smul.u32 128, %s15
        %p2042 = scmp.lt.s32.totalorder %s2041, 1023
        %s2043 = scalar_select %p2042, %s2041, 1023
        %s2044 = smul.addr %s2043, 4
        %s2045 = scalar_lea.vmem %s3, %s2044
      $region44: #{generator_forward.13} parent=39 // pred_fallthru
        _
    $region40: #{generator_forward.13} parent=5 // pred_fallthru
      _
  $region6: #{generator_forward.13} parent=0 // loop_footer
    %s13 = sadd.s32 1, %s9
  $region7: #{generator_forward.13} parent=0 // loop_footer_branch
    %8 = sbr.rel target = $region3
  $region8: #{generator_forward.13} parent=0 // loop_exit
    _

</llo_original>
